<compile_context>
chip_gen: v7x
topology: tpu7x:2x2x1
jax: 0.10.0
libtpu: 0.0.40
codegen_flags: <defaults>
</compile_context>

<pallas_src>
import jax
import jax.numpy as jnp
from jax import lax
from jax.experimental import pallas as pl
from jax.experimental.pallas import tpu as pltpu

NEG = -1e9      # finite "minus infinity": masked lanes never produce NaNs
LP = 128        # label dimension padded to one full lane register


def _round_up(x, m):
    return ((x + m - 1) // m) * m


# ----------------------------------------------------------------------------
# Fused kernel: emission matmul + CRF forward algorithm + gold-emission reduce
# grid = (batch blocks [parallel], time blocks [arbitrary, alpha carried in VMEM])
# ----------------------------------------------------------------------------
def make_crf_fused_kernel(t_tile, bb):
    def kernel(emb_ref, mask_ref, tags_ref, w_ref, bias_ref,
               exp_trans_ref, colmax_ref, start_ref, end_ref,
               logz_ref, emnum_ref, alpha_ref, em_ref):
        t_blk = pl.program_id(1)
        is_first = t_blk == 0

        @pl.when(is_first)
        def _init():
            alpha_ref[...] = jnp.zeros_like(alpha_ref)
            em_ref[...] = jnp.zeros_like(em_ref)

        w = w_ref[...]                 # (H, LP)  bf16, padded cols == 0
        bias = bias_ref[...]           # (1, LP)  f32,  padded == 0
        exp_trans = exp_trans_ref[...]  # (LP, LP) f32, exp(trans - colmax), pads == 0
        colmax = colmax_ref[...]       # (1, LP)  f32,  padded == 0
        start = start_ref[...]         # (1, LP)  f32,  padded == NEG

        alpha = alpha_ref[...]         # (bb, LP) carried forward variables
        em = em_ref[...]               # (bb, 1)  carried gold-emission sum

        lane = lax.broadcasted_iota(jnp.int32, (bb, LP), 1)

        # Short statically-unrolled loop over this time tile: slices are static
        # (free) and the grid axis bounds the code size / VMEM footprint.
        for t in range(t_tile):
            # --- emission scores for this step, computed on the MXU ------------
            x_t = emb_ref[:, t, :].astype(jnp.bfloat16)            # (bb, H)
            e_t = jnp.maximum(
                jnp.dot(x_t, w, preferred_element_type=jnp.float32) + bias, 0.0)

            m_t = mask_ref[:, t, :] > 0.0                          # (bb, 1) bool
            tag_t = tags_ref[:, t, :]                              # (bb, 1) int32

            # --- gold-path emission term (numerator), one-hot lane reduce ------
            gold = jnp.sum(jnp.where(lane == tag_t, e_t, 0.0),
                           axis=-1, keepdims=True)                 # (bb, 1)
            contrib = jnp.where(m_t, gold, 0.0)
            if t == 0:
                # torchcrf convention: emission at global t==0 counted regardless
                # of the mask.
                contrib = jnp.where(is_first, gold, contrib)
            em = em + contrib

            # --- forward recurrence: alpha'_j = LSE_i(alpha_i + trans_ij) + e_j -
            am = jnp.max(alpha, axis=-1, keepdims=True)
            p = jnp.exp(alpha - am)
            scores = am + colmax + jnp.log(
                jnp.dot(p, exp_trans, preferred_element_type=jnp.float32,
                        precision=lax.Precision.HIGHEST) + 1e-30)
            stepped = jnp.where(m_t, scores + e_t, alpha)
            if t == 0:
                # global t == 0: alpha = start + emission[0] (torchcrf semantics)
                alpha = jnp.where(is_first, start + e_t, stepped)
            else:
                alpha = stepped

        alpha_ref[...] = alpha
        em_ref[...] = em

        @pl.when(t_blk == pl.num_programs(1) - 1)
        def _finalize():
            a = alpha + end_ref[...]
            am2 = jnp.max(a, axis=-1, keepdims=True)
            logz_ref[...] = am2 + jnp.log(
                jnp.sum(jnp.exp(a - am2), axis=-1, keepdims=True))
            emnum_ref[...] = em

    return kernel


def crf_forward_fused(emb, mask, tags, W, b, trans_f, start_f, end_f):
    """emb (B,T,H) f32, mask/tags (B,T) -> (logZ (B,), gold-emission-sum (B,))."""
    B, T, H = emb.shape
    L = W.shape[0]
    assert L <= LP, f"num_labels {L} > {LP} not supported"

    # Batch tile: large enough to amortize the serial per-step latency, >= 2 batch
    # blocks when B > 8 so both TensorCores of a v7x chip get work, capped at 128
    # (vreg pressure).
    if B <= 8:
        bb = _round_up(max(B, 1), 8)
    else:
        bb = min(128, _round_up(pl.cdiv(B, 2), 8))

    # Time tile: unrolled in-kernel; keep the embedding block around <= 8 MiB so the
    # double-buffered pipeline stays well inside VMEM on every generation.
    t_tile = 32
    while t_tile > 8 and bb * t_tile * H * 4 > 8 * 1024 * 1024:
        t_tile //= 2
    if T <= t_tile:
        t_tile = T          # full time extent (allowed even if not 8-aligned)

    Bp = _round_up(B, bb)
    Tp = _round_up(T, t_tile)

    # Only the tiny mask/tags are padded (so padded timesteps stay masked); the large
    # embedding tensor is not padded -- ragged final blocks are handled by Pallas.
    mask3 = mask[:, :, None].astype(jnp.float32)
    tags3 = tags[:, :, None].astype(jnp.int32)
    if (Bp, Tp) != (B, T):
        mask3 = jnp.pad(mask3, ((0, Bp - B), (0, Tp - T), (0, 0)))
        tags3 = jnp.pad(tags3, ((0, Bp - B), (0, Tp - T), (0, 0)))
    emb = emb.astype(jnp.float32)
    if B < bb:              # only for tiny batches; avoids a block larger than the dim
        emb = jnp.pad(emb, ((0, bb - B), (0, 0), (0, 0)))

    # Small resident operands (padded to one lane register).
    Wp = jnp.zeros((H, LP), jnp.bfloat16).at[:, :L].set(W.T.astype(jnp.bfloat16))
    bp = jnp.zeros((1, LP), jnp.float32).at[0, :L].set(b.astype(jnp.float32))
    colmax = jnp.max(trans_f, axis=0)                       # per-column max shift
    exp_trans_p = jnp.zeros((LP, LP), jnp.float32).at[:L, :L].set(
        jnp.exp(trans_f - colmax[None, :]))
    colmax_p = jnp.zeros((1, LP), jnp.float32).at[0, :L].set(colmax)
    start_p = jnp.full((1, LP), NEG, jnp.float32).at[0, :L].set(start_f)
    end_p = jnp.full((1, LP), NEG, jnp.float32).at[0, :L].set(end_f)

    grid = (Bp // bb, Tp // t_tile)
    logz, em_num = pl.pallas_call(
        make_crf_fused_kernel(t_tile, bb),
        out_shape=(jax.ShapeDtypeStruct((Bp, 1), jnp.float32),
                   jax.ShapeDtypeStruct((Bp, 1), jnp.float32)),
        grid=grid,
        in_specs=[
            pl.BlockSpec((bb, t_tile, H), lambda bi, ti: (bi, ti, 0)),   # embeddings
            pl.BlockSpec((bb, t_tile, 1), lambda bi, ti: (bi, ti, 0)),   # mask
            pl.BlockSpec((bb, t_tile, 1), lambda bi, ti: (bi, ti, 0)),   # tags
            pl.BlockSpec((H, LP), lambda bi, ti: (0, 0)),                # W (bf16)
            pl.BlockSpec((1, LP), lambda bi, ti: (0, 0)),                # bias
            pl.BlockSpec((LP, LP), lambda bi, ti: (0, 0)),               # exp(trans-c)
            pl.BlockSpec((1, LP), lambda bi, ti: (0, 0)),                # colmax
            pl.BlockSpec((1, LP), lambda bi, ti: (0, 0)),                # start
            pl.BlockSpec((1, LP), lambda bi, ti: (0, 0)),                # end
        ],
        out_specs=(pl.BlockSpec((bb, 1), lambda bi, ti: (bi, 0)),
                   pl.BlockSpec((bb, 1), lambda bi, ti: (bi, 0))),
        scratch_shapes=[pltpu.VMEM((bb, LP), jnp.float32),   # alpha
                        pltpu.VMEM((bb, 1), jnp.float32)],   # gold-emission sum
        compiler_params=pltpu.CompilerParams(
            dimension_semantics=("parallel", "arbitrary"),
            vmem_limit_bytes=48 * 1024 * 1024),
    )(emb, mask3, tags3, Wp, bp, exp_trans_p, colmax_p, start_p, end_p)

    return logz[:B, 0], em_num[:B, 0]


# ----------------------------------------------------------------------------
# Full NERHead training-branch forward
# ----------------------------------------------------------------------------
def ner_head_forward(emb, labels, token_type_ids, W, b, trans, start, end):
    """Returns (-mean(log-likelihood), per-sequence log-likelihood)."""
    # TODO(synk): nn.Dropout(0.25) treated as identity (eval-mode semantics).
    trans_f = trans.astype(jnp.float32)
    start_f = start.astype(jnp.float32)
    end_f = end.astype(jnp.float32)

    # Replicate: crf_mask_modified[labels == -100] = 0 ; labels_modified[...] = 0
    mask = jnp.where(labels == -100, 0, token_type_ids).astype(jnp.float32)
    tags = jnp.where(labels == -100, 0, labels).astype(jnp.int32)

    logZ, em_num = crf_forward_fused(emb, mask, tags, W, b, trans_f, start_f, end_f)

    # Gold-path pieces that never touch the (B,T,L) emissions: tiny gathers in JAX.
    B, T = tags.shape
    num = start_f[tags[:, 0]] + em_num
    if T > 1:
        trans_gold = trans_f[tags[:, :-1], tags[:, 1:]]                  # (B, T-1)
        num = num + jnp.sum(mask[:, 1:] * trans_gold, axis=1)
    # NOTE: last_idx == -1 for an all-masked sequence is degenerate input (as torchcrf).
    last_idx = (jnp.sum(mask, axis=1) - 1).astype(jnp.int32)
    last_tags = jnp.take_along_axis(tags, last_idx[:, None], axis=1)[:, 0]
    num = num + end_f[last_tags]

    llh = num - logZ
    return -jnp.mean(llh), llh


# ----------------------------------------------------------------------------
# Pure-JAX reference (for correctness check)
# ----------------------------------------------------------------------------
def crf_llh_ref(emis, labels, token_type_ids, trans, start, end):
    B, T, L = emis.shape
    mask = jnp.where(labels == -100, 0, token_type_ids).astype(jnp.float32)
    tags = jnp.where(labels == -100, 0, labels).astype(jnp.int32)
    bidx = jnp.arange(B)

    num = start[tags[:, 0]] + emis[bidx, 0, tags[:, 0]]
    for t in range(1, T):
        num = num + mask[:, t] * (trans[tags[:, t - 1], tags[:, t]]
                                  + emis[bidx, t, tags[:, t]])
    last_idx = (jnp.sum(mask, axis=1) - 1).astype(jnp.int32)
    last_tags = jnp.take_along_axis(tags, last_idx[:, None], axis=1)[:, 0]
    num = num + end[last_tags]

    alpha = start[None, :] + emis[:, 0, :]
    for t in range(1, T):
        sc = jax.nn.logsumexp(alpha[:, :, None] + trans[None, :, :], axis=1)
        sc = sc + emis[:, t, :]
        alpha = jnp.where(mask[:, t:t + 1] > 0, sc, alpha)
    logZ = jax.nn.logsumexp(alpha + end[None, :], axis=-1)
    return num - logZ


# ----------------------------------------------------------------------------
if __name__ == "__main__":
    B, T, H, L = 2, 8, 32, 5
    key = jax.random.PRNGKey(0)
    k1, k2, k3, k4, k5, k6, k7 = jax.random.split(key, 7)

    emb = jax.random.normal(k1, (B, T, H), jnp.float32)
    W = jax.random.normal(k2, (L, H), jnp.float32) / jnp.sqrt(H)
    b = jax.random.normal(k3, (L,), jnp.float32) * 0.1
    trans = jax.random.normal(k4, (L, L), jnp.float32) * 0.1
    start = jax.random.normal(k5, (L,), jnp.float32) * 0.1
    end = jax.random.normal(k6, (L,), jnp.float32) * 0.1

    token_type_ids = jnp.array([[1, 1, 1, 1, 1, 1, 1, 1],
                                [1, 1, 1, 1, 1, 0, 0, 0]], jnp.int32)
    labels = jax.random.randint(k7, (B, T), 0, L, jnp.int32)
    labels = jnp.where(token_type_ids == 1, labels, -100)

    fwd = jax.jit(ner_head_forward)
    loss, llh = fwd(emb, labels, token_type_ids, W, b, trans, start, end)
    loss = jax.block_until_ready(loss)

    # correctness check against plain-JAX reference
    emis_ref = jax.nn.relu(jnp.einsum("bth,lh->btl", emb, W) + b[None, None, :])
    llh_ref = crf_llh_ref(emis_ref, labels, token_type_ids, trans, start, end)
    loss_ref = -jnp.mean(llh_ref)

    assert bool(jnp.all(jnp.isfinite(llh))), f"non-finite llh: {llh}"
    assert bool(jnp.allclose(llh, llh_ref, atol=2e-2, rtol=2e-2)), \
        f"CRF llh mismatch: {llh} vs {llh_ref}"
    assert bool(jnp.allclose(loss, loss_ref, atol=2e-2, rtol=2e-2)), \
        f"loss mismatch: {loss} vs {loss_ref}"

    print("KERNEL_OK")
</pallas_src>

<mosaic_0001>
module attributes {stable_mosaic.version = 11 : i64} {
  func.func @kernel(%arg0: i32, %arg1: i32, %arg2: memref<8x8x32xf32, #tpu.memory_space<vmem>>, %arg3: memref<8x8x1xf32, #tpu.memory_space<vmem>>, %arg4: memref<8x8x1xi32, #tpu.memory_space<vmem>>, %arg5: memref<32x128xbf16, #tpu.memory_space<vmem>>, %arg6: memref<1x128xf32, #tpu.memory_space<vmem>>, %arg7: memref<128x128xf32, #tpu.memory_space<vmem>>, %arg8: memref<1x128xf32, #tpu.memory_space<vmem>>, %arg9: memref<1x128xf32, #tpu.memory_space<vmem>>, %arg10: memref<1x128xf32, #tpu.memory_space<vmem>>, %arg11: memref<8x1xf32, #tpu.memory_space<vmem>>, %arg12: memref<8x1xf32, #tpu.memory_space<vmem>>, %arg13: memref<8x128xf32, #tpu.memory_space<vmem>>, %arg14: memref<8x1xf32, #tpu.memory_space<vmem>>) attributes {dimension_semantics = [#tpu.dimension_semantics<parallel>, #tpu.dimension_semantics<arbitrary>], iteration_bounds = array<i64: 1, 1>, scalar_prefetch = 0 : i64, scratch_operands = 2 : i64, tpu.core_type = #tpu.core_type<tc>, window_params = [{transform_indices = @transform_0, window_bounds = array<i64: 8, 8, 32>}, {transform_indices = @transform_1, window_bounds = array<i64: 8, 8, 1>}, {transform_indices = @transform_2, window_bounds = array<i64: 8, 8, 1>}, {pipeline_mode = #tpu.pipeline_mode<synchronous>, transform_indices = @transform_3, window_bounds = array<i64: 32, 128>}, {pipeline_mode = #tpu.pipeline_mode<synchronous>, transform_indices = @transform_4, window_bounds = array<i64: 1, 128>}, {pipeline_mode = #tpu.pipeline_mode<synchronous>, transform_indices = @transform_5, window_bounds = array<i64: 128, 128>}, {pipeline_mode = #tpu.pipeline_mode<synchronous>, transform_indices = @transform_6, window_bounds = array<i64: 1, 128>}, {pipeline_mode = #tpu.pipeline_mode<synchronous>, transform_indices = @transform_7, window_bounds = array<i64: 1, 128>}, {pipeline_mode = #tpu.pipeline_mode<synchronous>, transform_indices = @transform_8, window_bounds = array<i64: 1, 128>}, {transform_indices = @transform_9, window_bounds = array<i64: 8, 1>}, {transform_indices = @transform_10, window_bounds = array<i64: 8, 1>}]} {
    %c0_i32 = arith.constant 0 : i32
    %0 = arith.cmpi eq, %arg1, %c0_i32 : i32
    %1 = arith.extui %0 : i1 to i32
    %c0_i32_0 = arith.constant 0 : i32
    %2 = arith.cmpi ne, %1, %c0_i32_0 : i32
    scf.if %2 {
      %cst_156 = arith.constant 0.000000e+00 : f32
      %340 = vector.broadcast %cst_156 : f32 to vector<8x128xf32>
      %c0_157 = arith.constant 0 : index
      %c0_158 = arith.constant 0 : index
      %341 = vector.load %arg13[%c0_157, %c0_158] : memref<8x128xf32, #tpu.memory_space<vmem>>, vector<8x128xf32>
      tpu.vector_store %arg13[%c0_157, %c0_158], %340 {strides = array<i32>} : memref<8x128xf32, #tpu.memory_space<vmem>>, vector<8x128xf32>,
      %cst_159 = arith.constant 0.000000e+00 : f32
      %342 = vector.broadcast %cst_159 : f32 to vector<8x1xf32>
      %c0_160 = arith.constant 0 : index
      %c0_161 = arith.constant 0 : index
      %343 = vector.load %arg14[%c0_160, %c0_161] : memref<8x1xf32, #tpu.memory_space<vmem>>, vector<8x1xf32>
      tpu.vector_store %arg14[%c0_160, %c0_161], %342 {strides = array<i32>} : memref<8x1xf32, #tpu.memory_space<vmem>>, vector<8x1xf32>,
    } else {
    }
    %c0 = arith.constant 0 : index
    %c0_1 = arith.constant 0 : index
    %3 = vector.load %arg5[%c0, %c0_1] : memref<32x128xbf16, #tpu.memory_space<vmem>>, vector<32x128xbf16>
    %c0_2 = arith.constant 0 : index
    %c0_3 = arith.constant 0 : index
    %4 = vector.load %arg6[%c0_2, %c0_3] : memref<1x128xf32, #tpu.memory_space<vmem>>, vector<1x128xf32>
    %c0_4 = arith.constant 0 : index
    %c0_5 = arith.constant 0 : index
    %5 = vector.load %arg7[%c0_4, %c0_5] : memref<128x128xf32, #tpu.memory_space<vmem>>, vector<128x128xf32>
    %c0_6 = arith.constant 0 : index
    %c0_7 = arith.constant 0 : index
    %6 = vector.load %arg8[%c0_6, %c0_7] : memref<1x128xf32, #tpu.memory_space<vmem>>, vector<1x128xf32>
    %c0_8 = arith.constant 0 : index
    %c0_9 = arith.constant 0 : index
    %7 = vector.load %arg9[%c0_8, %c0_9] : memref<1x128xf32, #tpu.memory_space<vmem>>, vector<1x128xf32>
    %c0_10 = arith.constant 0 : index
    %c0_11 = arith.constant 0 : index
    %8 = vector.load %arg13[%c0_10, %c0_11] : memref<8x128xf32, #tpu.memory_space<vmem>>, vector<8x128xf32>
    %c0_12 = arith.constant 0 : index
    %c0_13 = arith.constant 0 : index
    %9 = vector.load %arg14[%c0_12, %c0_13] : memref<8x1xf32, #tpu.memory_space<vmem>>, vector<8x1xf32>
    %10 = tpu.iota {dimensions = array<i32: 1>} : vector<8x128xi32>
    %c0_14 = arith.constant 0 : index
    %c0_15 = arith.constant 0 : index
    %c0_16 = arith.constant 0 : index
    %11 = vector.load %arg2[%c0_14, %c0_15, %c0_16] : memref<8x8x32xf32, #tpu.memory_space<vmem>>, vector<8x1x32xf32>
    %12 = vector.shape_cast %11 : vector<8x1x32xf32> to vector<8x32xf32>
    %13 = arith.truncf %12 : vector<8x32xf32> to vector<8x32xbf16>
    %cst = arith.constant dense<0.000000e+00> : vector<8x128xf32>
    %14 = tpu.matmul %13, %3, %cst {dimension_numbers = #tpu.dot_dimension_numbers<[1], [0], [0], [1], [0, 0, 1, 1], [], []>} : vector<8x32xbf16>, vector<32x128xbf16>, vector<8x128xf32> -> vector<8x128xf32>
    %15 = vector.broadcast %4 : vector<1x128xf32> to vector<8x128xf32>
    %16 = arith.addf %14, %15 : vector<8x128xf32>
    %cst_17 = arith.constant 0.000000e+00 : f32
    %17 = vector.broadcast %cst_17 : f32 to vector<8x128xf32>
    %18 = arith.maximumf %16, %17 : vector<8x128xf32>
    %c0_18 = arith.constant 0 : index
    %c0_19 = arith.constant 0 : index
    %c0_20 = arith.constant 0 : index
    %19 = vector.load %arg3[%c0_18, %c0_19, %c0_20] : memref<8x8x1xf32, #tpu.memory_space<vmem>>, vector<8x1x1xf32>
    %20 = vector.shape_cast %19 : vector<8x1x1xf32> to vector<8x1xf32>
    %cst_21 = arith.constant 0.000000e+00 : f32
    %21 = vector.broadcast %cst_21 : f32 to vector<8x1xf32>
    %22 = arith.cmpf ogt, %20, %21 : vector<8x1xf32>
    %c0_22 = arith.constant 0 : index
    %c0_23 = arith.constant 0 : index
    %c0_24 = arith.constant 0 : index
    %23 = vector.load %arg4[%c0_22, %c0_23, %c0_24] : memref<8x8x1xi32, #tpu.memory_space<vmem>>, vector<8x1x1xi32>
    %24 = vector.shape_cast %23 : vector<8x1x1xi32> to vector<8x1xi32>
    %25 = vector.broadcast %24 : vector<8x1xi32> to vector<8x128xi32>
    %26 = arith.cmpi eq, %10, %25 : vector<8x128xi32>
    %cst_25 = arith.constant 0.000000e+00 : f32
    %27 = vector.broadcast %cst_25 : f32 to vector<8x128xf32>
    %28 = arith.select %26, %18, %27 : vector<8x128xi1>, vector<8x128xf32>
    %cst_26 = arith.constant dense<0.000000e+00> : vector<8xf32>
    %29 = vector.multi_reduction <add>, %28, %cst_26 [1] : vector<8x128xf32> to vector<8xf32>
    %30 = vector.shape_cast %29 : vector<8xf32> to vector<8x1xf32>
    %cst_27 = arith.constant 0.000000e+00 : f32
    %31 = vector.broadcast %cst_27 : f32 to vector<8x1xf32>
    %32 = arith.select %22, %30, %31 : vector<8x1xi1>, vector<8x1xf32>
    %33 = arith.select %0, %30, %32 : vector<8x1xf32>
    %34 = arith.addf %9, %33 : vector<8x1xf32>
    %cst_28 = arith.constant dense<0xFF800000> : vector<8xf32>
    %35 = vector.multi_reduction <maximumf>, %8, %cst_28 [1] : vector<8x128xf32> to vector<8xf32>
    %36 = vector.shape_cast %35 : vector<8xf32> to vector<8x1xf32>
    %37 = vector.broadcast %36 : vector<8x1xf32> to vector<8x128xf32>
    %38 = arith.subf %8, %37 : vector<8x128xf32>
    %39 = math.exp %38 : vector<8x128xf32>
    %40 = vector.broadcast %36 : vector<8x1xf32> to vector<8x128xf32>
    %41 = vector.broadcast %6 : vector<1x128xf32> to vector<8x128xf32>
    %42 = arith.addf %40, %41 : vector<8x128xf32>
    %cst_29 = arith.constant dense<0.000000e+00> : vector<8x128xf32>
    %43 = tpu.matmul %39, %5, %cst_29 {dimension_numbers = #tpu.dot_dimension_numbers<[1], [0], [0], [1], [0, 0, 1, 1], [], []>, precision = #tpu.contract_precision<fp32>} : vector<8x128xf32>, vector<128x128xf32>, vector<8x128xf32> -> vector<8x128xf32>
    %cst_30 = arith.constant 1.000000e-30 : f32
    %44 = vector.broadcast %cst_30 : f32 to vector<8x128xf32>
    %45 = arith.addf %43, %44 : vector<8x128xf32>
    %46 = math.log %45 : vector<8x128xf32>
    %47 = arith.addf %42, %46 : vector<8x128xf32>
    %48 = arith.addf %47, %18 : vector<8x128xf32>
    %49 = vector.shape_cast %22 : vector<8x1xi1> to vector<8x1xi1>
    %50 = vector.broadcast %49 : vector<8x1xi1> to vector<8x128xi1>
    %51 = arith.select %50, %48, %8 : vector<8x128xi1>, vector<8x128xf32>
    %52 = vector.broadcast %7 : vector<1x128xf32> to vector<8x128xf32>
    %53 = arith.addf %52, %18 : vector<8x128xf32>
    %54 = arith.select %0, %53, %51 : vector<8x128xf32>
    %c0_31 = arith.constant 0 : index
    %c1 = arith.constant 1 : index
    %c0_32 = arith.constant 0 : index
    %55 = vector.load %arg2[%c0_31, %c1, %c0_32] : memref<8x8x32xf32, #tpu.memory_space<vmem>>, vector<8x1x32xf32>
    %56 = vector.shape_cast %55 : vector<8x1x32xf32> to vector<8x32xf32>
    %57 = arith.truncf %56 : vector<8x32xf32> to vector<8x32xbf16>
    %cst_33 = arith.constant dense<0.000000e+00> : vector<8x128xf32>
    %58 = tpu.matmul %57, %3, %cst_33 {dimension_numbers = #tpu.dot_dimension_numbers<[1], [0], [0], [1], [0, 0, 1, 1], [], []>} : vector<8x32xbf16>, vector<32x128xbf16>, vector<8x128xf32> -> vector<8x128xf32>
    %59 = vector.broadcast %4 : vector<1x128xf32> to vector<8x128xf32>
    %60 = arith.addf %58, %59 : vector<8x128xf32>
    %cst_34 = arith.constant 0.000000e+00 : f32
    %61 = vector.broadcast %cst_34 : f32 to vector<8x128xf32>
    %62 = arith.maximumf %60, %61 : vector<8x128xf32>
    %c0_35 = arith.constant 0 : index
    %c1_36 = arith.constant 1 : index
    %c0_37 = arith.constant 0 : index
    %63 = vector.load %arg3[%c0_35, %c1_36, %c0_37] : memref<8x8x1xf32, #tpu.memory_space<vmem>>, vector<8x1x1xf32>
    %64 = vector.shape_cast %63 : vector<8x1x1xf32> to vector<8x1xf32>
    %cst_38 = arith.constant 0.000000e+00 : f32
    %65 = vector.broadcast %cst_38 : f32 to vector<8x1xf32>
    %66 = arith.cmpf ogt, %64, %65 : vector<8x1xf32>
    %c0_39 = arith.constant 0 : index
    %c1_40 = arith.constant 1 : index
    %c0_41 = arith.constant 0 : index
    %67 = vector.load %arg4[%c0_39, %c1_40, %c0_41] : memref<8x8x1xi32, #tpu.memory_space<vmem>>, vector<8x1x1xi32>
    %68 = vector.shape_cast %67 : vector<8x1x1xi32> to vector<8x1xi32>
    %69 = vector.broadcast %68 : vector<8x1xi32> to vector<8x128xi32>
    %70 = arith.cmpi eq, %10, %69 : vector<8x128xi32>
    %cst_42 = arith.constant 0.000000e+00 : f32
    %71 = vector.broadcast %cst_42 : f32 to vector<8x128xf32>
    %72 = arith.select %70, %62, %71 : vector<8x128xi1>, vector<8x128xf32>
    %cst_43 = arith.constant dense<0.000000e+00> : vector<8xf32>
    %73 = vector.multi_reduction <add>, %72, %cst_43 [1] : vector<8x128xf32> to vector<8xf32>
    %74 = vector.shape_cast %73 : vector<8xf32> to vector<8x1xf32>
    %cst_44 = arith.constant 0.000000e+00 : f32
    %75 = vector.broadcast %cst_44 : f32 to vector<8x1xf32>
    %76 = arith.select %66, %74, %75 : vector<8x1xi1>, vector<8x1xf32>
    %77 = arith.addf %34, %76 : vector<8x1xf32>
    %cst_45 = arith.constant dense<0xFF800000> : vector<8xf32>
    %78 = vector.multi_reduction <maximumf>, %54, %cst_45 [1] : vector<8x128xf32> to vector<8xf32>
    %79 = vector.shape_cast %78 : vector<8xf32> to vector<8x1xf32>
    %80 = vector.broadcast %79 : vector<8x1xf32> to vector<8x128xf32>
    %81 = arith.subf %54, %80 : vector<8x128xf32>
    %82 = math.exp %81 : vector<8x128xf32>
    %83 = vector.broadcast %79 : vector<8x1xf32> to vector<8x128xf32>
    %84 = vector.broadcast %6 : vector<1x128xf32> to vector<8x128xf32>
    %85 = arith.addf %83, %84 : vector<8x128xf32>
    %cst_46 = arith.constant dense<0.000000e+00> : vector<8x128xf32>
    %86 = tpu.matmul %82, %5, %cst_46 {dimension_numbers = #tpu.dot_dimension_numbers<[1], [0], [0], [1], [0, 0, 1, 1], [], []>, precision = #tpu.contract_precision<fp32>} : vector<8x128xf32>, vector<128x128xf32>, vector<8x128xf32> -> vector<8x128xf32>
    %cst_47 = arith.constant 1.000000e-30 : f32
    %87 = vector.broadcast %cst_47 : f32 to vector<8x128xf32>
    %88 = arith.addf %86, %87 : vector<8x128xf32>
    %89 = math.log %88 : vector<8x128xf32>
    %90 = arith.addf %85, %89 : vector<8x128xf32>
    %91 = arith.addf %90, %62 : vector<8x128xf32>
    %92 = vector.shape_cast %66 : vector<8x1xi1> to vector<8x1xi1>
    %93 = vector.broadcast %92 : vector<8x1xi1> to vector<8x128xi1>
    %94 = arith.select %93, %91, %54 : vector<8x128xi1>, vector<8x128xf32>
    %c0_48 = arith.constant 0 : index
    %c2 = arith.constant 2 : index
    %c0_49 = arith.constant 0 : index
    %95 = vector.load %arg2[%c0_48, %c2, %c0_49] : memref<8x8x32xf32, #tpu.memory_space<vmem>>, vector<8x1x32xf32>
    %96 = vector.shape_cast %95 : vector<8x1x32xf32> to vector<8x32xf32>
    %97 = arith.truncf %96 : vector<8x32xf32> to vector<8x32xbf16>
    %cst_50 = arith.constant dense<0.000000e+00> : vector<8x128xf32>
    %98 = tpu.matmul %97, %3, %cst_50 {dimension_numbers = #tpu.dot_dimension_numbers<[1], [0], [0], [1], [0, 0, 1, 1], [], []>} : vector<8x32xbf16>, vector<32x128xbf16>, vector<8x128xf32> -> vector<8x128xf32>
    %99 = vector.broadcast %4 : vector<1x128xf32> to vector<8x128xf32>
    %100 = arith.addf %98, %99 : vector<8x128xf32>
    %cst_51 = arith.constant 0.000000e+00 : f32
    %101 = vector.broadcast %cst_51 : f32 to vector<8x128xf32>
    %102 = arith.maximumf %100, %101 : vector<8x128xf32>
    %c0_52 = arith.constant 0 : index
    %c2_53 = arith.constant 2 : index
    %c0_54 = arith.constant 0 : index
    %103 = vector.load %arg3[%c0_52, %c2_53, %c0_54] : memref<8x8x1xf32, #tpu.memory_space<vmem>>, vector<8x1x1xf32>
    %104 = vector.shape_cast %103 : vector<8x1x1xf32> to vector<8x1xf32>
    %cst_55 = arith.constant 0.000000e+00 : f32
    %105 = vector.broadcast %cst_55 : f32 to vector<8x1xf32>
    %106 = arith.cmpf ogt, %104, %105 : vector<8x1xf32>
    %c0_56 = arith.constant 0 : index
    %c2_57 = arith.constant 2 : index
    %c0_58 = arith.constant 0 : index
    %107 = vector.load %arg4[%c0_56, %c2_57, %c0_58] : memref<8x8x1xi32, #tpu.memory_space<vmem>>, vector<8x1x1xi32>
    %108 = vector.shape_cast %107 : vector<8x1x1xi32> to vector<8x1xi32>
    %109 = vector.broadcast %108 : vector<8x1xi32> to vector<8x128xi32>
    %110 = arith.cmpi eq, %10, %109 : vector<8x128xi32>
    %cst_59 = arith.constant 0.000000e+00 : f32
    %111 = vector.broadcast %cst_59 : f32 to vector<8x128xf32>
    %112 = arith.select %110, %102, %111 : vector<8x128xi1>, vector<8x128xf32>
    %cst_60 = arith.constant dense<0.000000e+00> : vector<8xf32>
    %113 = vector.multi_reduction <add>, %112, %cst_60 [1] : vector<8x128xf32> to vector<8xf32>
    %114 = vector.shape_cast %113 : vector<8xf32> to vector<8x1xf32>
    %cst_61 = arith.constant 0.000000e+00 : f32
    %115 = vector.broadcast %cst_61 : f32 to vector<8x1xf32>
    %116 = arith.select %106, %114, %115 : vector<8x1xi1>, vector<8x1xf32>
    %117 = arith.addf %77, %116 : vector<8x1xf32>
    %cst_62 = arith.constant dense<0xFF800000> : vector<8xf32>
    %118 = vector.multi_reduction <maximumf>, %94, %cst_62 [1] : vector<8x128xf32> to vector<8xf32>
    %119 = vector.shape_cast %118 : vector<8xf32> to vector<8x1xf32>
    %120 = vector.broadcast %119 : vector<8x1xf32> to vector<8x128xf32>
    %121 = arith.subf %94, %120 : vector<8x128xf32>
    %122 = math.exp %121 : vector<8x128xf32>
    %123 = vector.broadcast %119 : vector<8x1xf32> to vector<8x128xf32>
    %124 = vector.broadcast %6 : vector<1x128xf32> to vector<8x128xf32>
    %125 = arith.addf %123, %124 : vector<8x128xf32>
    %cst_63 = arith.constant dense<0.000000e+00> : vector<8x128xf32>
    %126 = tpu.matmul %122, %5, %cst_63 {dimension_numbers = #tpu.dot_dimension_numbers<[1], [0], [0], [1], [0, 0, 1, 1], [], []>, precision = #tpu.contract_precision<fp32>} : vector<8x128xf32>, vector<128x128xf32>, vector<8x128xf32> -> vector<8x128xf32>
    %cst_64 = arith.constant 1.000000e-30 : f32
    %127 = vector.broadcast %cst_64 : f32 to vector<8x128xf32>
    %128 = arith.addf %126, %127 : vector<8x128xf32>
    %129 = math.log %128 : vector<8x128xf32>
    %130 = arith.addf %125, %129 : vector<8x128xf32>
    %131 = arith.addf %130, %102 : vector<8x128xf32>
    %132 = vector.shape_cast %106 : vector<8x1xi1> to vector<8x1xi1>
    %133 = vector.broadcast %132 : vector<8x1xi1> to vector<8x128xi1>
    %134 = arith.select %133, %131, %94 : vector<8x128xi1>, vector<8x128xf32>
    %c0_65 = arith.constant 0 : index
    %c3 = arith.constant 3 : index
    %c0_66 = arith.constant 0 : index
    %135 = vector.load %arg2[%c0_65, %c3, %c0_66] : memref<8x8x32xf32, #tpu.memory_space<vmem>>, vector<8x1x32xf32>
    %136 = vector.shape_cast %135 : vector<8x1x32xf32> to vector<8x32xf32>
    %137 = arith.truncf %136 : vector<8x32xf32> to vector<8x32xbf16>
    %cst_67 = arith.constant dense<0.000000e+00> : vector<8x128xf32>
    %138 = tpu.matmul %137, %3, %cst_67 {dimension_numbers = #tpu.dot_dimension_numbers<[1], [0], [0], [1], [0, 0, 1, 1], [], []>} : vector<8x32xbf16>, vector<32x128xbf16>, vector<8x128xf32> -> vector<8x128xf32>
    %139 = vector.broadcast %4 : vector<1x128xf32> to vector<8x128xf32>
    %140 = arith.addf %138, %139 : vector<8x128xf32>
    %cst_68 = arith.constant 0.000000e+00 : f32
    %141 = vector.broadcast %cst_68 : f32 to vector<8x128xf32>
    %142 = arith.maximumf %140, %141 : vector<8x128xf32>
    %c0_69 = arith.constant 0 : index
    %c3_70 = arith.constant 3 : index
    %c0_71 = arith.constant 0 : index
    %143 = vector.load %arg3[%c0_69, %c3_70, %c0_71] : memref<8x8x1xf32, #tpu.memory_space<vmem>>, vector<8x1x1xf32>
    %144 = vector.shape_cast %143 : vector<8x1x1xf32> to vector<8x1xf32>
    %cst_72 = arith.constant 0.000000e+00 : f32
    %145 = vector.broadcast %cst_72 : f32 to vector<8x1xf32>
    %146 = arith.cmpf ogt, %144, %145 : vector<8x1xf32>
    %c0_73 = arith.constant 0 : index
    %c3_74 = arith.constant 3 : index
    %c0_75 = arith.constant 0 : index
    %147 = vector.load %arg4[%c0_73, %c3_74, %c0_75] : memref<8x8x1xi32, #tpu.memory_space<vmem>>, vector<8x1x1xi32>
    %148 = vector.shape_cast %147 : vector<8x1x1xi32> to vector<8x1xi32>
    %149 = vector.broadcast %148 : vector<8x1xi32> to vector<8x128xi32>
    %150 = arith.cmpi eq, %10, %149 : vector<8x128xi32>
    %cst_76 = arith.constant 0.000000e+00 : f32
    %151 = vector.broadcast %cst_76 : f32 to vector<8x128xf32>
    %152 = arith.select %150, %142, %151 : vector<8x128xi1>, vector<8x128xf32>
    %cst_77 = arith.constant dense<0.000000e+00> : vector<8xf32>
    %153 = vector.multi_reduction <add>, %152, %cst_77 [1] : vector<8x128xf32> to vector<8xf32>
    %154 = vector.shape_cast %153 : vector<8xf32> to vector<8x1xf32>
    %cst_78 = arith.constant 0.000000e+00 : f32
    %155 = vector.broadcast %cst_78 : f32 to vector<8x1xf32>
    %156 = arith.select %146, %154, %155 : vector<8x1xi1>, vector<8x1xf32>
    %157 = arith.addf %117, %156 : vector<8x1xf32>
    %cst_79 = arith.constant dense<0xFF800000> : vector<8xf32>
    %158 = vector.multi_reduction <maximumf>, %134, %cst_79 [1] : vector<8x128xf32> to vector<8xf32>
    %159 = vector.shape_cast %158 : vector<8xf32> to vector<8x1xf32>
    %160 = vector.broadcast %159 : vector<8x1xf32> to vector<8x128xf32>
    %161 = arith.subf %134, %160 : vector<8x128xf32>
    %162 = math.exp %161 : vector<8x128xf32>
    %163 = vector.broadcast %159 : vector<8x1xf32> to vector<8x128xf32>
    %164 = vector.broadcast %6 : vector<1x128xf32> to vector<8x128xf32>
    %165 = arith.addf %163, %164 : vector<8x128xf32>
    %cst_80 = arith.constant dense<0.000000e+00> : vector<8x128xf32>
    %166 = tpu.matmul %162, %5, %cst_80 {dimension_numbers = #tpu.dot_dimension_numbers<[1], [0], [0], [1], [0, 0, 1, 1], [], []>, precision = #tpu.contract_precision<fp32>} : vector<8x128xf32>, vector<128x128xf32>, vector<8x128xf32> -> vector<8x128xf32>
    %cst_81 = arith.constant 1.000000e-30 : f32
    %167 = vector.broadcast %cst_81 : f32 to vector<8x128xf32>
    %168 = arith.addf %166, %167 : vector<8x128xf32>
    %169 = math.log %168 : vector<8x128xf32>
    %170 = arith.addf %165, %169 : vector<8x128xf32>
    %171 = arith.addf %170, %142 : vector<8x128xf32>
    %172 = vector.shape_cast %146 : vector<8x1xi1> to vector<8x1xi1>
    %173 = vector.broadcast %172 : vector<8x1xi1> to vector<8x128xi1>
    %174 = arith.select %173, %171, %134 : vector<8x128xi1>, vector<8x128xf32>
    %c0_82 = arith.constant 0 : index
    %c4 = arith.constant 4 : index
    %c0_83 = arith.constant 0 : index
    %175 = vector.load %arg2[%c0_82, %c4, %c0_83] : memref<8x8x32xf32, #tpu.memory_space<vmem>>, vector<8x1x32xf32>
    %176 = vector.shape_cast %175 : vector<8x1x32xf32> to vector<8x32xf32>
    %177 = arith.truncf %176 : vector<8x32xf32> to vector<8x32xbf16>
    %cst_84 = arith.constant dense<0.000000e+00> : vector<8x128xf32>
    %178 = tpu.matmul %177, %3, %cst_84 {dimension_numbers = #tpu.dot_dimension_numbers<[1], [0], [0], [1], [0, 0, 1, 1], [], []>} : vector<8x32xbf16>, vector<32x128xbf16>, vector<8x128xf32> -> vector<8x128xf32>
    %179 = vector.broadcast %4 : vector<1x128xf32> to vector<8x128xf32>
    %180 = arith.addf %178, %179 : vector<8x128xf32>
    %cst_85 = arith.constant 0.000000e+00 : f32
    %181 = vector.broadcast %cst_85 : f32 to vector<8x128xf32>
    %182 = arith.maximumf %180, %181 : vector<8x128xf32>
    %c0_86 = arith.constant 0 : index
    %c4_87 = arith.constant 4 : index
    %c0_88 = arith.constant 0 : index
    %183 = vector.load %arg3[%c0_86, %c4_87, %c0_88] : memref<8x8x1xf32, #tpu.memory_space<vmem>>, vector<8x1x1xf32>
    %184 = vector.shape_cast %183 : vector<8x1x1xf32> to vector<8x1xf32>
    %cst_89 = arith.constant 0.000000e+00 : f32
    %185 = vector.broadcast %cst_89 : f32 to vector<8x1xf32>
    %186 = arith.cmpf ogt, %184, %185 : vector<8x1xf32>
    %c0_90 = arith.constant 0 : index
    %c4_91 = arith.constant 4 : index
    %c0_92 = arith.constant 0 : index
    %187 = vector.load %arg4[%c0_90, %c4_91, %c0_92] : memref<8x8x1xi32, #tpu.memory_space<vmem>>, vector<8x1x1xi32>
    %188 = vector.shape_cast %187 : vector<8x1x1xi32> to vector<8x1xi32>
    %189 = vector.broadcast %188 : vector<8x1xi32> to vector<8x128xi32>
    %190 = arith.cmpi eq, %10, %189 : vector<8x128xi32>
    %cst_93 = arith.constant 0.000000e+00 : f32
    %191 = vector.broadcast %cst_93 : f32 to vector<8x128xf32>
    %192 = arith.select %190, %182, %191 : vector<8x128xi1>, vector<8x128xf32>
    %cst_94 = arith.constant dense<0.000000e+00> : vector<8xf32>
    %193 = vector.multi_reduction <add>, %192, %cst_94 [1] : vector<8x128xf32> to vector<8xf32>
    %194 = vector.shape_cast %193 : vector<8xf32> to vector<8x1xf32>
    %cst_95 = arith.constant 0.000000e+00 : f32
    %195 = vector.broadcast %cst_95 : f32 to vector<8x1xf32>
    %196 = arith.select %186, %194, %195 : vector<8x1xi1>, vector<8x1xf32>
    %197 = arith.addf %157, %196 : vector<8x1xf32>
    %cst_96 = arith.constant dense<0xFF800000> : vector<8xf32>
    %198 = vector.multi_reduction <maximumf>, %174, %cst_96 [1] : vector<8x128xf32> to vector<8xf32>
    %199 = vector.shape_cast %198 : vector<8xf32> to vector<8x1xf32>
    %200 = vector.broadcast %199 : vector<8x1xf32> to vector<8x128xf32>
    %201 = arith.subf %174, %200 : vector<8x128xf32>
    %202 = math.exp %201 : vector<8x128xf32>
    %203 = vector.broadcast %199 : vector<8x1xf32> to vector<8x128xf32>
    %204 = vector.broadcast %6 : vector<1x128xf32> to vector<8x128xf32>
    %205 = arith.addf %203, %204 : vector<8x128xf32>
    %cst_97 = arith.constant dense<0.000000e+00> : vector<8x128xf32>
    %206 = tpu.matmul %202, %5, %cst_97 {dimension_numbers = #tpu.dot_dimension_numbers<[1], [0], [0], [1], [0, 0, 1, 1], [], []>, precision = #tpu.contract_precision<fp32>} : vector<8x128xf32>, vector<128x128xf32>, vector<8x128xf32> -> vector<8x128xf32>
    %cst_98 = arith.constant 1.000000e-30 : f32
    %207 = vector.broadcast %cst_98 : f32 to vector<8x128xf32>
    %208 = arith.addf %206, %207 : vector<8x128xf32>
    %209 = math.log %208 : vector<8x128xf32>
    %210 = arith.addf %205, %209 : vector<8x128xf32>
    %211 = arith.addf %210, %182 : vector<8x128xf32>
    %212 = vector.shape_cast %186 : vector<8x1xi1> to vector<8x1xi1>
    %213 = vector.broadcast %212 : vector<8x1xi1> to vector<8x128xi1>
    %214 = arith.select %213, %211, %174 : vector<8x128xi1>, vector<8x128xf32>
    %c0_99 = arith.constant 0 : index
    %c5 = arith.constant 5 : index
    %c0_100 = arith.constant 0 : index
    %215 = vector.load %arg2[%c0_99, %c5, %c0_100] : memref<8x8x32xf32, #tpu.memory_space<vmem>>, vector<8x1x32xf32>
    %216 = vector.shape_cast %215 : vector<8x1x32xf32> to vector<8x32xf32>
    %217 = arith.truncf %216 : vector<8x32xf32> to vector<8x32xbf16>
    %cst_101 = arith.constant dense<0.000000e+00> : vector<8x128xf32>
    %218 = tpu.matmul %217, %3, %cst_101 {dimension_numbers = #tpu.dot_dimension_numbers<[1], [0], [0], [1], [0, 0, 1, 1], [], []>} : vector<8x32xbf16>, vector<32x128xbf16>, vector<8x128xf32> -> vector<8x128xf32>
    %219 = vector.broadcast %4 : vector<1x128xf32> to vector<8x128xf32>
    %220 = arith.addf %218, %219 : vector<8x128xf32>
    %cst_102 = arith.constant 0.000000e+00 : f32
    %221 = vector.broadcast %cst_102 : f32 to vector<8x128xf32>
    %222 = arith.maximumf %220, %221 : vector<8x128xf32>
    %c0_103 = arith.constant 0 : index
    %c5_104 = arith.constant 5 : index
    %c0_105 = arith.constant 0 : index
    %223 = vector.load %arg3[%c0_103, %c5_104, %c0_105] : memref<8x8x1xf32, #tpu.memory_space<vmem>>, vector<8x1x1xf32>
    %224 = vector.shape_cast %223 : vector<8x1x1xf32> to vector<8x1xf32>
    %cst_106 = arith.constant 0.000000e+00 : f32
    %225 = vector.broadcast %cst_106 : f32 to vector<8x1xf32>
    %226 = arith.cmpf ogt, %224, %225 : vector<8x1xf32>
    %c0_107 = arith.constant 0 : index
    %c5_108 = arith.constant 5 : index
    %c0_109 = arith.constant 0 : index
    %227 = vector.load %arg4[%c0_107, %c5_108, %c0_109] : memref<8x8x1xi32, #tpu.memory_space<vmem>>, vector<8x1x1xi32>
    %228 = vector.shape_cast %227 : vector<8x1x1xi32> to vector<8x1xi32>
    %229 = vector.broadcast %228 : vector<8x1xi32> to vector<8x128xi32>
    %230 = arith.cmpi eq, %10, %229 : vector<8x128xi32>
    %cst_110 = arith.constant 0.000000e+00 : f32
    %231 = vector.broadcast %cst_110 : f32 to vector<8x128xf32>
    %232 = arith.select %230, %222, %231 : vector<8x128xi1>, vector<8x128xf32>
    %cst_111 = arith.constant dense<0.000000e+00> : vector<8xf32>
    %233 = vector.multi_reduction <add>, %232, %cst_111 [1] : vector<8x128xf32> to vector<8xf32>
    %234 = vector.shape_cast %233 : vector<8xf32> to vector<8x1xf32>
    %cst_112 = arith.constant 0.000000e+00 : f32
    %235 = vector.broadcast %cst_112 : f32 to vector<8x1xf32>
    %236 = arith.select %226, %234, %235 : vector<8x1xi1>, vector<8x1xf32>
    %237 = arith.addf %197, %236 : vector<8x1xf32>
    %cst_113 = arith.constant dense<0xFF800000> : vector<8xf32>
    %238 = vector.multi_reduction <maximumf>, %214, %cst_113 [1] : vector<8x128xf32> to vector<8xf32>
    %239 = vector.shape_cast %238 : vector<8xf32> to vector<8x1xf32>
    %240 = vector.broadcast %239 : vector<8x1xf32> to vector<8x128xf32>
    %241 = arith.subf %214, %240 : vector<8x128xf32>
    %242 = math.exp %241 : vector<8x128xf32>
    %243 = vector.broadcast %239 : vector<8x1xf32> to vector<8x128xf32>
    %244 = vector.broadcast %6 : vector<1x128xf32> to vector<8x128xf32>
    %245 = arith.addf %243, %244 : vector<8x128xf32>
    %cst_114 = arith.constant dense<0.000000e+00> : vector<8x128xf32>
    %246 = tpu.matmul %242, %5, %cst_114 {dimension_numbers = #tpu.dot_dimension_numbers<[1], [0], [0], [1], [0, 0, 1, 1], [], []>, precision = #tpu.contract_precision<fp32>} : vector<8x128xf32>, vector<128x128xf32>, vector<8x128xf32> -> vector<8x128xf32>
    %cst_115 = arith.constant 1.000000e-30 : f32
    %247 = vector.broadcast %cst_115 : f32 to vector<8x128xf32>
    %248 = arith.addf %246, %247 : vector<8x128xf32>
    %249 = math.log %248 : vector<8x128xf32>
    %250 = arith.addf %245, %249 : vector<8x128xf32>
    %251 = arith.addf %250, %222 : vector<8x128xf32>
    %252 = vector.shape_cast %226 : vector<8x1xi1> to vector<8x1xi1>
    %253 = vector.broadcast %252 : vector<8x1xi1> to vector<8x128xi1>
    %254 = arith.select %253, %251, %214 : vector<8x128xi1>, vector<8x128xf32>
    %c0_116 = arith.constant 0 : index
    %c6 = arith.constant 6 : index
    %c0_117 = arith.constant 0 : index
    %255 = vector.load %arg2[%c0_116, %c6, %c0_117] : memref<8x8x32xf32, #tpu.memory_space<vmem>>, vector<8x1x32xf32>
    %256 = vector.shape_cast %255 : vector<8x1x32xf32> to vector<8x32xf32>
    %257 = arith.truncf %256 : vector<8x32xf32> to vector<8x32xbf16>
    %cst_118 = arith.constant dense<0.000000e+00> : vector<8x128xf32>
    %258 = tpu.matmul %257, %3, %cst_118 {dimension_numbers = #tpu.dot_dimension_numbers<[1], [0], [0], [1], [0, 0, 1, 1], [], []>} : vector<8x32xbf16>, vector<32x128xbf16>, vector<8x128xf32> -> vector<8x128xf32>
    %259 = vector.broadcast %4 : vector<1x128xf32> to vector<8x128xf32>
    %260 = arith.addf %258, %259 : vector<8x128xf32>
    %cst_119 = arith.constant 0.000000e+00 : f32
    %261 = vector.broadcast %cst_119 : f32 to vector<8x128xf32>
    %262 = arith.maximumf %260, %261 : vector<8x128xf32>
    %c0_120 = arith.constant 0 : index
    %c6_121 = arith.constant 6 : index
    %c0_122 = arith.constant 0 : index
    %263 = vector.load %arg3[%c0_120, %c6_121, %c0_122] : memref<8x8x1xf32, #tpu.memory_space<vmem>>, vector<8x1x1xf32>
    %264 = vector.shape_cast %263 : vector<8x1x1xf32> to vector<8x1xf32>
    %cst_123 = arith.constant 0.000000e+00 : f32
    %265 = vector.broadcast %cst_123 : f32 to vector<8x1xf32>
    %266 = arith.cmpf ogt, %264, %265 : vector<8x1xf32>
    %c0_124 = arith.constant 0 : index
    %c6_125 = arith.constant 6 : index
    %c0_126 = arith.constant 0 : index
    %267 = vector.load %arg4[%c0_124, %c6_125, %c0_126] : memref<8x8x1xi32, #tpu.memory_space<vmem>>, vector<8x1x1xi32>
    %268 = vector.shape_cast %267 : vector<8x1x1xi32> to vector<8x1xi32>
    %269 = vector.broadcast %268 : vector<8x1xi32> to vector<8x128xi32>
    %270 = arith.cmpi eq, %10, %269 : vector<8x128xi32>
    %cst_127 = arith.constant 0.000000e+00 : f32
    %271 = vector.broadcast %cst_127 : f32 to vector<8x128xf32>
    %272 = arith.select %270, %262, %271 : vector<8x128xi1>, vector<8x128xf32>
    %cst_128 = arith.constant dense<0.000000e+00> : vector<8xf32>
    %273 = vector.multi_reduction <add>, %272, %cst_128 [1] : vector<8x128xf32> to vector<8xf32>
    %274 = vector.shape_cast %273 : vector<8xf32> to vector<8x1xf32>
    %cst_129 = arith.constant 0.000000e+00 : f32
    %275 = vector.broadcast %cst_129 : f32 to vector<8x1xf32>
    %276 = arith.select %266, %274, %275 : vector<8x1xi1>, vector<8x1xf32>
    %277 = arith.addf %237, %276 : vector<8x1xf32>
    %cst_130 = arith.constant dense<0xFF800000> : vector<8xf32>
    %278 = vector.multi_reduction <maximumf>, %254, %cst_130 [1] : vector<8x128xf32> to vector<8xf32>
    %279 = vector.shape_cast %278 : vector<8xf32> to vector<8x1xf32>
    %280 = vector.broadcast %279 : vector<8x1xf32> to vector<8x128xf32>
    %281 = arith.subf %254, %280 : vector<8x128xf32>
    %282 = math.exp %281 : vector<8x128xf32>
    %283 = vector.broadcast %279 : vector<8x1xf32> to vector<8x128xf32>
    %284 = vector.broadcast %6 : vector<1x128xf32> to vector<8x128xf32>
    %285 = arith.addf %283, %284 : vector<8x128xf32>
    %cst_131 = arith.constant dense<0.000000e+00> : vector<8x128xf32>
    %286 = tpu.matmul %282, %5, %cst_131 {dimension_numbers = #tpu.dot_dimension_numbers<[1], [0], [0], [1], [0, 0, 1, 1], [], []>, precision = #tpu.contract_precision<fp32>} : vector<8x128xf32>, vector<128x128xf32>, vector<8x128xf32> -> vector<8x128xf32>
    %cst_132 = arith.constant 1.000000e-30 : f32
    %287 = vector.broadcast %cst_132 : f32 to vector<8x128xf32>
    %288 = arith.addf %286, %287 : vector<8x128xf32>
    %289 = math.log %288 : vector<8x128xf32>
    %290 = arith.addf %285, %289 : vector<8x128xf32>
    %291 = arith.addf %290, %262 : vector<8x128xf32>
    %292 = vector.shape_cast %266 : vector<8x1xi1> to vector<8x1xi1>
    %293 = vector.broadcast %292 : vector<8x1xi1> to vector<8x128xi1>
    %294 = arith.select %293, %291, %254 : vector<8x128xi1>, vector<8x128xf32>
    %c0_133 = arith.constant 0 : index
    %c7 = arith.constant 7 : index
    %c0_134 = arith.constant 0 : index
    %295 = vector.load %arg2[%c0_133, %c7, %c0_134] : memref<8x8x32xf32, #tpu.memory_space<vmem>>, vector<8x1x32xf32>
    %296 = vector.shape_cast %295 : vector<8x1x32xf32> to vector<8x32xf32>
    %297 = arith.truncf %296 : vector<8x32xf32> to vector<8x32xbf16>
    %cst_135 = arith.constant dense<0.000000e+00> : vector<8x128xf32>
    %298 = tpu.matmul %297, %3, %cst_135 {dimension_numbers = #tpu.dot_dimension_numbers<[1], [0], [0], [1], [0, 0, 1, 1], [], []>} : vector<8x32xbf16>, vector<32x128xbf16>, vector<8x128xf32> -> vector<8x128xf32>
    %299 = vector.broadcast %4 : vector<1x128xf32> to vector<8x128xf32>
    %300 = arith.addf %298, %299 : vector<8x128xf32>
    %cst_136 = arith.constant 0.000000e+00 : f32
    %301 = vector.broadcast %cst_136 : f32 to vector<8x128xf32>
    %302 = arith.maximumf %300, %301 : vector<8x128xf32>
    %c0_137 = arith.constant 0 : index
    %c7_138 = arith.constant 7 : index
    %c0_139 = arith.constant 0 : index
    %303 = vector.load %arg3[%c0_137, %c7_138, %c0_139] : memref<8x8x1xf32, #tpu.memory_space<vmem>>, vector<8x1x1xf32>
    %304 = vector.shape_cast %303 : vector<8x1x1xf32> to vector<8x1xf32>
    %cst_140 = arith.constant 0.000000e+00 : f32
    %305 = vector.broadcast %cst_140 : f32 to vector<8x1xf32>
    %306 = arith.cmpf ogt, %304, %305 : vector<8x1xf32>
    %c0_141 = arith.constant 0 : index
    %c7_142 = arith.constant 7 : index
    %c0_143 = arith.constant 0 : index
    %307 = vector.load %arg4[%c0_141, %c7_142, %c0_143] : memref<8x8x1xi32, #tpu.memory_space<vmem>>, vector<8x1x1xi32>
    %308 = vector.shape_cast %307 : vector<8x1x1xi32> to vector<8x1xi32>
    %309 = vector.broadcast %308 : vector<8x1xi32> to vector<8x128xi32>
    %310 = arith.cmpi eq, %10, %309 : vector<8x128xi32>
    %cst_144 = arith.constant 0.000000e+00 : f32
    %311 = vector.broadcast %cst_144 : f32 to vector<8x128xf32>
    %312 = arith.select %310, %302, %311 : vector<8x128xi1>, vector<8x128xf32>
    %cst_145 = arith.constant dense<0.000000e+00> : vector<8xf32>
    %313 = vector.multi_reduction <add>, %312, %cst_145 [1] : vector<8x128xf32> to vector<8xf32>
    %314 = vector.shape_cast %313 : vector<8xf32> to vector<8x1xf32>
    %cst_146 = arith.constant 0.000000e+00 : f32
    %315 = vector.broadcast %cst_146 : f32 to vector<8x1xf32>
    %316 = arith.select %306, %314, %315 : vector<8x1xi1>, vector<8x1xf32>
    %317 = arith.addf %277, %316 : vector<8x1xf32>
    %cst_147 = arith.constant dense<0xFF800000> : vector<8xf32>
    %318 = vector.multi_reduction <maximumf>, %294, %cst_147 [1] : vector<8x128xf32> to vector<8xf32>
    %319 = vector.shape_cast %318 : vector<8xf32> to vector<8x1xf32>
    %320 = vector.broadcast %319 : vector<8x1xf32> to vector<8x128xf32>
    %321 = arith.subf %294, %320 : vector<8x128xf32>
    %322 = math.exp %321 : vector<8x128xf32>
    %323 = vector.broadcast %319 : vector<8x1xf32> to vector<8x128xf32>
    %324 = vector.broadcast %6 : vector<1x128xf32> to vector<8x128xf32>
    %325 = arith.addf %323, %324 : vector<8x128xf32>
    %cst_148 = arith.constant dense<0.000000e+00> : vector<8x128xf32>
    %326 = tpu.matmul %322, %5, %cst_148 {dimension_numbers = #tpu.dot_dimension_numbers<[1], [0], [0], [1], [0, 0, 1, 1], [], []>, precision = #tpu.contract_precision<fp32>} : vector<8x128xf32>, vector<128x128xf32>, vector<8x128xf32> -> vector<8x128xf32>
    %cst_149 = arith.constant 1.000000e-30 : f32
    %327 = vector.broadcast %cst_149 : f32 to vector<8x128xf32>
    %328 = arith.addf %326, %327 : vector<8x128xf32>
    %329 = math.log %328 : vector<8x128xf32>
    %330 = arith.addf %325, %329 : vector<8x128xf32>
    %331 = arith.addf %330, %302 : vector<8x128xf32>
    %332 = vector.shape_cast %306 : vector<8x1xi1> to vector<8x1xi1>
    %333 = vector.broadcast %332 : vector<8x1xi1> to vector<8x128xi1>
    %334 = arith.select %333, %331, %294 : vector<8x128xi1>, vector<8x128xf32>
    %c0_150 = arith.constant 0 : index
    %c0_151 = arith.constant 0 : index
    %335 = vector.load %arg13[%c0_150, %c0_151] : memref<8x128xf32, #tpu.memory_space<vmem>>, vector<8x128xf32>
    tpu.vector_store %arg13[%c0_150, %c0_151], %334 {strides = array<i32>} : memref<8x128xf32, #tpu.memory_space<vmem>>, vector<8x128xf32>,
    %c0_152 = arith.constant 0 : index
    %c0_153 = arith.constant 0 : index
    %336 = vector.load %arg14[%c0_152, %c0_153] : memref<8x1xf32, #tpu.memory_space<vmem>>, vector<8x1xf32>
    tpu.vector_store %arg14[%c0_152, %c0_153], %317 {strides = array<i32>} : memref<8x1xf32, #tpu.memory_space<vmem>>, vector<8x1xf32>,
    %c0_i32_154 = arith.constant 0 : i32
    %337 = arith.cmpi eq, %arg1, %c0_i32_154 : i32
    %338 = arith.extui %337 : i1 to i32
    %c0_i32_155 = arith.constant 0 : i32
    %339 = arith.cmpi ne, %338, %c0_i32_155 : i32
    scf.if %339 {
      %c0_156 = arith.constant 0 : index
      %c0_157 = arith.constant 0 : index
      %340 = vector.load %arg10[%c0_156, %c0_157] : memref<1x128xf32, #tpu.memory_space<vmem>>, vector<1x128xf32>
      %341 = vector.broadcast %340 : vector<1x128xf32> to vector<8x128xf32>
      %342 = arith.addf %334, %341 : vector<8x128xf32>
      %cst_158 = arith.constant dense<0xFF800000> : vector<8xf32>
      %343 = vector.multi_reduction <maximumf>, %342, %cst_158 [1] : vector<8x128xf32> to vector<8xf32>
      %344 = vector.shape_cast %343 : vector<8xf32> to vector<8x1xf32>
      %345 = vector.broadcast %344 : vector<8x1xf32> to vector<8x128xf32>
      %346 = arith.subf %342, %345 : vector<8x128xf32>
      %347 = math.exp %346 : vector<8x128xf32>
      %cst_159 = arith.constant dense<0.000000e+00> : vector<8xf32>
      %348 = vector.multi_reduction <add>, %347, %cst_159 [1] : vector<8x128xf32> to vector<8xf32>
      %349 = vector.shape_cast %348 : vector<8xf32> to vector<8x1xf32>
      %350 = math.log %349 : vector<8x1xf32>
      %351 = arith.addf %344, %350 : vector<8x1xf32>
      %c0_160 = arith.constant 0 : index
      %c0_161 = arith.constant 0 : index
      %352 = vector.load %arg11[%c0_160, %c0_161] : memref<8x1xf32, #tpu.memory_space<vmem>>, vector<8x1xf32>
      tpu.vector_store %arg11[%c0_160, %c0_161], %351 {strides = array<i32>} : memref<8x1xf32, #tpu.memory_space<vmem>>, vector<8x1xf32>,
      %c0_162 = arith.constant 0 : index
      %c0_163 = arith.constant 0 : index
      %353 = vector.load %arg12[%c0_162, %c0_163] : memref<8x1xf32, #tpu.memory_space<vmem>>, vector<8x1xf32>
      tpu.vector_store %arg12[%c0_162, %c0_163], %317 {strides = array<i32>} : memref<8x1xf32, #tpu.memory_space<vmem>>, vector<8x1xf32>,
    } else {
    }
    return
  }
  func.func @transform_0(%arg0: i32, %arg1: i32) -> (i32, i32, i32) {
    %c0_i32 = arith.constant 0 : i32
    %c0_i32_0 = arith.constant 0 : i32
    return %arg0, %arg1, %c0_i32 : i32, i32, i32
  }
  func.func @transform_1(%arg0: i32, %arg1: i32) -> (i32, i32, i32) {
    %c0_i32 = arith.constant 0 : i32
    %c0_i32_0 = arith.constant 0 : i32
    return %arg0, %arg1, %c0_i32 : i32, i32, i32
  }
  func.func @transform_2(%arg0: i32, %arg1: i32) -> (i32, i32, i32) {
    %c0_i32 = arith.constant 0 : i32
    %c0_i32_0 = arith.constant 0 : i32
    return %arg0, %arg1, %c0_i32 : i32, i32, i32
  }
  func.func @transform_3(%arg0: i32, %arg1: i32) -> (i32, i32) {
    %c0_i32 = arith.constant 0 : i32
    %c0_i32_0 = arith.constant 0 : i32
    %c0_i32_1 = arith.constant 0 : i32
    return %c0_i32, %c0_i32_0 : i32, i32
  }
  func.func @transform_4(%arg0: i32, %arg1: i32) -> (i32, i32) {
    %c0_i32 = arith.constant 0 : i32
    %c0_i32_0 = arith.constant 0 : i32
    %c0_i32_1 = arith.constant 0 : i32
    return %c0_i32, %c0_i32_0 : i32, i32
  }
  func.func @transform_5(%arg0: i32, %arg1: i32) -> (i32, i32) {
    %c0_i32 = arith.constant 0 : i32
    %c0_i32_0 = arith.constant 0 : i32
    %c0_i32_1 = arith.constant 0 : i32
    return %c0_i32, %c0_i32_0 : i32, i32
  }
  func.func @transform_6(%arg0: i32, %arg1: i32) -> (i32, i32) {
    %c0_i32 = arith.constant 0 : i32
    %c0_i32_0 = arith.constant 0 : i32
    %c0_i32_1 = arith.constant 0 : i32
    return %c0_i32, %c0_i32_0 : i32, i32
  }
  func.func @transform_7(%arg0: i32, %arg1: i32) -> (i32, i32) {
    %c0_i32 = arith.constant 0 : i32
    %c0_i32_0 = arith.constant 0 : i32
    %c0_i32_1 = arith.constant 0 : i32
    return %c0_i32, %c0_i32_0 : i32, i32
  }
  func.func @transform_8(%arg0: i32, %arg1: i32) -> (i32, i32) {
    %c0_i32 = arith.constant 0 : i32
    %c0_i32_0 = arith.constant 0 : i32
    %c0_i32_1 = arith.constant 0 : i32
    return %c0_i32, %c0_i32_0 : i32, i32
  }
  func.func @transform_9(%arg0: i32, %arg1: i32) -> (i32, i32) {
    %c0_i32 = arith.constant 0 : i32
    %c0_i32_0 = arith.constant 0 : i32
    return %arg0, %c0_i32 : i32, i32
  }
  func.func @transform_10(%arg0: i32, %arg1: i32) -> (i32, i32) {
    %c0_i32 = arith.constant 0 : i32
    %c0_i32_0 = arith.constant 0 : i32
    return %arg0, %c0_i32 : i32, i32
  }
}

</mosaic_0001>

<llo_original>
// kernel: ner_head_forward.1
$region0: #{ner_head_forward.1}
  #allocation0 [shape = 'u32[]', space=smem, size = 0x4, offset = 0x4, fixed_abs, tag = 'smem constant byte address 0x4 - core index']
  #allocation1 [shape = 'u32[144,128]{1,0:T(1,128)}', space=vmem, size = 0x12000, scoped, tag = 'internal scratch']
  #allocation2 [shape = 'f32[8,128]{1,0:T(8,128)}', space=vmem, size = 0x1000, scoped, tag = 'scratch operand']
  #allocation3 [shape = 'f32[8,1]{1,0:T(8,128)}', space=vmem, size = 0x1000, scoped, tag = 'scratch operand']
  %s0 = inlined_call_operand.vmem [shape: f32[8,8,32], index: 0, kind: input, shape index: {}]
  %s1 = inlined_call_operand.vmem [shape: f32[8,8,1], index: 1, kind: input, shape index: {}]
  %s2 = inlined_call_operand.vmem [shape: s32[8,8,1], index: 2, kind: input, shape index: {}]
  %s3 = inlined_call_operand.vmem [shape: bf16[32,128], index: 3, kind: input, shape index: {}]
  %s4 = inlined_call_operand.vmem [shape: f32[1,128], index: 4, kind: input, shape index: {}]
  %s5 = inlined_call_operand.vmem [shape: f32[128,128], index: 5, kind: input, shape index: {}]
  %s6 = inlined_call_operand.vmem [shape: f32[1,128], index: 6, kind: input, shape index: {}]
  %s7 = inlined_call_operand.vmem [shape: f32[1,128], index: 7, kind: input, shape index: {}]
  %s8 = inlined_call_operand.vmem [shape: f32[1,128], index: 8, kind: input, shape index: {}]
  %s9 = inlined_call_operand.vmem [shape: f32[8,1], index: 9, kind: output, shape index: {0}]
  %s10 = inlined_call_operand.vmem [shape: f32[8,1], index: 10, kind: output, shape index: {1}]
  %11 = xla_tuple %s9, %s10
  %s12 = sld [smem:[#allocation0]]
  $region62: #{ner_head_forward.1} parent=0
    _
  %s14 = ssub.s32 1, %s12
  %s15 = scalar_select 0, %s14, %s12
  // Predicated region
  $region2: #{ner_head_forward.1} parent=0 // pred_check
    _
  $region3: #{ner_head_forward.1} parent=0 // pred_check_branch
    %17 = sbr.rel (0) target = $region5
  $region4: #{ner_head_forward.1} parent=0 // pred_region
    _
  $region5: #{ner_head_forward.1} parent=0 // pred_fallthru
    _
  // Predicated region
  $region6: #{ner_head_forward.1} parent=0 // pred_check
    _
  $region7: #{ner_head_forward.1} parent=0 // pred_check_branch
    %19 = sbr.rel (0) target = $region9
  $region8: #{ner_head_forward.1} parent=0 // pred_region
    _
  $region9: #{ner_head_forward.1} parent=0 // pred_fallthru
    _
  // Predicated region
  $region10: #{ner_head_forward.1} parent=0 // pred_check
    _
  $region11: #{ner_head_forward.1} parent=0 // pred_check_branch
    %21 = sbr.rel (0) target = $region13
  $region12: #{ner_head_forward.1} parent=0 // pred_region
    _
  $region13: #{ner_head_forward.1} parent=0 // pred_fallthru
    _
  // Predicated region
  $region14: #{ner_head_forward.1} parent=0 // pred_check
    _
  $region15: #{ner_head_forward.1} parent=0 // pred_check_branch
    %23 = sbr.rel (0) target = $region17
  $region16: #{ner_head_forward.1} parent=0 // pred_region
    _
  $region17: #{ner_head_forward.1} parent=0 // pred_fallthru
    _
  // Predicated region
  $region18: #{ner_head_forward.1} parent=0 // pred_check
    _
  $region19: #{ner_head_forward.1} parent=0 // pred_check_branch
    %25 = sbr.rel (0) target = $region21
  $region20: #{ner_head_forward.1} parent=0 // pred_region
    _
  $region21: #{ner_head_forward.1} parent=0 // pred_fallthru
    _
  // Predicated region
  $region22: #{ner_head_forward.1} parent=0 // pred_check
    _
  $region23: #{ner_head_forward.1} parent=0 // pred_check_branch
    %27 = sbr.rel (0) target = $region25
  $region24: #{ner_head_forward.1} parent=0 // pred_region
    _
  $region25: #{ner_head_forward.1} parent=0 // pred_fallthru
    _
  // Predicated region
  $region26: #{ner_head_forward.1} parent=0 // pred_check
    _
  $region27: #{ner_head_forward.1} parent=0 // pred_check_branch
    %29 = sbr.rel (0) target = $region29
  $region28: #{ner_head_forward.1} parent=0 // pred_region
    _
  $region29: #{ner_head_forward.1} parent=0 // pred_fallthru
    _
  // Predicated region
  $region30: #{ner_head_forward.1} parent=0 // pred_check
    _
  $region31: #{ner_head_forward.1} parent=0 // pred_check_branch
    %31 = sbr.rel (0) target = $region33
  $region32: #{ner_head_forward.1} parent=0 // pred_region
    _
  $region33: #{ner_head_forward.1} parent=0 // pred_fallthru
    _
  // Predicated region
  $region34: #{ner_head_forward.1} parent=0 // pred_check
    _
  $region35: #{ner_head_forward.1} parent=0 // pred_check_branch
    %33 = sbr.rel (0) target = $region37
  $region36: #{ner_head_forward.1} parent=0 // pred_region
    _
  $region37: #{ner_head_forward.1} parent=0 // pred_fallthru
    _
  %p35 = scmp.eq.s32.totalorder 0, 0
  // Predicated region
  $region38: #{ner_head_forward.1} parent=0 // pred_check
    %p36 = pneg %p35
  $region39: #{ner_head_forward.1} parent=0 // pred_check_branch
    %38 = sbr.rel (%p36) target = $region41
  $region40: #{ner_head_forward.1} parent=0 // pred_region
    %39 = vst [vmem:[#allocation2] sm:$0xff] 0.0
    %vm40 = vcmask 7168
    %41 = vst.msk [vmem:[#allocation3] sm:$0xff] %vm40, 0.0
  $region41: #{ner_head_forward.1} parent=0 // pred_fallthru
    _
  %v42 = vld [vmem:[%s3] sm:$0xf]
  %v43 = vld [vmem:[%s3 + $0x4] sm:$0xf]
  %v44 = vld [vmem:[%s3 + $0x8] sm:$0xf]
  %v45 = vld [vmem:[%s3 + $0xc] sm:$0xf]
  %v46 = vld [vmem:[%s4] sm:$0x1]
  %v47 = vld [vmem:[%s5] sm:$0xff]
  %v48 = vld [vmem:[%s5 + $0x8] sm:$0xff]
  %v49 = vld [vmem:[%s5 + $0x10] sm:$0xff]
  %v50 = vld [vmem:[%s5 + $0x18] sm:$0xff]
  %v51 = vld [vmem:[%s5 + $0x20] sm:$0xff]
  %v52 = vld [vmem:[%s5 + $0x28] sm:$0xff]
  %v53 = vld [vmem:[%s5 + $0x30] sm:$0xff]
  %v54 = vld [vmem:[%s5 + $0x38] sm:$0xff]
  %v55 = vld [vmem:[%s5 + $0x40] sm:$0xff]
  %v56 = vld [vmem:[%s5 + $0x48] sm:$0xff]
  %v57 = vld [vmem:[%s5 + $0x50] sm:$0xff]
  %v58 = vld [vmem:[%s5 + $0x58] sm:$0xff]
  %v59 = vld [vmem:[%s5 + $0x60] sm:$0xff]
  %v60 = vld [vmem:[%s5 + $0x68] sm:$0xff]
  %v61 = vld [vmem:[%s5 + $0x70] sm:$0xff]
  %v62 = vld [vmem:[%s5 + $0x78] sm:$0xff]
  %v63 = vld [vmem:[%s6] sm:$0x1]
  %v64 = vld [vmem:[%s7] sm:$0x1]
  %v65 = vld [vmem:[#allocation2] sm:$0xff]
  %v66 = vld [vmem:[#allocation3] sm:$0xff]
  %v67 = vlaneseq
  %v68 = vand.u32 %v67, 127
  %v69 = vld [vmem:[%s0] sm:$0x1]
  %v70 = vld [vmem:[%s0 + $0x8] sm:$0x1]
  %v71 = vld [vmem:[%s0 + $0x10] sm:$0x1]
  %v72 = vld [vmem:[%s0 + $0x18] sm:$0x1]
  %v73 = vld [vmem:[%s0 + $0x20] sm:$0x1]
  %v74 = vld [vmem:[%s0 + $0x28] sm:$0x1]
  %v75 = vld [vmem:[%s0 + $0x30] sm:$0x1]
  %v76 = vld [vmem:[%s0 + $0x38] sm:$0x1]
  %v77 = vpack.c.bf16 %v69, %v69
  %v78 = vpack.c.bf16 %v70, %v70
  %v79 = vpack.c.bf16 %v71, %v71
  %v80 = vpack.c.bf16 %v72, %v72
  %v81 = vpack.c.bf16 %v73, %v73
  %v82 = vpack.c.bf16 %v74, %v74
  %v83 = vpack.c.bf16 %v75, %v75
  %v84 = vpack.c.bf16 %v76, %v76
  %v86 = vlaneseq
  %v87 = vshrl.u32 %v86, 7
  %v88 = vsub.s32 0, %v87
  %v89 = vrot.slane %v46, %v88
  %v99 = vunpack.c.l.b16 %v77
  %v100 = vunpack.c.l.b16 %v78
  %v101 = vunpack.c.l.b16 %v79
  %v102 = vunpack.c.l.b16 %v80
  %v103 = vunpack.c.l.b16 %v81
  %v104 = vunpack.c.l.b16 %v82
  %v105 = vunpack.c.l.b16 %v83
  %v106 = vunpack.c.l.b16 %v84
  %v107 = vrot.slane %v100, 7
  %vm108 = vcmask 1041409
  %v109 = vsel %vm108, %v107, %v99
  %v110 = vrot.slane %v101, 6
  %vm111 = vcmask 1042434
  %v112 = vsel %vm111, %v110, %v109
  %v113 = vrot.slane %v102, 5
  %vm114 = vcmask 1043459
  %v115 = vsel %vm114, %v113, %v112
  %v116 = vrot.slane %v103, 4
  %vm117 = vcmask 1044484
  %v118 = vsel %vm117, %v116, %v115
  %v119 = vrot.slane %v104, 3
  %vm120 = vcmask 1045509
  %v121 = vsel %vm120, %v119, %v118
  %v122 = vrot.slane %v105, 2
  %vm123 = vcmask 1046534
  %v124 = vsel %vm123, %v122, %v121
  %v125 = vrot.slane %v106, 1
  %vm126 = vcmask 1047559
  %v127 = vsel %vm126, %v125, %v124
  %v128 = vpack.c.b16 %v127, %v127
  %v133 = vunpack.c.l.b16 %v42
  %v134 = vunpack.c.l.b16 %v43
  %v135 = vunpack.c.l.b16 %v44
  %v136 = vunpack.c.l.b16 %v45
  %v137 = vpack.c.b16 %v134, %v133
  %v138 = vpack.c.b16 %v136, %v135
  %vm141 = vcmask 261120
  %v143 = vsel %vm141, %v128, 0
  %145 = vmatprep.subr.bf16.mxu0 0
  %146 = vmatpush1.bf16.msra.mxu0 %v137
  %147 = vmatprep.subr.bf16.mxu0 0
  %148 = vmatpush1.bf16.msra.mxu0 %v138
  %149 = vmatprep.subr.bf16.mxu0 0
  %150 = vmatpush1.bf16.msra.mxu0 0
  %151 = vmatprep.subr.bf16.mxu0 0
  %152 = vmatpush1.bf16.msra.mxu0 0
  %153 = vmatprep.subr.bf16.mxu0 0
  %154 = vmatpush1.bf16.msra.mxu0 0
  %155 = vmatprep.subr.bf16.mxu0 0
  %156 = vmatpush1.bf16.msra.mxu0 0
  %157 = vmatprep.subr.bf16.mxu0 0
  %158 = vmatpush1.bf16.msra.mxu0 0
  %159 = vmatprep.subr.bf16.mxu0 0
  %160 = vmatpush1.bf16.msra.mxu0 0
  %161 = vmatprep.subr.bf16.mxu0 0
  %162 = vmatpush1.bf16.msra.mxu0 0
  %163 = vmatprep.subr.bf16.mxu0 0
  %164 = vmatpush1.bf16.msra.mxu0 0
  %165 = vmatprep.subr.bf16.mxu0 0
  %166 = vmatpush1.bf16.msra.mxu0 0
  %167 = vmatprep.subr.bf16.mxu0 0
  %168 = vmatpush1.bf16.msra.mxu0 0
  %169 = vmatprep.subr.bf16.mxu0 0
  %170 = vmatpush1.bf16.msra.mxu0 0
  %171 = vmatprep.subr.bf16.mxu0 0
  %172 = vmatpush1.bf16.msra.mxu0 0
  %173 = vmatprep.subr.bf16.mxu0 0
  %174 = vmatpush1.bf16.msra.mxu0 0
  %175 = vmatprep.subr.bf16.mxu0 0
  %176 = vmatpush1.bf16.msra.mxu0 0
  %177 = vmatprep.mubr.bf16.mxu0 0
  %178 = vmatmul.mubr.bf16.gmra.mrb[0].mxu0 %v143
  %v179 = vpop.f32.mrb[0].mxu0
  %v180 = vadd.f32 %v89, %v179
  %v181 = vpop.f32.mrb[0].mxu0
  %v182 = vpop.f32.mrb[0].mxu0
  %v183 = vpop.f32.mrb[0].mxu0
  %184 = vdwg.mxu0
  %v185 = vmax.f32 %v180, 0.0
  %v186 = vld [vmem:[%s1] sm:$0x1]
  %v187 = vld [vmem:[%s1 + $0x8] sm:$0x1]
  %v188 = vld [vmem:[%s1 + $0x10] sm:$0x1]
  %v189 = vld [vmem:[%s1 + $0x18] sm:$0x1]
  %v190 = vld [vmem:[%s1 + $0x20] sm:$0x1]
  %v191 = vld [vmem:[%s1 + $0x28] sm:$0x1]
  %v192 = vld [vmem:[%s1 + $0x30] sm:$0x1]
  %v193 = vld [vmem:[%s1 + $0x38] sm:$0x1]
  %vm194 = vcmp.gt.f32.partialorder %v186, 0.0
  %vm195 = vcmp.gt.f32.partialorder %v187, 0.0
  %vm196 = vcmp.gt.f32.partialorder %v188, 0.0
  %vm197 = vcmp.gt.f32.partialorder %v189, 0.0
  %vm198 = vcmp.gt.f32.partialorder %v190, 0.0
  %vm199 = vcmp.gt.f32.partialorder %v191, 0.0
  %vm200 = vcmp.gt.f32.partialorder %v192, 0.0
  %vm201 = vcmp.gt.f32.partialorder %v193, 0.0
  %v202 = vld [vmem:[%s2] sm:$0x1]
  %v203 = vld [vmem:[%s2 + $0x8] sm:$0x1]
  %v204 = vld [vmem:[%s2 + $0x10] sm:$0x1]
  %v205 = vld [vmem:[%s2 + $0x18] sm:$0x1]
  %v206 = vld [vmem:[%s2 + $0x20] sm:$0x1]
  %v207 = vld [vmem:[%s2 + $0x28] sm:$0x1]
  %v208 = vld [vmem:[%s2 + $0x30] sm:$0x1]
  %v209 = vld [vmem:[%s2 + $0x38] sm:$0x1]
  %210 = vset.pattern.permute.xlu0 0
  %211 = vperm.xlu0 %210, %v202
  %v212 = vpop.permute.xlu0 %211
  %213 = vset.pattern.permute.xlu0 0
  %214 = vperm.xlu0 %213, %v203
  %v215 = vpop.permute.xlu0 %214
  %216 = vset.pattern.permute.xlu0 0
  %217 = vperm.xlu0 %216, %v204
  %v218 = vpop.permute.xlu0 %217
  %219 = vset.pattern.permute.xlu0 0
  %220 = vperm.xlu0 %219, %v205
  %v221 = vpop.permute.xlu0 %220
  %222 = vset.pattern.permute.xlu0 0
  %223 = vperm.xlu0 %222, %v206
  %v224 = vpop.permute.xlu0 %223
  %225 = vset.pattern.permute.xlu0 0
  %226 = vperm.xlu0 %225, %v207
  %v227 = vpop.permute.xlu0 %226
  %228 = vset.pattern.permute.xlu0 0
  %229 = vperm.xlu0 %228, %v208
  %v230 = vpop.permute.xlu0 %229
  %231 = vset.pattern.permute.xlu0 0
  %232 = vperm.xlu0 %231, %v209
  %v233 = vpop.permute.xlu0 %232
  %v234 = vrot.slane %v215, 7
  %v235 = vsel %vm108, %v234, %v212
  %v236 = vrot.slane %v218, 6
  %v237 = vsel %vm111, %v236, %v235
  %v238 = vrot.slane %v221, 5
  %v239 = vsel %vm114, %v238, %v237
  %v240 = vrot.slane %v224, 4
  %v241 = vsel %vm117, %v240, %v239
  %v242 = vrot.slane %v227, 3
  %v243 = vsel %vm120, %v242, %v241
  %v244 = vrot.slane %v230, 2
  %v245 = vsel %vm123, %v244, %v243
  %v246 = vrot.slane %v233, 1
  %v247 = vsel %vm126, %v246, %v245
  %vm248 = vcmp.eq.s32.totalorder %v68, %v247
  %v249 = vsel %vm248, %v185, 0.0
  %250 = vadd.xlane.f32.xlu0 %v249
  %v251 = vpop.xlane.xlu0 %250
  %v253 = vrot.slane %v251, 1
  %v254 = vrot.slane %v251, 2
  %v255 = vrot.slane %v251, 3
  %v256 = vrot.slane %v251, 4
  %v257 = vrot.slane %v251, 5
  %v258 = vrot.slane %v251, 6
  %v259 = vrot.slane %v251, 7
  %v268 = vsel %vm194, %v251, 0.0
  %v269 = vsel %vm195, %v253, 0.0
  %v270 = vsel %vm196, %v254, 0.0
  %v271 = vsel %vm197, %v255, 0.0
  %v272 = vsel %vm198, %v256, 0.0
  %v273 = vsel %vm199, %v257, 0.0
  %v274 = vsel %vm200, %v258, 0.0
  %v275 = vsel %vm201, %v259, 0.0
  %s276 = scalar_select %p35, 1, 0
  %v277 = vstv %s276
  %vm278 = vcmp.eq.s32.totalorder %v277, 1
  %v287 = vrot.slane %v269, 7
  %v288 = vsel %vm108, %v287, %v268
  %v289 = vrot.slane %v270, 6
  %v290 = vsel %vm111, %v289, %v288
  %v291 = vrot.slane %v271, 5
  %v292 = vsel %vm114, %v291, %v290
  %v293 = vrot.slane %v272, 4
  %v294 = vsel %vm117, %v293, %v292
  %v295 = vrot.slane %v273, 3
  %v296 = vsel %vm120, %v295, %v294
  %v297 = vrot.slane %v274, 2
  %v298 = vsel %vm123, %v297, %v296
  %v299 = vrot.slane %v275, 1
  %v300 = vsel %vm126, %v299, %v298
  %v302 = vsel %vm278, %v251, %v300
  %v303 = vadd.f32 %v66, %v302
  %304 = vmax.xlane.f32.xlu0 %v65
  %v305 = vpop.xlane.xlu0 %304
  %v306 = vsub.f32 %v65, %v305
  %v307 = vmul.f32 %v306, 1.442695
  %v308 = vpow.pop %v307
  %v310 = vlaneseq
  %v311 = vshrl.u32 %v310, 7
  %v312 = vsub.s32 0, %v311
  %v313 = vrot.slane %v63, %v312
  %v315 = vadd.f32 %v305, %v313
  %316 = vmatprep.subr.mxu0 0.0
  %v317 = vand.u32 %v47, 4294901760
  %318 = vmatpush1.msra.mxu0 %v317
  %319 = vmatprep.subr.mxu0 0.0
  %v320 = vand.u32 %v48, 4294901760
  %321 = vmatpush1.msra.mxu0 %v320
  %322 = vmatprep.subr.mxu0 0.0
  %v323 = vand.u32 %v49, 4294901760
  %324 = vmatpush1.msra.mxu0 %v323
  %325 = vmatprep.subr.mxu0 0.0
  %v326 = vand.u32 %v50, 4294901760
  %327 = vmatpush1.msra.mxu0 %v326
  %328 = vmatprep.subr.mxu0 0.0
  %v329 = vand.u32 %v51, 4294901760
  %330 = vmatpush1.msra.mxu0 %v329
  %331 = vmatprep.subr.mxu0 0.0
  %v332 = vand.u32 %v52, 4294901760
  %333 = vmatpush1.msra.mxu0 %v332
  %334 = vmatprep.subr.mxu0 0.0
  %v335 = vand.u32 %v53, 4294901760
  %336 = vmatpush1.msra.mxu0 %v335
  %337 = vmatprep.subr.mxu0 0.0
  %v338 = vand.u32 %v54, 4294901760
  %339 = vmatpush1.msra.mxu0 %v338
  %340 = vmatprep.subr.mxu0 0.0
  %v341 = vand.u32 %v55, 4294901760
  %342 = vmatpush1.msra.mxu0 %v341
  %343 = vmatprep.subr.mxu0 0.0
  %v344 = vand.u32 %v56, 4294901760
  %345 = vmatpush1.msra.mxu0 %v344
  %346 = vmatprep.subr.mxu0 0.0
  %v347 = vand.u32 %v57, 4294901760
  %348 = vmatpush1.msra.mxu0 %v347
  %349 = vmatprep.subr.mxu0 0.0
  %v350 = vand.u32 %v58, 4294901760
  %351 = vmatpush1.msra.mxu0 %v350
  %352 = vmatprep.subr.mxu0 0.0
  %v353 = vand.u32 %v59, 4294901760
  %354 = vmatpush1.msra.mxu0 %v353
  %355 = vmatprep.subr.mxu0 0.0
  %v356 = vand.u32 %v60, 4294901760
  %357 = vmatpush1.msra.mxu0 %v356
  %358 = vmatprep.subr.mxu0 0.0
  %v359 = vand.u32 %v61, 4294901760
  %360 = vmatpush1.msra.mxu0 %v359
  %361 = vmatprep.subr.mxu0 0.0
  %v362 = vand.u32 %v62, 4294901760
  %363 = vmatpush1.msra.mxu0 %v362
  %364 = vmatprep.subr.mxu0 0.0
  %365 = vmatpush1.msra.mxu0 0.0
  %366 = vmatprep.subr.mxu0 0.0
  %367 = vmatpush1.msra.mxu0 0.0
  %368 = vmatprep.subr.mxu0 0.0
  %369 = vmatpush1.msra.mxu0 0.0
  %370 = vmatprep.subr.mxu0 0.0
  %371 = vmatpush1.msra.mxu0 0.0
  %372 = vmatprep.subr.mxu0 0.0
  %373 = vmatpush1.msra.mxu0 0.0
  %374 = vmatprep.subr.mxu0 0.0
  %375 = vmatpush1.msra.mxu0 0.0
  %376 = vmatprep.subr.mxu0 0.0
  %377 = vmatpush1.msra.mxu0 0.0
  %378 = vmatprep.subr.mxu0 0.0
  %379 = vmatpush1.msra.mxu0 0.0
  %380 = vmatprep.subr.mxu0 0.0
  %381 = vmatpush1.msra.mxu0 0.0
  %382 = vmatprep.subr.mxu0 0.0
  %383 = vmatpush1.msra.mxu0 0.0
  %384 = vmatprep.subr.mxu0 0.0
  %385 = vmatpush1.msra.mxu0 0.0
  %386 = vmatprep.subr.mxu0 0.0
  %387 = vmatpush1.msra.mxu0 0.0
  %388 = vmatprep.subr.mxu0 0.0
  %389 = vmatpush1.msra.mxu0 0.0
  %390 = vmatprep.subr.mxu0 0.0
  %391 = vmatpush1.msra.mxu0 0.0
  %392 = vmatprep.subr.mxu0 0.0
  %393 = vmatpush1.msra.mxu0 0.0
  %394 = vmatprep.subr.mxu0 0.0
  %395 = vmatpush1.msra.mxu0 0.0
  %396 = vmatprep.mubr.f32.mxu0 0.0
  %v397 = vand.u32 %v308, 4294901760
  %v398 = vsub.f32 %v308, %v397
  %v399 = vand.u32 %v398, 4294901760
  %v400 = vsub.f32 %v398, %v399
  %v401 = vand.u32 %v400, 4294901760
  %402 = vmatmul.mubr.f32.gmra.mrb[0].mxu0 %v401
  %v403 = vpop.f32.mrb[0].mxu0
  %v404 = vadd.f32 1e-30, %v403
  %v405 = vpop.f32.mrb[0].mxu0
  %406 = vdwg.mxu0
  %407 = vmatprep.subr.mxu0 0.0
  %v408 = vand.u32 %v47, 4294901760
  %v409 = vsub.f32 %v47, %v408
  %v410 = vand.u32 %v409, 4294901760
  %v411 = vsub.f32 %v409, %v410
  %v412 = vand.u32 %v411, 4294901760
  %413 = vmatpush1.msra.mxu0 %v412
  %414 = vmatprep.subr.mxu0 0.0
  %v415 = vand.u32 %v48, 4294901760
  %v416 = vsub.f32 %v48, %v415
  %v417 = vand.u32 %v416, 4294901760
  %v418 = vsub.f32 %v416, %v417
  %v419 = vand.u32 %v418, 4294901760
  %420 = vmatpush1.msra.mxu0 %v419
  %421 = vmatprep.subr.mxu0 0.0
  %v422 = vand.u32 %v49, 4294901760
  %v423 = vsub.f32 %v49, %v422
  %v424 = vand.u32 %v423, 4294901760
  %v425 = vsub.f32 %v423, %v424
  %v426 = vand.u32 %v425, 4294901760
  %427 = vmatpush1.msra.mxu0 %v426
  %428 = vmatprep.subr.mxu0 0.0
  %v429 = vand.u32 %v50, 4294901760
  %v430 = vsub.f32 %v50, %v429
  %v431 = vand.u32 %v430, 4294901760
  %v432 = vsub.f32 %v430, %v431
  %v433 = vand.u32 %v432, 4294901760
  %434 = vmatpush1.msra.mxu0 %v433
  %435 = vmatprep.subr.mxu0 0.0
  %v436 = vand.u32 %v51, 4294901760
  %v437 = vsub.f32 %v51, %v436
  %v438 = vand.u32 %v437, 4294901760
  %v439 = vsub.f32 %v437, %v438
  %v440 = vand.u32 %v439, 4294901760
  %441 = vmatpush1.msra.mxu0 %v440
  %442 = vmatprep.subr.mxu0 0.0
  %v443 = vand.u32 %v52, 4294901760
  %v444 = vsub.f32 %v52, %v443
  %v445 = vand.u32 %v444, 4294901760
  %v446 = vsub.f32 %v444, %v445
  %v447 = vand.u32 %v446, 4294901760
  %448 = vmatpush1.msra.mxu0 %v447
  %449 = vmatprep.subr.mxu0 0.0
  %v450 = vand.u32 %v53, 4294901760
  %v451 = vsub.f32 %v53, %v450
  %v452 = vand.u32 %v451, 4294901760
  %v453 = vsub.f32 %v451, %v452
  %v454 = vand.u32 %v453, 4294901760
  %455 = vmatpush1.msra.mxu0 %v454
  %456 = vmatprep.subr.mxu0 0.0
  %v457 = vand.u32 %v54, 4294901760
  %v458 = vsub.f32 %v54, %v457
  %v459 = vand.u32 %v458, 4294901760
  %v460 = vsub.f32 %v458, %v459
  %v461 = vand.u32 %v460, 4294901760
  %462 = vmatpush1.msra.mxu0 %v461
  %463 = vmatprep.subr.mxu0 0.0
  %v464 = vand.u32 %v55, 4294901760
  %v465 = vsub.f32 %v55, %v464
  %v466 = vand.u32 %v465, 4294901760
  %v467 = vsub.f32 %v465, %v466
  %v468 = vand.u32 %v467, 4294901760
  %469 = vmatpush1.msra.mxu0 %v468
  %470 = vmatprep.subr.mxu0 0.0
  %v471 = vand.u32 %v56, 4294901760
  %v472 = vsub.f32 %v56, %v471
  %v473 = vand.u32 %v472, 4294901760
  %v474 = vsub.f32 %v472, %v473
  %v475 = vand.u32 %v474, 4294901760
  %476 = vmatpush1.msra.mxu0 %v475
  %477 = vmatprep.subr.mxu0 0.0
  %v478 = vand.u32 %v57, 4294901760
  %v479 = vsub.f32 %v57, %v478
  %v480 = vand.u32 %v479, 4294901760
  %v481 = vsub.f32 %v479, %v480
  %v482 = vand.u32 %v481, 4294901760
  %483 = vmatpush1.msra.mxu0 %v482
  %484 = vmatprep.subr.mxu0 0.0
  %v485 = vand.u32 %v58, 4294901760
  %v486 = vsub.f32 %v58, %v485
  %v487 = vand.u32 %v486, 4294901760
  %v488 = vsub.f32 %v486, %v487
  %v489 = vand.u32 %v488, 4294901760
  %490 = vmatpush1.msra.mxu0 %v489
  %491 = vmatprep.subr.mxu0 0.0
  %v492 = vand.u32 %v59, 4294901760
  %v493 = vsub.f32 %v59, %v492
  %v494 = vand.u32 %v493, 4294901760
  %v495 = vsub.f32 %v493, %v494
  %v496 = vand.u32 %v495, 4294901760
  %497 = vmatpush1.msra.mxu0 %v496
  %498 = vmatprep.subr.mxu0 0.0
  %v499 = vand.u32 %v60, 4294901760
  %v500 = vsub.f32 %v60, %v499
  %v501 = vand.u32 %v500, 4294901760
  %v502 = vsub.f32 %v500, %v501
  %v503 = vand.u32 %v502, 4294901760
  %504 = vmatpush1.msra.mxu0 %v503
  %505 = vmatprep.subr.mxu0 0.0
  %v506 = vand.u32 %v61, 4294901760
  %v507 = vsub.f32 %v61, %v506
  %v508 = vand.u32 %v507, 4294901760
  %v509 = vsub.f32 %v507, %v508
  %v510 = vand.u32 %v509, 4294901760
  %511 = vmatpush1.msra.mxu0 %v510
  %512 = vmatprep.subr.mxu0 0.0
  %v513 = vand.u32 %v62, 4294901760
  %v514 = vsub.f32 %v62, %v513
  %v515 = vand.u32 %v514, 4294901760
  %v516 = vsub.f32 %v514, %v515
  %v517 = vand.u32 %v516, 4294901760
  %518 = vmatpush1.msra.mxu0 %v517
  %519 = vmatprep.subr.mxu0 0.0
  %520 = vmatpush1.msra.mxu0 0.0
  %521 = vmatprep.subr.mxu0 0.0
  %522 = vmatpush1.msra.mxu0 0.0
  %523 = vmatprep.subr.mxu0 0.0
  %524 = vmatpush1.msra.mxu0 0.0
  %525 = vmatprep.subr.mxu0 0.0
  %526 = vmatpush1.msra.mxu0 0.0
  %527 = vmatprep.subr.mxu0 0.0
  %528 = vmatpush1.msra.mxu0 0.0
  %529 = vmatprep.subr.mxu0 0.0
  %530 = vmatpush1.msra.mxu0 0.0
  %531 = vmatprep.subr.mxu0 0.0
  %532 = vmatpush1.msra.mxu0 0.0
  %533 = vmatprep.subr.mxu0 0.0
  %534 = vmatpush1.msra.mxu0 0.0
  %535 = vmatprep.subr.mxu0 0.0
  %536 = vmatpush1.msra.mxu0 0.0
  %537 = vmatprep.subr.mxu0 0.0
  %538 = vmatpush1.msra.mxu0 0.0
  %539 = vmatprep.subr.mxu0 0.0
  %540 = vmatpush1.msra.mxu0 0.0
  %541 = vmatprep.subr.mxu0 0.0
  %542 = vmatpush1.msra.mxu0 0.0
  %543 = vmatprep.subr.mxu0 0.0
  %544 = vmatpush1.msra.mxu0 0.0
  %545 = vmatprep.subr.mxu0 0.0
  %546 = vmatpush1.msra.mxu0 0.0
  %547 = vmatprep.subr.mxu0 0.0
  %548 = vmatpush1.msra.mxu0 0.0
  %549 = vmatprep.subr.mxu0 0.0
  %550 = vmatpush1.msra.mxu0 0.0
  %551 = vmatprep.mubr.f32.mxu0 0.0
  %v552 = vand.u32 %v308, 4294901760
  %553 = vmatmul.mubr.f32.gmra.mrb[0].mxu0 %v552
  %v554 = vpop.f32.mrb[0].mxu0
  %v555 = vadd.f32 %v404, %v554
  %v556 = vpop.f32.mrb[0].mxu0
  %557 = vdwg.mxu0
  %558 = vmatprep.subr.mxu0 0.0
  %v559 = vand.u32 %v47, 4294901760
  %v560 = vsub.f32 %v47, %v559
  %561 = vmatpush1.msra.mxu0 %v560
  %562 = vmatprep.subr.mxu0 0.0
  %v563 = vand.u32 %v48, 4294901760
  %v564 = vsub.f32 %v48, %v563
  %565 = vmatpush1.msra.mxu0 %v564
  %566 = vmatprep.subr.mxu0 0.0
  %v567 = vand.u32 %v49, 4294901760
  %v568 = vsub.f32 %v49, %v567
  %569 = vmatpush1.msra.mxu0 %v568
  %570 = vmatprep.subr.mxu0 0.0
  %v571 = vand.u32 %v50, 4294901760
  %v572 = vsub.f32 %v50, %v571
  %573 = vmatpush1.msra.mxu0 %v572
  %574 = vmatprep.subr.mxu0 0.0
  %v575 = vand.u32 %v51, 4294901760
  %v576 = vsub.f32 %v51, %v575
  %577 = vmatpush1.msra.mxu0 %v576
  %578 = vmatprep.subr.mxu0 0.0
  %v579 = vand.u32 %v52, 4294901760
  %v580 = vsub.f32 %v52, %v579
  %581 = vmatpush1.msra.mxu0 %v580
  %582 = vmatprep.subr.mxu0 0.0
  %v583 = vand.u32 %v53, 4294901760
  %v584 = vsub.f32 %v53, %v583
  %585 = vmatpush1.msra.mxu0 %v584
  %586 = vmatprep.subr.mxu0 0.0
  %v587 = vand.u32 %v54, 4294901760
  %v588 = vsub.f32 %v54, %v587
  %589 = vmatpush1.msra.mxu0 %v588
  %590 = vmatprep.subr.mxu0 0.0
  %v591 = vand.u32 %v55, 4294901760
  %v592 = vsub.f32 %v55, %v591
  %593 = vmatpush1.msra.mxu0 %v592
  %594 = vmatprep.subr.mxu0 0.0
  %v595 = vand.u32 %v56, 4294901760
  %v596 = vsub.f32 %v56, %v595
  %597 = vmatpush1.msra.mxu0 %v596
  %598 = vmatprep.subr.mxu0 0.0
  %v599 = vand.u32 %v57, 4294901760
  %v600 = vsub.f32 %v57, %v599
  %601 = vmatpush1.msra.mxu0 %v600
  %602 = vmatprep.subr.mxu0 0.0
  %v603 = vand.u32 %v58, 4294901760
  %v604 = vsub.f32 %v58, %v603
  %605 = vmatpush1.msra.mxu0 %v604
  %606 = vmatprep.subr.mxu0 0.0
  %v607 = vand.u32 %v59, 4294901760
  %v608 = vsub.f32 %v59, %v607
  %609 = vmatpush1.msra.mxu0 %v608
  %610 = vmatprep.subr.mxu0 0.0
  %v611 = vand.u32 %v60, 4294901760
  %v612 = vsub.f32 %v60, %v611
  %613 = vmatpush1.msra.mxu0 %v612
  %614 = vmatprep.subr.mxu0 0.0
  %v615 = vand.u32 %v61, 4294901760
  %v616 = vsub.f32 %v61, %v615
  %617 = vmatpush1.msra.mxu0 %v616
  %618 = vmatprep.subr.mxu0 0.0
  %v619 = vand.u32 %v62, 4294901760
  %v620 = vsub.f32 %v62, %v619
  %621 = vmatpush1.msra.mxu0 %v620
  %622 = vmatprep.subr.mxu0 0.0
  %623 = vmatpush1.msra.mxu0 0.0
  %624 = vmatprep.subr.mxu0 0.0
  %625 = vmatpush1.msra.mxu0 0.0
  %626 = vmatprep.subr.mxu0 0.0
  %627 = vmatpush1.msra.mxu0 0.0
  %628 = vmatprep.subr.mxu0 0.0
  %629 = vmatpush1.msra.mxu0 0.0
  %630 = vmatprep.subr.mxu0 0.0
  %631 = vmatpush1.msra.mxu0 0.0
  %632 = vmatprep.subr.mxu0 0.0
  %633 = vmatpush1.msra.mxu0 0.0
  %634 = vmatprep.subr.mxu0 0.0
  %635 = vmatpush1.msra.mxu0 0.0
  %636 = vmatprep.subr.mxu0 0.0
  %637 = vmatpush1.msra.mxu0 0.0
  %638 = vmatprep.subr.mxu0 0.0
  %639 = vmatpush1.msra.mxu0 0.0
  %640 = vmatprep.subr.mxu0 0.0
  %641 = vmatpush1.msra.mxu0 0.0
  %642 = vmatprep.subr.mxu0 0.0
  %643 = vmatpush1.msra.mxu0 0.0
  %644 = vmatprep.subr.mxu0 0.0
  %645 = vmatpush1.msra.mxu0 0.0
  %646 = vmatprep.subr.mxu0 0.0
  %647 = vmatpush1.msra.mxu0 0.0
  %648 = vmatprep.subr.mxu0 0.0
  %649 = vmatpush1.msra.mxu0 0.0
  %650 = vmatprep.subr.mxu0 0.0
  %651 = vmatpush1.msra.mxu0 0.0
  %652 = vmatprep.subr.mxu0 0.0
  %653 = vmatpush1.msra.mxu0 0.0
  %654 = vmatprep.mubr.f32.mxu0 0.0
  %v655 = vand.u32 %v308, 4294901760
  %v656 = vsub.f32 %v308, %v655
  %657 = vmatmul.mubr.f32.gmra.mrb[0].mxu0 %v656
  %v658 = vpop.f32.mrb[0].mxu0
  %v659 = vadd.f32 %v555, %v658
  %v660 = vpop.f32.mrb[0].mxu0
  %661 = vdwg.mxu0
  %662 = vmatprep.subr.mxu0 0.0
  %v663 = vand.u32 %v47, 4294901760
  %664 = vmatpush1.msra.mxu0 %v663
  %665 = vmatprep.subr.mxu0 0.0
  %v666 = vand.u32 %v48, 4294901760
  %667 = vmatpush1.msra.mxu0 %v666
  %668 = vmatprep.subr.mxu0 0.0
  %v669 = vand.u32 %v49, 4294901760
  %670 = vmatpush1.msra.mxu0 %v669
  %671 = vmatprep.subr.mxu0 0.0
  %v672 = vand.u32 %v50, 4294901760
  %673 = vmatpush1.msra.mxu0 %v672
  %674 = vmatprep.subr.mxu0 0.0
  %v675 = vand.u32 %v51, 4294901760
  %676 = vmatpush1.msra.mxu0 %v675
  %677 = vmatprep.subr.mxu0 0.0
  %v678 = vand.u32 %v52, 4294901760
  %679 = vmatpush1.msra.mxu0 %v678
  %680 = vmatprep.subr.mxu0 0.0
  %v681 = vand.u32 %v53, 4294901760
  %682 = vmatpush1.msra.mxu0 %v681
  %683 = vmatprep.subr.mxu0 0.0
  %v684 = vand.u32 %v54, 4294901760
  %685 = vmatpush1.msra.mxu0 %v684
  %686 = vmatprep.subr.mxu0 0.0
  %v687 = vand.u32 %v55, 4294901760
  %688 = vmatpush1.msra.mxu0 %v687
  %689 = vmatprep.subr.mxu0 0.0
  %v690 = vand.u32 %v56, 4294901760
  %691 = vmatpush1.msra.mxu0 %v690
  %692 = vmatprep.subr.mxu0 0.0
  %v693 = vand.u32 %v57, 4294901760
  %694 = vmatpush1.msra.mxu0 %v693
  %695 = vmatprep.subr.mxu0 0.0
  %v696 = vand.u32 %v58, 4294901760
  %697 = vmatpush1.msra.mxu0 %v696
  %698 = vmatprep.subr.mxu0 0.0
  %v699 = vand.u32 %v59, 4294901760
  %700 = vmatpush1.msra.mxu0 %v699
  %701 = vmatprep.subr.mxu0 0.0
  %v702 = vand.u32 %v60, 4294901760
  %703 = vmatpush1.msra.mxu0 %v702
  %704 = vmatprep.subr.mxu0 0.0
  %v705 = vand.u32 %v61, 4294901760
  %706 = vmatpush1.msra.mxu0 %v705
  %707 = vmatprep.subr.mxu0 0.0
  %v708 = vand.u32 %v62, 4294901760
  %709 = vmatpush1.msra.mxu0 %v708
  %710 = vmatprep.subr.mxu0 0.0
  %711 = vmatpush1.msra.mxu0 0.0
  %712 = vmatprep.subr.mxu0 0.0
  %713 = vmatpush1.msra.mxu0 0.0
  %714 = vmatprep.subr.mxu0 0.0
  %715 = vmatpush1.msra.mxu0 0.0
  %716 = vmatprep.subr.mxu0 0.0
  %717 = vmatpush1.msra.mxu0 0.0
  %718 = vmatprep.subr.mxu0 0.0
  %719 = vmatpush1.msra.mxu0 0.0
  %720 = vmatprep.subr.mxu0 0.0
  %721 = vmatpush1.msra.mxu0 0.0
  %722 = vmatprep.subr.mxu0 0.0
  %723 = vmatpush1.msra.mxu0 0.0
  %724 = vmatprep.subr.mxu0 0.0
  %725 = vmatpush1.msra.mxu0 0.0
  %726 = vmatprep.subr.mxu0 0.0
  %727 = vmatpush1.msra.mxu0 0.0
  %728 = vmatprep.subr.mxu0 0.0
  %729 = vmatpush1.msra.mxu0 0.0
  %730 = vmatprep.subr.mxu0 0.0
  %731 = vmatpush1.msra.mxu0 0.0
  %732 = vmatprep.subr.mxu0 0.0
  %733 = vmatpush1.msra.mxu0 0.0
  %734 = vmatprep.subr.mxu0 0.0
  %735 = vmatpush1.msra.mxu0 0.0
  %736 = vmatprep.subr.mxu0 0.0
  %737 = vmatpush1.msra.mxu0 0.0
  %738 = vmatprep.subr.mxu0 0.0
  %739 = vmatpush1.msra.mxu0 0.0
  %740 = vmatprep.subr.mxu0 0.0
  %741 = vmatpush1.msra.mxu0 0.0
  %742 = vmatprep.mubr.f32.mxu0 0.0
  %v743 = vand.u32 %v308, 4294901760
  %v744 = vsub.f32 %v308, %v743
  %v745 = vand.u32 %v744, 4294901760
  %746 = vmatmul.mubr.f32.gmra.mrb[0].mxu0 %v745
  %v747 = vpop.f32.mrb[0].mxu0
  %v748 = vadd.f32 %v659, %v747
  %v749 = vpop.f32.mrb[0].mxu0
  %750 = vdwg.mxu0
  %751 = vmatprep.subr.mxu0 0.0
  %v752 = vand.u32 %v47, 4294901760
  %v753 = vsub.f32 %v47, %v752
  %v754 = vand.u32 %v753, 4294901760
  %755 = vmatpush1.msra.mxu0 %v754
  %756 = vmatprep.subr.mxu0 0.0
  %v757 = vand.u32 %v48, 4294901760
  %v758 = vsub.f32 %v48, %v757
  %v759 = vand.u32 %v758, 4294901760
  %760 = vmatpush1.msra.mxu0 %v759
  %761 = vmatprep.subr.mxu0 0.0
  %v762 = vand.u32 %v49, 4294901760
  %v763 = vsub.f32 %v49, %v762
  %v764 = vand.u32 %v763, 4294901760
  %765 = vmatpush1.msra.mxu0 %v764
  %766 = vmatprep.subr.mxu0 0.0
  %v767 = vand.u32 %v50, 4294901760
  %v768 = vsub.f32 %v50, %v767
  %v769 = vand.u32 %v768, 4294901760
  %770 = vmatpush1.msra.mxu0 %v769
  %771 = vmatprep.subr.mxu0 0.0
  %v772 = vand.u32 %v51, 4294901760
  %v773 = vsub.f32 %v51, %v772
  %v774 = vand.u32 %v773, 4294901760
  %775 = vmatpush1.msra.mxu0 %v774
  %776 = vmatprep.subr.mxu0 0.0
  %v777 = vand.u32 %v52, 4294901760
  %v778 = vsub.f32 %v52, %v777
  %v779 = vand.u32 %v778, 4294901760
  %780 = vmatpush1.msra.mxu0 %v779
  %781 = vmatprep.subr.mxu0 0.0
  %v782 = vand.u32 %v53, 4294901760
  %v783 = vsub.f32 %v53, %v782
  %v784 = vand.u32 %v783, 4294901760
  %785 = vmatpush1.msra.mxu0 %v784
  %786 = vmatprep.subr.mxu0 0.0
  %v787 = vand.u32 %v54, 4294901760
  %v788 = vsub.f32 %v54, %v787
  %v789 = vand.u32 %v788, 4294901760
  %790 = vmatpush1.msra.mxu0 %v789
  %791 = vmatprep.subr.mxu0 0.0
  %v792 = vand.u32 %v55, 4294901760
  %v793 = vsub.f32 %v55, %v792
  %v794 = vand.u32 %v793, 4294901760
  %795 = vmatpush1.msra.mxu0 %v794
  %796 = vmatprep.subr.mxu0 0.0
  %v797 = vand.u32 %v56, 4294901760
  %v798 = vsub.f32 %v56, %v797
  %v799 = vand.u32 %v798, 4294901760
  %800 = vmatpush1.msra.mxu0 %v799
  %801 = vmatprep.subr.mxu0 0.0
  %v802 = vand.u32 %v57, 4294901760
  %v803 = vsub.f32 %v57, %v802
  %v804 = vand.u32 %v803, 4294901760
  %805 = vmatpush1.msra.mxu0 %v804
  %806 = vmatprep.subr.mxu0 0.0
  %v807 = vand.u32 %v58, 4294901760
  %v808 = vsub.f32 %v58, %v807
  %v809 = vand.u32 %v808, 4294901760
  %810 = vmatpush1.msra.mxu0 %v809
  %811 = vmatprep.subr.mxu0 0.0
  %v812 = vand.u32 %v59, 4294901760
  %v813 = vsub.f32 %v59, %v812
  %v814 = vand.u32 %v813, 4294901760
  %815 = vmatpush1.msra.mxu0 %v814
  %816 = vmatprep.subr.mxu0 0.0
  %v817 = vand.u32 %v60, 4294901760
  %v818 = vsub.f32 %v60, %v817
  %v819 = vand.u32 %v818, 4294901760
  %820 = vmatpush1.msra.mxu0 %v819
  %821 = vmatprep.subr.mxu0 0.0
  %v822 = vand.u32 %v61, 4294901760
  %v823 = vsub.f32 %v61, %v822
  %v824 = vand.u32 %v823, 4294901760
  %825 = vmatpush1.msra.mxu0 %v824
  %826 = vmatprep.subr.mxu0 0.0
  %v827 = vand.u32 %v62, 4294901760
  %v828 = vsub.f32 %v62, %v827
  %v829 = vand.u32 %v828, 4294901760
  %830 = vmatpush1.msra.mxu0 %v829
  %831 = vmatprep.subr.mxu0 0.0
  %832 = vmatpush1.msra.mxu0 0.0
  %833 = vmatprep.subr.mxu0 0.0
  %834 = vmatpush1.msra.mxu0 0.0
  %835 = vmatprep.subr.mxu0 0.0
  %836 = vmatpush1.msra.mxu0 0.0
  %837 = vmatprep.subr.mxu0 0.0
  %838 = vmatpush1.msra.mxu0 0.0
  %839 = vmatprep.subr.mxu0 0.0
  %840 = vmatpush1.msra.mxu0 0.0
  %841 = vmatprep.subr.mxu0 0.0
  %842 = vmatpush1.msra.mxu0 0.0
  %843 = vmatprep.subr.mxu0 0.0
  %844 = vmatpush1.msra.mxu0 0.0
  %845 = vmatprep.subr.mxu0 0.0
  %846 = vmatpush1.msra.mxu0 0.0
  %847 = vmatprep.subr.mxu0 0.0
  %848 = vmatpush1.msra.mxu0 0.0
  %849 = vmatprep.subr.mxu0 0.0
  %850 = vmatpush1.msra.mxu0 0.0
  %851 = vmatprep.subr.mxu0 0.0
  %852 = vmatpush1.msra.mxu0 0.0
  %853 = vmatprep.subr.mxu0 0.0
  %854 = vmatpush1.msra.mxu0 0.0
  %855 = vmatprep.subr.mxu0 0.0
  %856 = vmatpush1.msra.mxu0 0.0
  %857 = vmatprep.subr.mxu0 0.0
  %858 = vmatpush1.msra.mxu0 0.0
  %859 = vmatprep.subr.mxu0 0.0
  %860 = vmatpush1.msra.mxu0 0.0
  %861 = vmatprep.subr.mxu0 0.0
  %862 = vmatpush1.msra.mxu0 0.0
  %863 = vmatprep.mubr.f32.mxu0 0.0
  %v864 = vand.u32 %v308, 4294901760
  %865 = vmatmul.mubr.f32.gmra.mrb[0].mxu0 %v864
  %v866 = vpop.f32.mrb[0].mxu0
  %v867 = vadd.f32 %v748, %v866
  %v868 = vpop.f32.mrb[0].mxu0
  %869 = vdwg.mxu0
  %870 = vmatprep.subr.mxu0 0.0
  %v871 = vand.u32 %v47, 4294901760
  %872 = vmatpush1.msra.mxu0 %v871
  %873 = vmatprep.subr.mxu0 0.0
  %v874 = vand.u32 %v48, 4294901760
  %875 = vmatpush1.msra.mxu0 %v874
  %876 = vmatprep.subr.mxu0 0.0
  %v877 = vand.u32 %v49, 4294901760
  %878 = vmatpush1.msra.mxu0 %v877
  %879 = vmatprep.subr.mxu0 0.0
  %v880 = vand.u32 %v50, 4294901760
  %881 = vmatpush1.msra.mxu0 %v880
  %882 = vmatprep.subr.mxu0 0.0
  %v883 = vand.u32 %v51, 4294901760
  %884 = vmatpush1.msra.mxu0 %v883
  %885 = vmatprep.subr.mxu0 0.0
  %v886 = vand.u32 %v52, 4294901760
  %887 = vmatpush1.msra.mxu0 %v886
  %888 = vmatprep.subr.mxu0 0.0
  %v889 = vand.u32 %v53, 4294901760
  %890 = vmatpush1.msra.mxu0 %v889
  %891 = vmatprep.subr.mxu0 0.0
  %v892 = vand.u32 %v54, 4294901760
  %893 = vmatpush1.msra.mxu0 %v892
  %894 = vmatprep.subr.mxu0 0.0
  %v895 = vand.u32 %v55, 4294901760
  %896 = vmatpush1.msra.mxu0 %v895
  %897 = vmatprep.subr.mxu0 0.0
  %v898 = vand.u32 %v56, 4294901760
  %899 = vmatpush1.msra.mxu0 %v898
  %900 = vmatprep.subr.mxu0 0.0
  %v901 = vand.u32 %v57, 4294901760
  %902 = vmatpush1.msra.mxu0 %v901
  %903 = vmatprep.subr.mxu0 0.0
  %v904 = vand.u32 %v58, 4294901760
  %905 = vmatpush1.msra.mxu0 %v904
  %906 = vmatprep.subr.mxu0 0.0
  %v907 = vand.u32 %v59, 4294901760
  %908 = vmatpush1.msra.mxu0 %v907
  %909 = vmatprep.subr.mxu0 0.0
  %v910 = vand.u32 %v60, 4294901760
  %911 = vmatpush1.msra.mxu0 %v910
  %912 = vmatprep.subr.mxu0 0.0
  %v913 = vand.u32 %v61, 4294901760
  %914 = vmatpush1.msra.mxu0 %v913
  %915 = vmatprep.subr.mxu0 0.0
  %v916 = vand.u32 %v62, 4294901760
  %917 = vmatpush1.msra.mxu0 %v916
  %918 = vmatprep.subr.mxu0 0.0
  %919 = vmatpush1.msra.mxu0 0.0
  %920 = vmatprep.subr.mxu0 0.0
  %921 = vmatpush1.msra.mxu0 0.0
  %922 = vmatprep.subr.mxu0 0.0
  %923 = vmatpush1.msra.mxu0 0.0
  %924 = vmatprep.subr.mxu0 0.0
  %925 = vmatpush1.msra.mxu0 0.0
  %926 = vmatprep.subr.mxu0 0.0
  %927 = vmatpush1.msra.mxu0 0.0
  %928 = vmatprep.subr.mxu0 0.0
  %929 = vmatpush1.msra.mxu0 0.0
  %930 = vmatprep.subr.mxu0 0.0
  %931 = vmatpush1.msra.mxu0 0.0
  %932 = vmatprep.subr.mxu0 0.0
  %933 = vmatpush1.msra.mxu0 0.0
  %934 = vmatprep.subr.mxu0 0.0
  %935 = vmatpush1.msra.mxu0 0.0
  %936 = vmatprep.subr.mxu0 0.0
  %937 = vmatpush1.msra.mxu0 0.0
  %938 = vmatprep.subr.mxu0 0.0
  %939 = vmatpush1.msra.mxu0 0.0
  %940 = vmatprep.subr.mxu0 0.0
  %941 = vmatpush1.msra.mxu0 0.0
  %942 = vmatprep.subr.mxu0 0.0
  %943 = vmatpush1.msra.mxu0 0.0
  %944 = vmatprep.subr.mxu0 0.0
  %945 = vmatpush1.msra.mxu0 0.0
  %946 = vmatprep.subr.mxu0 0.0
  %947 = vmatpush1.msra.mxu0 0.0
  %948 = vmatprep.subr.mxu0 0.0
  %949 = vmatpush1.msra.mxu0 0.0
  %950 = vmatprep.mubr.f32.mxu0 0.0
  %v951 = vand.u32 %v308, 4294901760
  %952 = vmatmul.mubr.f32.gmra.mrb[0].mxu0 %v951
  %v953 = vpop.f32.mrb[0].mxu0
  %v954 = vadd.f32 %v867, %v953
  %v955 = vpop.f32.mrb[0].mxu0
  %956 = vdwg.mxu0
  %v957 = vlog2.pop %v954
  %v958 = vmul.f32 %v957, 0.6931472
  %v959 = vadd.f32 %v315, %v958
  %v960 = vadd.f32 %v959, %v185
  %v961 = vsel %vm194, 1, 0
  %v962 = vsel %vm195, 1, 0
  %v963 = vsel %vm196, 1, 0
  %v964 = vsel %vm197, 1, 0
  %v965 = vsel %vm198, 1, 0
  %v966 = vsel %vm199, 1, 0
  %v967 = vsel %vm200, 1, 0
  %v968 = vsel %vm201, 1, 0
  %969 = vset.pattern.permute.xlu0 0
  %970 = vperm.xlu0 %969, %v961
  %v971 = vpop.permute.xlu0 %970
  %972 = vset.pattern.permute.xlu0 0
  %973 = vperm.xlu0 %972, %v962
  %v974 = vpop.permute.xlu0 %973
  %975 = vset.pattern.permute.xlu0 0
  %976 = vperm.xlu0 %975, %v963
  %v977 = vpop.permute.xlu0 %976
  %978 = vset.pattern.permute.xlu0 0
  %979 = vperm.xlu0 %978, %v964
  %v980 = vpop.permute.xlu0 %979
  %981 = vset.pattern.permute.xlu0 0
  %982 = vperm.xlu0 %981, %v965
  %v983 = vpop.permute.xlu0 %982
  %984 = vset.pattern.permute.xlu0 0
  %985 = vperm.xlu0 %984, %v966
  %v986 = vpop.permute.xlu0 %985
  %987 = vset.pattern.permute.xlu0 0
  %988 = vperm.xlu0 %987, %v967
  %v989 = vpop.permute.xlu0 %988
  %990 = vset.pattern.permute.xlu0 0
  %991 = vperm.xlu0 %990, %v968
  %v992 = vpop.permute.xlu0 %991
  %vm993 = vcmp.eq.s32.totalorder %v971, 1
  %vm994 = vcmp.eq.s32.totalorder %v974, 1
  %vm995 = vcmp.eq.s32.totalorder %v977, 1
  %vm996 = vcmp.eq.s32.totalorder %v980, 1
  %vm997 = vcmp.eq.s32.totalorder %v983, 1
  %vm998 = vcmp.eq.s32.totalorder %v986, 1
  %vm999 = vcmp.eq.s32.totalorder %v989, 1
  %vm1000 = vcmp.eq.s32.totalorder %v992, 1
  %v1002 = vrot.slane %v960, 1
  %v1003 = vrot.slane %v960, 2
  %v1004 = vrot.slane %v960, 3
  %v1005 = vrot.slane %v960, 4
  %v1006 = vrot.slane %v960, 5
  %v1007 = vrot.slane %v960, 6
  %v1008 = vrot.slane %v960, 7
  %v1018 = vrot.slane %v65, 1
  %v1019 = vrot.slane %v65, 2
  %v1020 = vrot.slane %v65, 3
  %v1021 = vrot.slane %v65, 4
  %v1022 = vrot.slane %v65, 5
  %v1023 = vrot.slane %v65, 6
  %v1024 = vrot.slane %v65, 7
  %v1033 = vsel %vm993, %v960, %v65
  %v1034 = vsel %vm994, %v1002, %v1018
  %v1035 = vsel %vm995, %v1003, %v1019
  %v1036 = vsel %vm996, %v1004, %v1020
  %v1037 = vsel %vm997, %v1005, %v1021
  %v1038 = vsel %vm998, %v1006, %v1022
  %v1039 = vsel %vm999, %v1007, %v1023
  %v1040 = vsel %vm1000, %v1008, %v1024
  %v1042 = vlaneseq
  %v1043 = vshrl.u32 %v1042, 7
  %v1044 = vsub.s32 0, %v1043
  %v1045 = vrot.slane %v64, %v1044
  %v1047 = vadd.f32 %v1045, %v185
  %v1056 = vrot.slane %v1034, 7
  %v1057 = vsel %vm108, %v1056, %v1033
  %v1058 = vrot.slane %v1035, 6
  %v1059 = vsel %vm111, %v1058, %v1057
  %v1060 = vrot.slane %v1036, 5
  %v1061 = vsel %vm114, %v1060, %v1059
  %v1062 = vrot.slane %v1037, 4
  %v1063 = vsel %vm117, %v1062, %v1061
  %v1064 = vrot.slane %v1038, 3
  %v1065 = vsel %vm120, %v1064, %v1063
  %v1066 = vrot.slane %v1039, 2
  %v1067 = vsel %vm123, %v1066, %v1065
  %v1068 = vrot.slane %v1040, 1
  %v1069 = vsel %vm126, %v1068, %v1067
  %v1071 = vsel %vm278, %v1047, %v1069
  %v1072 = vld [vmem:[%s0 + $0x1] sm:$0x1]
  %v1073 = vld [vmem:[%s0 + $0x9] sm:$0x1]
  %v1074 = vld [vmem:[%s0 + $0x11] sm:$0x1]
  %v1075 = vld [vmem:[%s0 + $0x19] sm:$0x1]
  %v1076 = vld [vmem:[%s0 + $0x21] sm:$0x1]
  %v1077 = vld [vmem:[%s0 + $0x29] sm:$0x1]
  %v1078 = vld [vmem:[%s0 + $0x31] sm:$0x1]
  %v1079 = vld [vmem:[%s0 + $0x39] sm:$0x1]
  %v1080 = vpack.c.bf16 %v1072, %v1072
  %v1081 = vpack.c.bf16 %v1073, %v1073
  %v1082 = vpack.c.bf16 %v1074, %v1074
  %v1083 = vpack.c.bf16 %v1075, %v1075
  %v1084 = vpack.c.bf16 %v1076, %v1076
  %v1085 = vpack.c.bf16 %v1077, %v1077
  %v1086 = vpack.c.bf16 %v1078, %v1078
  %v1087 = vpack.c.bf16 %v1079, %v1079
  %v1096 = vunpack.c.l.b16 %v1080
  %v1097 = vunpack.c.l.b16 %v1081
  %v1098 = vunpack.c.l.b16 %v1082
  %v1099 = vunpack.c.l.b16 %v1083
  %v1100 = vunpack.c.l.b16 %v1084
  %v1101 = vunpack.c.l.b16 %v1085
  %v1102 = vunpack.c.l.b16 %v1086
  %v1103 = vunpack.c.l.b16 %v1087
  %v1104 = vrot.slane %v1097, 7
  %v1105 = vsel %vm108, %v1104, %v1096
  %v1106 = vrot.slane %v1098, 6
  %v1107 = vsel %vm111, %v1106, %v1105
  %v1108 = vrot.slane %v1099, 5
  %v1109 = vsel %vm114, %v1108, %v1107
  %v1110 = vrot.slane %v1100, 4
  %v1111 = vsel %vm117, %v1110, %v1109
  %v1112 = vrot.slane %v1101, 3
  %v1113 = vsel %vm120, %v1112, %v1111
  %v1114 = vrot.slane %v1102, 2
  %v1115 = vsel %vm123, %v1114, %v1113
  %v1116 = vrot.slane %v1103, 1
  %v1117 = vsel %vm126, %v1116, %v1115
  %v1118 = vpack.c.b16 %v1117, %v1117
  %v1120 = vsel %vm141, %v1118, 0
  %1122 = vmatprep.subr.bf16.mxu0 0
  %1123 = vmatpush1.bf16.msra.mxu0 %v137
  %1124 = vmatprep.subr.bf16.mxu0 0
  %1125 = vmatpush1.bf16.msra.mxu0 %v138
  %1126 = vmatprep.subr.bf16.mxu0 0
  %1127 = vmatpush1.bf16.msra.mxu0 0
  %1128 = vmatprep.subr.bf16.mxu0 0
  %1129 = vmatpush1.bf16.msra.mxu0 0
  %1130 = vmatprep.subr.bf16.mxu0 0
  %1131 = vmatpush1.bf16.msra.mxu0 0
  %1132 = vmatprep.subr.bf16.mxu0 0
  %1133 = vmatpush1.bf16.msra.mxu0 0
  %1134 = vmatprep.subr.bf16.mxu0 0
  %1135 = vmatpush1.bf16.msra.mxu0 0
  %1136 = vmatprep.subr.bf16.mxu0 0
  %1137 = vmatpush1.bf16.msra.mxu0 0
  %1138 = vmatprep.subr.bf16.mxu0 0
  %1139 = vmatpush1.bf16.msra.mxu0 0
  %1140 = vmatprep.subr.bf16.mxu0 0
  %1141 = vmatpush1.bf16.msra.mxu0 0
  %1142 = vmatprep.subr.bf16.mxu0 0
  %1143 = vmatpush1.bf16.msra.mxu0 0
  %1144 = vmatprep.subr.bf16.mxu0 0
  %1145 = vmatpush1.bf16.msra.mxu0 0
  %1146 = vmatprep.subr.bf16.mxu0 0
  %1147 = vmatpush1.bf16.msra.mxu0 0
  %1148 = vmatprep.subr.bf16.mxu0 0
  %1149 = vmatpush1.bf16.msra.mxu0 0
  %1150 = vmatprep.subr.bf16.mxu0 0
  %1151 = vmatpush1.bf16.msra.mxu0 0
  %1152 = vmatprep.subr.bf16.mxu0 0
  %1153 = vmatpush1.bf16.msra.mxu0 0
  %1154 = vmatprep.mubr.bf16.mxu0 0
  %1155 = vmatmul.mubr.bf16.gmra.mrb[0].mxu0 %v1120
  %v1156 = vpop.f32.mrb[0].mxu0
  %v1157 = vadd.f32 %v89, %v1156
  %v1158 = vpop.f32.mrb[0].mxu0
  %v1159 = vpop.f32.mrb[0].mxu0
  %v1160 = vpop.f32.mrb[0].mxu0
  %1161 = vdwg.mxu0
  %v1162 = vmax.f32 %v1157, 0.0
  %v1163 = vld [vmem:[%s1 + $0x1] sm:$0x1]
  %v1164 = vld [vmem:[%s1 + $0x9] sm:$0x1]
  %v1165 = vld [vmem:[%s1 + $0x11] sm:$0x1]
  %v1166 = vld [vmem:[%s1 + $0x19] sm:$0x1]
  %v1167 = vld [vmem:[%s1 + $0x21] sm:$0x1]
  %v1168 = vld [vmem:[%s1 + $0x29] sm:$0x1]
  %v1169 = vld [vmem:[%s1 + $0x31] sm:$0x1]
  %v1170 = vld [vmem:[%s1 + $0x39] sm:$0x1]
  %vm1171 = vcmp.gt.f32.partialorder %v1163, 0.0
  %vm1172 = vcmp.gt.f32.partialorder %v1164, 0.0
  %vm1173 = vcmp.gt.f32.partialorder %v1165, 0.0
  %vm1174 = vcmp.gt.f32.partialorder %v1166, 0.0
  %vm1175 = vcmp.gt.f32.partialorder %v1167, 0.0
  %vm1176 = vcmp.gt.f32.partialorder %v1168, 0.0
  %vm1177 = vcmp.gt.f32.partialorder %v1169, 0.0
  %vm1178 = vcmp.gt.f32.partialorder %v1170, 0.0
  %v1179 = vld [vmem:[%s2 + $0x1] sm:$0x1]
  %v1180 = vld [vmem:[%s2 + $0x9] sm:$0x1]
  %v1181 = vld [vmem:[%s2 + $0x11] sm:$0x1]
  %v1182 = vld [vmem:[%s2 + $0x19] sm:$0x1]
  %v1183 = vld [vmem:[%s2 + $0x21] sm:$0x1]
  %v1184 = vld [vmem:[%s2 + $0x29] sm:$0x1]
  %v1185 = vld [vmem:[%s2 + $0x31] sm:$0x1]
  %v1186 = vld [vmem:[%s2 + $0x39] sm:$0x1]
  %1187 = vset.pattern.permute.xlu0 0
  %1188 = vperm.xlu0 %1187, %v1179
  %v1189 = vpop.permute.xlu0 %1188
  %1190 = vset.pattern.permute.xlu0 0
  %1191 = vperm.xlu0 %1190, %v1180
  %v1192 = vpop.permute.xlu0 %1191
  %1193 = vset.pattern.permute.xlu0 0
  %1194 = vperm.xlu0 %1193, %v1181
  %v1195 = vpop.permute.xlu0 %1194
  %1196 = vset.pattern.permute.xlu0 0
  %1197 = vperm.xlu0 %1196, %v1182
  %v1198 = vpop.permute.xlu0 %1197
  %1199 = vset.pattern.permute.xlu0 0
  %1200 = vperm.xlu0 %1199, %v1183
  %v1201 = vpop.permute.xlu0 %1200
  %1202 = vset.pattern.permute.xlu0 0
  %1203 = vperm.xlu0 %1202, %v1184
  %v1204 = vpop.permute.xlu0 %1203
  %1205 = vset.pattern.permute.xlu0 0
  %1206 = vperm.xlu0 %1205, %v1185
  %v1207 = vpop.permute.xlu0 %1206
  %1208 = vset.pattern.permute.xlu0 0
  %1209 = vperm.xlu0 %1208, %v1186
  %v1210 = vpop.permute.xlu0 %1209
  %v1211 = vrot.slane %v1192, 7
  %v1212 = vsel %vm108, %v1211, %v1189
  %v1213 = vrot.slane %v1195, 6
  %v1214 = vsel %vm111, %v1213, %v1212
  %v1215 = vrot.slane %v1198, 5
  %v1216 = vsel %vm114, %v1215, %v1214
  %v1217 = vrot.slane %v1201, 4
  %v1218 = vsel %vm117, %v1217, %v1216
  %v1219 = vrot.slane %v1204, 3
  %v1220 = vsel %vm120, %v1219, %v1218
  %v1221 = vrot.slane %v1207, 2
  %v1222 = vsel %vm123, %v1221, %v1220
  %v1223 = vrot.slane %v1210, 1
  %v1224 = vsel %vm126, %v1223, %v1222
  %vm1225 = vcmp.eq.s32.totalorder %v68, %v1224
  %v1226 = vsel %vm1225, %v1162, 0.0
  %1227 = vadd.xlane.f32.xlu0 %v1226
  %v1228 = vpop.xlane.xlu0 %1227
  %v1230 = vrot.slane %v1228, 1
  %v1231 = vrot.slane %v1228, 2
  %v1232 = vrot.slane %v1228, 3
  %v1233 = vrot.slane %v1228, 4
  %v1234 = vrot.slane %v1228, 5
  %v1235 = vrot.slane %v1228, 6
  %v1236 = vrot.slane %v1228, 7
  %v1245 = vsel %vm1171, %v1228, 0.0
  %v1246 = vsel %vm1172, %v1230, 0.0
  %v1247 = vsel %vm1173, %v1231, 0.0
  %v1248 = vsel %vm1174, %v1232, 0.0
  %v1249 = vsel %vm1175, %v1233, 0.0
  %v1250 = vsel %vm1176, %v1234, 0.0
  %v1251 = vsel %vm1177, %v1235, 0.0
  %v1252 = vsel %vm1178, %v1236, 0.0
  %v1261 = vrot.slane %v1246, 7
  %v1262 = vsel %vm108, %v1261, %v1245
  %v1263 = vrot.slane %v1247, 6
  %v1264 = vsel %vm111, %v1263, %v1262
  %v1265 = vrot.slane %v1248, 5
  %v1266 = vsel %vm114, %v1265, %v1264
  %v1267 = vrot.slane %v1249, 4
  %v1268 = vsel %vm117, %v1267, %v1266
  %v1269 = vrot.slane %v1250, 3
  %v1270 = vsel %vm120, %v1269, %v1268
  %v1271 = vrot.slane %v1251, 2
  %v1272 = vsel %vm123, %v1271, %v1270
  %v1273 = vrot.slane %v1252, 1
  %v1274 = vsel %vm126, %v1273, %v1272
  %v1276 = vadd.f32 %v303, %v1274
  %1277 = vmax.xlane.f32.xlu0 %v1071
  %v1278 = vpop.xlane.xlu0 %1277
  %v1279 = vsub.f32 %v1071, %v1278
  %v1280 = vmul.f32 %v1279, 1.442695
  %v1281 = vpow.pop %v1280
  %v1282 = vadd.f32 %v1278, %v313
  %1283 = vmatprep.subr.mxu0 0.0
  %v1284 = vand.u32 %v47, 4294901760
  %1285 = vmatpush1.msra.mxu0 %v1284
  %1286 = vmatprep.subr.mxu0 0.0
  %v1287 = vand.u32 %v48, 4294901760
  %1288 = vmatpush1.msra.mxu0 %v1287
  %1289 = vmatprep.subr.mxu0 0.0
  %v1290 = vand.u32 %v49, 4294901760
  %1291 = vmatpush1.msra.mxu0 %v1290
  %1292 = vmatprep.subr.mxu0 0.0
  %v1293 = vand.u32 %v50, 4294901760
  %1294 = vmatpush1.msra.mxu0 %v1293
  %1295 = vmatprep.subr.mxu0 0.0
  %v1296 = vand.u32 %v51, 4294901760
  %1297 = vmatpush1.msra.mxu0 %v1296
  %1298 = vmatprep.subr.mxu0 0.0
  %v1299 = vand.u32 %v52, 4294901760
  %1300 = vmatpush1.msra.mxu0 %v1299
  %1301 = vmatprep.subr.mxu0 0.0
  %v1302 = vand.u32 %v53, 4294901760
  %1303 = vmatpush1.msra.mxu0 %v1302
  %1304 = vmatprep.subr.mxu0 0.0
  %v1305 = vand.u32 %v54, 4294901760
  %1306 = vmatpush1.msra.mxu0 %v1305
  %1307 = vmatprep.subr.mxu0 0.0
  %v1308 = vand.u32 %v55, 4294901760
  %1309 = vmatpush1.msra.mxu0 %v1308
  %1310 = vmatprep.subr.mxu0 0.0
  %v1311 = vand.u32 %v56, 4294901760
  %1312 = vmatpush1.msra.mxu0 %v1311
  %1313 = vmatprep.subr.mxu0 0.0
  %v1314 = vand.u32 %v57, 4294901760
  %1315 = vmatpush1.msra.mxu0 %v1314
  %1316 = vmatprep.subr.mxu0 0.0
  %v1317 = vand.u32 %v58, 4294901760
  %1318 = vmatpush1.msra.mxu0 %v1317
  %1319 = vmatprep.subr.mxu0 0.0
  %v1320 = vand.u32 %v59, 4294901760
  %1321 = vmatpush1.msra.mxu0 %v1320
  %1322 = vmatprep.subr.mxu0 0.0
  %v1323 = vand.u32 %v60, 4294901760
  %1324 = vmatpush1.msra.mxu0 %v1323
  %1325 = vmatprep.subr.mxu0 0.0
  %v1326 = vand.u32 %v61, 4294901760
  %1327 = vmatpush1.msra.mxu0 %v1326
  %1328 = vmatprep.subr.mxu0 0.0
  %v1329 = vand.u32 %v62, 4294901760
  %1330 = vmatpush1.msra.mxu0 %v1329
  %1331 = vmatprep.subr.mxu0 0.0
  %1332 = vmatpush1.msra.mxu0 0.0
  %1333 = vmatprep.subr.mxu0 0.0
  %1334 = vmatpush1.msra.mxu0 0.0
  %1335 = vmatprep.subr.mxu0 0.0
  %1336 = vmatpush1.msra.mxu0 0.0
  %1337 = vmatprep.subr.mxu0 0.0
  %1338 = vmatpush1.msra.mxu0 0.0
  %1339 = vmatprep.subr.mxu0 0.0
  %1340 = vmatpush1.msra.mxu0 0.0
  %1341 = vmatprep.subr.mxu0 0.0
  %1342 = vmatpush1.msra.mxu0 0.0
  %1343 = vmatprep.subr.mxu0 0.0
  %1344 = vmatpush1.msra.mxu0 0.0
  %1345 = vmatprep.subr.mxu0 0.0
  %1346 = vmatpush1.msra.mxu0 0.0
  %1347 = vmatprep.subr.mxu0 0.0
  %1348 = vmatpush1.msra.mxu0 0.0
  %1349 = vmatprep.subr.mxu0 0.0
  %1350 = vmatpush1.msra.mxu0 0.0
  %1351 = vmatprep.subr.mxu0 0.0
  %1352 = vmatpush1.msra.mxu0 0.0
  %1353 = vmatprep.subr.mxu0 0.0
  %1354 = vmatpush1.msra.mxu0 0.0
  %1355 = vmatprep.subr.mxu0 0.0
  %1356 = vmatpush1.msra.mxu0 0.0
  %1357 = vmatprep.subr.mxu0 0.0
  %1358 = vmatpush1.msra.mxu0 0.0
  %1359 = vmatprep.subr.mxu0 0.0
  %1360 = vmatpush1.msra.mxu0 0.0
  %1361 = vmatprep.subr.mxu0 0.0
  %1362 = vmatpush1.msra.mxu0 0.0
  %1363 = vmatprep.mubr.f32.mxu0 0.0
  %v1364 = vand.u32 %v1281, 4294901760
  %v1365 = vsub.f32 %v1281, %v1364
  %v1366 = vand.u32 %v1365, 4294901760
  %v1367 = vsub.f32 %v1365, %v1366
  %v1368 = vand.u32 %v1367, 4294901760
  %1369 = vmatmul.mubr.f32.gmra.mrb[0].mxu0 %v1368
  %v1370 = vpop.f32.mrb[0].mxu0
  %v1371 = vadd.f32 1e-30, %v1370
  %v1372 = vpop.f32.mrb[0].mxu0
  %1373 = vdwg.mxu0
  %1374 = vmatprep.subr.mxu0 0.0
  %v1375 = vand.u32 %v47, 4294901760
  %v1376 = vsub.f32 %v47, %v1375
  %v1377 = vand.u32 %v1376, 4294901760
  %v1378 = vsub.f32 %v1376, %v1377
  %v1379 = vand.u32 %v1378, 4294901760
  %1380 = vmatpush1.msra.mxu0 %v1379
  %1381 = vmatprep.subr.mxu0 0.0
  %v1382 = vand.u32 %v48, 4294901760
  %v1383 = vsub.f32 %v48, %v1382
  %v1384 = vand.u32 %v1383, 4294901760
  %v1385 = vsub.f32 %v1383, %v1384
  %v1386 = vand.u32 %v1385, 4294901760
  %1387 = vmatpush1.msra.mxu0 %v1386
  %1388 = vmatprep.subr.mxu0 0.0
  %v1389 = vand.u32 %v49, 4294901760
  %v1390 = vsub.f32 %v49, %v1389
  %v1391 = vand.u32 %v1390, 4294901760
  %v1392 = vsub.f32 %v1390, %v1391
  %v1393 = vand.u32 %v1392, 4294901760
  %1394 = vmatpush1.msra.mxu0 %v1393
  %1395 = vmatprep.subr.mxu0 0.0
  %v1396 = vand.u32 %v50, 4294901760
  %v1397 = vsub.f32 %v50, %v1396
  %v1398 = vand.u32 %v1397, 4294901760
  %v1399 = vsub.f32 %v1397, %v1398
  %v1400 = vand.u32 %v1399, 4294901760
  %1401 = vmatpush1.msra.mxu0 %v1400
  %1402 = vmatprep.subr.mxu0 0.0
  %v1403 = vand.u32 %v51, 4294901760
  %v1404 = vsub.f32 %v51, %v1403
  %v1405 = vand.u32 %v1404, 4294901760
  %v1406 = vsub.f32 %v1404, %v1405
  %v1407 = vand.u32 %v1406, 4294901760
  %1408 = vmatpush1.msra.mxu0 %v1407
  %1409 = vmatprep.subr.mxu0 0.0
  %v1410 = vand.u32 %v52, 4294901760
  %v1411 = vsub.f32 %v52, %v1410
  %v1412 = vand.u32 %v1411, 4294901760
  %v1413 = vsub.f32 %v1411, %v1412
  %v1414 = vand.u32 %v1413, 4294901760
  %1415 = vmatpush1.msra.mxu0 %v1414
  %1416 = vmatprep.subr.mxu0 0.0
  %v1417 = vand.u32 %v53, 4294901760
  %v1418 = vsub.f32 %v53, %v1417
  %v1419 = vand.u32 %v1418, 4294901760
  %v1420 = vsub.f32 %v1418, %v1419
  %v1421 = vand.u32 %v1420, 4294901760
  %1422 = vmatpush1.msra.mxu0 %v1421
  %1423 = vmatprep.subr.mxu0 0.0
  %v1424 = vand.u32 %v54, 4294901760
  %v1425 = vsub.f32 %v54, %v1424
  %v1426 = vand.u32 %v1425, 4294901760
  %v1427 = vsub.f32 %v1425, %v1426
  %v1428 = vand.u32 %v1427, 4294901760
  %1429 = vmatpush1.msra.mxu0 %v1428
  %1430 = vmatprep.subr.mxu0 0.0
  %v1431 = vand.u32 %v55, 4294901760
  %v1432 = vsub.f32 %v55, %v1431
  %v1433 = vand.u32 %v1432, 4294901760
  %v1434 = vsub.f32 %v1432, %v1433
  %v1435 = vand.u32 %v1434, 4294901760
  %1436 = vmatpush1.msra.mxu0 %v1435
  %1437 = vmatprep.subr.mxu0 0.0
  %v1438 = vand.u32 %v56, 4294901760
  %v1439 = vsub.f32 %v56, %v1438
  %v1440 = vand.u32 %v1439, 4294901760
  %v1441 = vsub.f32 %v1439, %v1440
  %v1442 = vand.u32 %v1441, 4294901760
  %1443 = vmatpush1.msra.mxu0 %v1442
  %1444 = vmatprep.subr.mxu0 0.0
  %v1445 = vand.u32 %v57, 4294901760
  %v1446 = vsub.f32 %v57, %v1445
  %v1447 = vand.u32 %v1446, 4294901760
  %v1448 = vsub.f32 %v1446, %v1447
  %v1449 = vand.u32 %v1448, 4294901760
  %1450 = vmatpush1.msra.mxu0 %v1449
  %1451 = vmatprep.subr.mxu0 0.0
  %v1452 = vand.u32 %v58, 4294901760
  %v1453 = vsub.f32 %v58, %v1452
  %v1454 = vand.u32 %v1453, 4294901760
  %v1455 = vsub.f32 %v1453, %v1454
  %v1456 = vand.u32 %v1455, 4294901760
  %1457 = vmatpush1.msra.mxu0 %v1456
  %1458 = vmatprep.subr.mxu0 0.0
  %v1459 = vand.u32 %v59, 4294901760
  %v1460 = vsub.f32 %v59, %v1459
  %v1461 = vand.u32 %v1460, 4294901760
  %v1462 = vsub.f32 %v1460, %v1461
  %v1463 = vand.u32 %v1462, 4294901760
  %1464 = vmatpush1.msra.mxu0 %v1463
  %1465 = vmatprep.subr.mxu0 0.0
  %v1466 = vand.u32 %v60, 4294901760
  %v1467 = vsub.f32 %v60, %v1466
  %v1468 = vand.u32 %v1467, 4294901760
  %v1469 = vsub.f32 %v1467, %v1468
  %v1470 = vand.u32 %v1469, 4294901760
  %1471 = vmatpush1.msra.mxu0 %v1470
  %1472 = vmatprep.subr.mxu0 0.0
  %v1473 = vand.u32 %v61, 4294901760
  %v1474 = vsub.f32 %v61, %v1473
  %v1475 = vand.u32 %v1474, 4294901760
  %v1476 = vsub.f32 %v1474, %v1475
  %v1477 = vand.u32 %v1476, 4294901760
  %1478 = vmatpush1.msra.mxu0 %v1477
  %1479 = vmatprep.subr.mxu0 0.0
  %v1480 = vand.u32 %v62, 4294901760
  %v1481 = vsub.f32 %v62, %v1480
  %v1482 = vand.u32 %v1481, 4294901760
  %v1483 = vsub.f32 %v1481, %v1482
  %v1484 = vand.u32 %v1483, 4294901760
  %1485 = vmatpush1.msra.mxu0 %v1484
  %1486 = vmatprep.subr.mxu0 0.0
  %1487 = vmatpush1.msra.mxu0 0.0
  %1488 = vmatprep.subr.mxu0 0.0
  %1489 = vmatpush1.msra.mxu0 0.0
  %1490 = vmatprep.subr.mxu0 0.0
  %1491 = vmatpush1.msra.mxu0 0.0
  %1492 = vmatprep.subr.mxu0 0.0
  %1493 = vmatpush1.msra.mxu0 0.0
  %1494 = vmatprep.subr.mxu0 0.0
  %1495 = vmatpush1.msra.mxu0 0.0
  %1496 = vmatprep.subr.mxu0 0.0
  %1497 = vmatpush1.msra.mxu0 0.0
  %1498 = vmatprep.subr.mxu0 0.0
  %1499 = vmatpush1.msra.mxu0 0.0
  %1500 = vmatprep.subr.mxu0 0.0
  %1501 = vmatpush1.msra.mxu0 0.0
  %1502 = vmatprep.subr.mxu0 0.0
  %1503 = vmatpush1.msra.mxu0 0.0
  %1504 = vmatprep.subr.mxu0 0.0
  %1505 = vmatpush1.msra.mxu0 0.0
  %1506 = vmatprep.subr.mxu0 0.0
  %1507 = vmatpush1.msra.mxu0 0.0
  %1508 = vmatprep.subr.mxu0 0.0
  %1509 = vmatpush1.msra.mxu0 0.0
  %1510 = vmatprep.subr.mxu0 0.0
  %1511 = vmatpush1.msra.mxu0 0.0
  %1512 = vmatprep.subr.mxu0 0.0
  %1513 = vmatpush1.msra.mxu0 0.0
  %1514 = vmatprep.subr.mxu0 0.0
  %1515 = vmatpush1.msra.mxu0 0.0
  %1516 = vmatprep.subr.mxu0 0.0
  %1517 = vmatpush1.msra.mxu0 0.0
  %1518 = vmatprep.mubr.f32.mxu0 0.0
  %v1519 = vand.u32 %v1281, 4294901760
  %1520 = vmatmul.mubr.f32.gmra.mrb[0].mxu0 %v1519
  %v1521 = vpop.f32.mrb[0].mxu0
  %v1522 = vadd.f32 %v1371, %v1521
  %v1523 = vpop.f32.mrb[0].mxu0
  %1524 = vdwg.mxu0
  %1525 = vmatprep.subr.mxu0 0.0
  %v1526 = vand.u32 %v47, 4294901760
  %v1527 = vsub.f32 %v47, %v1526
  %1528 = vmatpush1.msra.mxu0 %v1527
  %1529 = vmatprep.subr.mxu0 0.0
  %v1530 = vand.u32 %v48, 4294901760
  %v1531 = vsub.f32 %v48, %v1530
  %1532 = vmatpush1.msra.mxu0 %v1531
  %1533 = vmatprep.subr.mxu0 0.0
  %v1534 = vand.u32 %v49, 4294901760
  %v1535 = vsub.f32 %v49, %v1534
  %1536 = vmatpush1.msra.mxu0 %v1535
  %1537 = vmatprep.subr.mxu0 0.0
  %v1538 = vand.u32 %v50, 4294901760
  %v1539 = vsub.f32 %v50, %v1538
  %1540 = vmatpush1.msra.mxu0 %v1539
  %1541 = vmatprep.subr.mxu0 0.0
  %v1542 = vand.u32 %v51, 4294901760
  %v1543 = vsub.f32 %v51, %v1542
  %1544 = vmatpush1.msra.mxu0 %v1543
  %1545 = vmatprep.subr.mxu0 0.0
  %v1546 = vand.u32 %v52, 4294901760
  %v1547 = vsub.f32 %v52, %v1546
  %1548 = vmatpush1.msra.mxu0 %v1547
  %1549 = vmatprep.subr.mxu0 0.0
  %v1550 = vand.u32 %v53, 4294901760
  %v1551 = vsub.f32 %v53, %v1550
  %1552 = vmatpush1.msra.mxu0 %v1551
  %1553 = vmatprep.subr.mxu0 0.0
  %v1554 = vand.u32 %v54, 4294901760
  %v1555 = vsub.f32 %v54, %v1554
  %1556 = vmatpush1.msra.mxu0 %v1555
  %1557 = vmatprep.subr.mxu0 0.0
  %v1558 = vand.u32 %v55, 4294901760
  %v1559 = vsub.f32 %v55, %v1558
  %1560 = vmatpush1.msra.mxu0 %v1559
  %1561 = vmatprep.subr.mxu0 0.0
  %v1562 = vand.u32 %v56, 4294901760
  %v1563 = vsub.f32 %v56, %v1562
  %1564 = vmatpush1.msra.mxu0 %v1563
  %1565 = vmatprep.subr.mxu0 0.0
  %v1566 = vand.u32 %v57, 4294901760
  %v1567 = vsub.f32 %v57, %v1566
  %1568 = vmatpush1.msra.mxu0 %v1567
  %1569 = vmatprep.subr.mxu0 0.0
  %v1570 = vand.u32 %v58, 4294901760
  %v1571 = vsub.f32 %v58, %v1570
  %1572 = vmatpush1.msra.mxu0 %v1571
  %1573 = vmatprep.subr.mxu0 0.0
  %v1574 = vand.u32 %v59, 4294901760
  %v1575 = vsub.f32 %v59, %v1574
  %1576 = vmatpush1.msra.mxu0 %v1575
  %1577 = vmatprep.subr.mxu0 0.0
  %v1578 = vand.u32 %v60, 4294901760
  %v1579 = vsub.f32 %v60, %v1578
  %1580 = vmatpush1.msra.mxu0 %v1579
  %1581 = vmatprep.subr.mxu0 0.0
  %v1582 = vand.u32 %v61, 4294901760
  %v1583 = vsub.f32 %v61, %v1582
  %1584 = vmatpush1.msra.mxu0 %v1583
  %1585 = vmatprep.subr.mxu0 0.0
  %v1586 = vand.u32 %v62, 4294901760
  %v1587 = vsub.f32 %v62, %v1586
  %1588 = vmatpush1.msra.mxu0 %v1587
  %1589 = vmatprep.subr.mxu0 0.0
  %1590 = vmatpush1.msra.mxu0 0.0
  %1591 = vmatprep.subr.mxu0 0.0
  %1592 = vmatpush1.msra.mxu0 0.0
  %1593 = vmatprep.subr.mxu0 0.0
  %1594 = vmatpush1.msra.mxu0 0.0
  %1595 = vmatprep.subr.mxu0 0.0
  %1596 = vmatpush1.msra.mxu0 0.0
  %1597 = vmatprep.subr.mxu0 0.0
  %1598 = vmatpush1.msra.mxu0 0.0
  %1599 = vmatprep.subr.mxu0 0.0
  %1600 = vmatpush1.msra.mxu0 0.0
  %1601 = vmatprep.subr.mxu0 0.0
  %1602 = vmatpush1.msra.mxu0 0.0
  %1603 = vmatprep.subr.mxu0 0.0
  %1604 = vmatpush1.msra.mxu0 0.0
  %1605 = vmatprep.subr.mxu0 0.0
  %1606 = vmatpush1.msra.mxu0 0.0
  %1607 = vmatprep.subr.mxu0 0.0
  %1608 = vmatpush1.msra.mxu0 0.0
  %1609 = vmatprep.subr.mxu0 0.0
  %1610 = vmatpush1.msra.mxu0 0.0
  %1611 = vmatprep.subr.mxu0 0.0
  %1612 = vmatpush1.msra.mxu0 0.0
  %1613 = vmatprep.subr.mxu0 0.0
  %1614 = vmatpush1.msra.mxu0 0.0
  %1615 = vmatprep.subr.mxu0 0.0
  %1616 = vmatpush1.msra.mxu0 0.0
  %1617 = vmatprep.subr.mxu0 0.0
  %1618 = vmatpush1.msra.mxu0 0.0
  %1619 = vmatprep.subr.mxu0 0.0
  %1620 = vmatpush1.msra.mxu0 0.0
  %1621 = vmatprep.mubr.f32.mxu0 0.0
  %v1622 = vand.u32 %v1281, 4294901760
  %v1623 = vsub.f32 %v1281, %v1622
  %1624 = vmatmul.mubr.f32.gmra.mrb[0].mxu0 %v1623
  %v1625 = vpop.f32.mrb[0].mxu0
  %v1626 = vadd.f32 %v1522, %v1625
  %v1627 = vpop.f32.mrb[0].mxu0
  %1628 = vdwg.mxu0
  %1629 = vmatprep.subr.mxu0 0.0
  %v1630 = vand.u32 %v47, 4294901760
  %1631 = vmatpush1.msra.mxu0 %v1630
  %1632 = vmatprep.subr.mxu0 0.0
  %v1633 = vand.u32 %v48, 4294901760
  %1634 = vmatpush1.msra.mxu0 %v1633
  %1635 = vmatprep.subr.mxu0 0.0
  %v1636 = vand.u32 %v49, 4294901760
  %1637 = vmatpush1.msra.mxu0 %v1636
  %1638 = vmatprep.subr.mxu0 0.0
  %v1639 = vand.u32 %v50, 4294901760
  %1640 = vmatpush1.msra.mxu0 %v1639
  %1641 = vmatprep.subr.mxu0 0.0
  %v1642 = vand.u32 %v51, 4294901760
  %1643 = vmatpush1.msra.mxu0 %v1642
  %1644 = vmatprep.subr.mxu0 0.0
  %v1645 = vand.u32 %v52, 4294901760
  %1646 = vmatpush1.msra.mxu0 %v1645
  %1647 = vmatprep.subr.mxu0 0.0
  %v1648 = vand.u32 %v53, 4294901760
  %1649 = vmatpush1.msra.mxu0 %v1648
  %1650 = vmatprep.subr.mxu0 0.0
  %v1651 = vand.u32 %v54, 4294901760
  %1652 = vmatpush1.msra.mxu0 %v1651
  %1653 = vmatprep.subr.mxu0 0.0
  %v1654 = vand.u32 %v55, 4294901760
  %1655 = vmatpush1.msra.mxu0 %v1654
  %1656 = vmatprep.subr.mxu0 0.0
  %v1657 = vand.u32 %v56, 4294901760
  %1658 = vmatpush1.msra.mxu0 %v1657
  %1659 = vmatprep.subr.mxu0 0.0
  %v1660 = vand.u32 %v57, 4294901760
  %1661 = vmatpush1.msra.mxu0 %v1660
  %1662 = vmatprep.subr.mxu0 0.0
  %v1663 = vand.u32 %v58, 4294901760
  %1664 = vmatpush1.msra.mxu0 %v1663
  %1665 = vmatprep.subr.mxu0 0.0
  %v1666 = vand.u32 %v59, 4294901760
  %1667 = vmatpush1.msra.mxu0 %v1666
  %1668 = vmatprep.subr.mxu0 0.0
  %v1669 = vand.u32 %v60, 4294901760
  %1670 = vmatpush1.msra.mxu0 %v1669
  %1671 = vmatprep.subr.mxu0 0.0
  %v1672 = vand.u32 %v61, 4294901760
  %1673 = vmatpush1.msra.mxu0 %v1672
  %1674 = vmatprep.subr.mxu0 0.0
  %v1675 = vand.u32 %v62, 4294901760
  %1676 = vmatpush1.msra.mxu0 %v1675
  %1677 = vmatprep.subr.mxu0 0.0
  %1678 = vmatpush1.msra.mxu0 0.0
  %1679 = vmatprep.subr.mxu0 0.0
  %1680 = vmatpush1.msra.mxu0 0.0
  %1681 = vmatprep.subr.mxu0 0.0
  %1682 = vmatpush1.msra.mxu0 0.0
  %1683 = vmatprep.subr.mxu0 0.0
  %1684 = vmatpush1.msra.mxu0 0.0
  %1685 = vmatprep.subr.mxu0 0.0
  %1686 = vmatpush1.msra.mxu0 0.0
  %1687 = vmatprep.subr.mxu0 0.0
  %1688 = vmatpush1.msra.mxu0 0.0
  %1689 = vmatprep.subr.mxu0 0.0
  %1690 = vmatpush1.msra.mxu0 0.0
  %1691 = vmatprep.subr.mxu0 0.0
  %1692 = vmatpush1.msra.mxu0 0.0
  %1693 = vmatprep.subr.mxu0 0.0
  %1694 = vmatpush1.msra.mxu0 0.0
  %1695 = vmatprep.subr.mxu0 0.0
  %1696 = vmatpush1.msra.mxu0 0.0
  %1697 = vmatprep.subr.mxu0 0.0
  %1698 = vmatpush1.msra.mxu0 0.0
  %1699 = vmatprep.subr.mxu0 0.0
  %1700 = vmatpush1.msra.mxu0 0.0
  %1701 = vmatprep.subr.mxu0 0.0
  %1702 = vmatpush1.msra.mxu0 0.0
  %1703 = vmatprep.subr.mxu0 0.0
  %1704 = vmatpush1.msra.mxu0 0.0
  %1705 = vmatprep.subr.mxu0 0.0
  %1706 = vmatpush1.msra.mxu0 0.0
  %1707 = vmatprep.subr.mxu0 0.0
  %1708 = vmatpush1.msra.mxu0 0.0
  %1709 = vmatprep.mubr.f32.mxu0 0.0
  %v1710 = vand.u32 %v1281, 4294901760
  %v1711 = vsub.f32 %v1281, %v1710
  %v1712 = vand.u32 %v1711, 4294901760
  %1713 = vmatmul.mubr.f32.gmra.mrb[0].mxu0 %v1712
  %v1714 = vpop.f32.mrb[0].mxu0
  %v1715 = vadd.f32 %v1626, %v1714
  %v1716 = vpop.f32.mrb[0].mxu0
  %1717 = vdwg.mxu0
  %1718 = vmatprep.subr.mxu0 0.0
  %v1719 = vand.u32 %v47, 4294901760
  %v1720 = vsub.f32 %v47, %v1719
  %v1721 = vand.u32 %v1720, 4294901760
  %1722 = vmatpush1.msra.mxu0 %v1721
  %1723 = vmatprep.subr.mxu0 0.0
  %v1724 = vand.u32 %v48, 4294901760
  %v1725 = vsub.f32 %v48, %v1724
  %v1726 = vand.u32 %v1725, 4294901760
  %1727 = vmatpush1.msra.mxu0 %v1726
  %1728 = vmatprep.subr.mxu0 0.0
  %v1729 = vand.u32 %v49, 4294901760
  %v1730 = vsub.f32 %v49, %v1729
  %v1731 = vand.u32 %v1730, 4294901760
  %1732 = vmatpush1.msra.mxu0 %v1731
  %1733 = vmatprep.subr.mxu0 0.0
  %v1734 = vand.u32 %v50, 4294901760
  %v1735 = vsub.f32 %v50, %v1734
  %v1736 = vand.u32 %v1735, 4294901760
  %1737 = vmatpush1.msra.mxu0 %v1736
  %1738 = vmatprep.subr.mxu0 0.0
  %v1739 = vand.u32 %v51, 4294901760
  %v1740 = vsub.f32 %v51, %v1739
  %v1741 = vand.u32 %v1740, 4294901760
  %1742 = vmatpush1.msra.mxu0 %v1741
  %1743 = vmatprep.subr.mxu0 0.0
  %v1744 = vand.u32 %v52, 4294901760
  %v1745 = vsub.f32 %v52, %v1744
  %v1746 = vand.u32 %v1745, 4294901760
  %1747 = vmatpush1.msra.mxu0 %v1746
  %1748 = vmatprep.subr.mxu0 0.0
  %v1749 = vand.u32 %v53, 4294901760
  %v1750 = vsub.f32 %v53, %v1749
  %v1751 = vand.u32 %v1750, 4294901760
  %1752 = vmatpush1.msra.mxu0 %v1751
  %1753 = vmatprep.subr.mxu0 0.0
  %v1754 = vand.u32 %v54, 4294901760
  %v1755 = vsub.f32 %v54, %v1754
  %v1756 = vand.u32 %v1755, 4294901760
  %1757 = vmatpush1.msra.mxu0 %v1756
  %1758 = vmatprep.subr.mxu0 0.0
  %v1759 = vand.u32 %v55, 4294901760
  %v1760 = vsub.f32 %v55, %v1759
  %v1761 = vand.u32 %v1760, 4294901760
  %1762 = vmatpush1.msra.mxu0 %v1761
  %1763 = vmatprep.subr.mxu0 0.0
  %v1764 = vand.u32 %v56, 4294901760
  %v1765 = vsub.f32 %v56, %v1764
  %v1766 = vand.u32 %v1765, 4294901760
  %1767 = vmatpush1.msra.mxu0 %v1766
  %1768 = vmatprep.subr.mxu0 0.0
  %v1769 = vand.u32 %v57, 4294901760
  %v1770 = vsub.f32 %v57, %v1769
  %v1771 = vand.u32 %v1770, 4294901760
  %1772 = vmatpush1.msra.mxu0 %v1771
  %1773 = vmatprep.subr.mxu0 0.0
  %v1774 = vand.u32 %v58, 4294901760
  %v1775 = vsub.f32 %v58, %v1774
  %v1776 = vand.u32 %v1775, 4294901760
  %1777 = vmatpush1.msra.mxu0 %v1776
  %1778 = vmatprep.subr.mxu0 0.0
  %v1779 = vand.u32 %v59, 4294901760
  %v1780 = vsub.f32 %v59, %v1779
  %v1781 = vand.u32 %v1780, 4294901760
  %1782 = vmatpush1.msra.mxu0 %v1781
  %1783 = vmatprep.subr.mxu0 0.0
  %v1784 = vand.u32 %v60, 4294901760
  %v1785 = vsub.f32 %v60, %v1784
  %v1786 = vand.u32 %v1785, 4294901760
  %1787 = vmatpush1.msra.mxu0 %v1786
  %1788 = vmatprep.subr.mxu0 0.0
  %v1789 = vand.u32 %v61, 4294901760
  %v1790 = vsub.f32 %v61, %v1789
  %v1791 = vand.u32 %v1790, 4294901760
  %1792 = vmatpush1.msra.mxu0 %v1791
  %1793 = vmatprep.subr.mxu0 0.0
  %v1794 = vand.u32 %v62, 4294901760
  %v1795 = vsub.f32 %v62, %v1794
  %v1796 = vand.u32 %v1795, 4294901760
  %1797 = vmatpush1.msra.mxu0 %v1796
  %1798 = vmatprep.subr.mxu0 0.0
  %1799 = vmatpush1.msra.mxu0 0.0
  %1800 = vmatprep.subr.mxu0 0.0
  %1801 = vmatpush1.msra.mxu0 0.0
  %1802 = vmatprep.subr.mxu0 0.0
  %1803 = vmatpush1.msra.mxu0 0.0
  %1804 = vmatprep.subr.mxu0 0.0
  %1805 = vmatpush1.msra.mxu0 0.0
  %1806 = vmatprep.subr.mxu0 0.0
  %1807 = vmatpush1.msra.mxu0 0.0
  %1808 = vmatprep.subr.mxu0 0.0
  %1809 = vmatpush1.msra.mxu0 0.0
  %1810 = vmatprep.subr.mxu0 0.0
  %1811 = vmatpush1.msra.mxu0 0.0
  %1812 = vmatprep.subr.mxu0 0.0
  %1813 = vmatpush1.msra.mxu0 0.0
  %1814 = vmatprep.subr.mxu0 0.0
  %1815 = vmatpush1.msra.mxu0 0.0
  %1816 = vmatprep.subr.mxu0 0.0
  %1817 = vmatpush1.msra.mxu0 0.0
  %1818 = vmatprep.subr.mxu0 0.0
  %1819 = vmatpush1.msra.mxu0 0.0
  %1820 = vmatprep.subr.mxu0 0.0
  %1821 = vmatpush1.msra.mxu0 0.0
  %1822 = vmatprep.subr.mxu0 0.0
  %1823 = vmatpush1.msra.mxu0 0.0
  %1824 = vmatprep.subr.mxu0 0.0
  %1825 = vmatpush1.msra.mxu0 0.0
  %1826 = vmatprep.subr.mxu0 0.0
  %1827 = vmatpush1.msra.mxu0 0.0
  %1828 = vmatprep.subr.mxu0 0.0
  %1829 = vmatpush1.msra.mxu0 0.0
  %1830 = vmatprep.mubr.f32.mxu0 0.0
  %v1831 = vand.u32 %v1281, 4294901760
  %1832 = vmatmul.mubr.f32.gmra.mrb[0].mxu0 %v1831
  %v1833 = vpop.f32.mrb[0].mxu0
  %v1834 = vadd.f32 %v1715, %v1833
  %v1835 = vpop.f32.mrb[0].mxu0
  %1836 = vdwg.mxu0
  %1837 = vmatprep.subr.mxu0 0.0
  %v1838 = vand.u32 %v47, 4294901760
  %1839 = vmatpush1.msra.mxu0 %v1838
  %1840 = vmatprep.subr.mxu0 0.0
  %v1841 = vand.u32 %v48, 4294901760
  %1842 = vmatpush1.msra.mxu0 %v1841
  %1843 = vmatprep.subr.mxu0 0.0
  %v1844 = vand.u32 %v49, 4294901760
  %1845 = vmatpush1.msra.mxu0 %v1844
  %1846 = vmatprep.subr.mxu0 0.0
  %v1847 = vand.u32 %v50, 4294901760
  %1848 = vmatpush1.msra.mxu0 %v1847
  %1849 = vmatprep.subr.mxu0 0.0
  %v1850 = vand.u32 %v51, 4294901760
  %1851 = vmatpush1.msra.mxu0 %v1850
  %1852 = vmatprep.subr.mxu0 0.0
  %v1853 = vand.u32 %v52, 4294901760
  %1854 = vmatpush1.msra.mxu0 %v1853
  %1855 = vmatprep.subr.mxu0 0.0
  %v1856 = vand.u32 %v53, 4294901760
  %1857 = vmatpush1.msra.mxu0 %v1856
  %1858 = vmatprep.subr.mxu0 0.0
  %v1859 = vand.u32 %v54, 4294901760
  %1860 = vmatpush1.msra.mxu0 %v1859
  %1861 = vmatprep.subr.mxu0 0.0
  %v1862 = vand.u32 %v55, 4294901760
  %1863 = vmatpush1.msra.mxu0 %v1862
  %1864 = vmatprep.subr.mxu0 0.0
  %v1865 = vand.u32 %v56, 4294901760
  %1866 = vmatpush1.msra.mxu0 %v1865
  %1867 = vmatprep.subr.mxu0 0.0
  %v1868 = vand.u32 %v57, 4294901760
  %1869 = vmatpush1.msra.mxu0 %v1868
  %1870 = vmatprep.subr.mxu0 0.0
  %v1871 = vand.u32 %v58, 4294901760
  %1872 = vmatpush1.msra.mxu0 %v1871
  %1873 = vmatprep.subr.mxu0 0.0
  %v1874 = vand.u32 %v59, 4294901760
  %1875 = vmatpush1.msra.mxu0 %v1874
  %1876 = vmatprep.subr.mxu0 0.0
  %v1877 = vand.u32 %v60, 4294901760
  %1878 = vmatpush1.msra.mxu0 %v1877
  %1879 = vmatprep.subr.mxu0 0.0
  %v1880 = vand.u32 %v61, 4294901760
  %1881 = vmatpush1.msra.mxu0 %v1880
  %1882 = vmatprep.subr.mxu0 0.0
  %v1883 = vand.u32 %v62, 4294901760
  %1884 = vmatpush1.msra.mxu0 %v1883
  %1885 = vmatprep.subr.mxu0 0.0
  %1886 = vmatpush1.msra.mxu0 0.0
  %1887 = vmatprep.subr.mxu0 0.0
  %1888 = vmatpush1.msra.mxu0 0.0
  %1889 = vmatprep.subr.mxu0 0.0
  %1890 = vmatpush1.msra.mxu0 0.0
  %1891 = vmatprep.subr.mxu0 0.0
  %1892 = vmatpush1.msra.mxu0 0.0
  %1893 = vmatprep.subr.mxu0 0.0
  %1894 = vmatpush1.msra.mxu0 0.0
  %1895 = vmatprep.subr.mxu0 0.0
  %1896 = vmatpush1.msra.mxu0 0.0
  %1897 = vmatprep.subr.mxu0 0.0
  %1898 = vmatpush1.msra.mxu0 0.0
  %1899 = vmatprep.subr.mxu0 0.0
  %1900 = vmatpush1.msra.mxu0 0.0
  %1901 = vmatprep.subr.mxu0 0.0
  %1902 = vmatpush1.msra.mxu0 0.0
  %1903 = vmatprep.subr.mxu0 0.0
  %1904 = vmatpush1.msra.mxu0 0.0
  %1905 = vmatprep.subr.mxu0 0.0
  %1906 = vmatpush1.msra.mxu0 0.0
  %1907 = vmatprep.subr.mxu0 0.0
  %1908 = vmatpush1.msra.mxu0 0.0
  %1909 = vmatprep.subr.mxu0 0.0
  %1910 = vmatpush1.msra.mxu0 0.0
  %1911 = vmatprep.subr.mxu0 0.0
  %1912 = vmatpush1.msra.mxu0 0.0
  %1913 = vmatprep.subr.mxu0 0.0
  %1914 = vmatpush1.msra.mxu0 0.0
  %1915 = vmatprep.subr.mxu0 0.0
  %1916 = vmatpush1.msra.mxu0 0.0
  %1917 = vmatprep.mubr.f32.mxu0 0.0
  %v1918 = vand.u32 %v1281, 4294901760
  %1919 = vmatmul.mubr.f32.gmra.mrb[0].mxu0 %v1918
  %v1920 = vpop.f32.mrb[0].mxu0
  %v1921 = vadd.f32 %v1834, %v1920
  %v1922 = vpop.f32.mrb[0].mxu0
  %1923 = vdwg.mxu0
  %v1924 = vlog2.pop %v1921
  %v1925 = vmul.f32 %v1924, 0.6931472
  %v1926 = vadd.f32 %v1282, %v1925
  %v1927 = vadd.f32 %v1926, %v1162
  %v1928 = vsel %vm1171, 1, 0
  %v1929 = vsel %vm1172, 1, 0
  %v1930 = vsel %vm1173, 1, 0
  %v1931 = vsel %vm1174, 1, 0
  %v1932 = vsel %vm1175, 1, 0
  %v1933 = vsel %vm1176, 1, 0
  %v1934 = vsel %vm1177, 1, 0
  %v1935 = vsel %vm1178, 1, 0
  %1936 = vset.pattern.permute.xlu0 0
  %1937 = vperm.xlu0 %1936, %v1928
  %v1938 = vpop.permute.xlu0 %1937
  %1939 = vset.pattern.permute.xlu0 0
  %1940 = vperm.xlu0 %1939, %v1929
  %v1941 = vpop.permute.xlu0 %1940
  %1942 = vset.pattern.permute.xlu0 0
  %1943 = vperm.xlu0 %1942, %v1930
  %v1944 = vpop.permute.xlu0 %1943
  %1945 = vset.pattern.permute.xlu0 0
  %1946 = vperm.xlu0 %1945, %v1931
  %v1947 = vpop.permute.xlu0 %1946
  %1948 = vset.pattern.permute.xlu0 0
  %1949 = vperm.xlu0 %1948, %v1932
  %v1950 = vpop.permute.xlu0 %1949
  %1951 = vset.pattern.permute.xlu0 0
  %1952 = vperm.xlu0 %1951, %v1933
  %v1953 = vpop.permute.xlu0 %1952
  %1954 = vset.pattern.permute.xlu0 0
  %1955 = vperm.xlu0 %1954, %v1934
  %v1956 = vpop.permute.xlu0 %1955
  %1957 = vset.pattern.permute.xlu0 0
  %1958 = vperm.xlu0 %1957, %v1935
  %v1959 = vpop.permute.xlu0 %1958
  %vm1960 = vcmp.eq.s32.totalorder %v1938, 1
  %vm1961 = vcmp.eq.s32.totalorder %v1941, 1
  %vm1962 = vcmp.eq.s32.totalorder %v1944, 1
  %vm1963 = vcmp.eq.s32.totalorder %v1947, 1
  %vm1964 = vcmp.eq.s32.totalorder %v1950, 1
  %vm1965 = vcmp.eq.s32.totalorder %v1953, 1
  %vm1966 = vcmp.eq.s32.totalorder %v1956, 1
  %vm1967 = vcmp.eq.s32.totalorder %v1959, 1
  %v1969 = vrot.slane %v1927, 1
  %v1970 = vrot.slane %v1927, 2
  %v1971 = vrot.slane %v1927, 3
  %v1972 = vrot.slane %v1927, 4
  %v1973 = vrot.slane %v1927, 5
  %v1974 = vrot.slane %v1927, 6
  %v1975 = vrot.slane %v1927, 7
  %v1985 = vrot.slane %v1071, 1
  %v1986 = vrot.slane %v1071, 2
  %v1987 = vrot.slane %v1071, 3
  %v1988 = vrot.slane %v1071, 4
  %v1989 = vrot.slane %v1071, 5
  %v1990 = vrot.slane %v1071, 6
  %v1991 = vrot.slane %v1071, 7
  %v2000 = vsel %vm1960, %v1927, %v1071
  %v2001 = vsel %vm1961, %v1969, %v1985
  %v2002 = vsel %vm1962, %v1970, %v1986
  %v2003 = vsel %vm1963, %v1971, %v1987
  %v2004 = vsel %vm1964, %v1972, %v1988
  %v2005 = vsel %vm1965, %v1973, %v1989
  %v2006 = vsel %vm1966, %v1974, %v1990
  %v2007 = vsel %vm1967, %v1975, %v1991
  %v2008 = vld [vmem:[%s0 + $0x2] sm:$0x1]
  %v2009 = vld [vmem:[%s0 + $0xa] sm:$0x1]
  %v2010 = vld [vmem:[%s0 + $0x12] sm:$0x1]
  %v2011 = vld [vmem:[%s0 + $0x1a] sm:$0x1]
  %v2012 = vld [vmem:[%s0 + $0x22] sm:$0x1]
  %v2013 = vld [vmem:[%s0 + $0x2a] sm:$0x1]
  %v2014 = vld [vmem:[%s0 + $0x32] sm:$0x1]
  %v2015 = vld [vmem:[%s0 + $0x3a] sm:$0x1]
  %v2016 = vpack.c.bf16 %v2008, %v2008
  %v2017 = vpack.c.bf16 %v2009, %v2009
  %v2018 = vpack.c.bf16 %v2010, %v2010
  %v2019 = vpack.c.bf16 %v2011, %v2011
  %v2020 = vpack.c.bf16 %v2012, %v2012
  %v2021 = vpack.c.bf16 %v2013, %v2013
  %v2022 = vpack.c.bf16 %v2014, %v2014
  %v2023 = vpack.c.bf16 %v2015, %v2015
  %v2032 = vunpack.c.l.b16 %v2016
  %v2033 = vunpack.c.l.b16 %v2017
  %v2034 = vunpack.c.l.b16 %v2018
  %v2035 = vunpack.c.l.b16 %v2019
  %v2036 = vunpack.c.l.b16 %v2020
  %v2037 = vunpack.c.l.b16 %v2021
  %v2038 = vunpack.c.l.b16 %v2022
  %v2039 = vunpack.c.l.b16 %v2023
  %v2040 = vrot.slane %v2033, 7
  %v2041 = vsel %vm108, %v2040, %v2032
  %v2042 = vrot.slane %v2034, 6
  %v2043 = vsel %vm111, %v2042, %v2041
  %v2044 = vrot.slane %v2035, 5
  %v2045 = vsel %vm114, %v2044, %v2043
  %v2046 = vrot.slane %v2036, 4
  %v2047 = vsel %vm117, %v2046, %v2045
  %v2048 = vrot.slane %v2037, 3
  %v2049 = vsel %vm120, %v2048, %v2047
  %v2050 = vrot.slane %v2038, 2
  %v2051 = vsel %vm123, %v2050, %v2049
  %v2052 = vrot.slane %v2039, 1
  %v2053 = vsel %vm126, %v2052, %v2051
  %v2054 = vpack.c.b16 %v2053, %v2053
  %v2056 = vsel %vm141, %v2054, 0
  %2058 = vmatprep.subr.bf16.mxu0 0
  %2059 = vmatpush1.bf16.msra.mxu0 %v137
  %2060 = vmatprep.subr.bf16.mxu0 0
  %2061 = vmatpush1.bf16.msra.mxu0 %v138
  %2062 = vmatprep.subr.bf16.mxu0 0
  %2063 = vmatpush1.bf16.msra.mxu0 0
  %2064 = vmatprep.subr.bf16.mxu0 0
  %2065 = vmatpush1.bf16.msra.mxu0 0
  %2066 = vmatprep.subr.bf16.mxu0 0
  %2067 = vmatpush1.bf16.msra.mxu0 0
  %2068 = vmatprep.subr.bf16.mxu0 0
  %2069 = vmatpush1.bf16.msra.mxu0 0
  %2070 = vmatprep.subr.bf16.mxu0 0
  %2071 = vmatpush1.bf16.msra.mxu0 0
  %2072 = vmatprep.subr.bf16.mxu0 0
  %2073 = vmatpush1.bf16.msra.mxu0 0
  %2074 = vmatprep.subr.bf16.mxu0 0
  %2075 = vmatpush1.bf16.msra.mxu0 0
  %2076 = vmatprep.subr.bf16.mxu0 0
  %2077 = vmatpush1.bf16.msra.mxu0 0
  %2078 = vmatprep.subr.bf16.mxu0 0
  %2079 = vmatpush1.bf16.msra.mxu0 0
  %2080 = vmatprep.subr.bf16.mxu0 0
  %2081 = vmatpush1.bf16.msra.mxu0 0
  %2082 = vmatprep.subr.bf16.mxu0 0
  %2083 = vmatpush1.bf16.msra.mxu0 0
  %2084 = vmatprep.subr.bf16.mxu0 0
  %2085 = vmatpush1.bf16.msra.mxu0 0
  %2086 = vmatprep.subr.bf16.mxu0 0
  %2087 = vmatpush1.bf16.msra.mxu0 0
  %2088 = vmatprep.subr.bf16.mxu0 0
  %2089 = vmatpush1.bf16.msra.mxu0 0
  %2090 = vmatprep.mubr.bf16.mxu0 0
  %2091 = vmatmul.mubr.bf16.gmra.mrb[0].mxu0 %v2056
  %v2092 = vpop.f32.mrb[0].mxu0
  %v2093 = vadd.f32 %v89, %v2092
  %v2094 = vpop.f32.mrb[0].mxu0
  %v2095 = vpop.f32.mrb[0].mxu0
  %v2096 = vpop.f32.mrb[0].mxu0
  %2097 = vdwg.mxu0
  %v2098 = vmax.f32 %v2093, 0.0
  %v2099 = vld [vmem:[%s1 + $0x2] sm:$0x1]
  %v2100 = vld [vmem:[%s1 + $0xa] sm:$0x1]
  %v2101 = vld [vmem:[%s1 + $0x12] sm:$0x1]
  %v2102 = vld [vmem:[%s1 + $0x1a] sm:$0x1]
  %v2103 = vld [vmem:[%s1 + $0x22] sm:$0x1]
  %v2104 = vld [vmem:[%s1 + $0x2a] sm:$0x1]
  %v2105 = vld [vmem:[%s1 + $0x32] sm:$0x1]
  %v2106 = vld [vmem:[%s1 + $0x3a] sm:$0x1]
  %vm2107 = vcmp.gt.f32.partialorder %v2099, 0.0
  %vm2108 = vcmp.gt.f32.partialorder %v2100, 0.0
  %vm2109 = vcmp.gt.f32.partialorder %v2101, 0.0
  %vm2110 = vcmp.gt.f32.partialorder %v2102, 0.0
  %vm2111 = vcmp.gt.f32.partialorder %v2103, 0.0
  %vm2112 = vcmp.gt.f32.partialorder %v2104, 0.0
  %vm2113 = vcmp.gt.f32.partialorder %v2105, 0.0
  %vm2114 = vcmp.gt.f32.partialorder %v2106, 0.0
  %v2115 = vld [vmem:[%s2 + $0x2] sm:$0x1]
  %v2116 = vld [vmem:[%s2 + $0xa] sm:$0x1]
  %v2117 = vld [vmem:[%s2 + $0x12] sm:$0x1]
  %v2118 = vld [vmem:[%s2 + $0x1a] sm:$0x1]
  %v2119 = vld [vmem:[%s2 + $0x22] sm:$0x1]
  %v2120 = vld [vmem:[%s2 + $0x2a] sm:$0x1]
  %v2121 = vld [vmem:[%s2 + $0x32] sm:$0x1]
  %v2122 = vld [vmem:[%s2 + $0x3a] sm:$0x1]
  %2123 = vset.pattern.permute.xlu0 0
  %2124 = vperm.xlu0 %2123, %v2115
  %v2125 = vpop.permute.xlu0 %2124
  %2126 = vset.pattern.permute.xlu0 0
  %2127 = vperm.xlu0 %2126, %v2116
  %v2128 = vpop.permute.xlu0 %2127
  %2129 = vset.pattern.permute.xlu0 0
  %2130 = vperm.xlu0 %2129, %v2117
  %v2131 = vpop.permute.xlu0 %2130
  %2132 = vset.pattern.permute.xlu0 0
  %2133 = vperm.xlu0 %2132, %v2118
  %v2134 = vpop.permute.xlu0 %2133
  %2135 = vset.pattern.permute.xlu0 0
  %2136 = vperm.xlu0 %2135, %v2119
  %v2137 = vpop.permute.xlu0 %2136
  %2138 = vset.pattern.permute.xlu0 0
  %2139 = vperm.xlu0 %2138, %v2120
  %v2140 = vpop.permute.xlu0 %2139
  %2141 = vset.pattern.permute.xlu0 0
  %2142 = vperm.xlu0 %2141, %v2121
  %v2143 = vpop.permute.xlu0 %2142
  %2144 = vset.pattern.permute.xlu0 0
  %2145 = vperm.xlu0 %2144, %v2122
  %v2146 = vpop.permute.xlu0 %2145
  %v2147 = vrot.slane %v2128, 7
  %v2148 = vsel %vm108, %v2147, %v2125
  %v2149 = vrot.slane %v2131, 6
  %v2150 = vsel %vm111, %v2149, %v2148
  %v2151 = vrot.slane %v2134, 5
  %v2152 = vsel %vm114, %v2151, %v2150
  %v2153 = vrot.slane %v2137, 4
  %v2154 = vsel %vm117, %v2153, %v2152
  %v2155 = vrot.slane %v2140, 3
  %v2156 = vsel %vm120, %v2155, %v2154
  %v2157 = vrot.slane %v2143, 2
  %v2158 = vsel %vm123, %v2157, %v2156
  %v2159 = vrot.slane %v2146, 1
  %v2160 = vsel %vm126, %v2159, %v2158
  %vm2161 = vcmp.eq.s32.totalorder %v68, %v2160
  %v2162 = vsel %vm2161, %v2098, 0.0
  %2163 = vadd.xlane.f32.xlu0 %v2162
  %v2164 = vpop.xlane.xlu0 %2163
  %v2166 = vrot.slane %v2164, 1
  %v2167 = vrot.slane %v2164, 2
  %v2168 = vrot.slane %v2164, 3
  %v2169 = vrot.slane %v2164, 4
  %v2170 = vrot.slane %v2164, 5
  %v2171 = vrot.slane %v2164, 6
  %v2172 = vrot.slane %v2164, 7
  %v2181 = vsel %vm2107, %v2164, 0.0
  %v2182 = vsel %vm2108, %v2166, 0.0
  %v2183 = vsel %vm2109, %v2167, 0.0
  %v2184 = vsel %vm2110, %v2168, 0.0
  %v2185 = vsel %vm2111, %v2169, 0.0
  %v2186 = vsel %vm2112, %v2170, 0.0
  %v2187 = vsel %vm2113, %v2171, 0.0
  %v2188 = vsel %vm2114, %v2172, 0.0
  %v2197 = vrot.slane %v2182, 7
  %v2198 = vsel %vm108, %v2197, %v2181
  %v2199 = vrot.slane %v2183, 6
  %v2200 = vsel %vm111, %v2199, %v2198
  %v2201 = vrot.slane %v2184, 5
  %v2202 = vsel %vm114, %v2201, %v2200
  %v2203 = vrot.slane %v2185, 4
  %v2204 = vsel %vm117, %v2203, %v2202
  %v2205 = vrot.slane %v2186, 3
  %v2206 = vsel %vm120, %v2205, %v2204
  %v2207 = vrot.slane %v2187, 2
  %v2208 = vsel %vm123, %v2207, %v2206
  %v2209 = vrot.slane %v2188, 1
  %v2210 = vsel %vm126, %v2209, %v2208
  %v2212 = vadd.f32 %v1276, %v2210
  %v2221 = vrot.slane %v2001, 7
  %v2222 = vsel %vm108, %v2221, %v2000
  %v2223 = vrot.slane %v2002, 6
  %v2224 = vsel %vm111, %v2223, %v2222
  %v2225 = vrot.slane %v2003, 5
  %v2226 = vsel %vm114, %v2225, %v2224
  %v2227 = vrot.slane %v2004, 4
  %v2228 = vsel %vm117, %v2227, %v2226
  %v2229 = vrot.slane %v2005, 3
  %v2230 = vsel %vm120, %v2229, %v2228
  %v2231 = vrot.slane %v2006, 2
  %v2232 = vsel %vm123, %v2231, %v2230
  %v2233 = vrot.slane %v2007, 1
  %v2234 = vsel %vm126, %v2233, %v2232
  %2236 = vmax.xlane.f32.xlu0 %v2234
  %v2237 = vpop.xlane.xlu0 %2236
  %v2239 = vrot.slane %v2237, 1
  %v2240 = vrot.slane %v2237, 2
  %v2241 = vrot.slane %v2237, 3
  %v2242 = vrot.slane %v2237, 4
  %v2243 = vrot.slane %v2237, 5
  %v2244 = vrot.slane %v2237, 6
  %v2245 = vrot.slane %v2237, 7
  %v2254 = vsub.f32 %v2000, %v2237
  %v2255 = vsub.f32 %v2001, %v2239
  %v2256 = vsub.f32 %v2002, %v2240
  %v2257 = vsub.f32 %v2003, %v2241
  %v2258 = vsub.f32 %v2004, %v2242
  %v2259 = vsub.f32 %v2005, %v2243
  %v2260 = vsub.f32 %v2006, %v2244
  %v2261 = vsub.f32 %v2007, %v2245
  %v2262 = vmul.f32 %v2254, 1.442695
  %v2263 = vpow.pop %v2262
  %v2264 = vmul.f32 %v2255, 1.442695
  %v2265 = vpow.pop %v2264
  %v2266 = vmul.f32 %v2256, 1.442695
  %v2267 = vpow.pop %v2266
  %v2268 = vmul.f32 %v2257, 1.442695
  %v2269 = vpow.pop %v2268
  %v2270 = vmul.f32 %v2258, 1.442695
  %v2271 = vpow.pop %v2270
  %v2272 = vmul.f32 %v2259, 1.442695
  %v2273 = vpow.pop %v2272
  %v2274 = vmul.f32 %v2260, 1.442695
  %v2275 = vpow.pop %v2274
  %v2276 = vmul.f32 %v2261, 1.442695
  %v2277 = vpow.pop %v2276
  %v2278 = vadd.f32 %v2237, %v313
  %v2287 = vrot.slane %v2265, 7
  %v2288 = vsel %vm108, %v2287, %v2263
  %v2289 = vrot.slane %v2267, 6
  %v2290 = vsel %vm111, %v2289, %v2288
  %v2291 = vrot.slane %v2269, 5
  %v2292 = vsel %vm114, %v2291, %v2290
  %v2293 = vrot.slane %v2271, 4
  %v2294 = vsel %vm117, %v2293, %v2292
  %v2295 = vrot.slane %v2273, 3
  %v2296 = vsel %vm120, %v2295, %v2294
  %v2297 = vrot.slane %v2275, 2
  %v2298 = vsel %vm123, %v2297, %v2296
  %v2299 = vrot.slane %v2277, 1
  %v2300 = vsel %vm126, %v2299, %v2298
  %2302 = vmatprep.subr.mxu0 0.0
  %v2303 = vand.u32 %v47, 4294901760
  %2304 = vmatpush1.msra.mxu0 %v2303
  %2305 = vmatprep.subr.mxu0 0.0
  %v2306 = vand.u32 %v48, 4294901760
  %2307 = vmatpush1.msra.mxu0 %v2306
  %2308 = vmatprep.subr.mxu0 0.0
  %v2309 = vand.u32 %v49, 4294901760
  %2310 = vmatpush1.msra.mxu0 %v2309
  %2311 = vmatprep.subr.mxu0 0.0
  %v2312 = vand.u32 %v50, 4294901760
  %2313 = vmatpush1.msra.mxu0 %v2312
  %2314 = vmatprep.subr.mxu0 0.0
  %v2315 = vand.u32 %v51, 4294901760
  %2316 = vmatpush1.msra.mxu0 %v2315
  %2317 = vmatprep.subr.mxu0 0.0
  %v2318 = vand.u32 %v52, 4294901760
  %2319 = vmatpush1.msra.mxu0 %v2318
  %2320 = vmatprep.subr.mxu0 0.0
  %v2321 = vand.u32 %v53, 4294901760
  %2322 = vmatpush1.msra.mxu0 %v2321
  %2323 = vmatprep.subr.mxu0 0.0
  %v2324 = vand.u32 %v54, 4294901760
  %2325 = vmatpush1.msra.mxu0 %v2324
  %2326 = vmatprep.subr.mxu0 0.0
  %v2327 = vand.u32 %v55, 4294901760
  %2328 = vmatpush1.msra.mxu0 %v2327
  %2329 = vmatprep.subr.mxu0 0.0
  %v2330 = vand.u32 %v56, 4294901760
  %2331 = vmatpush1.msra.mxu0 %v2330
  %2332 = vmatprep.subr.mxu0 0.0
  %v2333 = vand.u32 %v57, 4294901760
  %2334 = vmatpush1.msra.mxu0 %v2333
  %2335 = vmatprep.subr.mxu0 0.0
  %v2336 = vand.u32 %v58, 4294901760
  %2337 = vmatpush1.msra.mxu0 %v2336
  %2338 = vmatprep.subr.mxu0 0.0
  %v2339 = vand.u32 %v59, 4294901760
  %2340 = vmatpush1.msra.mxu0 %v2339
  %2341 = vmatprep.subr.mxu0 0.0
  %v2342 = vand.u32 %v60, 4294901760
  %2343 = vmatpush1.msra.mxu0 %v2342
  %2344 = vmatprep.subr.mxu0 0.0
  %v2345 = vand.u32 %v61, 4294901760
  %2346 = vmatpush1.msra.mxu0 %v2345
  %2347 = vmatprep.subr.mxu0 0.0
  %v2348 = vand.u32 %v62, 4294901760
  %2349 = vmatpush1.msra.mxu0 %v2348
  %2350 = vmatprep.subr.mxu0 0.0
  %2351 = vmatpush1.msra.mxu0 0.0
  %2352 = vmatprep.subr.mxu0 0.0
  %2353 = vmatpush1.msra.mxu0 0.0
  %2354 = vmatprep.subr.mxu0 0.0
  %2355 = vmatpush1.msra.mxu0 0.0
  %2356 = vmatprep.subr.mxu0 0.0
  %2357 = vmatpush1.msra.mxu0 0.0
  %2358 = vmatprep.subr.mxu0 0.0
  %2359 = vmatpush1.msra.mxu0 0.0
  %2360 = vmatprep.subr.mxu0 0.0
  %2361 = vmatpush1.msra.mxu0 0.0
  %2362 = vmatprep.subr.mxu0 0.0
  %2363 = vmatpush1.msra.mxu0 0.0
  %2364 = vmatprep.subr.mxu0 0.0
  %2365 = vmatpush1.msra.mxu0 0.0
  %2366 = vmatprep.subr.mxu0 0.0
  %2367 = vmatpush1.msra.mxu0 0.0
  %2368 = vmatprep.subr.mxu0 0.0
  %2369 = vmatpush1.msra.mxu0 0.0
  %2370 = vmatprep.subr.mxu0 0.0
  %2371 = vmatpush1.msra.mxu0 0.0
  %2372 = vmatprep.subr.mxu0 0.0
  %2373 = vmatpush1.msra.mxu0 0.0
  %2374 = vmatprep.subr.mxu0 0.0
  %2375 = vmatpush1.msra.mxu0 0.0
  %2376 = vmatprep.subr.mxu0 0.0
  %2377 = vmatpush1.msra.mxu0 0.0
  %2378 = vmatprep.subr.mxu0 0.0
  %2379 = vmatpush1.msra.mxu0 0.0
  %2380 = vmatprep.subr.mxu0 0.0
  %2381 = vmatpush1.msra.mxu0 0.0
  %2382 = vmatprep.mubr.f32.mxu0 0.0
  %v2383 = vand.u32 %v2300, 4294901760
  %v2384 = vsub.f32 %v2300, %v2383
  %v2385 = vand.u32 %v2384, 4294901760
  %v2386 = vsub.f32 %v2384, %v2385
  %v2387 = vand.u32 %v2386, 4294901760
  %2388 = vmatmul.mubr.f32.gmra.mrb[0].mxu0 %v2387
  %v2389 = vpop.f32.mrb[0].mxu0
  %v2390 = vadd.f32 1e-30, %v2389
  %v2391 = vpop.f32.mrb[0].mxu0
  %2392 = vdwg.mxu0
  %2393 = vmatprep.subr.mxu0 0.0
  %v2394 = vand.u32 %v47, 4294901760
  %v2395 = vsub.f32 %v47, %v2394
  %v2396 = vand.u32 %v2395, 4294901760
  %v2397 = vsub.f32 %v2395, %v2396
  %v2398 = vand.u32 %v2397, 4294901760
  %2399 = vmatpush1.msra.mxu0 %v2398
  %2400 = vmatprep.subr.mxu0 0.0
  %v2401 = vand.u32 %v48, 4294901760
  %v2402 = vsub.f32 %v48, %v2401
  %v2403 = vand.u32 %v2402, 4294901760
  %v2404 = vsub.f32 %v2402, %v2403
  %v2405 = vand.u32 %v2404, 4294901760
  %2406 = vmatpush1.msra.mxu0 %v2405
  %2407 = vmatprep.subr.mxu0 0.0
  %v2408 = vand.u32 %v49, 4294901760
  %v2409 = vsub.f32 %v49, %v2408
  %v2410 = vand.u32 %v2409, 4294901760
  %v2411 = vsub.f32 %v2409, %v2410
  %v2412 = vand.u32 %v2411, 4294901760
  %2413 = vmatpush1.msra.mxu0 %v2412
  %2414 = vmatprep.subr.mxu0 0.0
  %v2415 = vand.u32 %v50, 4294901760
  %v2416 = vsub.f32 %v50, %v2415
  %v2417 = vand.u32 %v2416, 4294901760
  %v2418 = vsub.f32 %v2416, %v2417
  %v2419 = vand.u32 %v2418, 4294901760
  %2420 = vmatpush1.msra.mxu0 %v2419
  %2421 = vmatprep.subr.mxu0 0.0
  %v2422 = vand.u32 %v51, 4294901760
  %v2423 = vsub.f32 %v51, %v2422
  %v2424 = vand.u32 %v2423, 4294901760
  %v2425 = vsub.f32 %v2423, %v2424
  %v2426 = vand.u32 %v2425, 4294901760
  %2427 = vmatpush1.msra.mxu0 %v2426
  %2428 = vmatprep.subr.mxu0 0.0
  %v2429 = vand.u32 %v52, 4294901760
  %v2430 = vsub.f32 %v52, %v2429
  %v2431 = vand.u32 %v2430, 4294901760
  %v2432 = vsub.f32 %v2430, %v2431
  %v2433 = vand.u32 %v2432, 4294901760
  %2434 = vmatpush1.msra.mxu0 %v2433
  %2435 = vmatprep.subr.mxu0 0.0
  %v2436 = vand.u32 %v53, 4294901760
  %v2437 = vsub.f32 %v53, %v2436
  %v2438 = vand.u32 %v2437, 4294901760
  %v2439 = vsub.f32 %v2437, %v2438
  %v2440 = vand.u32 %v2439, 4294901760
  %2441 = vmatpush1.msra.mxu0 %v2440
  %2442 = vmatprep.subr.mxu0 0.0
  %v2443 = vand.u32 %v54, 4294901760
  %v2444 = vsub.f32 %v54, %v2443
  %v2445 = vand.u32 %v2444, 4294901760
  %v2446 = vsub.f32 %v2444, %v2445
  %v2447 = vand.u32 %v2446, 4294901760
  %2448 = vmatpush1.msra.mxu0 %v2447
  %2449 = vmatprep.subr.mxu0 0.0
  %v2450 = vand.u32 %v55, 4294901760
  %v2451 = vsub.f32 %v55, %v2450
  %v2452 = vand.u32 %v2451, 4294901760
  %v2453 = vsub.f32 %v2451, %v2452
  %v2454 = vand.u32 %v2453, 4294901760
  %2455 = vmatpush1.msra.mxu0 %v2454
  %2456 = vmatprep.subr.mxu0 0.0
  %v2457 = vand.u32 %v56, 4294901760
  %v2458 = vsub.f32 %v56, %v2457
  %v2459 = vand.u32 %v2458, 4294901760
  %v2460 = vsub.f32 %v2458, %v2459
  %v2461 = vand.u32 %v2460, 4294901760
  %2462 = vmatpush1.msra.mxu0 %v2461
  %2463 = vmatprep.subr.mxu0 0.0
  %v2464 = vand.u32 %v57, 4294901760
  %v2465 = vsub.f32 %v57, %v2464
  %v2466 = vand.u32 %v2465, 4294901760
  %v2467 = vsub.f32 %v2465, %v2466
  %v2468 = vand.u32 %v2467, 4294901760
  %2469 = vmatpush1.msra.mxu0 %v2468
  %2470 = vmatprep.subr.mxu0 0.0
  %v2471 = vand.u32 %v58, 4294901760
  %v2472 = vsub.f32 %v58, %v2471
  %v2473 = vand.u32 %v2472, 4294901760
  %v2474 = vsub.f32 %v2472, %v2473
  %v2475 = vand.u32 %v2474, 4294901760
  %2476 = vmatpush1.msra.mxu0 %v2475
  %2477 = vmatprep.subr.mxu0 0.0
  %v2478 = vand.u32 %v59, 4294901760
  %v2479 = vsub.f32 %v59, %v2478
  %v2480 = vand.u32 %v2479, 4294901760
  %v2481 = vsub.f32 %v2479, %v2480
  %v2482 = vand.u32 %v2481, 4294901760
  %2483 = vmatpush1.msra.mxu0 %v2482
  %2484 = vmatprep.subr.mxu0 0.0
  %v2485 = vand.u32 %v60, 4294901760
  %v2486 = vsub.f32 %v60, %v2485
  %v2487 = vand.u32 %v2486, 4294901760
  %v2488 = vsub.f32 %v2486, %v2487
  %v2489 = vand.u32 %v2488, 4294901760
  %2490 = vmatpush1.msra.mxu0 %v2489
  %2491 = vmatprep.subr.mxu0 0.0
  %v2492 = vand.u32 %v61, 4294901760
  %v2493 = vsub.f32 %v61, %v2492
  %v2494 = vand.u32 %v2493, 4294901760
  %v2495 = vsub.f32 %v2493, %v2494
  %v2496 = vand.u32 %v2495, 4294901760
  %2497 = vmatpush1.msra.mxu0 %v2496
  %2498 = vmatprep.subr.mxu0 0.0
  %v2499 = vand.u32 %v62, 4294901760
  %v2500 = vsub.f32 %v62, %v2499
  %v2501 = vand.u32 %v2500, 4294901760
  %v2502 = vsub.f32 %v2500, %v2501
  %v2503 = vand.u32 %v2502, 4294901760
  %2504 = vmatpush1.msra.mxu0 %v2503
  %2505 = vmatprep.subr.mxu0 0.0
  %2506 = vmatpush1.msra.mxu0 0.0
  %2507 = vmatprep.subr.mxu0 0.0
  %2508 = vmatpush1.msra.mxu0 0.0
  %2509 = vmatprep.subr.mxu0 0.0
  %2510 = vmatpush1.msra.mxu0 0.0
  %2511 = vmatprep.subr.mxu0 0.0
  %2512 = vmatpush1.msra.mxu0 0.0
  %2513 = vmatprep.subr.mxu0 0.0
  %2514 = vmatpush1.msra.mxu0 0.0
  %2515 = vmatprep.subr.mxu0 0.0
  %2516 = vmatpush1.msra.mxu0 0.0
  %2517 = vmatprep.subr.mxu0 0.0
  %2518 = vmatpush1.msra.mxu0 0.0
  %2519 = vmatprep.subr.mxu0 0.0
  %2520 = vmatpush1.msra.mxu0 0.0
  %2521 = vmatprep.subr.mxu0 0.0
  %2522 = vmatpush1.msra.mxu0 0.0
  %2523 = vmatprep.subr.mxu0 0.0
  %2524 = vmatpush1.msra.mxu0 0.0
  %2525 = vmatprep.subr.mxu0 0.0
  %2526 = vmatpush1.msra.mxu0 0.0
  %2527 = vmatprep.subr.mxu0 0.0
  %2528 = vmatpush1.msra.mxu0 0.0
  %2529 = vmatprep.subr.mxu0 0.0
  %2530 = vmatpush1.msra.mxu0 0.0
  %2531 = vmatprep.subr.mxu0 0.0
  %2532 = vmatpush1.msra.mxu0 0.0
  %2533 = vmatprep.subr.mxu0 0.0
  %2534 = vmatpush1.msra.mxu0 0.0
  %2535 = vmatprep.subr.mxu0 0.0
  %2536 = vmatpush1.msra.mxu0 0.0
  %2537 = vmatprep.mubr.f32.mxu0 0.0
  %v2538 = vand.u32 %v2300, 4294901760
  %2539 = vmatmul.mubr.f32.gmra.mrb[0].mxu0 %v2538
  %v2540 = vpop.f32.mrb[0].mxu0
  %v2541 = vadd.f32 %v2390, %v2540
  %v2542 = vpop.f32.mrb[0].mxu0
  %2543 = vdwg.mxu0
  %2544 = vmatprep.subr.mxu0 0.0
  %v2545 = vand.u32 %v47, 4294901760
  %v2546 = vsub.f32 %v47, %v2545
  %2547 = vmatpush1.msra.mxu0 %v2546
  %2548 = vmatprep.subr.mxu0 0.0
  %v2549 = vand.u32 %v48, 4294901760
  %v2550 = vsub.f32 %v48, %v2549
  %2551 = vmatpush1.msra.mxu0 %v2550
  %2552 = vmatprep.subr.mxu0 0.0
  %v2553 = vand.u32 %v49, 4294901760
  %v2554 = vsub.f32 %v49, %v2553
  %2555 = vmatpush1.msra.mxu0 %v2554
  %2556 = vmatprep.subr.mxu0 0.0
  %v2557 = vand.u32 %v50, 4294901760
  %v2558 = vsub.f32 %v50, %v2557
  %2559 = vmatpush1.msra.mxu0 %v2558
  %2560 = vmatprep.subr.mxu0 0.0
  %v2561 = vand.u32 %v51, 4294901760
  %v2562 = vsub.f32 %v51, %v2561
  %2563 = vmatpush1.msra.mxu0 %v2562
  %2564 = vmatprep.subr.mxu0 0.0
  %v2565 = vand.u32 %v52, 4294901760
  %v2566 = vsub.f32 %v52, %v2565
  %2567 = vmatpush1.msra.mxu0 %v2566
  %2568 = vmatprep.subr.mxu0 0.0
  %v2569 = vand.u32 %v53, 4294901760
  %v2570 = vsub.f32 %v53, %v2569
  %2571 = vmatpush1.msra.mxu0 %v2570
  %2572 = vmatprep.subr.mxu0 0.0
  %v2573 = vand.u32 %v54, 4294901760
  %v2574 = vsub.f32 %v54, %v2573
  %2575 = vmatpush1.msra.mxu0 %v2574
  %2576 = vmatprep.subr.mxu0 0.0
  %v2577 = vand.u32 %v55, 4294901760
  %v2578 = vsub.f32 %v55, %v2577
  %2579 = vmatpush1.msra.mxu0 %v2578
  %2580 = vmatprep.subr.mxu0 0.0
  %v2581 = vand.u32 %v56, 4294901760
  %v2582 = vsub.f32 %v56, %v2581
  %2583 = vmatpush1.msra.mxu0 %v2582
  %2584 = vmatprep.subr.mxu0 0.0
  %v2585 = vand.u32 %v57, 4294901760
  %v2586 = vsub.f32 %v57, %v2585
  %2587 = vmatpush1.msra.mxu0 %v2586
  %2588 = vmatprep.subr.mxu0 0.0
  %v2589 = vand.u32 %v58, 4294901760
  %v2590 = vsub.f32 %v58, %v2589
  %2591 = vmatpush1.msra.mxu0 %v2590
  %2592 = vmatprep.subr.mxu0 0.0
  %v2593 = vand.u32 %v59, 4294901760
  %v2594 = vsub.f32 %v59, %v2593
  %2595 = vmatpush1.msra.mxu0 %v2594
  %2596 = vmatprep.subr.mxu0 0.0
  %v2597 = vand.u32 %v60, 4294901760
  %v2598 = vsub.f32 %v60, %v2597
  %2599 = vmatpush1.msra.mxu0 %v2598
  %2600 = vmatprep.subr.mxu0 0.0
  %v2601 = vand.u32 %v61, 4294901760
  %v2602 = vsub.f32 %v61, %v2601
  %2603 = vmatpush1.msra.mxu0 %v2602
  %2604 = vmatprep.subr.mxu0 0.0
  %v2605 = vand.u32 %v62, 4294901760
  %v2606 = vsub.f32 %v62, %v2605
  %2607 = vmatpush1.msra.mxu0 %v2606
  %2608 = vmatprep.subr.mxu0 0.0
  %2609 = vmatpush1.msra.mxu0 0.0
  %2610 = vmatprep.subr.mxu0 0.0
  %2611 = vmatpush1.msra.mxu0 0.0
  %2612 = vmatprep.subr.mxu0 0.0
  %2613 = vmatpush1.msra.mxu0 0.0
  %2614 = vmatprep.subr.mxu0 0.0
  %2615 = vmatpush1.msra.mxu0 0.0
  %2616 = vmatprep.subr.mxu0 0.0
  %2617 = vmatpush1.msra.mxu0 0.0
  %2618 = vmatprep.subr.mxu0 0.0
  %2619 = vmatpush1.msra.mxu0 0.0
  %2620 = vmatprep.subr.mxu0 0.0
  %2621 = vmatpush1.msra.mxu0 0.0
  %2622 = vmatprep.subr.mxu0 0.0
  %2623 = vmatpush1.msra.mxu0 0.0
  %2624 = vmatprep.subr.mxu0 0.0
  %2625 = vmatpush1.msra.mxu0 0.0
  %2626 = vmatprep.subr.mxu0 0.0
  %2627 = vmatpush1.msra.mxu0 0.0
  %2628 = vmatprep.subr.mxu0 0.0
  %2629 = vmatpush1.msra.mxu0 0.0
  %2630 = vmatprep.subr.mxu0 0.0
  %2631 = vmatpush1.msra.mxu0 0.0
  %2632 = vmatprep.subr.mxu0 0.0
  %2633 = vmatpush1.msra.mxu0 0.0
  %2634 = vmatprep.subr.mxu0 0.0
  %2635 = vmatpush1.msra.mxu0 0.0
  %2636 = vmatprep.subr.mxu0 0.0
  %2637 = vmatpush1.msra.mxu0 0.0
  %2638 = vmatprep.subr.mxu0 0.0
  %2639 = vmatpush1.msra.mxu0 0.0
  %2640 = vmatprep.mubr.f32.mxu0 0.0
  %v2641 = vand.u32 %v2300, 4294901760
  %v2642 = vsub.f32 %v2300, %v2641
  %2643 = vmatmul.mubr.f32.gmra.mrb[0].mxu0 %v2642
  %v2644 = vpop.f32.mrb[0].mxu0
  %v2645 = vadd.f32 %v2541, %v2644
  %v2646 = vpop.f32.mrb[0].mxu0
  %2647 = vdwg.mxu0
  %2648 = vmatprep.subr.mxu0 0.0
  %v2649 = vand.u32 %v47, 4294901760
  %2650 = vmatpush1.msra.mxu0 %v2649
  %2651 = vmatprep.subr.mxu0 0.0
  %v2652 = vand.u32 %v48, 4294901760
  %2653 = vmatpush1.msra.mxu0 %v2652
  %2654 = vmatprep.subr.mxu0 0.0
  %v2655 = vand.u32 %v49, 4294901760
  %2656 = vmatpush1.msra.mxu0 %v2655
  %2657 = vmatprep.subr.mxu0 0.0
  %v2658 = vand.u32 %v50, 4294901760
  %2659 = vmatpush1.msra.mxu0 %v2658
  %2660 = vmatprep.subr.mxu0 0.0
  %v2661 = vand.u32 %v51, 4294901760
  %2662 = vmatpush1.msra.mxu0 %v2661
  %2663 = vmatprep.subr.mxu0 0.0
  %v2664 = vand.u32 %v52, 4294901760
  %2665 = vmatpush1.msra.mxu0 %v2664
  %2666 = vmatprep.subr.mxu0 0.0
  %v2667 = vand.u32 %v53, 4294901760
  %2668 = vmatpush1.msra.mxu0 %v2667
  %2669 = vmatprep.subr.mxu0 0.0
  %v2670 = vand.u32 %v54, 4294901760
  %2671 = vmatpush1.msra.mxu0 %v2670
  %2672 = vmatprep.subr.mxu0 0.0
  %v2673 = vand.u32 %v55, 4294901760
  %2674 = vmatpush1.msra.mxu0 %v2673
  %2675 = vmatprep.subr.mxu0 0.0
  %v2676 = vand.u32 %v56, 4294901760
  %2677 = vmatpush1.msra.mxu0 %v2676
  %2678 = vmatprep.subr.mxu0 0.0
  %v2679 = vand.u32 %v57, 4294901760
  %2680 = vmatpush1.msra.mxu0 %v2679
  %2681 = vmatprep.subr.mxu0 0.0
  %v2682 = vand.u32 %v58, 4294901760
  %2683 = vmatpush1.msra.mxu0 %v2682
  %2684 = vmatprep.subr.mxu0 0.0
  %v2685 = vand.u32 %v59, 4294901760
  %2686 = vmatpush1.msra.mxu0 %v2685
  %2687 = vmatprep.subr.mxu0 0.0
  %v2688 = vand.u32 %v60, 4294901760
  %2689 = vmatpush1.msra.mxu0 %v2688
  %2690 = vmatprep.subr.mxu0 0.0
  %v2691 = vand.u32 %v61, 4294901760
  %2692 = vmatpush1.msra.mxu0 %v2691
  %2693 = vmatprep.subr.mxu0 0.0
  %v2694 = vand.u32 %v62, 4294901760
  %2695 = vmatpush1.msra.mxu0 %v2694
  %2696 = vmatprep.subr.mxu0 0.0
  %2697 = vmatpush1.msra.mxu0 0.0
  %2698 = vmatprep.subr.mxu0 0.0
  %2699 = vmatpush1.msra.mxu0 0.0
  %2700 = vmatprep.subr.mxu0 0.0
  %2701 = vmatpush1.msra.mxu0 0.0
  %2702 = vmatprep.subr.mxu0 0.0
  %2703 = vmatpush1.msra.mxu0 0.0
  %2704 = vmatprep.subr.mxu0 0.0
  %2705 = vmatpush1.msra.mxu0 0.0
  %2706 = vmatprep.subr.mxu0 0.0
  %2707 = vmatpush1.msra.mxu0 0.0
  %2708 = vmatprep.subr.mxu0 0.0
  %2709 = vmatpush1.msra.mxu0 0.0
  %2710 = vmatprep.subr.mxu0 0.0
  %2711 = vmatpush1.msra.mxu0 0.0
  %2712 = vmatprep.subr.mxu0 0.0
  %2713 = vmatpush1.msra.mxu0 0.0
  %2714 = vmatprep.subr.mxu0 0.0
  %2715 = vmatpush1.msra.mxu0 0.0
  %2716 = vmatprep.subr.mxu0 0.0
  %2717 = vmatpush1.msra.mxu0 0.0
  %2718 = vmatprep.subr.mxu0 0.0
  %2719 = vmatpush1.msra.mxu0 0.0
  %2720 = vmatprep.subr.mxu0 0.0
  %2721 = vmatpush1.msra.mxu0 0.0
  %2722 = vmatprep.subr.mxu0 0.0
  %2723 = vmatpush1.msra.mxu0 0.0
  %2724 = vmatprep.subr.mxu0 0.0
  %2725 = vmatpush1.msra.mxu0 0.0
  %2726 = vmatprep.subr.mxu0 0.0
  %2727 = vmatpush1.msra.mxu0 0.0
  %2728 = vmatprep.mubr.f32.mxu0 0.0
  %v2729 = vand.u32 %v2300, 4294901760
  %v2730 = vsub.f32 %v2300, %v2729
  %v2731 = vand.u32 %v2730, 4294901760
  %2732 = vmatmul.mubr.f32.gmra.mrb[0].mxu0 %v2731
  %v2733 = vpop.f32.mrb[0].mxu0
  %v2734 = vadd.f32 %v2645, %v2733
  %v2735 = vpop.f32.mrb[0].mxu0
  %2736 = vdwg.mxu0
  %2737 = vmatprep.subr.mxu0 0.0
  %v2738 = vand.u32 %v47, 4294901760
  %v2739 = vsub.f32 %v47, %v2738
  %v2740 = vand.u32 %v2739, 4294901760
  %2741 = vmatpush1.msra.mxu0 %v2740
  %2742 = vmatprep.subr.mxu0 0.0
  %v2743 = vand.u32 %v48, 4294901760
  %v2744 = vsub.f32 %v48, %v2743
  %v2745 = vand.u32 %v2744, 4294901760
  %2746 = vmatpush1.msra.mxu0 %v2745
  %2747 = vmatprep.subr.mxu0 0.0
  %v2748 = vand.u32 %v49, 4294901760
  %v2749 = vsub.f32 %v49, %v2748
  %v2750 = vand.u32 %v2749, 4294901760
  %2751 = vmatpush1.msra.mxu0 %v2750
  %2752 = vmatprep.subr.mxu0 0.0
  %v2753 = vand.u32 %v50, 4294901760
  %v2754 = vsub.f32 %v50, %v2753
  %v2755 = vand.u32 %v2754, 4294901760
  %2756 = vmatpush1.msra.mxu0 %v2755
  %2757 = vmatprep.subr.mxu0 0.0
  %v2758 = vand.u32 %v51, 4294901760
  %v2759 = vsub.f32 %v51, %v2758
  %v2760 = vand.u32 %v2759, 4294901760
  %2761 = vmatpush1.msra.mxu0 %v2760
  %2762 = vmatprep.subr.mxu0 0.0
  %v2763 = vand.u32 %v52, 4294901760
  %v2764 = vsub.f32 %v52, %v2763
  %v2765 = vand.u32 %v2764, 4294901760
  %2766 = vmatpush1.msra.mxu0 %v2765
  %2767 = vmatprep.subr.mxu0 0.0
  %v2768 = vand.u32 %v53, 4294901760
  %v2769 = vsub.f32 %v53, %v2768
  %v2770 = vand.u32 %v2769, 4294901760
  %2771 = vmatpush1.msra.mxu0 %v2770
  %2772 = vmatprep.subr.mxu0 0.0
  %v2773 = vand.u32 %v54, 4294901760
  %v2774 = vsub.f32 %v54, %v2773
  %v2775 = vand.u32 %v2774, 4294901760
  %2776 = vmatpush1.msra.mxu0 %v2775
  %2777 = vmatprep.subr.mxu0 0.0
  %v2778 = vand.u32 %v55, 4294901760
  %v2779 = vsub.f32 %v55, %v2778
  %v2780 = vand.u32 %v2779, 4294901760
  %2781 = vmatpush1.msra.mxu0 %v2780
  %2782 = vmatprep.subr.mxu0 0.0
  %v2783 = vand.u32 %v56, 4294901760
  %v2784 = vsub.f32 %v56, %v2783
  %v2785 = vand.u32 %v2784, 4294901760
  %2786 = vmatpush1.msra.mxu0 %v2785
  %2787 = vmatprep.subr.mxu0 0.0
  %v2788 = vand.u32 %v57, 4294901760
  %v2789 = vsub.f32 %v57, %v2788
  %v2790 = vand.u32 %v2789, 4294901760
  %2791 = vmatpush1.msra.mxu0 %v2790
  %2792 = vmatprep.subr.mxu0 0.0
  %v2793 = vand.u32 %v58, 4294901760
  %v2794 = vsub.f32 %v58, %v2793
  %v2795 = vand.u32 %v2794, 4294901760
  %2796 = vmatpush1.msra.mxu0 %v2795
  %2797 = vmatprep.subr.mxu0 0.0
  %v2798 = vand.u32 %v59, 4294901760
  %v2799 = vsub.f32 %v59, %v2798
  %v2800 = vand.u32 %v2799, 4294901760
  %2801 = vmatpush1.msra.mxu0 %v2800
  %2802 = vmatprep.subr.mxu0 0.0
  %v2803 = vand.u32 %v60, 4294901760
  %v2804 = vsub.f32 %v60, %v2803
  %v2805 = vand.u32 %v2804, 4294901760
  %2806 = vmatpush1.msra.mxu0 %v2805
  %2807 = vmatprep.subr.mxu0 0.0
  %v2808 = vand.u32 %v61, 4294901760
  %v2809 = vsub.f32 %v61, %v2808
  %v2810 = vand.u32 %v2809, 4294901760
  %2811 = vmatpush1.msra.mxu0 %v2810
  %2812 = vmatprep.subr.mxu0 0.0
  %v2813 = vand.u32 %v62, 4294901760
  %v2814 = vsub.f32 %v62, %v2813
  %v2815 = vand.u32 %v2814, 4294901760
  %2816 = vmatpush1.msra.mxu0 %v2815
  %2817 = vmatprep.subr.mxu0 0.0
  %2818 = vmatpush1.msra.mxu0 0.0
  %2819 = vmatprep.subr.mxu0 0.0
  %2820 = vmatpush1.msra.mxu0 0.0
  %2821 = vmatprep.subr.mxu0 0.0
  %2822 = vmatpush1.msra.mxu0 0.0
  %2823 = vmatprep.subr.mxu0 0.0
  %2824 = vmatpush1.msra.mxu0 0.0
  %2825 = vmatprep.subr.mxu0 0.0
  %2826 = vmatpush1.msra.mxu0 0.0
  %2827 = vmatprep.subr.mxu0 0.0
  %2828 = vmatpush1.msra.mxu0 0.0
  %2829 = vmatprep.subr.mxu0 0.0
  %2830 = vmatpush1.msra.mxu0 0.0
  %2831 = vmatprep.subr.mxu0 0.0
  %2832 = vmatpush1.msra.mxu0 0.0
  %2833 = vmatprep.subr.mxu0 0.0
  %2834 = vmatpush1.msra.mxu0 0.0
  %2835 = vmatprep.subr.mxu0 0.0
  %2836 = vmatpush1.msra.mxu0 0.0
  %2837 = vmatprep.subr.mxu0 0.0
  %2838 = vmatpush1.msra.mxu0 0.0
  %2839 = vmatprep.subr.mxu0 0.0
  %2840 = vmatpush1.msra.mxu0 0.0
  %2841 = vmatprep.subr.mxu0 0.0
  %2842 = vmatpush1.msra.mxu0 0.0
  %2843 = vmatprep.subr.mxu0 0.0
  %2844 = vmatpush1.msra.mxu0 0.0
  %2845 = vmatprep.subr.mxu0 0.0
  %2846 = vmatpush1.msra.mxu0 0.0
  %2847 = vmatprep.subr.mxu0 0.0
  %2848 = vmatpush1.msra.mxu0 0.0
  %2849 = vmatprep.mubr.f32.mxu0 0.0
  %v2850 = vand.u32 %v2300, 4294901760
  %2851 = vmatmul.mubr.f32.gmra.mrb[0].mxu0 %v2850
  %v2852 = vpop.f32.mrb[0].mxu0
  %v2853 = vadd.f32 %v2734, %v2852
  %v2854 = vpop.f32.mrb[0].mxu0
  %2855 = vdwg.mxu0
  %2856 = vmatprep.subr.mxu0 0.0
  %v2857 = vand.u32 %v47, 4294901760
  %2858 = vmatpush1.msra.mxu0 %v2857
  %2859 = vmatprep.subr.mxu0 0.0
  %v2860 = vand.u32 %v48, 4294901760
  %2861 = vmatpush1.msra.mxu0 %v2860
  %2862 = vmatprep.subr.mxu0 0.0
  %v2863 = vand.u32 %v49, 4294901760
  %2864 = vmatpush1.msra.mxu0 %v2863
  %2865 = vmatprep.subr.mxu0 0.0
  %v2866 = vand.u32 %v50, 4294901760
  %2867 = vmatpush1.msra.mxu0 %v2866
  %2868 = vmatprep.subr.mxu0 0.0
  %v2869 = vand.u32 %v51, 4294901760
  %2870 = vmatpush1.msra.mxu0 %v2869
  %2871 = vmatprep.subr.mxu0 0.0
  %v2872 = vand.u32 %v52, 4294901760
  %2873 = vmatpush1.msra.mxu0 %v2872
  %2874 = vmatprep.subr.mxu0 0.0
  %v2875 = vand.u32 %v53, 4294901760
  %2876 = vmatpush1.msra.mxu0 %v2875
  %2877 = vmatprep.subr.mxu0 0.0
  %v2878 = vand.u32 %v54, 4294901760
  %2879 = vmatpush1.msra.mxu0 %v2878
  %2880 = vmatprep.subr.mxu0 0.0
  %v2881 = vand.u32 %v55, 4294901760
  %2882 = vmatpush1.msra.mxu0 %v2881
  %2883 = vmatprep.subr.mxu0 0.0
  %v2884 = vand.u32 %v56, 4294901760
  %2885 = vmatpush1.msra.mxu0 %v2884
  %2886 = vmatprep.subr.mxu0 0.0
  %v2887 = vand.u32 %v57, 4294901760
  %2888 = vmatpush1.msra.mxu0 %v2887
  %2889 = vmatprep.subr.mxu0 0.0
  %v2890 = vand.u32 %v58, 4294901760
  %2891 = vmatpush1.msra.mxu0 %v2890
  %2892 = vmatprep.subr.mxu0 0.0
  %v2893 = vand.u32 %v59, 4294901760
  %2894 = vmatpush1.msra.mxu0 %v2893
  %2895 = vmatprep.subr.mxu0 0.0
  %v2896 = vand.u32 %v60, 4294901760
  %2897 = vmatpush1.msra.mxu0 %v2896
  %2898 = vmatprep.subr.mxu0 0.0
  %v2899 = vand.u32 %v61, 4294901760
  %2900 = vmatpush1.msra.mxu0 %v2899
  %2901 = vmatprep.subr.mxu0 0.0
  %v2902 = vand.u32 %v62, 4294901760
  %2903 = vmatpush1.msra.mxu0 %v2902
  %2904 = vmatprep.subr.mxu0 0.0
  %2905 = vmatpush1.msra.mxu0 0.0
  %2906 = vmatprep.subr.mxu0 0.0
  %2907 = vmatpush1.msra.mxu0 0.0
  %2908 = vmatprep.subr.mxu0 0.0
  %2909 = vmatpush1.msra.mxu0 0.0
  %2910 = vmatprep.subr.mxu0 0.0
  %2911 = vmatpush1.msra.mxu0 0.0
  %2912 = vmatprep.subr.mxu0 0.0
  %2913 = vmatpush1.msra.mxu0 0.0
  %2914 = vmatprep.subr.mxu0 0.0
  %2915 = vmatpush1.msra.mxu0 0.0
  %2916 = vmatprep.subr.mxu0 0.0
  %2917 = vmatpush1.msra.mxu0 0.0
  %2918 = vmatprep.subr.mxu0 0.0
  %2919 = vmatpush1.msra.mxu0 0.0
  %2920 = vmatprep.subr.mxu0 0.0
  %2921 = vmatpush1.msra.mxu0 0.0
  %2922 = vmatprep.subr.mxu0 0.0
  %2923 = vmatpush1.msra.mxu0 0.0
  %2924 = vmatprep.subr.mxu0 0.0
  %2925 = vmatpush1.msra.mxu0 0.0
  %2926 = vmatprep.subr.mxu0 0.0
  %2927 = vmatpush1.msra.mxu0 0.0
  %2928 = vmatprep.subr.mxu0 0.0
  %2929 = vmatpush1.msra.mxu0 0.0
  %2930 = vmatprep.subr.mxu0 0.0
  %2931 = vmatpush1.msra.mxu0 0.0
  %2932 = vmatprep.subr.mxu0 0.0
  %2933 = vmatpush1.msra.mxu0 0.0
  %2934 = vmatprep.subr.mxu0 0.0
  %2935 = vmatpush1.msra.mxu0 0.0
  %2936 = vmatprep.mubr.f32.mxu0 0.0
  %v2937 = vand.u32 %v2300, 4294901760
  %2938 = vmatmul.mubr.f32.gmra.mrb[0].mxu0 %v2937
  %v2939 = vpop.f32.mrb[0].mxu0
  %v2940 = vadd.f32 %v2853, %v2939
  %v2941 = vpop.f32.mrb[0].mxu0
  %2942 = vdwg.mxu0
  %v2943 = vlog2.pop %v2940
  %v2944 = vmul.f32 %v2943, 0.6931472
  %v2945 = vadd.f32 %v2278, %v2944
  %v2946 = vadd.f32 %v2945, %v2098
  %v2947 = vsel %vm2107, 1, 0
  %v2948 = vsel %vm2108, 1, 0
  %v2949 = vsel %vm2109, 1, 0
  %v2950 = vsel %vm2110, 1, 0
  %v2951 = vsel %vm2111, 1, 0
  %v2952 = vsel %vm2112, 1, 0
  %v2953 = vsel %vm2113, 1, 0
  %v2954 = vsel %vm2114, 1, 0
  %2955 = vset.pattern.permute.xlu0 0
  %2956 = vperm.xlu0 %2955, %v2947
  %v2957 = vpop.permute.xlu0 %2956
  %2958 = vset.pattern.permute.xlu0 0
  %2959 = vperm.xlu0 %2958, %v2948
  %v2960 = vpop.permute.xlu0 %2959
  %2961 = vset.pattern.permute.xlu0 0
  %2962 = vperm.xlu0 %2961, %v2949
  %v2963 = vpop.permute.xlu0 %2962
  %2964 = vset.pattern.permute.xlu0 0
  %2965 = vperm.xlu0 %2964, %v2950
  %v2966 = vpop.permute.xlu0 %2965
  %2967 = vset.pattern.permute.xlu0 0
  %2968 = vperm.xlu0 %2967, %v2951
  %v2969 = vpop.permute.xlu0 %2968
  %2970 = vset.pattern.permute.xlu0 0
  %2971 = vperm.xlu0 %2970, %v2952
  %v2972 = vpop.permute.xlu0 %2971
  %2973 = vset.pattern.permute.xlu0 0
  %2974 = vperm.xlu0 %2973, %v2953
  %v2975 = vpop.permute.xlu0 %2974
  %2976 = vset.pattern.permute.xlu0 0
  %2977 = vperm.xlu0 %2976, %v2954
  %v2978 = vpop.permute.xlu0 %2977
  %vm2979 = vcmp.eq.s32.totalorder %v2957, 1
  %vm2980 = vcmp.eq.s32.totalorder %v2960, 1
  %vm2981 = vcmp.eq.s32.totalorder %v2963, 1
  %vm2982 = vcmp.eq.s32.totalorder %v2966, 1
  %vm2983 = vcmp.eq.s32.totalorder %v2969, 1
  %vm2984 = vcmp.eq.s32.totalorder %v2972, 1
  %vm2985 = vcmp.eq.s32.totalorder %v2975, 1
  %vm2986 = vcmp.eq.s32.totalorder %v2978, 1
  %v2988 = vrot.slane %v2946, 1
  %v2989 = vrot.slane %v2946, 2
  %v2990 = vrot.slane %v2946, 3
  %v2991 = vrot.slane %v2946, 4
  %v2992 = vrot.slane %v2946, 5
  %v2993 = vrot.slane %v2946, 6
  %v2994 = vrot.slane %v2946, 7
  %v3003 = vsel %vm2979, %v2946, %v2000
  %v3004 = vsel %vm2980, %v2988, %v2001
  %v3005 = vsel %vm2981, %v2989, %v2002
  %v3006 = vsel %vm2982, %v2990, %v2003
  %v3007 = vsel %vm2983, %v2991, %v2004
  %v3008 = vsel %vm2984, %v2992, %v2005
  %v3009 = vsel %vm2985, %v2993, %v2006
  %v3010 = vsel %vm2986, %v2994, %v2007
  %v3011 = vld [vmem:[%s0 + $0x3] sm:$0x1]
  %v3012 = vld [vmem:[%s0 + $0xb] sm:$0x1]
  %v3013 = vld [vmem:[%s0 + $0x13] sm:$0x1]
  %v3014 = vld [vmem:[%s0 + $0x1b] sm:$0x1]
  %v3015 = vld [vmem:[%s0 + $0x23] sm:$0x1]
  %v3016 = vld [vmem:[%s0 + $0x2b] sm:$0x1]
  %v3017 = vld [vmem:[%s0 + $0x33] sm:$0x1]
  %v3018 = vld [vmem:[%s0 + $0x3b] sm:$0x1]
  %v3019 = vpack.c.bf16 %v3011, %v3011
  %v3020 = vpack.c.bf16 %v3012, %v3012
  %v3021 = vpack.c.bf16 %v3013, %v3013
  %v3022 = vpack.c.bf16 %v3014, %v3014
  %v3023 = vpack.c.bf16 %v3015, %v3015
  %v3024 = vpack.c.bf16 %v3016, %v3016
  %v3025 = vpack.c.bf16 %v3017, %v3017
  %v3026 = vpack.c.bf16 %v3018, %v3018
  %v3035 = vunpack.c.l.b16 %v3019
  %v3036 = vunpack.c.l.b16 %v3020
  %v3037 = vunpack.c.l.b16 %v3021
  %v3038 = vunpack.c.l.b16 %v3022
  %v3039 = vunpack.c.l.b16 %v3023
  %v3040 = vunpack.c.l.b16 %v3024
  %v3041 = vunpack.c.l.b16 %v3025
  %v3042 = vunpack.c.l.b16 %v3026
  %v3043 = vrot.slane %v3036, 7
  %v3044 = vsel %vm108, %v3043, %v3035
  %v3045 = vrot.slane %v3037, 6
  %v3046 = vsel %vm111, %v3045, %v3044
  %v3047 = vrot.slane %v3038, 5
  %v3048 = vsel %vm114, %v3047, %v3046
  %v3049 = vrot.slane %v3039, 4
  %v3050 = vsel %vm117, %v3049, %v3048
  %v3051 = vrot.slane %v3040, 3
  %v3052 = vsel %vm120, %v3051, %v3050
  %v3053 = vrot.slane %v3041, 2
  %v3054 = vsel %vm123, %v3053, %v3052
  %v3055 = vrot.slane %v3042, 1
  %v3056 = vsel %vm126, %v3055, %v3054
  %v3057 = vpack.c.b16 %v3056, %v3056
  %v3059 = vsel %vm141, %v3057, 0
  %3061 = vmatprep.subr.bf16.mxu0 0
  %3062 = vmatpush1.bf16.msra.mxu0 %v137
  %3063 = vmatprep.subr.bf16.mxu0 0
  %3064 = vmatpush1.bf16.msra.mxu0 %v138
  %3065 = vmatprep.subr.bf16.mxu0 0
  %3066 = vmatpush1.bf16.msra.mxu0 0
  %3067 = vmatprep.subr.bf16.mxu0 0
  %3068 = vmatpush1.bf16.msra.mxu0 0
  %3069 = vmatprep.subr.bf16.mxu0 0
  %3070 = vmatpush1.bf16.msra.mxu0 0
  %3071 = vmatprep.subr.bf16.mxu0 0
  %3072 = vmatpush1.bf16.msra.mxu0 0
  %3073 = vmatprep.subr.bf16.mxu0 0
  %3074 = vmatpush1.bf16.msra.mxu0 0
  %3075 = vmatprep.subr.bf16.mxu0 0
  %3076 = vmatpush1.bf16.msra.mxu0 0
  %3077 = vmatprep.subr.bf16.mxu0 0
  %3078 = vmatpush1.bf16.msra.mxu0 0
  %3079 = vmatprep.subr.bf16.mxu0 0
  %3080 = vmatpush1.bf16.msra.mxu0 0
  %3081 = vmatprep.subr.bf16.mxu0 0
  %3082 = vmatpush1.bf16.msra.mxu0 0
  %3083 = vmatprep.subr.bf16.mxu0 0
  %3084 = vmatpush1.bf16.msra.mxu0 0
  %3085 = vmatprep.subr.bf16.mxu0 0
  %3086 = vmatpush1.bf16.msra.mxu0 0
  %3087 = vmatprep.subr.bf16.mxu0 0
  %3088 = vmatpush1.bf16.msra.mxu0 0
  %3089 = vmatprep.subr.bf16.mxu0 0
  %3090 = vmatpush1.bf16.msra.mxu0 0
  %3091 = vmatprep.subr.bf16.mxu0 0
  %3092 = vmatpush1.bf16.msra.mxu0 0
  %3093 = vmatprep.mubr.bf16.mxu0 0
  %3094 = vmatmul.mubr.bf16.gmra.mrb[0].mxu0 %v3059
  %v3095 = vpop.f32.mrb[0].mxu0
  %v3096 = vadd.f32 %v89, %v3095
  %v3097 = vpop.f32.mrb[0].mxu0
  %v3098 = vpop.f32.mrb[0].mxu0
  %v3099 = vpop.f32.mrb[0].mxu0
  %3100 = vdwg.mxu0
  %v3101 = vmax.f32 %v3096, 0.0
  %v3102 = vld [vmem:[%s1 + $0x3] sm:$0x1]
  %v3103 = vld [vmem:[%s1 + $0xb] sm:$0x1]
  %v3104 = vld [vmem:[%s1 + $0x13] sm:$0x1]
  %v3105 = vld [vmem:[%s1 + $0x1b] sm:$0x1]
  %v3106 = vld [vmem:[%s1 + $0x23] sm:$0x1]
  %v3107 = vld [vmem:[%s1 + $0x2b] sm:$0x1]
  %v3108 = vld [vmem:[%s1 + $0x33] sm:$0x1]
  %v3109 = vld [vmem:[%s1 + $0x3b] sm:$0x1]
  %vm3110 = vcmp.gt.f32.partialorder %v3102, 0.0
  %vm3111 = vcmp.gt.f32.partialorder %v3103, 0.0
  %vm3112 = vcmp.gt.f32.partialorder %v3104, 0.0
  %vm3113 = vcmp.gt.f32.partialorder %v3105, 0.0
  %vm3114 = vcmp.gt.f32.partialorder %v3106, 0.0
  %vm3115 = vcmp.gt.f32.partialorder %v3107, 0.0
  %vm3116 = vcmp.gt.f32.partialorder %v3108, 0.0
  %vm3117 = vcmp.gt.f32.partialorder %v3109, 0.0
  %v3118 = vld [vmem:[%s2 + $0x3] sm:$0x1]
  %v3119 = vld [vmem:[%s2 + $0xb] sm:$0x1]
  %v3120 = vld [vmem:[%s2 + $0x13] sm:$0x1]
  %v3121 = vld [vmem:[%s2 + $0x1b] sm:$0x1]
  %v3122 = vld [vmem:[%s2 + $0x23] sm:$0x1]
  %v3123 = vld [vmem:[%s2 + $0x2b] sm:$0x1]
  %v3124 = vld [vmem:[%s2 + $0x33] sm:$0x1]
  %v3125 = vld [vmem:[%s2 + $0x3b] sm:$0x1]
  %3126 = vset.pattern.permute.xlu0 0
  %3127 = vperm.xlu0 %3126, %v3118
  %v3128 = vpop.permute.xlu0 %3127
  %3129 = vset.pattern.permute.xlu0 0
  %3130 = vperm.xlu0 %3129, %v3119
  %v3131 = vpop.permute.xlu0 %3130
  %3132 = vset.pattern.permute.xlu0 0
  %3133 = vperm.xlu0 %3132, %v3120
  %v3134 = vpop.permute.xlu0 %3133
  %3135 = vset.pattern.permute.xlu0 0
  %3136 = vperm.xlu0 %3135, %v3121
  %v3137 = vpop.permute.xlu0 %3136
  %3138 = vset.pattern.permute.xlu0 0
  %3139 = vperm.xlu0 %3138, %v3122
  %v3140 = vpop.permute.xlu0 %3139
  %3141 = vset.pattern.permute.xlu0 0
  %3142 = vperm.xlu0 %3141, %v3123
  %v3143 = vpop.permute.xlu0 %3142
  %3144 = vset.pattern.permute.xlu0 0
  %3145 = vperm.xlu0 %3144, %v3124
  %v3146 = vpop.permute.xlu0 %3145
  %3147 = vset.pattern.permute.xlu0 0
  %3148 = vperm.xlu0 %3147, %v3125
  %v3149 = vpop.permute.xlu0 %3148
  %v3150 = vrot.slane %v3131, 7
  %v3151 = vsel %vm108, %v3150, %v3128
  %v3152 = vrot.slane %v3134, 6
  %v3153 = vsel %vm111, %v3152, %v3151
  %v3154 = vrot.slane %v3137, 5
  %v3155 = vsel %vm114, %v3154, %v3153
  %v3156 = vrot.slane %v3140, 4
  %v3157 = vsel %vm117, %v3156, %v3155
  %v3158 = vrot.slane %v3143, 3
  %v3159 = vsel %vm120, %v3158, %v3157
  %v3160 = vrot.slane %v3146, 2
  %v3161 = vsel %vm123, %v3160, %v3159
  %v3162 = vrot.slane %v3149, 1
  %v3163 = vsel %vm126, %v3162, %v3161
  %vm3164 = vcmp.eq.s32.totalorder %v68, %v3163
  %v3165 = vsel %vm3164, %v3101, 0.0
  %3166 = vadd.xlane.f32.xlu0 %v3165
  %v3167 = vpop.xlane.xlu0 %3166
  %v3169 = vrot.slane %v3167, 1
  %v3170 = vrot.slane %v3167, 2
  %v3171 = vrot.slane %v3167, 3
  %v3172 = vrot.slane %v3167, 4
  %v3173 = vrot.slane %v3167, 5
  %v3174 = vrot.slane %v3167, 6
  %v3175 = vrot.slane %v3167, 7
  %v3184 = vsel %vm3110, %v3167, 0.0
  %v3185 = vsel %vm3111, %v3169, 0.0
  %v3186 = vsel %vm3112, %v3170, 0.0
  %v3187 = vsel %vm3113, %v3171, 0.0
  %v3188 = vsel %vm3114, %v3172, 0.0
  %v3189 = vsel %vm3115, %v3173, 0.0
  %v3190 = vsel %vm3116, %v3174, 0.0
  %v3191 = vsel %vm3117, %v3175, 0.0
  %v3200 = vrot.slane %v3185, 7
  %v3201 = vsel %vm108, %v3200, %v3184
  %v3202 = vrot.slane %v3186, 6
  %v3203 = vsel %vm111, %v3202, %v3201
  %v3204 = vrot.slane %v3187, 5
  %v3205 = vsel %vm114, %v3204, %v3203
  %v3206 = vrot.slane %v3188, 4
  %v3207 = vsel %vm117, %v3206, %v3205
  %v3208 = vrot.slane %v3189, 3
  %v3209 = vsel %vm120, %v3208, %v3207
  %v3210 = vrot.slane %v3190, 2
  %v3211 = vsel %vm123, %v3210, %v3209
  %v3212 = vrot.slane %v3191, 1
  %v3213 = vsel %vm126, %v3212, %v3211
  %v3215 = vadd.f32 %v2212, %v3213
  %v3224 = vrot.slane %v3004, 7
  %v3225 = vsel %vm108, %v3224, %v3003
  %v3226 = vrot.slane %v3005, 6
  %v3227 = vsel %vm111, %v3226, %v3225
  %v3228 = vrot.slane %v3006, 5
  %v3229 = vsel %vm114, %v3228, %v3227
  %v3230 = vrot.slane %v3007, 4
  %v3231 = vsel %vm117, %v3230, %v3229
  %v3232 = vrot.slane %v3008, 3
  %v3233 = vsel %vm120, %v3232, %v3231
  %v3234 = vrot.slane %v3009, 2
  %v3235 = vsel %vm123, %v3234, %v3233
  %v3236 = vrot.slane %v3010, 1
  %v3237 = vsel %vm126, %v3236, %v3235
  %3239 = vmax.xlane.f32.xlu0 %v3237
  %v3240 = vpop.xlane.xlu0 %3239
  %v3242 = vrot.slane %v3240, 1
  %v3243 = vrot.slane %v3240, 2
  %v3244 = vrot.slane %v3240, 3
  %v3245 = vrot.slane %v3240, 4
  %v3246 = vrot.slane %v3240, 5
  %v3247 = vrot.slane %v3240, 6
  %v3248 = vrot.slane %v3240, 7
  %v3257 = vsub.f32 %v3003, %v3240
  %v3258 = vsub.f32 %v3004, %v3242
  %v3259 = vsub.f32 %v3005, %v3243
  %v3260 = vsub.f32 %v3006, %v3244
  %v3261 = vsub.f32 %v3007, %v3245
  %v3262 = vsub.f32 %v3008, %v3246
  %v3263 = vsub.f32 %v3009, %v3247
  %v3264 = vsub.f32 %v3010, %v3248
  %v3265 = vmul.f32 %v3257, 1.442695
  %v3266 = vpow.pop %v3265
  %v3267 = vmul.f32 %v3258, 1.442695
  %v3268 = vpow.pop %v3267
  %v3269 = vmul.f32 %v3259, 1.442695
  %v3270 = vpow.pop %v3269
  %v3271 = vmul.f32 %v3260, 1.442695
  %v3272 = vpow.pop %v3271
  %v3273 = vmul.f32 %v3261, 1.442695
  %v3274 = vpow.pop %v3273
  %v3275 = vmul.f32 %v3262, 1.442695
  %v3276 = vpow.pop %v3275
  %v3277 = vmul.f32 %v3263, 1.442695
  %v3278 = vpow.pop %v3277
  %v3279 = vmul.f32 %v3264, 1.442695
  %v3280 = vpow.pop %v3279
  %v3281 = vadd.f32 %v3240, %v313
  %v3290 = vrot.slane %v3268, 7
  %v3291 = vsel %vm108, %v3290, %v3266
  %v3292 = vrot.slane %v3270, 6
  %v3293 = vsel %vm111, %v3292, %v3291
  %v3294 = vrot.slane %v3272, 5
  %v3295 = vsel %vm114, %v3294, %v3293
  %v3296 = vrot.slane %v3274, 4
  %v3297 = vsel %vm117, %v3296, %v3295
  %v3298 = vrot.slane %v3276, 3
  %v3299 = vsel %vm120, %v3298, %v3297
  %v3300 = vrot.slane %v3278, 2
  %v3301 = vsel %vm123, %v3300, %v3299
  %v3302 = vrot.slane %v3280, 1
  %v3303 = vsel %vm126, %v3302, %v3301
  %3305 = vmatprep.subr.mxu0 0.0
  %v3306 = vand.u32 %v47, 4294901760
  %3307 = vmatpush1.msra.mxu0 %v3306
  %3308 = vmatprep.subr.mxu0 0.0
  %v3309 = vand.u32 %v48, 4294901760
  %3310 = vmatpush1.msra.mxu0 %v3309
  %3311 = vmatprep.subr.mxu0 0.0
  %v3312 = vand.u32 %v49, 4294901760
  %3313 = vmatpush1.msra.mxu0 %v3312
  %3314 = vmatprep.subr.mxu0 0.0
  %v3315 = vand.u32 %v50, 4294901760
  %3316 = vmatpush1.msra.mxu0 %v3315
  %3317 = vmatprep.subr.mxu0 0.0
  %v3318 = vand.u32 %v51, 4294901760
  %3319 = vmatpush1.msra.mxu0 %v3318
  %3320 = vmatprep.subr.mxu0 0.0
  %v3321 = vand.u32 %v52, 4294901760
  %3322 = vmatpush1.msra.mxu0 %v3321
  %3323 = vmatprep.subr.mxu0 0.0
  %v3324 = vand.u32 %v53, 4294901760
  %3325 = vmatpush1.msra.mxu0 %v3324
  %3326 = vmatprep.subr.mxu0 0.0
  %v3327 = vand.u32 %v54, 4294901760
  %3328 = vmatpush1.msra.mxu0 %v3327
  %3329 = vmatprep.subr.mxu0 0.0
  %v3330 = vand.u32 %v55, 4294901760
  %3331 = vmatpush1.msra.mxu0 %v3330
  %3332 = vmatprep.subr.mxu0 0.0
  %v3333 = vand.u32 %v56, 4294901760
  %3334 = vmatpush1.msra.mxu0 %v3333
  %3335 = vmatprep.subr.mxu0 0.0
  %v3336 = vand.u32 %v57, 4294901760
  %3337 = vmatpush1.msra.mxu0 %v3336
  %3338 = vmatprep.subr.mxu0 0.0
  %v3339 = vand.u32 %v58, 4294901760
  %3340 = vmatpush1.msra.mxu0 %v3339
  %3341 = vmatprep.subr.mxu0 0.0
  %v3342 = vand.u32 %v59, 4294901760
  %3343 = vmatpush1.msra.mxu0 %v3342
  %3344 = vmatprep.subr.mxu0 0.0
  %v3345 = vand.u32 %v60, 4294901760
  %3346 = vmatpush1.msra.mxu0 %v3345
  %3347 = vmatprep.subr.mxu0 0.0
  %v3348 = vand.u32 %v61, 4294901760
  %3349 = vmatpush1.msra.mxu0 %v3348
  %3350 = vmatprep.subr.mxu0 0.0
  %v3351 = vand.u32 %v62, 4294901760
  %3352 = vmatpush1.msra.mxu0 %v3351
  %3353 = vmatprep.subr.mxu0 0.0
  %3354 = vmatpush1.msra.mxu0 0.0
  %3355 = vmatprep.subr.mxu0 0.0
  %3356 = vmatpush1.msra.mxu0 0.0
  %3357 = vmatprep.subr.mxu0 0.0
  %3358 = vmatpush1.msra.mxu0 0.0
  %3359 = vmatprep.subr.mxu0 0.0
  %3360 = vmatpush1.msra.mxu0 0.0
  %3361 = vmatprep.subr.mxu0 0.0
  %3362 = vmatpush1.msra.mxu0 0.0
  %3363 = vmatprep.subr.mxu0 0.0
  %3364 = vmatpush1.msra.mxu0 0.0
  %3365 = vmatprep.subr.mxu0 0.0
  %3366 = vmatpush1.msra.mxu0 0.0
  %3367 = vmatprep.subr.mxu0 0.0
  %3368 = vmatpush1.msra.mxu0 0.0
  %3369 = vmatprep.subr.mxu0 0.0
  %3370 = vmatpush1.msra.mxu0 0.0
  %3371 = vmatprep.subr.mxu0 0.0
  %3372 = vmatpush1.msra.mxu0 0.0
  %3373 = vmatprep.subr.mxu0 0.0
  %3374 = vmatpush1.msra.mxu0 0.0
  %3375 = vmatprep.subr.mxu0 0.0
  %3376 = vmatpush1.msra.mxu0 0.0
  %3377 = vmatprep.subr.mxu0 0.0
  %3378 = vmatpush1.msra.mxu0 0.0
  %3379 = vmatprep.subr.mxu0 0.0
  %3380 = vmatpush1.msra.mxu0 0.0
  %3381 = vmatprep.subr.mxu0 0.0
  %3382 = vmatpush1.msra.mxu0 0.0
  %3383 = vmatprep.subr.mxu0 0.0
  %3384 = vmatpush1.msra.mxu0 0.0
  %3385 = vmatprep.mubr.f32.mxu0 0.0
  %v3386 = vand.u32 %v3303, 4294901760
  %v3387 = vsub.f32 %v3303, %v3386
  %v3388 = vand.u32 %v3387, 4294901760
  %v3389 = vsub.f32 %v3387, %v3388
  %v3390 = vand.u32 %v3389, 4294901760
  %3391 = vmatmul.mubr.f32.gmra.mrb[0].mxu0 %v3390
  %v3392 = vpop.f32.mrb[0].mxu0
  %v3393 = vadd.f32 1e-30, %v3392
  %v3394 = vpop.f32.mrb[0].mxu0
  %3395 = vdwg.mxu0
  %3396 = vmatprep.subr.mxu0 0.0
  %v3397 = vand.u32 %v47, 4294901760
  %v3398 = vsub.f32 %v47, %v3397
  %v3399 = vand.u32 %v3398, 4294901760
  %v3400 = vsub.f32 %v3398, %v3399
  %v3401 = vand.u32 %v3400, 4294901760
  %3402 = vmatpush1.msra.mxu0 %v3401
  %3403 = vmatprep.subr.mxu0 0.0
  %v3404 = vand.u32 %v48, 4294901760
  %v3405 = vsub.f32 %v48, %v3404
  %v3406 = vand.u32 %v3405, 4294901760
  %v3407 = vsub.f32 %v3405, %v3406
  %v3408 = vand.u32 %v3407, 4294901760
  %3409 = vmatpush1.msra.mxu0 %v3408
  %3410 = vmatprep.subr.mxu0 0.0
  %v3411 = vand.u32 %v49, 4294901760
  %v3412 = vsub.f32 %v49, %v3411
  %v3413 = vand.u32 %v3412, 4294901760
  %v3414 = vsub.f32 %v3412, %v3413
  %v3415 = vand.u32 %v3414, 4294901760
  %3416 = vmatpush1.msra.mxu0 %v3415
  %3417 = vmatprep.subr.mxu0 0.0
  %v3418 = vand.u32 %v50, 4294901760
  %v3419 = vsub.f32 %v50, %v3418
  %v3420 = vand.u32 %v3419, 4294901760
  %v3421 = vsub.f32 %v3419, %v3420
  %v3422 = vand.u32 %v3421, 4294901760
  %3423 = vmatpush1.msra.mxu0 %v3422
  %3424 = vmatprep.subr.mxu0 0.0
  %v3425 = vand.u32 %v51, 4294901760
  %v3426 = vsub.f32 %v51, %v3425
  %v3427 = vand.u32 %v3426, 4294901760
  %v3428 = vsub.f32 %v3426, %v3427
  %v3429 = vand.u32 %v3428, 4294901760
  %3430 = vmatpush1.msra.mxu0 %v3429
  %3431 = vmatprep.subr.mxu0 0.0
  %v3432 = vand.u32 %v52, 4294901760
  %v3433 = vsub.f32 %v52, %v3432
  %v3434 = vand.u32 %v3433, 4294901760
  %v3435 = vsub.f32 %v3433, %v3434
  %v3436 = vand.u32 %v3435, 4294901760
  %3437 = vmatpush1.msra.mxu0 %v3436
  %3438 = vmatprep.subr.mxu0 0.0
  %v3439 = vand.u32 %v53, 4294901760
  %v3440 = vsub.f32 %v53, %v3439
  %v3441 = vand.u32 %v3440, 4294901760
  %v3442 = vsub.f32 %v3440, %v3441
  %v3443 = vand.u32 %v3442, 4294901760
  %3444 = vmatpush1.msra.mxu0 %v3443
  %3445 = vmatprep.subr.mxu0 0.0
  %v3446 = vand.u32 %v54, 4294901760
  %v3447 = vsub.f32 %v54, %v3446
  %v3448 = vand.u32 %v3447, 4294901760
  %v3449 = vsub.f32 %v3447, %v3448
  %v3450 = vand.u32 %v3449, 4294901760
  %3451 = vmatpush1.msra.mxu0 %v3450
  %3452 = vmatprep.subr.mxu0 0.0
  %v3453 = vand.u32 %v55, 4294901760
  %v3454 = vsub.f32 %v55, %v3453
  %v3455 = vand.u32 %v3454, 4294901760
  %v3456 = vsub.f32 %v3454, %v3455
  %v3457 = vand.u32 %v3456, 4294901760
  %3458 = vmatpush1.msra.mxu0 %v3457
  %3459 = vmatprep.subr.mxu0 0.0
  %v3460 = vand.u32 %v56, 4294901760
  %v3461 = vsub.f32 %v56, %v3460
  %v3462 = vand.u32 %v3461, 4294901760
  %v3463 = vsub.f32 %v3461, %v3462
  %v3464 = vand.u32 %v3463, 4294901760
  %3465 = vmatpush1.msra.mxu0 %v3464
  %3466 = vmatprep.subr.mxu0 0.0
  %v3467 = vand.u32 %v57, 4294901760
  %v3468 = vsub.f32 %v57, %v3467
  %v3469 = vand.u32 %v3468, 4294901760
  %v3470 = vsub.f32 %v3468, %v3469
  %v3471 = vand.u32 %v3470, 4294901760
  %3472 = vmatpush1.msra.mxu0 %v3471
  %3473 = vmatprep.subr.mxu0 0.0
  %v3474 = vand.u32 %v58, 4294901760
  %v3475 = vsub.f32 %v58, %v3474
  %v3476 = vand.u32 %v3475, 4294901760
  %v3477 = vsub.f32 %v3475, %v3476
  %v3478 = vand.u32 %v3477, 4294901760
  %3479 = vmatpush1.msra.mxu0 %v3478
  %3480 = vmatprep.subr.mxu0 0.0
  %v3481 = vand.u32 %v59, 4294901760
  %v3482 = vsub.f32 %v59, %v3481
  %v3483 = vand.u32 %v3482, 4294901760
  %v3484 = vsub.f32 %v3482, %v3483
  %v3485 = vand.u32 %v3484, 4294901760
  %3486 = vmatpush1.msra.mxu0 %v3485
  %3487 = vmatprep.subr.mxu0 0.0
  %v3488 = vand.u32 %v60, 4294901760
  %v3489 = vsub.f32 %v60, %v3488
  %v3490 = vand.u32 %v3489, 4294901760
  %v3491 = vsub.f32 %v3489, %v3490
  %v3492 = vand.u32 %v3491, 4294901760
  %3493 = vmatpush1.msra.mxu0 %v3492
  %3494 = vmatprep.subr.mxu0 0.0
  %v3495 = vand.u32 %v61, 4294901760
  %v3496 = vsub.f32 %v61, %v3495
  %v3497 = vand.u32 %v3496, 4294901760
  %v3498 = vsub.f32 %v3496, %v3497
  %v3499 = vand.u32 %v3498, 4294901760
  %3500 = vmatpush1.msra.mxu0 %v3499
  %3501 = vmatprep.subr.mxu0 0.0
  %v3502 = vand.u32 %v62, 4294901760
  %v3503 = vsub.f32 %v62, %v3502
  %v3504 = vand.u32 %v3503, 4294901760
  %v3505 = vsub.f32 %v3503, %v3504
  %v3506 = vand.u32 %v3505, 4294901760
  %3507 = vmatpush1.msra.mxu0 %v3506
  %3508 = vmatprep.subr.mxu0 0.0
  %3509 = vmatpush1.msra.mxu0 0.0
  %3510 = vmatprep.subr.mxu0 0.0
  %3511 = vmatpush1.msra.mxu0 0.0
  %3512 = vmatprep.subr.mxu0 0.0
  %3513 = vmatpush1.msra.mxu0 0.0
  %3514 = vmatprep.subr.mxu0 0.0
  %3515 = vmatpush1.msra.mxu0 0.0
  %3516 = vmatprep.subr.mxu0 0.0
  %3517 = vmatpush1.msra.mxu0 0.0
  %3518 = vmatprep.subr.mxu0 0.0
  %3519 = vmatpush1.msra.mxu0 0.0
  %3520 = vmatprep.subr.mxu0 0.0
  %3521 = vmatpush1.msra.mxu0 0.0
  %3522 = vmatprep.subr.mxu0 0.0
  %3523 = vmatpush1.msra.mxu0 0.0
  %3524 = vmatprep.subr.mxu0 0.0
  %3525 = vmatpush1.msra.mxu0 0.0
  %3526 = vmatprep.subr.mxu0 0.0
  %3527 = vmatpush1.msra.mxu0 0.0
  %3528 = vmatprep.subr.mxu0 0.0
  %3529 = vmatpush1.msra.mxu0 0.0
  %3530 = vmatprep.subr.mxu0 0.0
  %3531 = vmatpush1.msra.mxu0 0.0
  %3532 = vmatprep.subr.mxu0 0.0
  %3533 = vmatpush1.msra.mxu0 0.0
  %3534 = vmatprep.subr.mxu0 0.0
  %3535 = vmatpush1.msra.mxu0 0.0
  %3536 = vmatprep.subr.mxu0 0.0
  %3537 = vmatpush1.msra.mxu0 0.0
  %3538 = vmatprep.subr.mxu0 0.0
  %3539 = vmatpush1.msra.mxu0 0.0
  %3540 = vmatprep.mubr.f32.mxu0 0.0
  %v3541 = vand.u32 %v3303, 4294901760
  %3542 = vmatmul.mubr.f32.gmra.mrb[0].mxu0 %v3541
  %v3543 = vpop.f32.mrb[0].mxu0
  %v3544 = vadd.f32 %v3393, %v3543
  %v3545 = vpop.f32.mrb[0].mxu0
  %3546 = vdwg.mxu0
  %3547 = vmatprep.subr.mxu0 0.0
  %v3548 = vand.u32 %v47, 4294901760
  %v3549 = vsub.f32 %v47, %v3548
  %3550 = vmatpush1.msra.mxu0 %v3549
  %3551 = vmatprep.subr.mxu0 0.0
  %v3552 = vand.u32 %v48, 4294901760
  %v3553 = vsub.f32 %v48, %v3552
  %3554 = vmatpush1.msra.mxu0 %v3553
  %3555 = vmatprep.subr.mxu0 0.0
  %v3556 = vand.u32 %v49, 4294901760
  %v3557 = vsub.f32 %v49, %v3556
  %3558 = vmatpush1.msra.mxu0 %v3557
  %3559 = vmatprep.subr.mxu0 0.0
  %v3560 = vand.u32 %v50, 4294901760
  %v3561 = vsub.f32 %v50, %v3560
  %3562 = vmatpush1.msra.mxu0 %v3561
  %3563 = vmatprep.subr.mxu0 0.0
  %v3564 = vand.u32 %v51, 4294901760
  %v3565 = vsub.f32 %v51, %v3564
  %3566 = vmatpush1.msra.mxu0 %v3565
  %3567 = vmatprep.subr.mxu0 0.0
  %v3568 = vand.u32 %v52, 4294901760
  %v3569 = vsub.f32 %v52, %v3568
  %3570 = vmatpush1.msra.mxu0 %v3569
  %3571 = vmatprep.subr.mxu0 0.0
  %v3572 = vand.u32 %v53, 4294901760
  %v3573 = vsub.f32 %v53, %v3572
  %3574 = vmatpush1.msra.mxu0 %v3573
  %3575 = vmatprep.subr.mxu0 0.0
  %v3576 = vand.u32 %v54, 4294901760
  %v3577 = vsub.f32 %v54, %v3576
  %3578 = vmatpush1.msra.mxu0 %v3577
  %3579 = vmatprep.subr.mxu0 0.0
  %v3580 = vand.u32 %v55, 4294901760
  %v3581 = vsub.f32 %v55, %v3580
  %3582 = vmatpush1.msra.mxu0 %v3581
  %3583 = vmatprep.subr.mxu0 0.0
  %v3584 = vand.u32 %v56, 4294901760
  %v3585 = vsub.f32 %v56, %v3584
  %3586 = vmatpush1.msra.mxu0 %v3585
  %3587 = vmatprep.subr.mxu0 0.0
  %v3588 = vand.u32 %v57, 4294901760
  %v3589 = vsub.f32 %v57, %v3588
  %3590 = vmatpush1.msra.mxu0 %v3589
  %3591 = vmatprep.subr.mxu0 0.0
  %v3592 = vand.u32 %v58, 4294901760
  %v3593 = vsub.f32 %v58, %v3592
  %3594 = vmatpush1.msra.mxu0 %v3593
  %3595 = vmatprep.subr.mxu0 0.0
  %v3596 = vand.u32 %v59, 4294901760
  %v3597 = vsub.f32 %v59, %v3596
  %3598 = vmatpush1.msra.mxu0 %v3597
  %3599 = vmatprep.subr.mxu0 0.0
  %v3600 = vand.u32 %v60, 4294901760
  %v3601 = vsub.f32 %v60, %v3600
  %3602 = vmatpush1.msra.mxu0 %v3601
  %3603 = vmatprep.subr.mxu0 0.0
  %v3604 = vand.u32 %v61, 4294901760
  %v3605 = vsub.f32 %v61, %v3604
  %3606 = vmatpush1.msra.mxu0 %v3605
  %3607 = vmatprep.subr.mxu0 0.0
  %v3608 = vand.u32 %v62, 4294901760
  %v3609 = vsub.f32 %v62, %v3608
  %3610 = vmatpush1.msra.mxu0 %v3609
  %3611 = vmatprep.subr.mxu0 0.0
  %3612 = vmatpush1.msra.mxu0 0.0
  %3613 = vmatprep.subr.mxu0 0.0
  %3614 = vmatpush1.msra.mxu0 0.0
  %3615 = vmatprep.subr.mxu0 0.0
  %3616 = vmatpush1.msra.mxu0 0.0
  %3617 = vmatprep.subr.mxu0 0.0
  %3618 = vmatpush1.msra.mxu0 0.0
  %3619 = vmatprep.subr.mxu0 0.0
  %3620 = vmatpush1.msra.mxu0 0.0
  %3621 = vmatprep.subr.mxu0 0.0
  %3622 = vmatpush1.msra.mxu0 0.0
  %3623 = vmatprep.subr.mxu0 0.0
  %3624 = vmatpush1.msra.mxu0 0.0
  %3625 = vmatprep.subr.mxu0 0.0
  %3626 = vmatpush1.msra.mxu0 0.0
  %3627 = vmatprep.subr.mxu0 0.0
  %3628 = vmatpush1.msra.mxu0 0.0
  %3629 = vmatprep.subr.mxu0 0.0
  %3630 = vmatpush1.msra.mxu0 0.0
  %3631 = vmatprep.subr.mxu0 0.0
  %3632 = vmatpush1.msra.mxu0 0.0
  %3633 = vmatprep.subr.mxu0 0.0
  %3634 = vmatpush1.msra.mxu0 0.0
  %3635 = vmatprep.subr.mxu0 0.0
  %3636 = vmatpush1.msra.mxu0 0.0
  %3637 = vmatprep.subr.mxu0 0.0
  %3638 = vmatpush1.msra.mxu0 0.0
  %3639 = vmatprep.subr.mxu0 0.0
  %3640 = vmatpush1.msra.mxu0 0.0
  %3641 = vmatprep.subr.mxu0 0.0
  %3642 = vmatpush1.msra.mxu0 0.0
  %3643 = vmatprep.mubr.f32.mxu0 0.0
  %v3644 = vand.u32 %v3303, 4294901760
  %v3645 = vsub.f32 %v3303, %v3644
  %3646 = vmatmul.mubr.f32.gmra.mrb[0].mxu0 %v3645
  %v3647 = vpop.f32.mrb[0].mxu0
  %v3648 = vadd.f32 %v3544, %v3647
  %v3649 = vpop.f32.mrb[0].mxu0
  %3650 = vdwg.mxu0
  %3651 = vmatprep.subr.mxu0 0.0
  %v3652 = vand.u32 %v47, 4294901760
  %3653 = vmatpush1.msra.mxu0 %v3652
  %3654 = vmatprep.subr.mxu0 0.0
  %v3655 = vand.u32 %v48, 4294901760
  %3656 = vmatpush1.msra.mxu0 %v3655
  %3657 = vmatprep.subr.mxu0 0.0
  %v3658 = vand.u32 %v49, 4294901760
  %3659 = vmatpush1.msra.mxu0 %v3658
  %3660 = vmatprep.subr.mxu0 0.0
  %v3661 = vand.u32 %v50, 4294901760
  %3662 = vmatpush1.msra.mxu0 %v3661
  %3663 = vmatprep.subr.mxu0 0.0
  %v3664 = vand.u32 %v51, 4294901760
  %3665 = vmatpush1.msra.mxu0 %v3664
  %3666 = vmatprep.subr.mxu0 0.0
  %v3667 = vand.u32 %v52, 4294901760
  %3668 = vmatpush1.msra.mxu0 %v3667
  %3669 = vmatprep.subr.mxu0 0.0
  %v3670 = vand.u32 %v53, 4294901760
  %3671 = vmatpush1.msra.mxu0 %v3670
  %3672 = vmatprep.subr.mxu0 0.0
  %v3673 = vand.u32 %v54, 4294901760
  %3674 = vmatpush1.msra.mxu0 %v3673
  %3675 = vmatprep.subr.mxu0 0.0
  %v3676 = vand.u32 %v55, 4294901760
  %3677 = vmatpush1.msra.mxu0 %v3676
  %3678 = vmatprep.subr.mxu0 0.0
  %v3679 = vand.u32 %v56, 4294901760
  %3680 = vmatpush1.msra.mxu0 %v3679
  %3681 = vmatprep.subr.mxu0 0.0
  %v3682 = vand.u32 %v57, 4294901760
  %3683 = vmatpush1.msra.mxu0 %v3682
  %3684 = vmatprep.subr.mxu0 0.0
  %v3685 = vand.u32 %v58, 4294901760
  %3686 = vmatpush1.msra.mxu0 %v3685
  %3687 = vmatprep.subr.mxu0 0.0
  %v3688 = vand.u32 %v59, 4294901760
  %3689 = vmatpush1.msra.mxu0 %v3688
  %3690 = vmatprep.subr.mxu0 0.0
  %v3691 = vand.u32 %v60, 4294901760
  %3692 = vmatpush1.msra.mxu0 %v3691
  %3693 = vmatprep.subr.mxu0 0.0
  %v3694 = vand.u32 %v61, 4294901760
  %3695 = vmatpush1.msra.mxu0 %v3694
  %3696 = vmatprep.subr.mxu0 0.0
  %v3697 = vand.u32 %v62, 4294901760
  %3698 = vmatpush1.msra.mxu0 %v3697
  %3699 = vmatprep.subr.mxu0 0.0
  %3700 = vmatpush1.msra.mxu0 0.0
  %3701 = vmatprep.subr.mxu0 0.0
  %3702 = vmatpush1.msra.mxu0 0.0
  %3703 = vmatprep.subr.mxu0 0.0
  %3704 = vmatpush1.msra.mxu0 0.0
  %3705 = vmatprep.subr.mxu0 0.0
  %3706 = vmatpush1.msra.mxu0 0.0
  %3707 = vmatprep.subr.mxu0 0.0
  %3708 = vmatpush1.msra.mxu0 0.0
  %3709 = vmatprep.subr.mxu0 0.0
  %3710 = vmatpush1.msra.mxu0 0.0
  %3711 = vmatprep.subr.mxu0 0.0
  %3712 = vmatpush1.msra.mxu0 0.0
  %3713 = vmatprep.subr.mxu0 0.0
  %3714 = vmatpush1.msra.mxu0 0.0
  %3715 = vmatprep.subr.mxu0 0.0
  %3716 = vmatpush1.msra.mxu0 0.0
  %3717 = vmatprep.subr.mxu0 0.0
  %3718 = vmatpush1.msra.mxu0 0.0
  %3719 = vmatprep.subr.mxu0 0.0
  %3720 = vmatpush1.msra.mxu0 0.0
  %3721 = vmatprep.subr.mxu0 0.0
  %3722 = vmatpush1.msra.mxu0 0.0
  %3723 = vmatprep.subr.mxu0 0.0
  %3724 = vmatpush1.msra.mxu0 0.0
  %3725 = vmatprep.subr.mxu0 0.0
  %3726 = vmatpush1.msra.mxu0 0.0
  %3727 = vmatprep.subr.mxu0 0.0
  %3728 = vmatpush1.msra.mxu0 0.0
  %3729 = vmatprep.subr.mxu0 0.0
  %3730 = vmatpush1.msra.mxu0 0.0
  %3731 = vmatprep.mubr.f32.mxu0 0.0
  %v3732 = vand.u32 %v3303, 4294901760
  %v3733 = vsub.f32 %v3303, %v3732
  %v3734 = vand.u32 %v3733, 4294901760
  %3735 = vmatmul.mubr.f32.gmra.mrb[0].mxu0 %v3734
  %v3736 = vpop.f32.mrb[0].mxu0
  %v3737 = vadd.f32 %v3648, %v3736
  %v3738 = vpop.f32.mrb[0].mxu0
  %3739 = vdwg.mxu0
  %3740 = vmatprep.subr.mxu0 0.0
  %v3741 = vand.u32 %v47, 4294901760
  %v3742 = vsub.f32 %v47, %v3741
  %v3743 = vand.u32 %v3742, 4294901760
  %3744 = vmatpush1.msra.mxu0 %v3743
  %3745 = vmatprep.subr.mxu0 0.0
  %v3746 = vand.u32 %v48, 4294901760
  %v3747 = vsub.f32 %v48, %v3746
  %v3748 = vand.u32 %v3747, 4294901760
  %3749 = vmatpush1.msra.mxu0 %v3748
  %3750 = vmatprep.subr.mxu0 0.0
  %v3751 = vand.u32 %v49, 4294901760
  %v3752 = vsub.f32 %v49, %v3751
  %v3753 = vand.u32 %v3752, 4294901760
  %3754 = vmatpush1.msra.mxu0 %v3753
  %3755 = vmatprep.subr.mxu0 0.0
  %v3756 = vand.u32 %v50, 4294901760
  %v3757 = vsub.f32 %v50, %v3756
  %v3758 = vand.u32 %v3757, 4294901760
  %3759 = vmatpush1.msra.mxu0 %v3758
  %3760 = vmatprep.subr.mxu0 0.0
  %v3761 = vand.u32 %v51, 4294901760
  %v3762 = vsub.f32 %v51, %v3761
  %v3763 = vand.u32 %v3762, 4294901760
  %3764 = vmatpush1.msra.mxu0 %v3763
  %3765 = vmatprep.subr.mxu0 0.0
  %v3766 = vand.u32 %v52, 4294901760
  %v3767 = vsub.f32 %v52, %v3766
  %v3768 = vand.u32 %v3767, 4294901760
  %3769 = vmatpush1.msra.mxu0 %v3768
  %3770 = vmatprep.subr.mxu0 0.0
  %v3771 = vand.u32 %v53, 4294901760
  %v3772 = vsub.f32 %v53, %v3771
  %v3773 = vand.u32 %v3772, 4294901760
  %3774 = vmatpush1.msra.mxu0 %v3773
  %3775 = vmatprep.subr.mxu0 0.0
  %v3776 = vand.u32 %v54, 4294901760
  %v3777 = vsub.f32 %v54, %v3776
  %v3778 = vand.u32 %v3777, 4294901760
  %3779 = vmatpush1.msra.mxu0 %v3778
  %3780 = vmatprep.subr.mxu0 0.0
  %v3781 = vand.u32 %v55, 4294901760
  %v3782 = vsub.f32 %v55, %v3781
  %v3783 = vand.u32 %v3782, 4294901760
  %3784 = vmatpush1.msra.mxu0 %v3783
  %3785 = vmatprep.subr.mxu0 0.0
  %v3786 = vand.u32 %v56, 4294901760
  %v3787 = vsub.f32 %v56, %v3786
  %v3788 = vand.u32 %v3787, 4294901760
  %3789 = vmatpush1.msra.mxu0 %v3788
  %3790 = vmatprep.subr.mxu0 0.0
  %v3791 = vand.u32 %v57, 4294901760
  %v3792 = vsub.f32 %v57, %v3791
  %v3793 = vand.u32 %v3792, 4294901760
  %3794 = vmatpush1.msra.mxu0 %v3793
  %3795 = vmatprep.subr.mxu0 0.0
  %v3796 = vand.u32 %v58, 4294901760
  %v3797 = vsub.f32 %v58, %v3796
  %v3798 = vand.u32 %v3797, 4294901760
  %3799 = vmatpush1.msra.mxu0 %v3798
  %3800 = vmatprep.subr.mxu0 0.0
  %v3801 = vand.u32 %v59, 4294901760
  %v3802 = vsub.f32 %v59, %v3801
  %v3803 = vand.u32 %v3802, 4294901760
  %3804 = vmatpush1.msra.mxu0 %v3803
  %3805 = vmatprep.subr.mxu0 0.0
  %v3806 = vand.u32 %v60, 4294901760
  %v3807 = vsub.f32 %v60, %v3806
  %v3808 = vand.u32 %v3807, 4294901760
  %3809 = vmatpush1.msra.mxu0 %v3808
  %3810 = vmatprep.subr.mxu0 0.0
  %v3811 = vand.u32 %v61, 4294901760
  %v3812 = vsub.f32 %v61, %v3811
  %v3813 = vand.u32 %v3812, 4294901760
  %3814 = vmatpush1.msra.mxu0 %v3813
  %3815 = vmatprep.subr.mxu0 0.0
  %v3816 = vand.u32 %v62, 4294901760
  %v3817 = vsub.f32 %v62, %v3816
  %v3818 = vand.u32 %v3817, 4294901760
  %3819 = vmatpush1.msra.mxu0 %v3818
  %3820 = vmatprep.subr.mxu0 0.0
  %3821 = vmatpush1.msra.mxu0 0.0
  %3822 = vmatprep.subr.mxu0 0.0
  %3823 = vmatpush1.msra.mxu0 0.0
  %3824 = vmatprep.subr.mxu0 0.0
  %3825 = vmatpush1.msra.mxu0 0.0
  %3826 = vmatprep.subr.mxu0 0.0
  %3827 = vmatpush1.msra.mxu0 0.0
  %3828 = vmatprep.subr.mxu0 0.0
  %3829 = vmatpush1.msra.mxu0 0.0
  %3830 = vmatprep.subr.mxu0 0.0
  %3831 = vmatpush1.msra.mxu0 0.0
  %3832 = vmatprep.subr.mxu0 0.0
  %3833 = vmatpush1.msra.mxu0 0.0
  %3834 = vmatprep.subr.mxu0 0.0
  %3835 = vmatpush1.msra.mxu0 0.0
  %3836 = vmatprep.subr.mxu0 0.0
  %3837 = vmatpush1.msra.mxu0 0.0
  %3838 = vmatprep.subr.mxu0 0.0
  %3839 = vmatpush1.msra.mxu0 0.0
  %3840 = vmatprep.subr.mxu0 0.0
  %3841 = vmatpush1.msra.mxu0 0.0
  %3842 = vmatprep.subr.mxu0 0.0
  %3843 = vmatpush1.msra.mxu0 0.0
  %3844 = vmatprep.subr.mxu0 0.0
  %3845 = vmatpush1.msra.mxu0 0.0
  %3846 = vmatprep.subr.mxu0 0.0
  %3847 = vmatpush1.msra.mxu0 0.0
  %3848 = vmatprep.subr.mxu0 0.0
  %3849 = vmatpush1.msra.mxu0 0.0
  %3850 = vmatprep.subr.mxu0 0.0
  %3851 = vmatpush1.msra.mxu0 0.0
  %3852 = vmatprep.mubr.f32.mxu0 0.0
  %v3853 = vand.u32 %v3303, 4294901760
  %3854 = vmatmul.mubr.f32.gmra.mrb[0].mxu0 %v3853
  %v3855 = vpop.f32.mrb[0].mxu0
  %v3856 = vadd.f32 %v3737, %v3855
  %v3857 = vpop.f32.mrb[0].mxu0
  %3858 = vdwg.mxu0
  %3859 = vmatprep.subr.mxu0 0.0
  %v3860 = vand.u32 %v47, 4294901760
  %3861 = vmatpush1.msra.mxu0 %v3860
  %3862 = vmatprep.subr.mxu0 0.0
  %v3863 = vand.u32 %v48, 4294901760
  %3864 = vmatpush1.msra.mxu0 %v3863
  %3865 = vmatprep.subr.mxu0 0.0
  %v3866 = vand.u32 %v49, 4294901760
  %3867 = vmatpush1.msra.mxu0 %v3866
  %3868 = vmatprep.subr.mxu0 0.0
  %v3869 = vand.u32 %v50, 4294901760
  %3870 = vmatpush1.msra.mxu0 %v3869
  %3871 = vmatprep.subr.mxu0 0.0
  %v3872 = vand.u32 %v51, 4294901760
  %3873 = vmatpush1.msra.mxu0 %v3872
  %3874 = vmatprep.subr.mxu0 0.0
  %v3875 = vand.u32 %v52, 4294901760
  %3876 = vmatpush1.msra.mxu0 %v3875
  %3877 = vmatprep.subr.mxu0 0.0
  %v3878 = vand.u32 %v53, 4294901760
  %3879 = vmatpush1.msra.mxu0 %v3878
  %3880 = vmatprep.subr.mxu0 0.0
  %v3881 = vand.u32 %v54, 4294901760
  %3882 = vmatpush1.msra.mxu0 %v3881
  %3883 = vmatprep.subr.mxu0 0.0
  %v3884 = vand.u32 %v55, 4294901760
  %3885 = vmatpush1.msra.mxu0 %v3884
  %3886 = vmatprep.subr.mxu0 0.0
  %v3887 = vand.u32 %v56, 4294901760
  %3888 = vmatpush1.msra.mxu0 %v3887
  %3889 = vmatprep.subr.mxu0 0.0
  %v3890 = vand.u32 %v57, 4294901760
  %3891 = vmatpush1.msra.mxu0 %v3890
  %3892 = vmatprep.subr.mxu0 0.0
  %v3893 = vand.u32 %v58, 4294901760
  %3894 = vmatpush1.msra.mxu0 %v3893
  %3895 = vmatprep.subr.mxu0 0.0
  %v3896 = vand.u32 %v59, 4294901760
  %3897 = vmatpush1.msra.mxu0 %v3896
  %3898 = vmatprep.subr.mxu0 0.0
  %v3899 = vand.u32 %v60, 4294901760
  %3900 = vmatpush1.msra.mxu0 %v3899
  %3901 = vmatprep.subr.mxu0 0.0
  %v3902 = vand.u32 %v61, 4294901760
  %3903 = vmatpush1.msra.mxu0 %v3902
  %3904 = vmatprep.subr.mxu0 0.0
  %v3905 = vand.u32 %v62, 4294901760
  %3906 = vmatpush1.msra.mxu0 %v3905
  %3907 = vmatprep.subr.mxu0 0.0
  %3908 = vmatpush1.msra.mxu0 0.0
  %3909 = vmatprep.subr.mxu0 0.0
  %3910 = vmatpush1.msra.mxu0 0.0
  %3911 = vmatprep.subr.mxu0 0.0
  %3912 = vmatpush1.msra.mxu0 0.0
  %3913 = vmatprep.subr.mxu0 0.0
  %3914 = vmatpush1.msra.mxu0 0.0
  %3915 = vmatprep.subr.mxu0 0.0
  %3916 = vmatpush1.msra.mxu0 0.0
  %3917 = vmatprep.subr.mxu0 0.0
  %3918 = vmatpush1.msra.mxu0 0.0
  %3919 = vmatprep.subr.mxu0 0.0
  %3920 = vmatpush1.msra.mxu0 0.0
  %3921 = vmatprep.subr.mxu0 0.0
  %3922 = vmatpush1.msra.mxu0 0.0
  %3923 = vmatprep.subr.mxu0 0.0
  %3924 = vmatpush1.msra.mxu0 0.0
  %3925 = vmatprep.subr.mxu0 0.0
  %3926 = vmatpush1.msra.mxu0 0.0
  %3927 = vmatprep.subr.mxu0 0.0
  %3928 = vmatpush1.msra.mxu0 0.0
  %3929 = vmatprep.subr.mxu0 0.0
  %3930 = vmatpush1.msra.mxu0 0.0
  %3931 = vmatprep.subr.mxu0 0.0
  %3932 = vmatpush1.msra.mxu0 0.0
  %3933 = vmatprep.subr.mxu0 0.0
  %3934 = vmatpush1.msra.mxu0 0.0
  %3935 = vmatprep.subr.mxu0 0.0
  %3936 = vmatpush1.msra.mxu0 0.0
  %3937 = vmatprep.subr.mxu0 0.0
  %3938 = vmatpush1.msra.mxu0 0.0
  %3939 = vmatprep.mubr.f32.mxu0 0.0
  %v3940 = vand.u32 %v3303, 4294901760
  %3941 = vmatmul.mubr.f32.gmra.mrb[0].mxu0 %v3940
  %v3942 = vpop.f32.mrb[0].mxu0
  %v3943 = vadd.f32 %v3856, %v3942
  %v3944 = vpop.f32.mrb[0].mxu0
  %3945 = vdwg.mxu0
  %v3946 = vlog2.pop %v3943
  %v3947 = vmul.f32 %v3946, 0.6931472
  %v3948 = vadd.f32 %v3281, %v3947
  %v3949 = vadd.f32 %v3948, %v3101
  %v3950 = vsel %vm3110, 1, 0
  %v3951 = vsel %vm3111, 1, 0
  %v3952 = vsel %vm3112, 1, 0
  %v3953 = vsel %vm3113, 1, 0
  %v3954 = vsel %vm3114, 1, 0
  %v3955 = vsel %vm3115, 1, 0
  %v3956 = vsel %vm3116, 1, 0
  %v3957 = vsel %vm3117, 1, 0
  %3958 = vset.pattern.permute.xlu0 0
  %3959 = vperm.xlu0 %3958, %v3950
  %v3960 = vpop.permute.xlu0 %3959
  %3961 = vset.pattern.permute.xlu0 0
  %3962 = vperm.xlu0 %3961, %v3951
  %v3963 = vpop.permute.xlu0 %3962
  %3964 = vset.pattern.permute.xlu0 0
  %3965 = vperm.xlu0 %3964, %v3952
  %v3966 = vpop.permute.xlu0 %3965
  %3967 = vset.pattern.permute.xlu0 0
  %3968 = vperm.xlu0 %3967, %v3953
  %v3969 = vpop.permute.xlu0 %3968
  %3970 = vset.pattern.permute.xlu0 0
  %3971 = vperm.xlu0 %3970, %v3954
  %v3972 = vpop.permute.xlu0 %3971
  %3973 = vset.pattern.permute.xlu0 0
  %3974 = vperm.xlu0 %3973, %v3955
  %v3975 = vpop.permute.xlu0 %3974
  %3976 = vset.pattern.permute.xlu0 0
  %3977 = vperm.xlu0 %3976, %v3956
  %v3978 = vpop.permute.xlu0 %3977
  %3979 = vset.pattern.permute.xlu0 0
  %3980 = vperm.xlu0 %3979, %v3957
  %v3981 = vpop.permute.xlu0 %3980
  %vm3982 = vcmp.eq.s32.totalorder %v3960, 1
  %vm3983 = vcmp.eq.s32.totalorder %v3963, 1
  %vm3984 = vcmp.eq.s32.totalorder %v3966, 1
  %vm3985 = vcmp.eq.s32.totalorder %v3969, 1
  %vm3986 = vcmp.eq.s32.totalorder %v3972, 1
  %vm3987 = vcmp.eq.s32.totalorder %v3975, 1
  %vm3988 = vcmp.eq.s32.totalorder %v3978, 1
  %vm3989 = vcmp.eq.s32.totalorder %v3981, 1
  %v3991 = vrot.slane %v3949, 1
  %v3992 = vrot.slane %v3949, 2
  %v3993 = vrot.slane %v3949, 3
  %v3994 = vrot.slane %v3949, 4
  %v3995 = vrot.slane %v3949, 5
  %v3996 = vrot.slane %v3949, 6
  %v3997 = vrot.slane %v3949, 7
  %v4006 = vsel %vm3982, %v3949, %v3003
  %v4007 = vsel %vm3983, %v3991, %v3004
  %v4008 = vsel %vm3984, %v3992, %v3005
  %v4009 = vsel %vm3985, %v3993, %v3006
  %v4010 = vsel %vm3986, %v3994, %v3007
  %v4011 = vsel %vm3987, %v3995, %v3008
  %v4012 = vsel %vm3988, %v3996, %v3009
  %v4013 = vsel %vm3989, %v3997, %v3010
  %v4014 = vld [vmem:[%s0 + $0x4] sm:$0x1]
  %v4015 = vld [vmem:[%s0 + $0xc] sm:$0x1]
  %v4016 = vld [vmem:[%s0 + $0x14] sm:$0x1]
  %v4017 = vld [vmem:[%s0 + $0x1c] sm:$0x1]
  %v4018 = vld [vmem:[%s0 + $0x24] sm:$0x1]
  %v4019 = vld [vmem:[%s0 + $0x2c] sm:$0x1]
  %v4020 = vld [vmem:[%s0 + $0x34] sm:$0x1]
  %v4021 = vld [vmem:[%s0 + $0x3c] sm:$0x1]
  %v4022 = vpack.c.bf16 %v4014, %v4014
  %v4023 = vpack.c.bf16 %v4015, %v4015
  %v4024 = vpack.c.bf16 %v4016, %v4016
  %v4025 = vpack.c.bf16 %v4017, %v4017
  %v4026 = vpack.c.bf16 %v4018, %v4018
  %v4027 = vpack.c.bf16 %v4019, %v4019
  %v4028 = vpack.c.bf16 %v4020, %v4020
  %v4029 = vpack.c.bf16 %v4021, %v4021
  %v4038 = vunpack.c.l.b16 %v4022
  %v4039 = vunpack.c.l.b16 %v4023
  %v4040 = vunpack.c.l.b16 %v4024
  %v4041 = vunpack.c.l.b16 %v4025
  %v4042 = vunpack.c.l.b16 %v4026
  %v4043 = vunpack.c.l.b16 %v4027
  %v4044 = vunpack.c.l.b16 %v4028
  %v4045 = vunpack.c.l.b16 %v4029
  %v4046 = vrot.slane %v4039, 7
  %v4047 = vsel %vm108, %v4046, %v4038
  %v4048 = vrot.slane %v4040, 6
  %v4049 = vsel %vm111, %v4048, %v4047
  %v4050 = vrot.slane %v4041, 5
  %v4051 = vsel %vm114, %v4050, %v4049
  %v4052 = vrot.slane %v4042, 4
  %v4053 = vsel %vm117, %v4052, %v4051
  %v4054 = vrot.slane %v4043, 3
  %v4055 = vsel %vm120, %v4054, %v4053
  %v4056 = vrot.slane %v4044, 2
  %v4057 = vsel %vm123, %v4056, %v4055
  %v4058 = vrot.slane %v4045, 1
  %v4059 = vsel %vm126, %v4058, %v4057
  %v4060 = vpack.c.b16 %v4059, %v4059
  %v4062 = vsel %vm141, %v4060, 0
  %4064 = vmatprep.subr.bf16.mxu0 0
  %4065 = vmatpush1.bf16.msra.mxu0 %v137
  %4066 = vmatprep.subr.bf16.mxu0 0
  %4067 = vmatpush1.bf16.msra.mxu0 %v138
  %4068 = vmatprep.subr.bf16.mxu0 0
  %4069 = vmatpush1.bf16.msra.mxu0 0
  %4070 = vmatprep.subr.bf16.mxu0 0
  %4071 = vmatpush1.bf16.msra.mxu0 0
  %4072 = vmatprep.subr.bf16.mxu0 0
  %4073 = vmatpush1.bf16.msra.mxu0 0
  %4074 = vmatprep.subr.bf16.mxu0 0
  %4075 = vmatpush1.bf16.msra.mxu0 0
  %4076 = vmatprep.subr.bf16.mxu0 0
  %4077 = vmatpush1.bf16.msra.mxu0 0
  %4078 = vmatprep.subr.bf16.mxu0 0
  %4079 = vmatpush1.bf16.msra.mxu0 0
  %4080 = vmatprep.subr.bf16.mxu0 0
  %4081 = vmatpush1.bf16.msra.mxu0 0
  %4082 = vmatprep.subr.bf16.mxu0 0
  %4083 = vmatpush1.bf16.msra.mxu0 0
  %4084 = vmatprep.subr.bf16.mxu0 0
  %4085 = vmatpush1.bf16.msra.mxu0 0
  %4086 = vmatprep.subr.bf16.mxu0 0
  %4087 = vmatpush1.bf16.msra.mxu0 0
  %4088 = vmatprep.subr.bf16.mxu0 0
  %4089 = vmatpush1.bf16.msra.mxu0 0
  %4090 = vmatprep.subr.bf16.mxu0 0
  %4091 = vmatpush1.bf16.msra.mxu0 0
  %4092 = vmatprep.subr.bf16.mxu0 0
  %4093 = vmatpush1.bf16.msra.mxu0 0
  %4094 = vmatprep.subr.bf16.mxu0 0
  %4095 = vmatpush1.bf16.msra.mxu0 0
  %4096 = vmatprep.mubr.bf16.mxu0 0
  %4097 = vmatmul.mubr.bf16.gmra.mrb[0].mxu0 %v4062
  %v4098 = vpop.f32.mrb[0].mxu0
  %v4099 = vadd.f32 %v89, %v4098
  %v4100 = vpop.f32.mrb[0].mxu0
  %v4101 = vpop.f32.mrb[0].mxu0
  %v4102 = vpop.f32.mrb[0].mxu0
  %4103 = vdwg.mxu0
  %v4104 = vmax.f32 %v4099, 0.0
  %v4105 = vld [vmem:[%s1 + $0x4] sm:$0x1]
  %v4106 = vld [vmem:[%s1 + $0xc] sm:$0x1]
  %v4107 = vld [vmem:[%s1 + $0x14] sm:$0x1]
  %v4108 = vld [vmem:[%s1 + $0x1c] sm:$0x1]
  %v4109 = vld [vmem:[%s1 + $0x24] sm:$0x1]
  %v4110 = vld [vmem:[%s1 + $0x2c] sm:$0x1]
  %v4111 = vld [vmem:[%s1 + $0x34] sm:$0x1]
  %v4112 = vld [vmem:[%s1 + $0x3c] sm:$0x1]
  %vm4113 = vcmp.gt.f32.partialorder %v4105, 0.0
  %vm4114 = vcmp.gt.f32.partialorder %v4106, 0.0
  %vm4115 = vcmp.gt.f32.partialorder %v4107, 0.0
  %vm4116 = vcmp.gt.f32.partialorder %v4108, 0.0
  %vm4117 = vcmp.gt.f32.partialorder %v4109, 0.0
  %vm4118 = vcmp.gt.f32.partialorder %v4110, 0.0
  %vm4119 = vcmp.gt.f32.partialorder %v4111, 0.0
  %vm4120 = vcmp.gt.f32.partialorder %v4112, 0.0
  %v4121 = vld [vmem:[%s2 + $0x4] sm:$0x1]
  %v4122 = vld [vmem:[%s2 + $0xc] sm:$0x1]
  %v4123 = vld [vmem:[%s2 + $0x14] sm:$0x1]
  %v4124 = vld [vmem:[%s2 + $0x1c] sm:$0x1]
  %v4125 = vld [vmem:[%s2 + $0x24] sm:$0x1]
  %v4126 = vld [vmem:[%s2 + $0x2c] sm:$0x1]
  %v4127 = vld [vmem:[%s2 + $0x34] sm:$0x1]
  %v4128 = vld [vmem:[%s2 + $0x3c] sm:$0x1]
  %4129 = vset.pattern.permute.xlu0 0
  %4130 = vperm.xlu0 %4129, %v4121
  %v4131 = vpop.permute.xlu0 %4130
  %4132 = vset.pattern.permute.xlu0 0
  %4133 = vperm.xlu0 %4132, %v4122
  %v4134 = vpop.permute.xlu0 %4133
  %4135 = vset.pattern.permute.xlu0 0
  %4136 = vperm.xlu0 %4135, %v4123
  %v4137 = vpop.permute.xlu0 %4136
  %4138 = vset.pattern.permute.xlu0 0
  %4139 = vperm.xlu0 %4138, %v4124
  %v4140 = vpop.permute.xlu0 %4139
  %4141 = vset.pattern.permute.xlu0 0
  %4142 = vperm.xlu0 %4141, %v4125
  %v4143 = vpop.permute.xlu0 %4142
  %4144 = vset.pattern.permute.xlu0 0
  %4145 = vperm.xlu0 %4144, %v4126
  %v4146 = vpop.permute.xlu0 %4145
  %4147 = vset.pattern.permute.xlu0 0
  %4148 = vperm.xlu0 %4147, %v4127
  %v4149 = vpop.permute.xlu0 %4148
  %4150 = vset.pattern.permute.xlu0 0
  %4151 = vperm.xlu0 %4150, %v4128
  %v4152 = vpop.permute.xlu0 %4151
  %v4153 = vrot.slane %v4134, 7
  %v4154 = vsel %vm108, %v4153, %v4131
  %v4155 = vrot.slane %v4137, 6
  %v4156 = vsel %vm111, %v4155, %v4154
  %v4157 = vrot.slane %v4140, 5
  %v4158 = vsel %vm114, %v4157, %v4156
  %v4159 = vrot.slane %v4143, 4
  %v4160 = vsel %vm117, %v4159, %v4158
  %v4161 = vrot.slane %v4146, 3
  %v4162 = vsel %vm120, %v4161, %v4160
  %v4163 = vrot.slane %v4149, 2
  %v4164 = vsel %vm123, %v4163, %v4162
  %v4165 = vrot.slane %v4152, 1
  %v4166 = vsel %vm126, %v4165, %v4164
  %vm4167 = vcmp.eq.s32.totalorder %v68, %v4166
  %v4168 = vsel %vm4167, %v4104, 0.0
  %4169 = vadd.xlane.f32.xlu0 %v4168
  %v4170 = vpop.xlane.xlu0 %4169
  %v4172 = vrot.slane %v4170, 1
  %v4173 = vrot.slane %v4170, 2
  %v4174 = vrot.slane %v4170, 3
  %v4175 = vrot.slane %v4170, 4
  %v4176 = vrot.slane %v4170, 5
  %v4177 = vrot.slane %v4170, 6
  %v4178 = vrot.slane %v4170, 7
  %v4187 = vsel %vm4113, %v4170, 0.0
  %v4188 = vsel %vm4114, %v4172, 0.0
  %v4189 = vsel %vm4115, %v4173, 0.0
  %v4190 = vsel %vm4116, %v4174, 0.0
  %v4191 = vsel %vm4117, %v4175, 0.0
  %v4192 = vsel %vm4118, %v4176, 0.0
  %v4193 = vsel %vm4119, %v4177, 0.0
  %v4194 = vsel %vm4120, %v4178, 0.0
  %v4203 = vrot.slane %v4188, 7
  %v4204 = vsel %vm108, %v4203, %v4187
  %v4205 = vrot.slane %v4189, 6
  %v4206 = vsel %vm111, %v4205, %v4204
  %v4207 = vrot.slane %v4190, 5
  %v4208 = vsel %vm114, %v4207, %v4206
  %v4209 = vrot.slane %v4191, 4
  %v4210 = vsel %vm117, %v4209, %v4208
  %v4211 = vrot.slane %v4192, 3
  %v4212 = vsel %vm120, %v4211, %v4210
  %v4213 = vrot.slane %v4193, 2
  %v4214 = vsel %vm123, %v4213, %v4212
  %v4215 = vrot.slane %v4194, 1
  %v4216 = vsel %vm126, %v4215, %v4214
  %v4218 = vadd.f32 %v3215, %v4216
  %v4227 = vrot.slane %v4007, 7
  %v4228 = vsel %vm108, %v4227, %v4006
  %v4229 = vrot.slane %v4008, 6
  %v4230 = vsel %vm111, %v4229, %v4228
  %v4231 = vrot.slane %v4009, 5
  %v4232 = vsel %vm114, %v4231, %v4230
  %v4233 = vrot.slane %v4010, 4
  %v4234 = vsel %vm117, %v4233, %v4232
  %v4235 = vrot.slane %v4011, 3
  %v4236 = vsel %vm120, %v4235, %v4234
  %v4237 = vrot.slane %v4012, 2
  %v4238 = vsel %vm123, %v4237, %v4236
  %v4239 = vrot.slane %v4013, 1
  %v4240 = vsel %vm126, %v4239, %v4238
  %4242 = vmax.xlane.f32.xlu0 %v4240
  %v4243 = vpop.xlane.xlu0 %4242
  %v4245 = vrot.slane %v4243, 1
  %v4246 = vrot.slane %v4243, 2
  %v4247 = vrot.slane %v4243, 3
  %v4248 = vrot.slane %v4243, 4
  %v4249 = vrot.slane %v4243, 5
  %v4250 = vrot.slane %v4243, 6
  %v4251 = vrot.slane %v4243, 7
  %v4260 = vsub.f32 %v4006, %v4243
  %v4261 = vsub.f32 %v4007, %v4245
  %v4262 = vsub.f32 %v4008, %v4246
  %v4263 = vsub.f32 %v4009, %v4247
  %v4264 = vsub.f32 %v4010, %v4248
  %v4265 = vsub.f32 %v4011, %v4249
  %v4266 = vsub.f32 %v4012, %v4250
  %v4267 = vsub.f32 %v4013, %v4251
  %v4268 = vmul.f32 %v4260, 1.442695
  %v4269 = vpow.pop %v4268
  %v4270 = vmul.f32 %v4261, 1.442695
  %v4271 = vpow.pop %v4270
  %v4272 = vmul.f32 %v4262, 1.442695
  %v4273 = vpow.pop %v4272
  %v4274 = vmul.f32 %v4263, 1.442695
  %v4275 = vpow.pop %v4274
  %v4276 = vmul.f32 %v4264, 1.442695
  %v4277 = vpow.pop %v4276
  %v4278 = vmul.f32 %v4265, 1.442695
  %v4279 = vpow.pop %v4278
  %v4280 = vmul.f32 %v4266, 1.442695
  %v4281 = vpow.pop %v4280
  %v4282 = vmul.f32 %v4267, 1.442695
  %v4283 = vpow.pop %v4282
  %v4284 = vadd.f32 %v4243, %v313
  %v4293 = vrot.slane %v4271, 7
  %v4294 = vsel %vm108, %v4293, %v4269
  %v4295 = vrot.slane %v4273, 6
  %v4296 = vsel %vm111, %v4295, %v4294
  %v4297 = vrot.slane %v4275, 5
  %v4298 = vsel %vm114, %v4297, %v4296
  %v4299 = vrot.slane %v4277, 4
  %v4300 = vsel %vm117, %v4299, %v4298
  %v4301 = vrot.slane %v4279, 3
  %v4302 = vsel %vm120, %v4301, %v4300
  %v4303 = vrot.slane %v4281, 2
  %v4304 = vsel %vm123, %v4303, %v4302
  %v4305 = vrot.slane %v4283, 1
  %v4306 = vsel %vm126, %v4305, %v4304
  %4308 = vmatprep.subr.mxu0 0.0
  %v4309 = vand.u32 %v47, 4294901760
  %4310 = vmatpush1.msra.mxu0 %v4309
  %4311 = vmatprep.subr.mxu0 0.0
  %v4312 = vand.u32 %v48, 4294901760
  %4313 = vmatpush1.msra.mxu0 %v4312
  %4314 = vmatprep.subr.mxu0 0.0
  %v4315 = vand.u32 %v49, 4294901760
  %4316 = vmatpush1.msra.mxu0 %v4315
  %4317 = vmatprep.subr.mxu0 0.0
  %v4318 = vand.u32 %v50, 4294901760
  %4319 = vmatpush1.msra.mxu0 %v4318
  %4320 = vmatprep.subr.mxu0 0.0
  %v4321 = vand.u32 %v51, 4294901760
  %4322 = vmatpush1.msra.mxu0 %v4321
  %4323 = vmatprep.subr.mxu0 0.0
  %v4324 = vand.u32 %v52, 4294901760
  %4325 = vmatpush1.msra.mxu0 %v4324
  %4326 = vmatprep.subr.mxu0 0.0
  %v4327 = vand.u32 %v53, 4294901760
  %4328 = vmatpush1.msra.mxu0 %v4327
  %4329 = vmatprep.subr.mxu0 0.0
  %v4330 = vand.u32 %v54, 4294901760
  %4331 = vmatpush1.msra.mxu0 %v4330
  %4332 = vmatprep.subr.mxu0 0.0
  %v4333 = vand.u32 %v55, 4294901760
  %4334 = vmatpush1.msra.mxu0 %v4333
  %4335 = vmatprep.subr.mxu0 0.0
  %v4336 = vand.u32 %v56, 4294901760
  %4337 = vmatpush1.msra.mxu0 %v4336
  %4338 = vmatprep.subr.mxu0 0.0
  %v4339 = vand.u32 %v57, 4294901760
  %4340 = vmatpush1.msra.mxu0 %v4339
  %4341 = vmatprep.subr.mxu0 0.0
  %v4342 = vand.u32 %v58, 4294901760
  %4343 = vmatpush1.msra.mxu0 %v4342
  %4344 = vmatprep.subr.mxu0 0.0
  %v4345 = vand.u32 %v59, 4294901760
  %4346 = vmatpush1.msra.mxu0 %v4345
  %4347 = vmatprep.subr.mxu0 0.0
  %v4348 = vand.u32 %v60, 4294901760
  %4349 = vmatpush1.msra.mxu0 %v4348
  %4350 = vmatprep.subr.mxu0 0.0
  %v4351 = vand.u32 %v61, 4294901760
  %4352 = vmatpush1.msra.mxu0 %v4351
  %4353 = vmatprep.subr.mxu0 0.0
  %v4354 = vand.u32 %v62, 4294901760
  %4355 = vmatpush1.msra.mxu0 %v4354
  %4356 = vmatprep.subr.mxu0 0.0
  %4357 = vmatpush1.msra.mxu0 0.0
  %4358 = vmatprep.subr.mxu0 0.0
  %4359 = vmatpush1.msra.mxu0 0.0
  %4360 = vmatprep.subr.mxu0 0.0
  %4361 = vmatpush1.msra.mxu0 0.0
  %4362 = vmatprep.subr.mxu0 0.0
  %4363 = vmatpush1.msra.mxu0 0.0
  %4364 = vmatprep.subr.mxu0 0.0
  %4365 = vmatpush1.msra.mxu0 0.0
  %4366 = vmatprep.subr.mxu0 0.0
  %4367 = vmatpush1.msra.mxu0 0.0
  %4368 = vmatprep.subr.mxu0 0.0
  %4369 = vmatpush1.msra.mxu0 0.0
  %4370 = vmatprep.subr.mxu0 0.0
  %4371 = vmatpush1.msra.mxu0 0.0
  %4372 = vmatprep.subr.mxu0 0.0
  %4373 = vmatpush1.msra.mxu0 0.0
  %4374 = vmatprep.subr.mxu0 0.0
  %4375 = vmatpush1.msra.mxu0 0.0
  %4376 = vmatprep.subr.mxu0 0.0
  %4377 = vmatpush1.msra.mxu0 0.0
  %4378 = vmatprep.subr.mxu0 0.0
  %4379 = vmatpush1.msra.mxu0 0.0
  %4380 = vmatprep.subr.mxu0 0.0
  %4381 = vmatpush1.msra.mxu0 0.0
  %4382 = vmatprep.subr.mxu0 0.0
  %4383 = vmatpush1.msra.mxu0 0.0
  %4384 = vmatprep.subr.mxu0 0.0
  %4385 = vmatpush1.msra.mxu0 0.0
  %4386 = vmatprep.subr.mxu0 0.0
  %4387 = vmatpush1.msra.mxu0 0.0
  %4388 = vmatprep.mubr.f32.mxu0 0.0
  %v4389 = vand.u32 %v4306, 4294901760
  %v4390 = vsub.f32 %v4306, %v4389
  %v4391 = vand.u32 %v4390, 4294901760
  %v4392 = vsub.f32 %v4390, %v4391
  %v4393 = vand.u32 %v4392, 4294901760
  %4394 = vmatmul.mubr.f32.gmra.mrb[0].mxu0 %v4393
  %v4395 = vpop.f32.mrb[0].mxu0
  %v4396 = vadd.f32 1e-30, %v4395
  %v4397 = vpop.f32.mrb[0].mxu0
  %4398 = vdwg.mxu0
  %4399 = vmatprep.subr.mxu0 0.0
  %v4400 = vand.u32 %v47, 4294901760
  %v4401 = vsub.f32 %v47, %v4400
  %v4402 = vand.u32 %v4401, 4294901760
  %v4403 = vsub.f32 %v4401, %v4402
  %v4404 = vand.u32 %v4403, 4294901760
  %4405 = vmatpush1.msra.mxu0 %v4404
  %4406 = vmatprep.subr.mxu0 0.0
  %v4407 = vand.u32 %v48, 4294901760
  %v4408 = vsub.f32 %v48, %v4407
  %v4409 = vand.u32 %v4408, 4294901760
  %v4410 = vsub.f32 %v4408, %v4409
  %v4411 = vand.u32 %v4410, 4294901760
  %4412 = vmatpush1.msra.mxu0 %v4411
  %4413 = vmatprep.subr.mxu0 0.0
  %v4414 = vand.u32 %v49, 4294901760
  %v4415 = vsub.f32 %v49, %v4414
  %v4416 = vand.u32 %v4415, 4294901760
  %v4417 = vsub.f32 %v4415, %v4416
  %v4418 = vand.u32 %v4417, 4294901760
  %4419 = vmatpush1.msra.mxu0 %v4418
  %4420 = vmatprep.subr.mxu0 0.0
  %v4421 = vand.u32 %v50, 4294901760
  %v4422 = vsub.f32 %v50, %v4421
  %v4423 = vand.u32 %v4422, 4294901760
  %v4424 = vsub.f32 %v4422, %v4423
  %v4425 = vand.u32 %v4424, 4294901760
  %4426 = vmatpush1.msra.mxu0 %v4425
  %4427 = vmatprep.subr.mxu0 0.0
  %v4428 = vand.u32 %v51, 4294901760
  %v4429 = vsub.f32 %v51, %v4428
  %v4430 = vand.u32 %v4429, 4294901760
  %v4431 = vsub.f32 %v4429, %v4430
  %v4432 = vand.u32 %v4431, 4294901760
  %4433 = vmatpush1.msra.mxu0 %v4432
  %4434 = vmatprep.subr.mxu0 0.0
  %v4435 = vand.u32 %v52, 4294901760
  %v4436 = vsub.f32 %v52, %v4435
  %v4437 = vand.u32 %v4436, 4294901760
  %v4438 = vsub.f32 %v4436, %v4437
  %v4439 = vand.u32 %v4438, 4294901760
  %4440 = vmatpush1.msra.mxu0 %v4439
  %4441 = vmatprep.subr.mxu0 0.0
  %v4442 = vand.u32 %v53, 4294901760
  %v4443 = vsub.f32 %v53, %v4442
  %v4444 = vand.u32 %v4443, 4294901760
  %v4445 = vsub.f32 %v4443, %v4444
  %v4446 = vand.u32 %v4445, 4294901760
  %4447 = vmatpush1.msra.mxu0 %v4446
  %4448 = vmatprep.subr.mxu0 0.0
  %v4449 = vand.u32 %v54, 4294901760
  %v4450 = vsub.f32 %v54, %v4449
  %v4451 = vand.u32 %v4450, 4294901760
  %v4452 = vsub.f32 %v4450, %v4451
  %v4453 = vand.u32 %v4452, 4294901760
  %4454 = vmatpush1.msra.mxu0 %v4453
  %4455 = vmatprep.subr.mxu0 0.0
  %v4456 = vand.u32 %v55, 4294901760
  %v4457 = vsub.f32 %v55, %v4456
  %v4458 = vand.u32 %v4457, 4294901760
  %v4459 = vsub.f32 %v4457, %v4458
  %v4460 = vand.u32 %v4459, 4294901760
  %4461 = vmatpush1.msra.mxu0 %v4460
  %4462 = vmatprep.subr.mxu0 0.0
  %v4463 = vand.u32 %v56, 4294901760
  %v4464 = vsub.f32 %v56, %v4463
  %v4465 = vand.u32 %v4464, 4294901760
  %v4466 = vsub.f32 %v4464, %v4465
  %v4467 = vand.u32 %v4466, 4294901760
  %4468 = vmatpush1.msra.mxu0 %v4467
  %4469 = vmatprep.subr.mxu0 0.0
  %v4470 = vand.u32 %v57, 4294901760
  %v4471 = vsub.f32 %v57, %v4470
  %v4472 = vand.u32 %v4471, 4294901760
  %v4473 = vsub.f32 %v4471, %v4472
  %v4474 = vand.u32 %v4473, 4294901760
  %4475 = vmatpush1.msra.mxu0 %v4474
  %4476 = vmatprep.subr.mxu0 0.0
  %v4477 = vand.u32 %v58, 4294901760
  %v4478 = vsub.f32 %v58, %v4477
  %v4479 = vand.u32 %v4478, 4294901760
  %v4480 = vsub.f32 %v4478, %v4479
  %v4481 = vand.u32 %v4480, 4294901760
  %4482 = vmatpush1.msra.mxu0 %v4481
  %4483 = vmatprep.subr.mxu0 0.0
  %v4484 = vand.u32 %v59, 4294901760
  %v4485 = vsub.f32 %v59, %v4484
  %v4486 = vand.u32 %v4485, 4294901760
  %v4487 = vsub.f32 %v4485, %v4486
  %v4488 = vand.u32 %v4487, 4294901760
  %4489 = vmatpush1.msra.mxu0 %v4488
  %4490 = vmatprep.subr.mxu0 0.0
  %v4491 = vand.u32 %v60, 4294901760
  %v4492 = vsub.f32 %v60, %v4491
  %v4493 = vand.u32 %v4492, 4294901760
  %v4494 = vsub.f32 %v4492, %v4493
  %v4495 = vand.u32 %v4494, 4294901760
  %4496 = vmatpush1.msra.mxu0 %v4495
  %4497 = vmatprep.subr.mxu0 0.0
  %v4498 = vand.u32 %v61, 4294901760
  %v4499 = vsub.f32 %v61, %v4498
  %v4500 = vand.u32 %v4499, 4294901760
  %v4501 = vsub.f32 %v4499, %v4500
  %v4502 = vand.u32 %v4501, 4294901760
  %4503 = vmatpush1.msra.mxu0 %v4502
  %4504 = vmatprep.subr.mxu0 0.0
  %v4505 = vand.u32 %v62, 4294901760
  %v4506 = vsub.f32 %v62, %v4505
  %v4507 = vand.u32 %v4506, 4294901760
  %v4508 = vsub.f32 %v4506, %v4507
  %v4509 = vand.u32 %v4508, 4294901760
  %4510 = vmatpush1.msra.mxu0 %v4509
  %4511 = vmatprep.subr.mxu0 0.0
  %4512 = vmatpush1.msra.mxu0 0.0
  %4513 = vmatprep.subr.mxu0 0.0
  %4514 = vmatpush1.msra.mxu0 0.0
  %4515 = vmatprep.subr.mxu0 0.0
  %4516 = vmatpush1.msra.mxu0 0.0
  %4517 = vmatprep.subr.mxu0 0.0
  %4518 = vmatpush1.msra.mxu0 0.0
  %4519 = vmatprep.subr.mxu0 0.0
  %4520 = vmatpush1.msra.mxu0 0.0
  %4521 = vmatprep.subr.mxu0 0.0
  %4522 = vmatpush1.msra.mxu0 0.0
  %4523 = vmatprep.subr.mxu0 0.0
  %4524 = vmatpush1.msra.mxu0 0.0
  %4525 = vmatprep.subr.mxu0 0.0
  %4526 = vmatpush1.msra.mxu0 0.0
  %4527 = vmatprep.subr.mxu0 0.0
  %4528 = vmatpush1.msra.mxu0 0.0
  %4529 = vmatprep.subr.mxu0 0.0
  %4530 = vmatpush1.msra.mxu0 0.0
  %4531 = vmatprep.subr.mxu0 0.0
  %4532 = vmatpush1.msra.mxu0 0.0
  %4533 = vmatprep.subr.mxu0 0.0
  %4534 = vmatpush1.msra.mxu0 0.0
  %4535 = vmatprep.subr.mxu0 0.0
  %4536 = vmatpush1.msra.mxu0 0.0
  %4537 = vmatprep.subr.mxu0 0.0
  %4538 = vmatpush1.msra.mxu0 0.0
  %4539 = vmatprep.subr.mxu0 0.0
  %4540 = vmatpush1.msra.mxu0 0.0
  %4541 = vmatprep.subr.mxu0 0.0
  %4542 = vmatpush1.msra.mxu0 0.0
  %4543 = vmatprep.mubr.f32.mxu0 0.0
  %v4544 = vand.u32 %v4306, 4294901760
  %4545 = vmatmul.mubr.f32.gmra.mrb[0].mxu0 %v4544
  %v4546 = vpop.f32.mrb[0].mxu0
  %v4547 = vadd.f32 %v4396, %v4546
  %v4548 = vpop.f32.mrb[0].mxu0
  %4549 = vdwg.mxu0
  %4550 = vmatprep.subr.mxu0 0.0
  %v4551 = vand.u32 %v47, 4294901760
  %v4552 = vsub.f32 %v47, %v4551
  %4553 = vmatpush1.msra.mxu0 %v4552
  %4554 = vmatprep.subr.mxu0 0.0
  %v4555 = vand.u32 %v48, 4294901760
  %v4556 = vsub.f32 %v48, %v4555
  %4557 = vmatpush1.msra.mxu0 %v4556
  %4558 = vmatprep.subr.mxu0 0.0
  %v4559 = vand.u32 %v49, 4294901760
  %v4560 = vsub.f32 %v49, %v4559
  %4561 = vmatpush1.msra.mxu0 %v4560
  %4562 = vmatprep.subr.mxu0 0.0
  %v4563 = vand.u32 %v50, 4294901760
  %v4564 = vsub.f32 %v50, %v4563
  %4565 = vmatpush1.msra.mxu0 %v4564
  %4566 = vmatprep.subr.mxu0 0.0
  %v4567 = vand.u32 %v51, 4294901760
  %v4568 = vsub.f32 %v51, %v4567
  %4569 = vmatpush1.msra.mxu0 %v4568
  %4570 = vmatprep.subr.mxu0 0.0
  %v4571 = vand.u32 %v52, 4294901760
  %v4572 = vsub.f32 %v52, %v4571
  %4573 = vmatpush1.msra.mxu0 %v4572
  %4574 = vmatprep.subr.mxu0 0.0
  %v4575 = vand.u32 %v53, 4294901760
  %v4576 = vsub.f32 %v53, %v4575
  %4577 = vmatpush1.msra.mxu0 %v4576
  %4578 = vmatprep.subr.mxu0 0.0
  %v4579 = vand.u32 %v54, 4294901760
  %v4580 = vsub.f32 %v54, %v4579
  %4581 = vmatpush1.msra.mxu0 %v4580
  %4582 = vmatprep.subr.mxu0 0.0
  %v4583 = vand.u32 %v55, 4294901760
  %v4584 = vsub.f32 %v55, %v4583
  %4585 = vmatpush1.msra.mxu0 %v4584
  %4586 = vmatprep.subr.mxu0 0.0
  %v4587 = vand.u32 %v56, 4294901760
  %v4588 = vsub.f32 %v56, %v4587
  %4589 = vmatpush1.msra.mxu0 %v4588
  %4590 = vmatprep.subr.mxu0 0.0
  %v4591 = vand.u32 %v57, 4294901760
  %v4592 = vsub.f32 %v57, %v4591
  %4593 = vmatpush1.msra.mxu0 %v4592
  %4594 = vmatprep.subr.mxu0 0.0
  %v4595 = vand.u32 %v58, 4294901760
  %v4596 = vsub.f32 %v58, %v4595
  %4597 = vmatpush1.msra.mxu0 %v4596
  %4598 = vmatprep.subr.mxu0 0.0
  %v4599 = vand.u32 %v59, 4294901760
  %v4600 = vsub.f32 %v59, %v4599
  %4601 = vmatpush1.msra.mxu0 %v4600
  %4602 = vmatprep.subr.mxu0 0.0
  %v4603 = vand.u32 %v60, 4294901760
  %v4604 = vsub.f32 %v60, %v4603
  %4605 = vmatpush1.msra.mxu0 %v4604
  %4606 = vmatprep.subr.mxu0 0.0
  %v4607 = vand.u32 %v61, 4294901760
  %v4608 = vsub.f32 %v61, %v4607
  %4609 = vmatpush1.msra.mxu0 %v4608
  %4610 = vmatprep.subr.mxu0 0.0
  %v4611 = vand.u32 %v62, 4294901760
  %v4612 = vsub.f32 %v62, %v4611
  %4613 = vmatpush1.msra.mxu0 %v4612
  %4614 = vmatprep.subr.mxu0 0.0
  %4615 = vmatpush1.msra.mxu0 0.0
  %4616 = vmatprep.subr.mxu0 0.0
  %4617 = vmatpush1.msra.mxu0 0.0
  %4618 = vmatprep.subr.mxu0 0.0
  %4619 = vmatpush1.msra.mxu0 0.0
  %4620 = vmatprep.subr.mxu0 0.0
  %4621 = vmatpush1.msra.mxu0 0.0
  %4622 = vmatprep.subr.mxu0 0.0
  %4623 = vmatpush1.msra.mxu0 0.0
  %4624 = vmatprep.subr.mxu0 0.0
  %4625 = vmatpush1.msra.mxu0 0.0
  %4626 = vmatprep.subr.mxu0 0.0
  %4627 = vmatpush1.msra.mxu0 0.0
  %4628 = vmatprep.subr.mxu0 0.0
  %4629 = vmatpush1.msra.mxu0 0.0
  %4630 = vmatprep.subr.mxu0 0.0
  %4631 = vmatpush1.msra.mxu0 0.0
  %4632 = vmatprep.subr.mxu0 0.0
  %4633 = vmatpush1.msra.mxu0 0.0
  %4634 = vmatprep.subr.mxu0 0.0
  %4635 = vmatpush1.msra.mxu0 0.0
  %4636 = vmatprep.subr.mxu0 0.0
  %4637 = vmatpush1.msra.mxu0 0.0
  %4638 = vmatprep.subr.mxu0 0.0
  %4639 = vmatpush1.msra.mxu0 0.0
  %4640 = vmatprep.subr.mxu0 0.0
  %4641 = vmatpush1.msra.mxu0 0.0
  %4642 = vmatprep.subr.mxu0 0.0
  %4643 = vmatpush1.msra.mxu0 0.0
  %4644 = vmatprep.subr.mxu0 0.0
  %4645 = vmatpush1.msra.mxu0 0.0
  %4646 = vmatprep.mubr.f32.mxu0 0.0
  %v4647 = vand.u32 %v4306, 4294901760
  %v4648 = vsub.f32 %v4306, %v4647
  %4649 = vmatmul.mubr.f32.gmra.mrb[0].mxu0 %v4648
  %v4650 = vpop.f32.mrb[0].mxu0
  %v4651 = vadd.f32 %v4547, %v4650
  %v4652 = vpop.f32.mrb[0].mxu0
  %4653 = vdwg.mxu0
  %4654 = vmatprep.subr.mxu0 0.0
  %v4655 = vand.u32 %v47, 4294901760
  %4656 = vmatpush1.msra.mxu0 %v4655
  %4657 = vmatprep.subr.mxu0 0.0
  %v4658 = vand.u32 %v48, 4294901760
  %4659 = vmatpush1.msra.mxu0 %v4658
  %4660 = vmatprep.subr.mxu0 0.0
  %v4661 = vand.u32 %v49, 4294901760
  %4662 = vmatpush1.msra.mxu0 %v4661
  %4663 = vmatprep.subr.mxu0 0.0
  %v4664 = vand.u32 %v50, 4294901760
  %4665 = vmatpush1.msra.mxu0 %v4664
  %4666 = vmatprep.subr.mxu0 0.0
  %v4667 = vand.u32 %v51, 4294901760
  %4668 = vmatpush1.msra.mxu0 %v4667
  %4669 = vmatprep.subr.mxu0 0.0
  %v4670 = vand.u32 %v52, 4294901760
  %4671 = vmatpush1.msra.mxu0 %v4670
  %4672 = vmatprep.subr.mxu0 0.0
  %v4673 = vand.u32 %v53, 4294901760
  %4674 = vmatpush1.msra.mxu0 %v4673
  %4675 = vmatprep.subr.mxu0 0.0
  %v4676 = vand.u32 %v54, 4294901760
  %4677 = vmatpush1.msra.mxu0 %v4676
  %4678 = vmatprep.subr.mxu0 0.0
  %v4679 = vand.u32 %v55, 4294901760
  %4680 = vmatpush1.msra.mxu0 %v4679
  %4681 = vmatprep.subr.mxu0 0.0
  %v4682 = vand.u32 %v56, 4294901760
  %4683 = vmatpush1.msra.mxu0 %v4682
  %4684 = vmatprep.subr.mxu0 0.0
  %v4685 = vand.u32 %v57, 4294901760
  %4686 = vmatpush1.msra.mxu0 %v4685
  %4687 = vmatprep.subr.mxu0 0.0
  %v4688 = vand.u32 %v58, 4294901760
  %4689 = vmatpush1.msra.mxu0 %v4688
  %4690 = vmatprep.subr.mxu0 0.0
  %v4691 = vand.u32 %v59, 4294901760
  %4692 = vmatpush1.msra.mxu0 %v4691
  %4693 = vmatprep.subr.mxu0 0.0
  %v4694 = vand.u32 %v60, 4294901760
  %4695 = vmatpush1.msra.mxu0 %v4694
  %4696 = vmatprep.subr.mxu0 0.0
  %v4697 = vand.u32 %v61, 4294901760
  %4698 = vmatpush1.msra.mxu0 %v4697
  %4699 = vmatprep.subr.mxu0 0.0
  %v4700 = vand.u32 %v62, 4294901760
  %4701 = vmatpush1.msra.mxu0 %v4700
  %4702 = vmatprep.subr.mxu0 0.0
  %4703 = vmatpush1.msra.mxu0 0.0
  %4704 = vmatprep.subr.mxu0 0.0
  %4705 = vmatpush1.msra.mxu0 0.0
  %4706 = vmatprep.subr.mxu0 0.0
  %4707 = vmatpush1.msra.mxu0 0.0
  %4708 = vmatprep.subr.mxu0 0.0
  %4709 = vmatpush1.msra.mxu0 0.0
  %4710 = vmatprep.subr.mxu0 0.0
  %4711 = vmatpush1.msra.mxu0 0.0
  %4712 = vmatprep.subr.mxu0 0.0
  %4713 = vmatpush1.msra.mxu0 0.0
  %4714 = vmatprep.subr.mxu0 0.0
  %4715 = vmatpush1.msra.mxu0 0.0
  %4716 = vmatprep.subr.mxu0 0.0
  %4717 = vmatpush1.msra.mxu0 0.0
  %4718 = vmatprep.subr.mxu0 0.0
  %4719 = vmatpush1.msra.mxu0 0.0
  %4720 = vmatprep.subr.mxu0 0.0
  %4721 = vmatpush1.msra.mxu0 0.0
  %4722 = vmatprep.subr.mxu0 0.0
  %4723 = vmatpush1.msra.mxu0 0.0
  %4724 = vmatprep.subr.mxu0 0.0
  %4725 = vmatpush1.msra.mxu0 0.0
  %4726 = vmatprep.subr.mxu0 0.0
  %4727 = vmatpush1.msra.mxu0 0.0
  %4728 = vmatprep.subr.mxu0 0.0
  %4729 = vmatpush1.msra.mxu0 0.0
  %4730 = vmatprep.subr.mxu0 0.0
  %4731 = vmatpush1.msra.mxu0 0.0
  %4732 = vmatprep.subr.mxu0 0.0
  %4733 = vmatpush1.msra.mxu0 0.0
  %4734 = vmatprep.mubr.f32.mxu0 0.0
  %v4735 = vand.u32 %v4306, 4294901760
  %v4736 = vsub.f32 %v4306, %v4735
  %v4737 = vand.u32 %v4736, 4294901760
  %4738 = vmatmul.mubr.f32.gmra.mrb[0].mxu0 %v4737
  %v4739 = vpop.f32.mrb[0].mxu0
  %v4740 = vadd.f32 %v4651, %v4739
  %v4741 = vpop.f32.mrb[0].mxu0
  %4742 = vdwg.mxu0
  %4743 = vmatprep.subr.mxu0 0.0
  %v4744 = vand.u32 %v47, 4294901760
  %v4745 = vsub.f32 %v47, %v4744
  %v4746 = vand.u32 %v4745, 4294901760
  %4747 = vmatpush1.msra.mxu0 %v4746
  %4748 = vmatprep.subr.mxu0 0.0
  %v4749 = vand.u32 %v48, 4294901760
  %v4750 = vsub.f32 %v48, %v4749
  %v4751 = vand.u32 %v4750, 4294901760
  %4752 = vmatpush1.msra.mxu0 %v4751
  %4753 = vmatprep.subr.mxu0 0.0
  %v4754 = vand.u32 %v49, 4294901760
  %v4755 = vsub.f32 %v49, %v4754
  %v4756 = vand.u32 %v4755, 4294901760
  %4757 = vmatpush1.msra.mxu0 %v4756
  %4758 = vmatprep.subr.mxu0 0.0
  %v4759 = vand.u32 %v50, 4294901760
  %v4760 = vsub.f32 %v50, %v4759
  %v4761 = vand.u32 %v4760, 4294901760
  %4762 = vmatpush1.msra.mxu0 %v4761
  %4763 = vmatprep.subr.mxu0 0.0
  %v4764 = vand.u32 %v51, 4294901760
  %v4765 = vsub.f32 %v51, %v4764
  %v4766 = vand.u32 %v4765, 4294901760
  %4767 = vmatpush1.msra.mxu0 %v4766
  %4768 = vmatprep.subr.mxu0 0.0
  %v4769 = vand.u32 %v52, 4294901760
  %v4770 = vsub.f32 %v52, %v4769
  %v4771 = vand.u32 %v4770, 4294901760
  %4772 = vmatpush1.msra.mxu0 %v4771
  %4773 = vmatprep.subr.mxu0 0.0
  %v4774 = vand.u32 %v53, 4294901760
  %v4775 = vsub.f32 %v53, %v4774
  %v4776 = vand.u32 %v4775, 4294901760
  %4777 = vmatpush1.msra.mxu0 %v4776
  %4778 = vmatprep.subr.mxu0 0.0
  %v4779 = vand.u32 %v54, 4294901760
  %v4780 = vsub.f32 %v54, %v4779
  %v4781 = vand.u32 %v4780, 4294901760
  %4782 = vmatpush1.msra.mxu0 %v4781
  %4783 = vmatprep.subr.mxu0 0.0
  %v4784 = vand.u32 %v55, 4294901760
  %v4785 = vsub.f32 %v55, %v4784
  %v4786 = vand.u32 %v4785, 4294901760
  %4787 = vmatpush1.msra.mxu0 %v4786
  %4788 = vmatprep.subr.mxu0 0.0
  %v4789 = vand.u32 %v56, 4294901760
  %v4790 = vsub.f32 %v56, %v4789
  %v4791 = vand.u32 %v4790, 4294901760
  %4792 = vmatpush1.msra.mxu0 %v4791
  %4793 = vmatprep.subr.mxu0 0.0
  %v4794 = vand.u32 %v57, 4294901760
  %v4795 = vsub.f32 %v57, %v4794
  %v4796 = vand.u32 %v4795, 4294901760
  %4797 = vmatpush1.msra.mxu0 %v4796
  %4798 = vmatprep.subr.mxu0 0.0
  %v4799 = vand.u32 %v58, 4294901760
  %v4800 = vsub.f32 %v58, %v4799
  %v4801 = vand.u32 %v4800, 4294901760
  %4802 = vmatpush1.msra.mxu0 %v4801
  %4803 = vmatprep.subr.mxu0 0.0
  %v4804 = vand.u32 %v59, 4294901760
  %v4805 = vsub.f32 %v59, %v4804
  %v4806 = vand.u32 %v4805, 4294901760
  %4807 = vmatpush1.msra.mxu0 %v4806
  %4808 = vmatprep.subr.mxu0 0.0
  %v4809 = vand.u32 %v60, 4294901760
  %v4810 = vsub.f32 %v60, %v4809
  %v4811 = vand.u32 %v4810, 4294901760
  %4812 = vmatpush1.msra.mxu0 %v4811
  %4813 = vmatprep.subr.mxu0 0.0
  %v4814 = vand.u32 %v61, 4294901760
  %v4815 = vsub.f32 %v61, %v4814
  %v4816 = vand.u32 %v4815, 4294901760
  %4817 = vmatpush1.msra.mxu0 %v4816
  %4818 = vmatprep.subr.mxu0 0.0
  %v4819 = vand.u32 %v62, 4294901760
  %v4820 = vsub.f32 %v62, %v4819
  %v4821 = vand.u32 %v4820, 4294901760
  %4822 = vmatpush1.msra.mxu0 %v4821
  %4823 = vmatprep.subr.mxu0 0.0
  %4824 = vmatpush1.msra.mxu0 0.0
  %4825 = vmatprep.subr.mxu0 0.0
  %4826 = vmatpush1.msra.mxu0 0.0
  %4827 = vmatprep.subr.mxu0 0.0
  %4828 = vmatpush1.msra.mxu0 0.0
  %4829 = vmatprep.subr.mxu0 0.0
  %4830 = vmatpush1.msra.mxu0 0.0
  %4831 = vmatprep.subr.mxu0 0.0
  %4832 = vmatpush1.msra.mxu0 0.0
  %4833 = vmatprep.subr.mxu0 0.0
  %4834 = vmatpush1.msra.mxu0 0.0
  %4835 = vmatprep.subr.mxu0 0.0
  %4836 = vmatpush1.msra.mxu0 0.0
  %4837 = vmatprep.subr.mxu0 0.0
  %4838 = vmatpush1.msra.mxu0 0.0
  %4839 = vmatprep.subr.mxu0 0.0
  %4840 = vmatpush1.msra.mxu0 0.0
  %4841 = vmatprep.subr.mxu0 0.0
  %4842 = vmatpush1.msra.mxu0 0.0
  %4843 = vmatprep.subr.mxu0 0.0
  %4844 = vmatpush1.msra.mxu0 0.0
  %4845 = vmatprep.subr.mxu0 0.0
  %4846 = vmatpush1.msra.mxu0 0.0
  %4847 = vmatprep.subr.mxu0 0.0
  %4848 = vmatpush1.msra.mxu0 0.0
  %4849 = vmatprep.subr.mxu0 0.0
  %4850 = vmatpush1.msra.mxu0 0.0
  %4851 = vmatprep.subr.mxu0 0.0
  %4852 = vmatpush1.msra.mxu0 0.0
  %4853 = vmatprep.subr.mxu0 0.0
  %4854 = vmatpush1.msra.mxu0 0.0
  %4855 = vmatprep.mubr.f32.mxu0 0.0
  %v4856 = vand.u32 %v4306, 4294901760
  %4857 = vmatmul.mubr.f32.gmra.mrb[0].mxu0 %v4856
  %v4858 = vpop.f32.mrb[0].mxu0
  %v4859 = vadd.f32 %v4740, %v4858
  %v4860 = vpop.f32.mrb[0].mxu0
  %4861 = vdwg.mxu0
  %4862 = vmatprep.subr.mxu0 0.0
  %v4863 = vand.u32 %v47, 4294901760
  %4864 = vmatpush1.msra.mxu0 %v4863
  %4865 = vmatprep.subr.mxu0 0.0
  %v4866 = vand.u32 %v48, 4294901760
  %4867 = vmatpush1.msra.mxu0 %v4866
  %4868 = vmatprep.subr.mxu0 0.0
  %v4869 = vand.u32 %v49, 4294901760
  %4870 = vmatpush1.msra.mxu0 %v4869
  %4871 = vmatprep.subr.mxu0 0.0
  %v4872 = vand.u32 %v50, 4294901760
  %4873 = vmatpush1.msra.mxu0 %v4872
  %4874 = vmatprep.subr.mxu0 0.0
  %v4875 = vand.u32 %v51, 4294901760
  %4876 = vmatpush1.msra.mxu0 %v4875
  %4877 = vmatprep.subr.mxu0 0.0
  %v4878 = vand.u32 %v52, 4294901760
  %4879 = vmatpush1.msra.mxu0 %v4878
  %4880 = vmatprep.subr.mxu0 0.0
  %v4881 = vand.u32 %v53, 4294901760
  %4882 = vmatpush1.msra.mxu0 %v4881
  %4883 = vmatprep.subr.mxu0 0.0
  %v4884 = vand.u32 %v54, 4294901760
  %4885 = vmatpush1.msra.mxu0 %v4884
  %4886 = vmatprep.subr.mxu0 0.0
  %v4887 = vand.u32 %v55, 4294901760
  %4888 = vmatpush1.msra.mxu0 %v4887
  %4889 = vmatprep.subr.mxu0 0.0
  %v4890 = vand.u32 %v56, 4294901760
  %4891 = vmatpush1.msra.mxu0 %v4890
  %4892 = vmatprep.subr.mxu0 0.0
  %v4893 = vand.u32 %v57, 4294901760
  %4894 = vmatpush1.msra.mxu0 %v4893
  %4895 = vmatprep.subr.mxu0 0.0
  %v4896 = vand.u32 %v58, 4294901760
  %4897 = vmatpush1.msra.mxu0 %v4896
  %4898 = vmatprep.subr.mxu0 0.0
  %v4899 = vand.u32 %v59, 4294901760
  %4900 = vmatpush1.msra.mxu0 %v4899
  %4901 = vmatprep.subr.mxu0 0.0
  %v4902 = vand.u32 %v60, 4294901760
  %4903 = vmatpush1.msra.mxu0 %v4902
  %4904 = vmatprep.subr.mxu0 0.0
  %v4905 = vand.u32 %v61, 4294901760
  %4906 = vmatpush1.msra.mxu0 %v4905
  %4907 = vmatprep.subr.mxu0 0.0
  %v4908 = vand.u32 %v62, 4294901760
  %4909 = vmatpush1.msra.mxu0 %v4908
  %4910 = vmatprep.subr.mxu0 0.0
  %4911 = vmatpush1.msra.mxu0 0.0
  %4912 = vmatprep.subr.mxu0 0.0
  %4913 = vmatpush1.msra.mxu0 0.0
  %4914 = vmatprep.subr.mxu0 0.0
  %4915 = vmatpush1.msra.mxu0 0.0
  %4916 = vmatprep.subr.mxu0 0.0
  %4917 = vmatpush1.msra.mxu0 0.0
  %4918 = vmatprep.subr.mxu0 0.0
  %4919 = vmatpush1.msra.mxu0 0.0
  %4920 = vmatprep.subr.mxu0 0.0
  %4921 = vmatpush1.msra.mxu0 0.0
  %4922 = vmatprep.subr.mxu0 0.0
  %4923 = vmatpush1.msra.mxu0 0.0
  %4924 = vmatprep.subr.mxu0 0.0
  %4925 = vmatpush1.msra.mxu0 0.0
  %4926 = vmatprep.subr.mxu0 0.0
  %4927 = vmatpush1.msra.mxu0 0.0
  %4928 = vmatprep.subr.mxu0 0.0
  %4929 = vmatpush1.msra.mxu0 0.0
  %4930 = vmatprep.subr.mxu0 0.0
  %4931 = vmatpush1.msra.mxu0 0.0
  %4932 = vmatprep.subr.mxu0 0.0
  %4933 = vmatpush1.msra.mxu0 0.0
  %4934 = vmatprep.subr.mxu0 0.0
  %4935 = vmatpush1.msra.mxu0 0.0
  %4936 = vmatprep.subr.mxu0 0.0
  %4937 = vmatpush1.msra.mxu0 0.0
  %4938 = vmatprep.subr.mxu0 0.0
  %4939 = vmatpush1.msra.mxu0 0.0
  %4940 = vmatprep.subr.mxu0 0.0
  %4941 = vmatpush1.msra.mxu0 0.0
  %4942 = vmatprep.mubr.f32.mxu0 0.0
  %v4943 = vand.u32 %v4306, 4294901760
  %4944 = vmatmul.mubr.f32.gmra.mrb[0].mxu0 %v4943
  %v4945 = vpop.f32.mrb[0].mxu0
  %v4946 = vadd.f32 %v4859, %v4945
  %v4947 = vpop.f32.mrb[0].mxu0
  %4948 = vdwg.mxu0
  %v4949 = vlog2.pop %v4946
  %v4950 = vmul.f32 %v4949, 0.6931472
  %v4951 = vadd.f32 %v4284, %v4950
  %v4952 = vadd.f32 %v4951, %v4104
  %v4953 = vsel %vm4113, 1, 0
  %v4954 = vsel %vm4114, 1, 0
  %v4955 = vsel %vm4115, 1, 0
  %v4956 = vsel %vm4116, 1, 0
  %v4957 = vsel %vm4117, 1, 0
  %v4958 = vsel %vm4118, 1, 0
  %v4959 = vsel %vm4119, 1, 0
  %v4960 = vsel %vm4120, 1, 0
  %4961 = vset.pattern.permute.xlu0 0
  %4962 = vperm.xlu0 %4961, %v4953
  %v4963 = vpop.permute.xlu0 %4962
  %4964 = vset.pattern.permute.xlu0 0
  %4965 = vperm.xlu0 %4964, %v4954
  %v4966 = vpop.permute.xlu0 %4965
  %4967 = vset.pattern.permute.xlu0 0
  %4968 = vperm.xlu0 %4967, %v4955
  %v4969 = vpop.permute.xlu0 %4968
  %4970 = vset.pattern.permute.xlu0 0
  %4971 = vperm.xlu0 %4970, %v4956
  %v4972 = vpop.permute.xlu0 %4971
  %4973 = vset.pattern.permute.xlu0 0
  %4974 = vperm.xlu0 %4973, %v4957
  %v4975 = vpop.permute.xlu0 %4974
  %4976 = vset.pattern.permute.xlu0 0
  %4977 = vperm.xlu0 %4976, %v4958
  %v4978 = vpop.permute.xlu0 %4977
  %4979 = vset.pattern.permute.xlu0 0
  %4980 = vperm.xlu0 %4979, %v4959
  %v4981 = vpop.permute.xlu0 %4980
  %4982 = vset.pattern.permute.xlu0 0
  %4983 = vperm.xlu0 %4982, %v4960
  %v4984 = vpop.permute.xlu0 %4983
  %vm4985 = vcmp.eq.s32.totalorder %v4963, 1
  %vm4986 = vcmp.eq.s32.totalorder %v4966, 1
  %vm4987 = vcmp.eq.s32.totalorder %v4969, 1
  %vm4988 = vcmp.eq.s32.totalorder %v4972, 1
  %vm4989 = vcmp.eq.s32.totalorder %v4975, 1
  %vm4990 = vcmp.eq.s32.totalorder %v4978, 1
  %vm4991 = vcmp.eq.s32.totalorder %v4981, 1
  %vm4992 = vcmp.eq.s32.totalorder %v4984, 1
  %v4994 = vrot.slane %v4952, 1
  %v4995 = vrot.slane %v4952, 2
  %v4996 = vrot.slane %v4952, 3
  %v4997 = vrot.slane %v4952, 4
  %v4998 = vrot.slane %v4952, 5
  %v4999 = vrot.slane %v4952, 6
  %v5000 = vrot.slane %v4952, 7
  %v5009 = vsel %vm4985, %v4952, %v4006
  %v5010 = vsel %vm4986, %v4994, %v4007
  %v5011 = vsel %vm4987, %v4995, %v4008
  %v5012 = vsel %vm4988, %v4996, %v4009
  %v5013 = vsel %vm4989, %v4997, %v4010
  %v5014 = vsel %vm4990, %v4998, %v4011
  %v5015 = vsel %vm4991, %v4999, %v4012
  %v5016 = vsel %vm4992, %v5000, %v4013
  %v5017 = vld [vmem:[%s0 + $0x5] sm:$0x1]
  %v5018 = vld [vmem:[%s0 + $0xd] sm:$0x1]
  %v5019 = vld [vmem:[%s0 + $0x15] sm:$0x1]
  %v5020 = vld [vmem:[%s0 + $0x1d] sm:$0x1]
  %v5021 = vld [vmem:[%s0 + $0x25] sm:$0x1]
  %v5022 = vld [vmem:[%s0 + $0x2d] sm:$0x1]
  %v5023 = vld [vmem:[%s0 + $0x35] sm:$0x1]
  %v5024 = vld [vmem:[%s0 + $0x3d] sm:$0x1]
  %v5025 = vpack.c.bf16 %v5017, %v5017
  %v5026 = vpack.c.bf16 %v5018, %v5018
  %v5027 = vpack.c.bf16 %v5019, %v5019
  %v5028 = vpack.c.bf16 %v5020, %v5020
  %v5029 = vpack.c.bf16 %v5021, %v5021
  %v5030 = vpack.c.bf16 %v5022, %v5022
  %v5031 = vpack.c.bf16 %v5023, %v5023
  %v5032 = vpack.c.bf16 %v5024, %v5024
  %v5041 = vunpack.c.l.b16 %v5025
  %v5042 = vunpack.c.l.b16 %v5026
  %v5043 = vunpack.c.l.b16 %v5027
  %v5044 = vunpack.c.l.b16 %v5028
  %v5045 = vunpack.c.l.b16 %v5029
  %v5046 = vunpack.c.l.b16 %v5030
  %v5047 = vunpack.c.l.b16 %v5031
  %v5048 = vunpack.c.l.b16 %v5032
  %v5049 = vrot.slane %v5042, 7
  %v5050 = vsel %vm108, %v5049, %v5041
  %v5051 = vrot.slane %v5043, 6
  %v5052 = vsel %vm111, %v5051, %v5050
  %v5053 = vrot.slane %v5044, 5
  %v5054 = vsel %vm114, %v5053, %v5052
  %v5055 = vrot.slane %v5045, 4
  %v5056 = vsel %vm117, %v5055, %v5054
  %v5057 = vrot.slane %v5046, 3
  %v5058 = vsel %vm120, %v5057, %v5056
  %v5059 = vrot.slane %v5047, 2
  %v5060 = vsel %vm123, %v5059, %v5058
  %v5061 = vrot.slane %v5048, 1
  %v5062 = vsel %vm126, %v5061, %v5060
  %v5063 = vpack.c.b16 %v5062, %v5062
  %v5065 = vsel %vm141, %v5063, 0
  %5067 = vmatprep.subr.bf16.mxu0 0
  %5068 = vmatpush1.bf16.msra.mxu0 %v137
  %5069 = vmatprep.subr.bf16.mxu0 0
  %5070 = vmatpush1.bf16.msra.mxu0 %v138
  %5071 = vmatprep.subr.bf16.mxu0 0
  %5072 = vmatpush1.bf16.msra.mxu0 0
  %5073 = vmatprep.subr.bf16.mxu0 0
  %5074 = vmatpush1.bf16.msra.mxu0 0
  %5075 = vmatprep.subr.bf16.mxu0 0
  %5076 = vmatpush1.bf16.msra.mxu0 0
  %5077 = vmatprep.subr.bf16.mxu0 0
  %5078 = vmatpush1.bf16.msra.mxu0 0
  %5079 = vmatprep.subr.bf16.mxu0 0
  %5080 = vmatpush1.bf16.msra.mxu0 0
  %5081 = vmatprep.subr.bf16.mxu0 0
  %5082 = vmatpush1.bf16.msra.mxu0 0
  %5083 = vmatprep.subr.bf16.mxu0 0
  %5084 = vmatpush1.bf16.msra.mxu0 0
  %5085 = vmatprep.subr.bf16.mxu0 0
  %5086 = vmatpush1.bf16.msra.mxu0 0
  %5087 = vmatprep.subr.bf16.mxu0 0
  %5088 = vmatpush1.bf16.msra.mxu0 0
  %5089 = vmatprep.subr.bf16.mxu0 0
  %5090 = vmatpush1.bf16.msra.mxu0 0
  %5091 = vmatprep.subr.bf16.mxu0 0
  %5092 = vmatpush1.bf16.msra.mxu0 0
  %5093 = vmatprep.subr.bf16.mxu0 0
  %5094 = vmatpush1.bf16.msra.mxu0 0
  %5095 = vmatprep.subr.bf16.mxu0 0
  %5096 = vmatpush1.bf16.msra.mxu0 0
  %5097 = vmatprep.subr.bf16.mxu0 0
  %5098 = vmatpush1.bf16.msra.mxu0 0
  %5099 = vmatprep.mubr.bf16.mxu0 0
  %5100 = vmatmul.mubr.bf16.gmra.mrb[0].mxu0 %v5065
  %v5101 = vpop.f32.mrb[0].mxu0
  %v5102 = vadd.f32 %v89, %v5101
  %v5103 = vpop.f32.mrb[0].mxu0
  %v5104 = vpop.f32.mrb[0].mxu0
  %v5105 = vpop.f32.mrb[0].mxu0
  %5106 = vdwg.mxu0
  %v5107 = vmax.f32 %v5102, 0.0
  %v5108 = vld [vmem:[%s1 + $0x5] sm:$0x1]
  %v5109 = vld [vmem:[%s1 + $0xd] sm:$0x1]
  %v5110 = vld [vmem:[%s1 + $0x15] sm:$0x1]
  %v5111 = vld [vmem:[%s1 + $0x1d] sm:$0x1]
  %v5112 = vld [vmem:[%s1 + $0x25] sm:$0x1]
  %v5113 = vld [vmem:[%s1 + $0x2d] sm:$0x1]
  %v5114 = vld [vmem:[%s1 + $0x35] sm:$0x1]
  %v5115 = vld [vmem:[%s1 + $0x3d] sm:$0x1]
  %vm5116 = vcmp.gt.f32.partialorder %v5108, 0.0
  %vm5117 = vcmp.gt.f32.partialorder %v5109, 0.0
  %vm5118 = vcmp.gt.f32.partialorder %v5110, 0.0
  %vm5119 = vcmp.gt.f32.partialorder %v5111, 0.0
  %vm5120 = vcmp.gt.f32.partialorder %v5112, 0.0
  %vm5121 = vcmp.gt.f32.partialorder %v5113, 0.0
  %vm5122 = vcmp.gt.f32.partialorder %v5114, 0.0
  %vm5123 = vcmp.gt.f32.partialorder %v5115, 0.0
  %v5124 = vld [vmem:[%s2 + $0x5] sm:$0x1]
  %v5125 = vld [vmem:[%s2 + $0xd] sm:$0x1]
  %v5126 = vld [vmem:[%s2 + $0x15] sm:$0x1]
  %v5127 = vld [vmem:[%s2 + $0x1d] sm:$0x1]
  %v5128 = vld [vmem:[%s2 + $0x25] sm:$0x1]
  %v5129 = vld [vmem:[%s2 + $0x2d] sm:$0x1]
  %v5130 = vld [vmem:[%s2 + $0x35] sm:$0x1]
  %v5131 = vld [vmem:[%s2 + $0x3d] sm:$0x1]
  %5132 = vset.pattern.permute.xlu0 0
  %5133 = vperm.xlu0 %5132, %v5124
  %v5134 = vpop.permute.xlu0 %5133
  %5135 = vset.pattern.permute.xlu0 0
  %5136 = vperm.xlu0 %5135, %v5125
  %v5137 = vpop.permute.xlu0 %5136
  %5138 = vset.pattern.permute.xlu0 0
  %5139 = vperm.xlu0 %5138, %v5126
  %v5140 = vpop.permute.xlu0 %5139
  %5141 = vset.pattern.permute.xlu0 0
  %5142 = vperm.xlu0 %5141, %v5127
  %v5143 = vpop.permute.xlu0 %5142
  %5144 = vset.pattern.permute.xlu0 0
  %5145 = vperm.xlu0 %5144, %v5128
  %v5146 = vpop.permute.xlu0 %5145
  %5147 = vset.pattern.permute.xlu0 0
  %5148 = vperm.xlu0 %5147, %v5129
  %v5149 = vpop.permute.xlu0 %5148
  %5150 = vset.pattern.permute.xlu0 0
  %5151 = vperm.xlu0 %5150, %v5130
  %v5152 = vpop.permute.xlu0 %5151
  %5153 = vset.pattern.permute.xlu0 0
  %5154 = vperm.xlu0 %5153, %v5131
  %v5155 = vpop.permute.xlu0 %5154
  %v5156 = vrot.slane %v5137, 7
  %v5157 = vsel %vm108, %v5156, %v5134
  %v5158 = vrot.slane %v5140, 6
  %v5159 = vsel %vm111, %v5158, %v5157
  %v5160 = vrot.slane %v5143, 5
  %v5161 = vsel %vm114, %v5160, %v5159
  %v5162 = vrot.slane %v5146, 4
  %v5163 = vsel %vm117, %v5162, %v5161
  %v5164 = vrot.slane %v5149, 3
  %v5165 = vsel %vm120, %v5164, %v5163
  %v5166 = vrot.slane %v5152, 2
  %v5167 = vsel %vm123, %v5166, %v5165
  %v5168 = vrot.slane %v5155, 1
  %v5169 = vsel %vm126, %v5168, %v5167
  %vm5170 = vcmp.eq.s32.totalorder %v68, %v5169
  %v5171 = vsel %vm5170, %v5107, 0.0
  %5172 = vadd.xlane.f32.xlu0 %v5171
  %v5173 = vpop.xlane.xlu0 %5172
  %v5175 = vrot.slane %v5173, 1
  %v5176 = vrot.slane %v5173, 2
  %v5177 = vrot.slane %v5173, 3
  %v5178 = vrot.slane %v5173, 4
  %v5179 = vrot.slane %v5173, 5
  %v5180 = vrot.slane %v5173, 6
  %v5181 = vrot.slane %v5173, 7
  %v5190 = vsel %vm5116, %v5173, 0.0
  %v5191 = vsel %vm5117, %v5175, 0.0
  %v5192 = vsel %vm5118, %v5176, 0.0
  %v5193 = vsel %vm5119, %v5177, 0.0
  %v5194 = vsel %vm5120, %v5178, 0.0
  %v5195 = vsel %vm5121, %v5179, 0.0
  %v5196 = vsel %vm5122, %v5180, 0.0
  %v5197 = vsel %vm5123, %v5181, 0.0
  %v5206 = vrot.slane %v5191, 7
  %v5207 = vsel %vm108, %v5206, %v5190
  %v5208 = vrot.slane %v5192, 6
  %v5209 = vsel %vm111, %v5208, %v5207
  %v5210 = vrot.slane %v5193, 5
  %v5211 = vsel %vm114, %v5210, %v5209
  %v5212 = vrot.slane %v5194, 4
  %v5213 = vsel %vm117, %v5212, %v5211
  %v5214 = vrot.slane %v5195, 3
  %v5215 = vsel %vm120, %v5214, %v5213
  %v5216 = vrot.slane %v5196, 2
  %v5217 = vsel %vm123, %v5216, %v5215
  %v5218 = vrot.slane %v5197, 1
  %v5219 = vsel %vm126, %v5218, %v5217
  %v5221 = vadd.f32 %v4218, %v5219
  %v5230 = vrot.slane %v5010, 7
  %v5231 = vsel %vm108, %v5230, %v5009
  %v5232 = vrot.slane %v5011, 6
  %v5233 = vsel %vm111, %v5232, %v5231
  %v5234 = vrot.slane %v5012, 5
  %v5235 = vsel %vm114, %v5234, %v5233
  %v5236 = vrot.slane %v5013, 4
  %v5237 = vsel %vm117, %v5236, %v5235
  %v5238 = vrot.slane %v5014, 3
  %v5239 = vsel %vm120, %v5238, %v5237
  %v5240 = vrot.slane %v5015, 2
  %v5241 = vsel %vm123, %v5240, %v5239
  %v5242 = vrot.slane %v5016, 1
  %v5243 = vsel %vm126, %v5242, %v5241
  %5245 = vmax.xlane.f32.xlu0 %v5243
  %v5246 = vpop.xlane.xlu0 %5245
  %v5248 = vrot.slane %v5246, 1
  %v5249 = vrot.slane %v5246, 2
  %v5250 = vrot.slane %v5246, 3
  %v5251 = vrot.slane %v5246, 4
  %v5252 = vrot.slane %v5246, 5
  %v5253 = vrot.slane %v5246, 6
  %v5254 = vrot.slane %v5246, 7
  %v5263 = vsub.f32 %v5009, %v5246
  %v5264 = vsub.f32 %v5010, %v5248
  %v5265 = vsub.f32 %v5011, %v5249
  %v5266 = vsub.f32 %v5012, %v5250
  %v5267 = vsub.f32 %v5013, %v5251
  %v5268 = vsub.f32 %v5014, %v5252
  %v5269 = vsub.f32 %v5015, %v5253
  %v5270 = vsub.f32 %v5016, %v5254
  %v5271 = vmul.f32 %v5263, 1.442695
  %v5272 = vpow.pop %v5271
  %v5273 = vmul.f32 %v5264, 1.442695
  %v5274 = vpow.pop %v5273
  %v5275 = vmul.f32 %v5265, 1.442695
  %v5276 = vpow.pop %v5275
  %v5277 = vmul.f32 %v5266, 1.442695
  %v5278 = vpow.pop %v5277
  %v5279 = vmul.f32 %v5267, 1.442695
  %v5280 = vpow.pop %v5279
  %v5281 = vmul.f32 %v5268, 1.442695
  %v5282 = vpow.pop %v5281
  %v5283 = vmul.f32 %v5269, 1.442695
  %v5284 = vpow.pop %v5283
  %v5285 = vmul.f32 %v5270, 1.442695
  %v5286 = vpow.pop %v5285
  %v5287 = vadd.f32 %v5246, %v313
  %v5296 = vrot.slane %v5274, 7
  %v5297 = vsel %vm108, %v5296, %v5272
  %v5298 = vrot.slane %v5276, 6
  %v5299 = vsel %vm111, %v5298, %v5297
  %v5300 = vrot.slane %v5278, 5
  %v5301 = vsel %vm114, %v5300, %v5299
  %v5302 = vrot.slane %v5280, 4
  %v5303 = vsel %vm117, %v5302, %v5301
  %v5304 = vrot.slane %v5282, 3
  %v5305 = vsel %vm120, %v5304, %v5303
  %v5306 = vrot.slane %v5284, 2
  %v5307 = vsel %vm123, %v5306, %v5305
  %v5308 = vrot.slane %v5286, 1
  %v5309 = vsel %vm126, %v5308, %v5307
  %5311 = vmatprep.subr.mxu0 0.0
  %v5312 = vand.u32 %v47, 4294901760
  %5313 = vmatpush1.msra.mxu0 %v5312
  %5314 = vmatprep.subr.mxu0 0.0
  %v5315 = vand.u32 %v48, 4294901760
  %5316 = vmatpush1.msra.mxu0 %v5315
  %5317 = vmatprep.subr.mxu0 0.0
  %v5318 = vand.u32 %v49, 4294901760
  %5319 = vmatpush1.msra.mxu0 %v5318
  %5320 = vmatprep.subr.mxu0 0.0
  %v5321 = vand.u32 %v50, 4294901760
  %5322 = vmatpush1.msra.mxu0 %v5321
  %5323 = vmatprep.subr.mxu0 0.0
  %v5324 = vand.u32 %v51, 4294901760
  %5325 = vmatpush1.msra.mxu0 %v5324
  %5326 = vmatprep.subr.mxu0 0.0
  %v5327 = vand.u32 %v52, 4294901760
  %5328 = vmatpush1.msra.mxu0 %v5327
  %5329 = vmatprep.subr.mxu0 0.0
  %v5330 = vand.u32 %v53, 4294901760
  %5331 = vmatpush1.msra.mxu0 %v5330
  %5332 = vmatprep.subr.mxu0 0.0
  %v5333 = vand.u32 %v54, 4294901760
  %5334 = vmatpush1.msra.mxu0 %v5333
  %5335 = vmatprep.subr.mxu0 0.0
  %v5336 = vand.u32 %v55, 4294901760
  %5337 = vmatpush1.msra.mxu0 %v5336
  %5338 = vmatprep.subr.mxu0 0.0
  %v5339 = vand.u32 %v56, 4294901760
  %5340 = vmatpush1.msra.mxu0 %v5339
  %5341 = vmatprep.subr.mxu0 0.0
  %v5342 = vand.u32 %v57, 4294901760
  %5343 = vmatpush1.msra.mxu0 %v5342
  %5344 = vmatprep.subr.mxu0 0.0
  %v5345 = vand.u32 %v58, 4294901760
  %5346 = vmatpush1.msra.mxu0 %v5345
  %5347 = vmatprep.subr.mxu0 0.0
  %v5348 = vand.u32 %v59, 4294901760
  %5349 = vmatpush1.msra.mxu0 %v5348
  %5350 = vmatprep.subr.mxu0 0.0
  %v5351 = vand.u32 %v60, 4294901760
  %5352 = vmatpush1.msra.mxu0 %v5351
  %5353 = vmatprep.subr.mxu0 0.0
  %v5354 = vand.u32 %v61, 4294901760
  %5355 = vmatpush1.msra.mxu0 %v5354
  %5356 = vmatprep.subr.mxu0 0.0
  %v5357 = vand.u32 %v62, 4294901760
  %5358 = vmatpush1.msra.mxu0 %v5357
  %5359 = vmatprep.subr.mxu0 0.0
  %5360 = vmatpush1.msra.mxu0 0.0
  %5361 = vmatprep.subr.mxu0 0.0
  %5362 = vmatpush1.msra.mxu0 0.0
  %5363 = vmatprep.subr.mxu0 0.0
  %5364 = vmatpush1.msra.mxu0 0.0
  %5365 = vmatprep.subr.mxu0 0.0
  %5366 = vmatpush1.msra.mxu0 0.0
  %5367 = vmatprep.subr.mxu0 0.0
  %5368 = vmatpush1.msra.mxu0 0.0
  %5369 = vmatprep.subr.mxu0 0.0
  %5370 = vmatpush1.msra.mxu0 0.0
  %5371 = vmatprep.subr.mxu0 0.0
  %5372 = vmatpush1.msra.mxu0 0.0
  %5373 = vmatprep.subr.mxu0 0.0
  %5374 = vmatpush1.msra.mxu0 0.0
  %5375 = vmatprep.subr.mxu0 0.0
  %5376 = vmatpush1.msra.mxu0 0.0
  %5377 = vmatprep.subr.mxu0 0.0
  %5378 = vmatpush1.msra.mxu0 0.0
  %5379 = vmatprep.subr.mxu0 0.0
  %5380 = vmatpush1.msra.mxu0 0.0
  %5381 = vmatprep.subr.mxu0 0.0
  %5382 = vmatpush1.msra.mxu0 0.0
  %5383 = vmatprep.subr.mxu0 0.0
  %5384 = vmatpush1.msra.mxu0 0.0
  %5385 = vmatprep.subr.mxu0 0.0
  %5386 = vmatpush1.msra.mxu0 0.0
  %5387 = vmatprep.subr.mxu0 0.0
  %5388 = vmatpush1.msra.mxu0 0.0
  %5389 = vmatprep.subr.mxu0 0.0
  %5390 = vmatpush1.msra.mxu0 0.0
  %5391 = vmatprep.mubr.f32.mxu0 0.0
  %v5392 = vand.u32 %v5309, 4294901760
  %v5393 = vsub.f32 %v5309, %v5392
  %v5394 = vand.u32 %v5393, 4294901760
  %v5395 = vsub.f32 %v5393, %v5394
  %v5396 = vand.u32 %v5395, 4294901760
  %5397 = vmatmul.mubr.f32.gmra.mrb[0].mxu0 %v5396
  %v5398 = vpop.f32.mrb[0].mxu0
  %v5399 = vadd.f32 1e-30, %v5398
  %v5400 = vpop.f32.mrb[0].mxu0
  %5401 = vdwg.mxu0
  %5402 = vmatprep.subr.mxu0 0.0
  %v5403 = vand.u32 %v47, 4294901760
  %v5404 = vsub.f32 %v47, %v5403
  %v5405 = vand.u32 %v5404, 4294901760
  %v5406 = vsub.f32 %v5404, %v5405
  %v5407 = vand.u32 %v5406, 4294901760
  %5408 = vmatpush1.msra.mxu0 %v5407
  %5409 = vmatprep.subr.mxu0 0.0
  %v5410 = vand.u32 %v48, 4294901760
  %v5411 = vsub.f32 %v48, %v5410
  %v5412 = vand.u32 %v5411, 4294901760
  %v5413 = vsub.f32 %v5411, %v5412
  %v5414 = vand.u32 %v5413, 4294901760
  %5415 = vmatpush1.msra.mxu0 %v5414
  %5416 = vmatprep.subr.mxu0 0.0
  %v5417 = vand.u32 %v49, 4294901760
  %v5418 = vsub.f32 %v49, %v5417
  %v5419 = vand.u32 %v5418, 4294901760
  %v5420 = vsub.f32 %v5418, %v5419
  %v5421 = vand.u32 %v5420, 4294901760
  %5422 = vmatpush1.msra.mxu0 %v5421
  %5423 = vmatprep.subr.mxu0 0.0
  %v5424 = vand.u32 %v50, 4294901760
  %v5425 = vsub.f32 %v50, %v5424
  %v5426 = vand.u32 %v5425, 4294901760
  %v5427 = vsub.f32 %v5425, %v5426
  %v5428 = vand.u32 %v5427, 4294901760
  %5429 = vmatpush1.msra.mxu0 %v5428
  %5430 = vmatprep.subr.mxu0 0.0
  %v5431 = vand.u32 %v51, 4294901760
  %v5432 = vsub.f32 %v51, %v5431
  %v5433 = vand.u32 %v5432, 4294901760
  %v5434 = vsub.f32 %v5432, %v5433
  %v5435 = vand.u32 %v5434, 4294901760
  %5436 = vmatpush1.msra.mxu0 %v5435
  %5437 = vmatprep.subr.mxu0 0.0
  %v5438 = vand.u32 %v52, 4294901760
  %v5439 = vsub.f32 %v52, %v5438
  %v5440 = vand.u32 %v5439, 4294901760
  %v5441 = vsub.f32 %v5439, %v5440
  %v5442 = vand.u32 %v5441, 4294901760
  %5443 = vmatpush1.msra.mxu0 %v5442
  %5444 = vmatprep.subr.mxu0 0.0
  %v5445 = vand.u32 %v53, 4294901760
  %v5446 = vsub.f32 %v53, %v5445
  %v5447 = vand.u32 %v5446, 4294901760
  %v5448 = vsub.f32 %v5446, %v5447
  %v5449 = vand.u32 %v5448, 4294901760
  %5450 = vmatpush1.msra.mxu0 %v5449
  %5451 = vmatprep.subr.mxu0 0.0
  %v5452 = vand.u32 %v54, 4294901760
  %v5453 = vsub.f32 %v54, %v5452
  %v5454 = vand.u32 %v5453, 4294901760
  %v5455 = vsub.f32 %v5453, %v5454
  %v5456 = vand.u32 %v5455, 4294901760
  %5457 = vmatpush1.msra.mxu0 %v5456
  %5458 = vmatprep.subr.mxu0 0.0
  %v5459 = vand.u32 %v55, 4294901760
  %v5460 = vsub.f32 %v55, %v5459
  %v5461 = vand.u32 %v5460, 4294901760
  %v5462 = vsub.f32 %v5460, %v5461
  %v5463 = vand.u32 %v5462, 4294901760
  %5464 = vmatpush1.msra.mxu0 %v5463
  %5465 = vmatprep.subr.mxu0 0.0
  %v5466 = vand.u32 %v56, 4294901760
  %v5467 = vsub.f32 %v56, %v5466
  %v5468 = vand.u32 %v5467, 4294901760
  %v5469 = vsub.f32 %v5467, %v5468
  %v5470 = vand.u32 %v5469, 4294901760
  %5471 = vmatpush1.msra.mxu0 %v5470
  %5472 = vmatprep.subr.mxu0 0.0
  %v5473 = vand.u32 %v57, 4294901760
  %v5474 = vsub.f32 %v57, %v5473
  %v5475 = vand.u32 %v5474, 4294901760
  %v5476 = vsub.f32 %v5474, %v5475
  %v5477 = vand.u32 %v5476, 4294901760
  %5478 = vmatpush1.msra.mxu0 %v5477
  %5479 = vmatprep.subr.mxu0 0.0
  %v5480 = vand.u32 %v58, 4294901760
  %v5481 = vsub.f32 %v58, %v5480
  %v5482 = vand.u32 %v5481, 4294901760
  %v5483 = vsub.f32 %v5481, %v5482
  %v5484 = vand.u32 %v5483, 4294901760
  %5485 = vmatpush1.msra.mxu0 %v5484
  %5486 = vmatprep.subr.mxu0 0.0
  %v5487 = vand.u32 %v59, 4294901760
  %v5488 = vsub.f32 %v59, %v5487
  %v5489 = vand.u32 %v5488, 4294901760
  %v5490 = vsub.f32 %v5488, %v5489
  %v5491 = vand.u32 %v5490, 4294901760
  %5492 = vmatpush1.msra.mxu0 %v5491
  %5493 = vmatprep.subr.mxu0 0.0
  %v5494 = vand.u32 %v60, 4294901760
  %v5495 = vsub.f32 %v60, %v5494
  %v5496 = vand.u32 %v5495, 4294901760
  %v5497 = vsub.f32 %v5495, %v5496
  %v5498 = vand.u32 %v5497, 4294901760
  %5499 = vmatpush1.msra.mxu0 %v5498
  %5500 = vmatprep.subr.mxu0 0.0
  %v5501 = vand.u32 %v61, 4294901760
  %v5502 = vsub.f32 %v61, %v5501
  %v5503 = vand.u32 %v5502, 4294901760
  %v5504 = vsub.f32 %v5502, %v5503
  %v5505 = vand.u32 %v5504, 4294901760
  %5506 = vmatpush1.msra.mxu0 %v5505
  %5507 = vmatprep.subr.mxu0 0.0
  %v5508 = vand.u32 %v62, 4294901760
  %v5509 = vsub.f32 %v62, %v5508
  %v5510 = vand.u32 %v5509, 4294901760
  %v5511 = vsub.f32 %v5509, %v5510
  %v5512 = vand.u32 %v5511, 4294901760
  %5513 = vmatpush1.msra.mxu0 %v5512
  %5514 = vmatprep.subr.mxu0 0.0
  %5515 = vmatpush1.msra.mxu0 0.0
  %5516 = vmatprep.subr.mxu0 0.0
  %5517 = vmatpush1.msra.mxu0 0.0
  %5518 = vmatprep.subr.mxu0 0.0
  %5519 = vmatpush1.msra.mxu0 0.0
  %5520 = vmatprep.subr.mxu0 0.0
  %5521 = vmatpush1.msra.mxu0 0.0
  %5522 = vmatprep.subr.mxu0 0.0
  %5523 = vmatpush1.msra.mxu0 0.0
  %5524 = vmatprep.subr.mxu0 0.0
  %5525 = vmatpush1.msra.mxu0 0.0
  %5526 = vmatprep.subr.mxu0 0.0
  %5527 = vmatpush1.msra.mxu0 0.0
  %5528 = vmatprep.subr.mxu0 0.0
  %5529 = vmatpush1.msra.mxu0 0.0
  %5530 = vmatprep.subr.mxu0 0.0
  %5531 = vmatpush1.msra.mxu0 0.0
  %5532 = vmatprep.subr.mxu0 0.0
  %5533 = vmatpush1.msra.mxu0 0.0
  %5534 = vmatprep.subr.mxu0 0.0
  %5535 = vmatpush1.msra.mxu0 0.0
  %5536 = vmatprep.subr.mxu0 0.0
  %5537 = vmatpush1.msra.mxu0 0.0
  %5538 = vmatprep.subr.mxu0 0.0
  %5539 = vmatpush1.msra.mxu0 0.0
  %5540 = vmatprep.subr.mxu0 0.0
  %5541 = vmatpush1.msra.mxu0 0.0
  %5542 = vmatprep.subr.mxu0 0.0
  %5543 = vmatpush1.msra.mxu0 0.0
  %5544 = vmatprep.subr.mxu0 0.0
  %5545 = vmatpush1.msra.mxu0 0.0
  %5546 = vmatprep.mubr.f32.mxu0 0.0
  %v5547 = vand.u32 %v5309, 4294901760
  %5548 = vmatmul.mubr.f32.gmra.mrb[0].mxu0 %v5547
  %v5549 = vpop.f32.mrb[0].mxu0
  %v5550 = vadd.f32 %v5399, %v5549
  %v5551 = vpop.f32.mrb[0].mxu0
  %5552 = vdwg.mxu0
  %5553 = vmatprep.subr.mxu0 0.0
  %v5554 = vand.u32 %v47, 4294901760
  %v5555 = vsub.f32 %v47, %v5554
  %5556 = vmatpush1.msra.mxu0 %v5555
  %5557 = vmatprep.subr.mxu0 0.0
  %v5558 = vand.u32 %v48, 4294901760
  %v5559 = vsub.f32 %v48, %v5558
  %5560 = vmatpush1.msra.mxu0 %v5559
  %5561 = vmatprep.subr.mxu0 0.0
  %v5562 = vand.u32 %v49, 4294901760
  %v5563 = vsub.f32 %v49, %v5562
  %5564 = vmatpush1.msra.mxu0 %v5563
  %5565 = vmatprep.subr.mxu0 0.0
  %v5566 = vand.u32 %v50, 4294901760
  %v5567 = vsub.f32 %v50, %v5566
  %5568 = vmatpush1.msra.mxu0 %v5567
  %5569 = vmatprep.subr.mxu0 0.0
  %v5570 = vand.u32 %v51, 4294901760
  %v5571 = vsub.f32 %v51, %v5570
  %5572 = vmatpush1.msra.mxu0 %v5571
  %5573 = vmatprep.subr.mxu0 0.0
  %v5574 = vand.u32 %v52, 4294901760
  %v5575 = vsub.f32 %v52, %v5574
  %5576 = vmatpush1.msra.mxu0 %v5575
  %5577 = vmatprep.subr.mxu0 0.0
  %v5578 = vand.u32 %v53, 4294901760
  %v5579 = vsub.f32 %v53, %v5578
  %5580 = vmatpush1.msra.mxu0 %v5579
  %5581 = vmatprep.subr.mxu0 0.0
  %v5582 = vand.u32 %v54, 4294901760
  %v5583 = vsub.f32 %v54, %v5582
  %5584 = vmatpush1.msra.mxu0 %v5583
  %5585 = vmatprep.subr.mxu0 0.0
  %v5586 = vand.u32 %v55, 4294901760
  %v5587 = vsub.f32 %v55, %v5586
  %5588 = vmatpush1.msra.mxu0 %v5587
  %5589 = vmatprep.subr.mxu0 0.0
  %v5590 = vand.u32 %v56, 4294901760
  %v5591 = vsub.f32 %v56, %v5590
  %5592 = vmatpush1.msra.mxu0 %v5591
  %5593 = vmatprep.subr.mxu0 0.0
  %v5594 = vand.u32 %v57, 4294901760
  %v5595 = vsub.f32 %v57, %v5594
  %5596 = vmatpush1.msra.mxu0 %v5595
  %5597 = vmatprep.subr.mxu0 0.0
  %v5598 = vand.u32 %v58, 4294901760
  %v5599 = vsub.f32 %v58, %v5598
  %5600 = vmatpush1.msra.mxu0 %v5599
  %5601 = vmatprep.subr.mxu0 0.0
  %v5602 = vand.u32 %v59, 4294901760
  %v5603 = vsub.f32 %v59, %v5602
  %5604 = vmatpush1.msra.mxu0 %v5603
  %5605 = vmatprep.subr.mxu0 0.0
  %v5606 = vand.u32 %v60, 4294901760
  %v5607 = vsub.f32 %v60, %v5606
  %5608 = vmatpush1.msra.mxu0 %v5607
  %5609 = vmatprep.subr.mxu0 0.0
  %v5610 = vand.u32 %v61, 4294901760
  %v5611 = vsub.f32 %v61, %v5610
  %5612 = vmatpush1.msra.mxu0 %v5611
  %5613 = vmatprep.subr.mxu0 0.0
  %v5614 = vand.u32 %v62, 4294901760
  %v5615 = vsub.f32 %v62, %v5614
  %5616 = vmatpush1.msra.mxu0 %v5615
  %5617 = vmatprep.subr.mxu0 0.0
  %5618 = vmatpush1.msra.mxu0 0.0
  %5619 = vmatprep.subr.mxu0 0.0
  %5620 = vmatpush1.msra.mxu0 0.0
  %5621 = vmatprep.subr.mxu0 0.0
  %5622 = vmatpush1.msra.mxu0 0.0
  %5623 = vmatprep.subr.mxu0 0.0
  %5624 = vmatpush1.msra.mxu0 0.0
  %5625 = vmatprep.subr.mxu0 0.0
  %5626 = vmatpush1.msra.mxu0 0.0
  %5627 = vmatprep.subr.mxu0 0.0
  %5628 = vmatpush1.msra.mxu0 0.0
  %5629 = vmatprep.subr.mxu0 0.0
  %5630 = vmatpush1.msra.mxu0 0.0
  %5631 = vmatprep.subr.mxu0 0.0
  %5632 = vmatpush1.msra.mxu0 0.0
  %5633 = vmatprep.subr.mxu0 0.0
  %5634 = vmatpush1.msra.mxu0 0.0
  %5635 = vmatprep.subr.mxu0 0.0
  %5636 = vmatpush1.msra.mxu0 0.0
  %5637 = vmatprep.subr.mxu0 0.0
  %5638 = vmatpush1.msra.mxu0 0.0
  %5639 = vmatprep.subr.mxu0 0.0
  %5640 = vmatpush1.msra.mxu0 0.0
  %5641 = vmatprep.subr.mxu0 0.0
  %5642 = vmatpush1.msra.mxu0 0.0
  %5643 = vmatprep.subr.mxu0 0.0
  %5644 = vmatpush1.msra.mxu0 0.0
  %5645 = vmatprep.subr.mxu0 0.0
  %5646 = vmatpush1.msra.mxu0 0.0
  %5647 = vmatprep.subr.mxu0 0.0
  %5648 = vmatpush1.msra.mxu0 0.0
  %5649 = vmatprep.mubr.f32.mxu0 0.0
  %v5650 = vand.u32 %v5309, 4294901760
  %v5651 = vsub.f32 %v5309, %v5650
  %5652 = vmatmul.mubr.f32.gmra.mrb[0].mxu0 %v5651
  %v5653 = vpop.f32.mrb[0].mxu0
  %v5654 = vadd.f32 %v5550, %v5653
  %v5655 = vpop.f32.mrb[0].mxu0
  %5656 = vdwg.mxu0
  %5657 = vmatprep.subr.mxu0 0.0
  %v5658 = vand.u32 %v47, 4294901760
  %5659 = vmatpush1.msra.mxu0 %v5658
  %5660 = vmatprep.subr.mxu0 0.0
  %v5661 = vand.u32 %v48, 4294901760
  %5662 = vmatpush1.msra.mxu0 %v5661
  %5663 = vmatprep.subr.mxu0 0.0
  %v5664 = vand.u32 %v49, 4294901760
  %5665 = vmatpush1.msra.mxu0 %v5664
  %5666 = vmatprep.subr.mxu0 0.0
  %v5667 = vand.u32 %v50, 4294901760
  %5668 = vmatpush1.msra.mxu0 %v5667
  %5669 = vmatprep.subr.mxu0 0.0
  %v5670 = vand.u32 %v51, 4294901760
  %5671 = vmatpush1.msra.mxu0 %v5670
  %5672 = vmatprep.subr.mxu0 0.0
  %v5673 = vand.u32 %v52, 4294901760
  %5674 = vmatpush1.msra.mxu0 %v5673
  %5675 = vmatprep.subr.mxu0 0.0
  %v5676 = vand.u32 %v53, 4294901760
  %5677 = vmatpush1.msra.mxu0 %v5676
  %5678 = vmatprep.subr.mxu0 0.0
  %v5679 = vand.u32 %v54, 4294901760
  %5680 = vmatpush1.msra.mxu0 %v5679
  %5681 = vmatprep.subr.mxu0 0.0
  %v5682 = vand.u32 %v55, 4294901760
  %5683 = vmatpush1.msra.mxu0 %v5682
  %5684 = vmatprep.subr.mxu0 0.0
  %v5685 = vand.u32 %v56, 4294901760
  %5686 = vmatpush1.msra.mxu0 %v5685
  %5687 = vmatprep.subr.mxu0 0.0
  %v5688 = vand.u32 %v57, 4294901760
  %5689 = vmatpush1.msra.mxu0 %v5688
  %5690 = vmatprep.subr.mxu0 0.0
  %v5691 = vand.u32 %v58, 4294901760
  %5692 = vmatpush1.msra.mxu0 %v5691
  %5693 = vmatprep.subr.mxu0 0.0
  %v5694 = vand.u32 %v59, 4294901760
  %5695 = vmatpush1.msra.mxu0 %v5694
  %5696 = vmatprep.subr.mxu0 0.0
  %v5697 = vand.u32 %v60, 4294901760
  %5698 = vmatpush1.msra.mxu0 %v5697
  %5699 = vmatprep.subr.mxu0 0.0
  %v5700 = vand.u32 %v61, 4294901760
  %5701 = vmatpush1.msra.mxu0 %v5700
  %5702 = vmatprep.subr.mxu0 0.0
  %v5703 = vand.u32 %v62, 4294901760
  %5704 = vmatpush1.msra.mxu0 %v5703
  %5705 = vmatprep.subr.mxu0 0.0
  %5706 = vmatpush1.msra.mxu0 0.0
  %5707 = vmatprep.subr.mxu0 0.0
  %5708 = vmatpush1.msra.mxu0 0.0
  %5709 = vmatprep.subr.mxu0 0.0
  %5710 = vmatpush1.msra.mxu0 0.0
  %5711 = vmatprep.subr.mxu0 0.0
  %5712 = vmatpush1.msra.mxu0 0.0
  %5713 = vmatprep.subr.mxu0 0.0
  %5714 = vmatpush1.msra.mxu0 0.0
  %5715 = vmatprep.subr.mxu0 0.0
  %5716 = vmatpush1.msra.mxu0 0.0
  %5717 = vmatprep.subr.mxu0 0.0
  %5718 = vmatpush1.msra.mxu0 0.0
  %5719 = vmatprep.subr.mxu0 0.0
  %5720 = vmatpush1.msra.mxu0 0.0
  %5721 = vmatprep.subr.mxu0 0.0
  %5722 = vmatpush1.msra.mxu0 0.0
  %5723 = vmatprep.subr.mxu0 0.0
  %5724 = vmatpush1.msra.mxu0 0.0
  %5725 = vmatprep.subr.mxu0 0.0
  %5726 = vmatpush1.msra.mxu0 0.0
  %5727 = vmatprep.subr.mxu0 0.0
  %5728 = vmatpush1.msra.mxu0 0.0
  %5729 = vmatprep.subr.mxu0 0.0
  %5730 = vmatpush1.msra.mxu0 0.0
  %5731 = vmatprep.subr.mxu0 0.0
  %5732 = vmatpush1.msra.mxu0 0.0
  %5733 = vmatprep.subr.mxu0 0.0
  %5734 = vmatpush1.msra.mxu0 0.0
  %5735 = vmatprep.subr.mxu0 0.0
  %5736 = vmatpush1.msra.mxu0 0.0
  %5737 = vmatprep.mubr.f32.mxu0 0.0
  %v5738 = vand.u32 %v5309, 4294901760
  %v5739 = vsub.f32 %v5309, %v5738
  %v5740 = vand.u32 %v5739, 4294901760
  %5741 = vmatmul.mubr.f32.gmra.mrb[0].mxu0 %v5740
  %v5742 = vpop.f32.mrb[0].mxu0
  %v5743 = vadd.f32 %v5654, %v5742
  %v5744 = vpop.f32.mrb[0].mxu0
  %5745 = vdwg.mxu0
  %5746 = vmatprep.subr.mxu0 0.0
  %v5747 = vand.u32 %v47, 4294901760
  %v5748 = vsub.f32 %v47, %v5747
  %v5749 = vand.u32 %v5748, 4294901760
  %5750 = vmatpush1.msra.mxu0 %v5749
  %5751 = vmatprep.subr.mxu0 0.0
  %v5752 = vand.u32 %v48, 4294901760
  %v5753 = vsub.f32 %v48, %v5752
  %v5754 = vand.u32 %v5753, 4294901760
  %5755 = vmatpush1.msra.mxu0 %v5754
  %5756 = vmatprep.subr.mxu0 0.0
  %v5757 = vand.u32 %v49, 4294901760
  %v5758 = vsub.f32 %v49, %v5757
  %v5759 = vand.u32 %v5758, 4294901760
  %5760 = vmatpush1.msra.mxu0 %v5759
  %5761 = vmatprep.subr.mxu0 0.0
  %v5762 = vand.u32 %v50, 4294901760
  %v5763 = vsub.f32 %v50, %v5762
  %v5764 = vand.u32 %v5763, 4294901760
  %5765 = vmatpush1.msra.mxu0 %v5764
  %5766 = vmatprep.subr.mxu0 0.0
  %v5767 = vand.u32 %v51, 4294901760
  %v5768 = vsub.f32 %v51, %v5767
  %v5769 = vand.u32 %v5768, 4294901760
  %5770 = vmatpush1.msra.mxu0 %v5769
  %5771 = vmatprep.subr.mxu0 0.0
  %v5772 = vand.u32 %v52, 4294901760
  %v5773 = vsub.f32 %v52, %v5772
  %v5774 = vand.u32 %v5773, 4294901760
  %5775 = vmatpush1.msra.mxu0 %v5774
  %5776 = vmatprep.subr.mxu0 0.0
  %v5777 = vand.u32 %v53, 4294901760
  %v5778 = vsub.f32 %v53, %v5777
  %v5779 = vand.u32 %v5778, 4294901760
  %5780 = vmatpush1.msra.mxu0 %v5779
  %5781 = vmatprep.subr.mxu0 0.0
  %v5782 = vand.u32 %v54, 4294901760
  %v5783 = vsub.f32 %v54, %v5782
  %v5784 = vand.u32 %v5783, 4294901760
  %5785 = vmatpush1.msra.mxu0 %v5784
  %5786 = vmatprep.subr.mxu0 0.0
  %v5787 = vand.u32 %v55, 4294901760
  %v5788 = vsub.f32 %v55, %v5787
  %v5789 = vand.u32 %v5788, 4294901760
  %5790 = vmatpush1.msra.mxu0 %v5789
  %5791 = vmatprep.subr.mxu0 0.0
  %v5792 = vand.u32 %v56, 4294901760
  %v5793 = vsub.f32 %v56, %v5792
  %v5794 = vand.u32 %v5793, 4294901760
  %5795 = vmatpush1.msra.mxu0 %v5794
  %5796 = vmatprep.subr.mxu0 0.0
  %v5797 = vand.u32 %v57, 4294901760
  %v5798 = vsub.f32 %v57, %v5797
  %v5799 = vand.u32 %v5798, 4294901760
  %5800 = vmatpush1.msra.mxu0 %v5799
  %5801 = vmatprep.subr.mxu0 0.0
  %v5802 = vand.u32 %v58, 4294901760
  %v5803 = vsub.f32 %v58, %v5802
  %v5804 = vand.u32 %v5803, 4294901760
  %5805 = vmatpush1.msra.mxu0 %v5804
  %5806 = vmatprep.subr.mxu0 0.0
  %v5807 = vand.u32 %v59, 4294901760
  %v5808 = vsub.f32 %v59, %v5807
  %v5809 = vand.u32 %v5808, 4294901760
  %5810 = vmatpush1.msra.mxu0 %v5809
  %5811 = vmatprep.subr.mxu0 0.0
  %v5812 = vand.u32 %v60, 4294901760
  %v5813 = vsub.f32 %v60, %v5812
  %v5814 = vand.u32 %v5813, 4294901760
  %5815 = vmatpush1.msra.mxu0 %v5814
  %5816 = vmatprep.subr.mxu0 0.0
  %v5817 = vand.u32 %v61, 4294901760
  %v5818 = vsub.f32 %v61, %v5817
  %v5819 = vand.u32 %v5818, 4294901760
  %5820 = vmatpush1.msra.mxu0 %v5819
  %5821 = vmatprep.subr.mxu0 0.0
  %v5822 = vand.u32 %v62, 4294901760
  %v5823 = vsub.f32 %v62, %v5822
  %v5824 = vand.u32 %v5823, 4294901760
  %5825 = vmatpush1.msra.mxu0 %v5824
  %5826 = vmatprep.subr.mxu0 0.0
  %5827 = vmatpush1.msra.mxu0 0.0
  %5828 = vmatprep.subr.mxu0 0.0
  %5829 = vmatpush1.msra.mxu0 0.0
  %5830 = vmatprep.subr.mxu0 0.0
  %5831 = vmatpush1.msra.mxu0 0.0
  %5832 = vmatprep.subr.mxu0 0.0
  %5833 = vmatpush1.msra.mxu0 0.0
  %5834 = vmatprep.subr.mxu0 0.0
  %5835 = vmatpush1.msra.mxu0 0.0
  %5836 = vmatprep.subr.mxu0 0.0
  %5837 = vmatpush1.msra.mxu0 0.0
  %5838 = vmatprep.subr.mxu0 0.0
  %5839 = vmatpush1.msra.mxu0 0.0
  %5840 = vmatprep.subr.mxu0 0.0
  %5841 = vmatpush1.msra.mxu0 0.0
  %5842 = vmatprep.subr.mxu0 0.0
  %5843 = vmatpush1.msra.mxu0 0.0
  %5844 = vmatprep.subr.mxu0 0.0
  %5845 = vmatpush1.msra.mxu0 0.0
  %5846 = vmatprep.subr.mxu0 0.0
  %5847 = vmatpush1.msra.mxu0 0.0
  %5848 = vmatprep.subr.mxu0 0.0
  %5849 = vmatpush1.msra.mxu0 0.0
  %5850 = vmatprep.subr.mxu0 0.0
  %5851 = vmatpush1.msra.mxu0 0.0
  %5852 = vmatprep.subr.mxu0 0.0
  %5853 = vmatpush1.msra.mxu0 0.0
  %5854 = vmatprep.subr.mxu0 0.0
  %5855 = vmatpush1.msra.mxu0 0.0
  %5856 = vmatprep.subr.mxu0 0.0
  %5857 = vmatpush1.msra.mxu0 0.0
  %5858 = vmatprep.mubr.f32.mxu0 0.0
  %v5859 = vand.u32 %v5309, 4294901760
  %5860 = vmatmul.mubr.f32.gmra.mrb[0].mxu0 %v5859
  %v5861 = vpop.f32.mrb[0].mxu0
  %v5862 = vadd.f32 %v5743, %v5861
  %v5863 = vpop.f32.mrb[0].mxu0
  %5864 = vdwg.mxu0
  %5865 = vmatprep.subr.mxu0 0.0
  %v5866 = vand.u32 %v47, 4294901760
  %5867 = vmatpush1.msra.mxu0 %v5866
  %5868 = vmatprep.subr.mxu0 0.0
  %v5869 = vand.u32 %v48, 4294901760
  %5870 = vmatpush1.msra.mxu0 %v5869
  %5871 = vmatprep.subr.mxu0 0.0
  %v5872 = vand.u32 %v49, 4294901760
  %5873 = vmatpush1.msra.mxu0 %v5872
  %5874 = vmatprep.subr.mxu0 0.0
  %v5875 = vand.u32 %v50, 4294901760
  %5876 = vmatpush1.msra.mxu0 %v5875
  %5877 = vmatprep.subr.mxu0 0.0
  %v5878 = vand.u32 %v51, 4294901760
  %5879 = vmatpush1.msra.mxu0 %v5878
  %5880 = vmatprep.subr.mxu0 0.0
  %v5881 = vand.u32 %v52, 4294901760
  %5882 = vmatpush1.msra.mxu0 %v5881
  %5883 = vmatprep.subr.mxu0 0.0
  %v5884 = vand.u32 %v53, 4294901760
  %5885 = vmatpush1.msra.mxu0 %v5884
  %5886 = vmatprep.subr.mxu0 0.0
  %v5887 = vand.u32 %v54, 4294901760
  %5888 = vmatpush1.msra.mxu0 %v5887
  %5889 = vmatprep.subr.mxu0 0.0
  %v5890 = vand.u32 %v55, 4294901760
  %5891 = vmatpush1.msra.mxu0 %v5890
  %5892 = vmatprep.subr.mxu0 0.0
  %v5893 = vand.u32 %v56, 4294901760
  %5894 = vmatpush1.msra.mxu0 %v5893
  %5895 = vmatprep.subr.mxu0 0.0
  %v5896 = vand.u32 %v57, 4294901760
  %5897 = vmatpush1.msra.mxu0 %v5896
  %5898 = vmatprep.subr.mxu0 0.0
  %v5899 = vand.u32 %v58, 4294901760
  %5900 = vmatpush1.msra.mxu0 %v5899
  %5901 = vmatprep.subr.mxu0 0.0
  %v5902 = vand.u32 %v59, 4294901760
  %5903 = vmatpush1.msra.mxu0 %v5902
  %5904 = vmatprep.subr.mxu0 0.0
  %v5905 = vand.u32 %v60, 4294901760
  %5906 = vmatpush1.msra.mxu0 %v5905
  %5907 = vmatprep.subr.mxu0 0.0
  %v5908 = vand.u32 %v61, 4294901760
  %5909 = vmatpush1.msra.mxu0 %v5908
  %5910 = vmatprep.subr.mxu0 0.0
  %v5911 = vand.u32 %v62, 4294901760
  %5912 = vmatpush1.msra.mxu0 %v5911
  %5913 = vmatprep.subr.mxu0 0.0
  %5914 = vmatpush1.msra.mxu0 0.0
  %5915 = vmatprep.subr.mxu0 0.0
  %5916 = vmatpush1.msra.mxu0 0.0
  %5917 = vmatprep.subr.mxu0 0.0
  %5918 = vmatpush1.msra.mxu0 0.0
  %5919 = vmatprep.subr.mxu0 0.0
  %5920 = vmatpush1.msra.mxu0 0.0
  %5921 = vmatprep.subr.mxu0 0.0
  %5922 = vmatpush1.msra.mxu0 0.0
  %5923 = vmatprep.subr.mxu0 0.0
  %5924 = vmatpush1.msra.mxu0 0.0
  %5925 = vmatprep.subr.mxu0 0.0
  %5926 = vmatpush1.msra.mxu0 0.0
  %5927 = vmatprep.subr.mxu0 0.0
  %5928 = vmatpush1.msra.mxu0 0.0
  %5929 = vmatprep.subr.mxu0 0.0
  %5930 = vmatpush1.msra.mxu0 0.0
  %5931 = vmatprep.subr.mxu0 0.0
  %5932 = vmatpush1.msra.mxu0 0.0
  %5933 = vmatprep.subr.mxu0 0.0
  %5934 = vmatpush1.msra.mxu0 0.0
  %5935 = vmatprep.subr.mxu0 0.0
  %5936 = vmatpush1.msra.mxu0 0.0
  %5937 = vmatprep.subr.mxu0 0.0
  %5938 = vmatpush1.msra.mxu0 0.0
  %5939 = vmatprep.subr.mxu0 0.0
  %5940 = vmatpush1.msra.mxu0 0.0
  %5941 = vmatprep.subr.mxu0 0.0
  %5942 = vmatpush1.msra.mxu0 0.0
  %5943 = vmatprep.subr.mxu0 0.0
  %5944 = vmatpush1.msra.mxu0 0.0
  %5945 = vmatprep.mubr.f32.mxu0 0.0
  %v5946 = vand.u32 %v5309, 4294901760
  %5947 = vmatmul.mubr.f32.gmra.mrb[0].mxu0 %v5946
  %v5948 = vpop.f32.mrb[0].mxu0
  %v5949 = vadd.f32 %v5862, %v5948
  %v5950 = vpop.f32.mrb[0].mxu0
  %5951 = vdwg.mxu0
  %v5952 = vlog2.pop %v5949
  %v5953 = vmul.f32 %v5952, 0.6931472
  %v5954 = vadd.f32 %v5287, %v5953
  %v5955 = vadd.f32 %v5954, %v5107
  %v5956 = vsel %vm5116, 1, 0
  %v5957 = vsel %vm5117, 1, 0
  %v5958 = vsel %vm5118, 1, 0
  %v5959 = vsel %vm5119, 1, 0
  %v5960 = vsel %vm5120, 1, 0
  %v5961 = vsel %vm5121, 1, 0
  %v5962 = vsel %vm5122, 1, 0
  %v5963 = vsel %vm5123, 1, 0
  %5964 = vset.pattern.permute.xlu0 0
  %5965 = vperm.xlu0 %5964, %v5956
  %v5966 = vpop.permute.xlu0 %5965
  %5967 = vset.pattern.permute.xlu0 0
  %5968 = vperm.xlu0 %5967, %v5957
  %v5969 = vpop.permute.xlu0 %5968
  %5970 = vset.pattern.permute.xlu0 0
  %5971 = vperm.xlu0 %5970, %v5958
  %v5972 = vpop.permute.xlu0 %5971
  %5973 = vset.pattern.permute.xlu0 0
  %5974 = vperm.xlu0 %5973, %v5959
  %v5975 = vpop.permute.xlu0 %5974
  %5976 = vset.pattern.permute.xlu0 0
  %5977 = vperm.xlu0 %5976, %v5960
  %v5978 = vpop.permute.xlu0 %5977
  %5979 = vset.pattern.permute.xlu0 0
  %5980 = vperm.xlu0 %5979, %v5961
  %v5981 = vpop.permute.xlu0 %5980
  %5982 = vset.pattern.permute.xlu0 0
  %5983 = vperm.xlu0 %5982, %v5962
  %v5984 = vpop.permute.xlu0 %5983
  %5985 = vset.pattern.permute.xlu0 0
  %5986 = vperm.xlu0 %5985, %v5963
  %v5987 = vpop.permute.xlu0 %5986
  %vm5988 = vcmp.eq.s32.totalorder %v5966, 1
  %vm5989 = vcmp.eq.s32.totalorder %v5969, 1
  %vm5990 = vcmp.eq.s32.totalorder %v5972, 1
  %vm5991 = vcmp.eq.s32.totalorder %v5975, 1
  %vm5992 = vcmp.eq.s32.totalorder %v5978, 1
  %vm5993 = vcmp.eq.s32.totalorder %v5981, 1
  %vm5994 = vcmp.eq.s32.totalorder %v5984, 1
  %vm5995 = vcmp.eq.s32.totalorder %v5987, 1
  %v5997 = vrot.slane %v5955, 1
  %v5998 = vrot.slane %v5955, 2
  %v5999 = vrot.slane %v5955, 3
  %v6000 = vrot.slane %v5955, 4
  %v6001 = vrot.slane %v5955, 5
  %v6002 = vrot.slane %v5955, 6
  %v6003 = vrot.slane %v5955, 7
  %v6012 = vsel %vm5988, %v5955, %v5009
  %v6013 = vsel %vm5989, %v5997, %v5010
  %v6014 = vsel %vm5990, %v5998, %v5011
  %v6015 = vsel %vm5991, %v5999, %v5012
  %v6016 = vsel %vm5992, %v6000, %v5013
  %v6017 = vsel %vm5993, %v6001, %v5014
  %v6018 = vsel %vm5994, %v6002, %v5015
  %v6019 = vsel %vm5995, %v6003, %v5016
  %v6020 = vld [vmem:[%s0 + $0x6] sm:$0x1]
  %v6021 = vld [vmem:[%s0 + $0xe] sm:$0x1]
  %v6022 = vld [vmem:[%s0 + $0x16] sm:$0x1]
  %v6023 = vld [vmem:[%s0 + $0x1e] sm:$0x1]
  %v6024 = vld [vmem:[%s0 + $0x26] sm:$0x1]
  %v6025 = vld [vmem:[%s0 + $0x2e] sm:$0x1]
  %v6026 = vld [vmem:[%s0 + $0x36] sm:$0x1]
  %v6027 = vld [vmem:[%s0 + $0x3e] sm:$0x1]
  %v6028 = vpack.c.bf16 %v6020, %v6020
  %v6029 = vpack.c.bf16 %v6021, %v6021
  %v6030 = vpack.c.bf16 %v6022, %v6022
  %v6031 = vpack.c.bf16 %v6023, %v6023
  %v6032 = vpack.c.bf16 %v6024, %v6024
  %v6033 = vpack.c.bf16 %v6025, %v6025
  %v6034 = vpack.c.bf16 %v6026, %v6026
  %v6035 = vpack.c.bf16 %v6027, %v6027
  %v6044 = vunpack.c.l.b16 %v6028
  %v6045 = vunpack.c.l.b16 %v6029
  %v6046 = vunpack.c.l.b16 %v6030
  %v6047 = vunpack.c.l.b16 %v6031
  %v6048 = vunpack.c.l.b16 %v6032
  %v6049 = vunpack.c.l.b16 %v6033
  %v6050 = vunpack.c.l.b16 %v6034
  %v6051 = vunpack.c.l.b16 %v6035
  %v6052 = vrot.slane %v6045, 7
  %v6053 = vsel %vm108, %v6052, %v6044
  %v6054 = vrot.slane %v6046, 6
  %v6055 = vsel %vm111, %v6054, %v6053
  %v6056 = vrot.slane %v6047, 5
  %v6057 = vsel %vm114, %v6056, %v6055
  %v6058 = vrot.slane %v6048, 4
  %v6059 = vsel %vm117, %v6058, %v6057
  %v6060 = vrot.slane %v6049, 3
  %v6061 = vsel %vm120, %v6060, %v6059
  %v6062 = vrot.slane %v6050, 2
  %v6063 = vsel %vm123, %v6062, %v6061
  %v6064 = vrot.slane %v6051, 1
  %v6065 = vsel %vm126, %v6064, %v6063
  %v6066 = vpack.c.b16 %v6065, %v6065
  %v6068 = vsel %vm141, %v6066, 0
  %6070 = vmatprep.subr.bf16.mxu0 0
  %6071 = vmatpush1.bf16.msra.mxu0 %v137
  %6072 = vmatprep.subr.bf16.mxu0 0
  %6073 = vmatpush1.bf16.msra.mxu0 %v138
  %6074 = vmatprep.subr.bf16.mxu0 0
  %6075 = vmatpush1.bf16.msra.mxu0 0
  %6076 = vmatprep.subr.bf16.mxu0 0
  %6077 = vmatpush1.bf16.msra.mxu0 0
  %6078 = vmatprep.subr.bf16.mxu0 0
  %6079 = vmatpush1.bf16.msra.mxu0 0
  %6080 = vmatprep.subr.bf16.mxu0 0
  %6081 = vmatpush1.bf16.msra.mxu0 0
  %6082 = vmatprep.subr.bf16.mxu0 0
  %6083 = vmatpush1.bf16.msra.mxu0 0
  %6084 = vmatprep.subr.bf16.mxu0 0
  %6085 = vmatpush1.bf16.msra.mxu0 0
  %6086 = vmatprep.subr.bf16.mxu0 0
  %6087 = vmatpush1.bf16.msra.mxu0 0
  %6088 = vmatprep.subr.bf16.mxu0 0
  %6089 = vmatpush1.bf16.msra.mxu0 0
  %6090 = vmatprep.subr.bf16.mxu0 0
  %6091 = vmatpush1.bf16.msra.mxu0 0
  %6092 = vmatprep.subr.bf16.mxu0 0
  %6093 = vmatpush1.bf16.msra.mxu0 0
  %6094 = vmatprep.subr.bf16.mxu0 0
  %6095 = vmatpush1.bf16.msra.mxu0 0
  %6096 = vmatprep.subr.bf16.mxu0 0
  %6097 = vmatpush1.bf16.msra.mxu0 0
  %6098 = vmatprep.subr.bf16.mxu0 0
  %6099 = vmatpush1.bf16.msra.mxu0 0
  %6100 = vmatprep.subr.bf16.mxu0 0
  %6101 = vmatpush1.bf16.msra.mxu0 0
  %6102 = vmatprep.mubr.bf16.mxu0 0
  %6103 = vmatmul.mubr.bf16.gmra.mrb[0].mxu0 %v6068
  %v6104 = vpop.f32.mrb[0].mxu0
  %v6105 = vadd.f32 %v89, %v6104
  %v6106 = vpop.f32.mrb[0].mxu0
  %v6107 = vpop.f32.mrb[0].mxu0
  %v6108 = vpop.f32.mrb[0].mxu0
  %6109 = vdwg.mxu0
  %v6110 = vmax.f32 %v6105, 0.0
  %v6111 = vld [vmem:[%s1 + $0x6] sm:$0x1]
  %v6112 = vld [vmem:[%s1 + $0xe] sm:$0x1]
  %v6113 = vld [vmem:[%s1 + $0x16] sm:$0x1]
  %v6114 = vld [vmem:[%s1 + $0x1e] sm:$0x1]
  %v6115 = vld [vmem:[%s1 + $0x26] sm:$0x1]
  %v6116 = vld [vmem:[%s1 + $0x2e] sm:$0x1]
  %v6117 = vld [vmem:[%s1 + $0x36] sm:$0x1]
  %v6118 = vld [vmem:[%s1 + $0x3e] sm:$0x1]
  %vm6119 = vcmp.gt.f32.partialorder %v6111, 0.0
  %vm6120 = vcmp.gt.f32.partialorder %v6112, 0.0
  %vm6121 = vcmp.gt.f32.partialorder %v6113, 0.0
  %vm6122 = vcmp.gt.f32.partialorder %v6114, 0.0
  %vm6123 = vcmp.gt.f32.partialorder %v6115, 0.0
  %vm6124 = vcmp.gt.f32.partialorder %v6116, 0.0
  %vm6125 = vcmp.gt.f32.partialorder %v6117, 0.0
  %vm6126 = vcmp.gt.f32.partialorder %v6118, 0.0
  %v6127 = vld [vmem:[%s2 + $0x6] sm:$0x1]
  %v6128 = vld [vmem:[%s2 + $0xe] sm:$0x1]
  %v6129 = vld [vmem:[%s2 + $0x16] sm:$0x1]
  %v6130 = vld [vmem:[%s2 + $0x1e] sm:$0x1]
  %v6131 = vld [vmem:[%s2 + $0x26] sm:$0x1]
  %v6132 = vld [vmem:[%s2 + $0x2e] sm:$0x1]
  %v6133 = vld [vmem:[%s2 + $0x36] sm:$0x1]
  %v6134 = vld [vmem:[%s2 + $0x3e] sm:$0x1]
  %6135 = vset.pattern.permute.xlu0 0
  %6136 = vperm.xlu0 %6135, %v6127
  %v6137 = vpop.permute.xlu0 %6136
  %6138 = vset.pattern.permute.xlu0 0
  %6139 = vperm.xlu0 %6138, %v6128
  %v6140 = vpop.permute.xlu0 %6139
  %6141 = vset.pattern.permute.xlu0 0
  %6142 = vperm.xlu0 %6141, %v6129
  %v6143 = vpop.permute.xlu0 %6142
  %6144 = vset.pattern.permute.xlu0 0
  %6145 = vperm.xlu0 %6144, %v6130
  %v6146 = vpop.permute.xlu0 %6145
  %6147 = vset.pattern.permute.xlu0 0
  %6148 = vperm.xlu0 %6147, %v6131
  %v6149 = vpop.permute.xlu0 %6148
  %6150 = vset.pattern.permute.xlu0 0
  %6151 = vperm.xlu0 %6150, %v6132
  %v6152 = vpop.permute.xlu0 %6151
  %6153 = vset.pattern.permute.xlu0 0
  %6154 = vperm.xlu0 %6153, %v6133
  %v6155 = vpop.permute.xlu0 %6154
  %6156 = vset.pattern.permute.xlu0 0
  %6157 = vperm.xlu0 %6156, %v6134
  %v6158 = vpop.permute.xlu0 %6157
  %v6159 = vrot.slane %v6140, 7
  %v6160 = vsel %vm108, %v6159, %v6137
  %v6161 = vrot.slane %v6143, 6
  %v6162 = vsel %vm111, %v6161, %v6160
  %v6163 = vrot.slane %v6146, 5
  %v6164 = vsel %vm114, %v6163, %v6162
  %v6165 = vrot.slane %v6149, 4
  %v6166 = vsel %vm117, %v6165, %v6164
  %v6167 = vrot.slane %v6152, 3
  %v6168 = vsel %vm120, %v6167, %v6166
  %v6169 = vrot.slane %v6155, 2
  %v6170 = vsel %vm123, %v6169, %v6168
  %v6171 = vrot.slane %v6158, 1
  %v6172 = vsel %vm126, %v6171, %v6170
  %vm6173 = vcmp.eq.s32.totalorder %v68, %v6172
  %v6174 = vsel %vm6173, %v6110, 0.0
  %6175 = vadd.xlane.f32.xlu0 %v6174
  %v6176 = vpop.xlane.xlu0 %6175
  %v6178 = vrot.slane %v6176, 1
  %v6179 = vrot.slane %v6176, 2
  %v6180 = vrot.slane %v6176, 3
  %v6181 = vrot.slane %v6176, 4
  %v6182 = vrot.slane %v6176, 5
  %v6183 = vrot.slane %v6176, 6
  %v6184 = vrot.slane %v6176, 7
  %v6193 = vsel %vm6119, %v6176, 0.0
  %v6194 = vsel %vm6120, %v6178, 0.0
  %v6195 = vsel %vm6121, %v6179, 0.0
  %v6196 = vsel %vm6122, %v6180, 0.0
  %v6197 = vsel %vm6123, %v6181, 0.0
  %v6198 = vsel %vm6124, %v6182, 0.0
  %v6199 = vsel %vm6125, %v6183, 0.0
  %v6200 = vsel %vm6126, %v6184, 0.0
  %v6209 = vrot.slane %v6194, 7
  %v6210 = vsel %vm108, %v6209, %v6193
  %v6211 = vrot.slane %v6195, 6
  %v6212 = vsel %vm111, %v6211, %v6210
  %v6213 = vrot.slane %v6196, 5
  %v6214 = vsel %vm114, %v6213, %v6212
  %v6215 = vrot.slane %v6197, 4
  %v6216 = vsel %vm117, %v6215, %v6214
  %v6217 = vrot.slane %v6198, 3
  %v6218 = vsel %vm120, %v6217, %v6216
  %v6219 = vrot.slane %v6199, 2
  %v6220 = vsel %vm123, %v6219, %v6218
  %v6221 = vrot.slane %v6200, 1
  %v6222 = vsel %vm126, %v6221, %v6220
  %v6224 = vadd.f32 %v5221, %v6222
  %v6233 = vrot.slane %v6013, 7
  %v6234 = vsel %vm108, %v6233, %v6012
  %v6235 = vrot.slane %v6014, 6
  %v6236 = vsel %vm111, %v6235, %v6234
  %v6237 = vrot.slane %v6015, 5
  %v6238 = vsel %vm114, %v6237, %v6236
  %v6239 = vrot.slane %v6016, 4
  %v6240 = vsel %vm117, %v6239, %v6238
  %v6241 = vrot.slane %v6017, 3
  %v6242 = vsel %vm120, %v6241, %v6240
  %v6243 = vrot.slane %v6018, 2
  %v6244 = vsel %vm123, %v6243, %v6242
  %v6245 = vrot.slane %v6019, 1
  %v6246 = vsel %vm126, %v6245, %v6244
  %6248 = vmax.xlane.f32.xlu0 %v6246
  %v6249 = vpop.xlane.xlu0 %6248
  %v6251 = vrot.slane %v6249, 1
  %v6252 = vrot.slane %v6249, 2
  %v6253 = vrot.slane %v6249, 3
  %v6254 = vrot.slane %v6249, 4
  %v6255 = vrot.slane %v6249, 5
  %v6256 = vrot.slane %v6249, 6
  %v6257 = vrot.slane %v6249, 7
  %v6266 = vsub.f32 %v6012, %v6249
  %v6267 = vsub.f32 %v6013, %v6251
  %v6268 = vsub.f32 %v6014, %v6252
  %v6269 = vsub.f32 %v6015, %v6253
  %v6270 = vsub.f32 %v6016, %v6254
  %v6271 = vsub.f32 %v6017, %v6255
  %v6272 = vsub.f32 %v6018, %v6256
  %v6273 = vsub.f32 %v6019, %v6257
  %v6274 = vmul.f32 %v6266, 1.442695
  %v6275 = vpow.pop %v6274
  %v6276 = vmul.f32 %v6267, 1.442695
  %v6277 = vpow.pop %v6276
  %v6278 = vmul.f32 %v6268, 1.442695
  %v6279 = vpow.pop %v6278
  %v6280 = vmul.f32 %v6269, 1.442695
  %v6281 = vpow.pop %v6280
  %v6282 = vmul.f32 %v6270, 1.442695
  %v6283 = vpow.pop %v6282
  %v6284 = vmul.f32 %v6271, 1.442695
  %v6285 = vpow.pop %v6284
  %v6286 = vmul.f32 %v6272, 1.442695
  %v6287 = vpow.pop %v6286
  %v6288 = vmul.f32 %v6273, 1.442695
  %v6289 = vpow.pop %v6288
  %v6290 = vadd.f32 %v6249, %v313
  %v6299 = vrot.slane %v6277, 7
  %v6300 = vsel %vm108, %v6299, %v6275
  %v6301 = vrot.slane %v6279, 6
  %v6302 = vsel %vm111, %v6301, %v6300
  %v6303 = vrot.slane %v6281, 5
  %v6304 = vsel %vm114, %v6303, %v6302
  %v6305 = vrot.slane %v6283, 4
  %v6306 = vsel %vm117, %v6305, %v6304
  %v6307 = vrot.slane %v6285, 3
  %v6308 = vsel %vm120, %v6307, %v6306
  %v6309 = vrot.slane %v6287, 2
  %v6310 = vsel %vm123, %v6309, %v6308
  %v6311 = vrot.slane %v6289, 1
  %v6312 = vsel %vm126, %v6311, %v6310
  %6314 = vmatprep.subr.mxu0 0.0
  %v6315 = vand.u32 %v47, 4294901760
  %6316 = vmatpush1.msra.mxu0 %v6315
  %6317 = vmatprep.subr.mxu0 0.0
  %v6318 = vand.u32 %v48, 4294901760
  %6319 = vmatpush1.msra.mxu0 %v6318
  %6320 = vmatprep.subr.mxu0 0.0
  %v6321 = vand.u32 %v49, 4294901760
  %6322 = vmatpush1.msra.mxu0 %v6321
  %6323 = vmatprep.subr.mxu0 0.0
  %v6324 = vand.u32 %v50, 4294901760
  %6325 = vmatpush1.msra.mxu0 %v6324
  %6326 = vmatprep.subr.mxu0 0.0
  %v6327 = vand.u32 %v51, 4294901760
  %6328 = vmatpush1.msra.mxu0 %v6327
  %6329 = vmatprep.subr.mxu0 0.0
  %v6330 = vand.u32 %v52, 4294901760
  %6331 = vmatpush1.msra.mxu0 %v6330
  %6332 = vmatprep.subr.mxu0 0.0
  %v6333 = vand.u32 %v53, 4294901760
  %6334 = vmatpush1.msra.mxu0 %v6333
  %6335 = vmatprep.subr.mxu0 0.0
  %v6336 = vand.u32 %v54, 4294901760
  %6337 = vmatpush1.msra.mxu0 %v6336
  %6338 = vmatprep.subr.mxu0 0.0
  %v6339 = vand.u32 %v55, 4294901760
  %6340 = vmatpush1.msra.mxu0 %v6339
  %6341 = vmatprep.subr.mxu0 0.0
  %v6342 = vand.u32 %v56, 4294901760
  %6343 = vmatpush1.msra.mxu0 %v6342
  %6344 = vmatprep.subr.mxu0 0.0
  %v6345 = vand.u32 %v57, 4294901760
  %6346 = vmatpush1.msra.mxu0 %v6345
  %6347 = vmatprep.subr.mxu0 0.0
  %v6348 = vand.u32 %v58, 4294901760
  %6349 = vmatpush1.msra.mxu0 %v6348
  %6350 = vmatprep.subr.mxu0 0.0
  %v6351 = vand.u32 %v59, 4294901760
  %6352 = vmatpush1.msra.mxu0 %v6351
  %6353 = vmatprep.subr.mxu0 0.0
  %v6354 = vand.u32 %v60, 4294901760
  %6355 = vmatpush1.msra.mxu0 %v6354
  %6356 = vmatprep.subr.mxu0 0.0
  %v6357 = vand.u32 %v61, 4294901760
  %6358 = vmatpush1.msra.mxu0 %v6357
  %6359 = vmatprep.subr.mxu0 0.0
  %v6360 = vand.u32 %v62, 4294901760
  %6361 = vmatpush1.msra.mxu0 %v6360
  %6362 = vmatprep.subr.mxu0 0.0
  %6363 = vmatpush1.msra.mxu0 0.0
  %6364 = vmatprep.subr.mxu0 0.0
  %6365 = vmatpush1.msra.mxu0 0.0
  %6366 = vmatprep.subr.mxu0 0.0
  %6367 = vmatpush1.msra.mxu0 0.0
  %6368 = vmatprep.subr.mxu0 0.0
  %6369 = vmatpush1.msra.mxu0 0.0
  %6370 = vmatprep.subr.mxu0 0.0
  %6371 = vmatpush1.msra.mxu0 0.0
  %6372 = vmatprep.subr.mxu0 0.0
  %6373 = vmatpush1.msra.mxu0 0.0
  %6374 = vmatprep.subr.mxu0 0.0
  %6375 = vmatpush1.msra.mxu0 0.0
  %6376 = vmatprep.subr.mxu0 0.0
  %6377 = vmatpush1.msra.mxu0 0.0
  %6378 = vmatprep.subr.mxu0 0.0
  %6379 = vmatpush1.msra.mxu0 0.0
  %6380 = vmatprep.subr.mxu0 0.0
  %6381 = vmatpush1.msra.mxu0 0.0
  %6382 = vmatprep.subr.mxu0 0.0
  %6383 = vmatpush1.msra.mxu0 0.0
  %6384 = vmatprep.subr.mxu0 0.0
  %6385 = vmatpush1.msra.mxu0 0.0
  %6386 = vmatprep.subr.mxu0 0.0
  %6387 = vmatpush1.msra.mxu0 0.0
  %6388 = vmatprep.subr.mxu0 0.0
  %6389 = vmatpush1.msra.mxu0 0.0
  %6390 = vmatprep.subr.mxu0 0.0
  %6391 = vmatpush1.msra.mxu0 0.0
  %6392 = vmatprep.subr.mxu0 0.0
  %6393 = vmatpush1.msra.mxu0 0.0
  %6394 = vmatprep.mubr.f32.mxu0 0.0
  %v6395 = vand.u32 %v6312, 4294901760
  %v6396 = vsub.f32 %v6312, %v6395
  %v6397 = vand.u32 %v6396, 4294901760
  %v6398 = vsub.f32 %v6396, %v6397
  %v6399 = vand.u32 %v6398, 4294901760
  %6400 = vmatmul.mubr.f32.gmra.mrb[0].mxu0 %v6399
  %v6401 = vpop.f32.mrb[0].mxu0
  %v6402 = vadd.f32 1e-30, %v6401
  %v6403 = vpop.f32.mrb[0].mxu0
  %6404 = vdwg.mxu0
  %6405 = vmatprep.subr.mxu0 0.0
  %v6406 = vand.u32 %v47, 4294901760
  %v6407 = vsub.f32 %v47, %v6406
  %v6408 = vand.u32 %v6407, 4294901760
  %v6409 = vsub.f32 %v6407, %v6408
  %v6410 = vand.u32 %v6409, 4294901760
  %6411 = vmatpush1.msra.mxu0 %v6410
  %6412 = vmatprep.subr.mxu0 0.0
  %v6413 = vand.u32 %v48, 4294901760
  %v6414 = vsub.f32 %v48, %v6413
  %v6415 = vand.u32 %v6414, 4294901760
  %v6416 = vsub.f32 %v6414, %v6415
  %v6417 = vand.u32 %v6416, 4294901760
  %6418 = vmatpush1.msra.mxu0 %v6417
  %6419 = vmatprep.subr.mxu0 0.0
  %v6420 = vand.u32 %v49, 4294901760
  %v6421 = vsub.f32 %v49, %v6420
  %v6422 = vand.u32 %v6421, 4294901760
  %v6423 = vsub.f32 %v6421, %v6422
  %v6424 = vand.u32 %v6423, 4294901760
  %6425 = vmatpush1.msra.mxu0 %v6424
  %6426 = vmatprep.subr.mxu0 0.0
  %v6427 = vand.u32 %v50, 4294901760
  %v6428 = vsub.f32 %v50, %v6427
  %v6429 = vand.u32 %v6428, 4294901760
  %v6430 = vsub.f32 %v6428, %v6429
  %v6431 = vand.u32 %v6430, 4294901760
  %6432 = vmatpush1.msra.mxu0 %v6431
  %6433 = vmatprep.subr.mxu0 0.0
  %v6434 = vand.u32 %v51, 4294901760
  %v6435 = vsub.f32 %v51, %v6434
  %v6436 = vand.u32 %v6435, 4294901760
  %v6437 = vsub.f32 %v6435, %v6436
  %v6438 = vand.u32 %v6437, 4294901760
  %6439 = vmatpush1.msra.mxu0 %v6438
  %6440 = vmatprep.subr.mxu0 0.0
  %v6441 = vand.u32 %v52, 4294901760
  %v6442 = vsub.f32 %v52, %v6441
  %v6443 = vand.u32 %v6442, 4294901760
  %v6444 = vsub.f32 %v6442, %v6443
  %v6445 = vand.u32 %v6444, 4294901760
  %6446 = vmatpush1.msra.mxu0 %v6445
  %6447 = vmatprep.subr.mxu0 0.0
  %v6448 = vand.u32 %v53, 4294901760
  %v6449 = vsub.f32 %v53, %v6448
  %v6450 = vand.u32 %v6449, 4294901760
  %v6451 = vsub.f32 %v6449, %v6450
  %v6452 = vand.u32 %v6451, 4294901760
  %6453 = vmatpush1.msra.mxu0 %v6452
  %6454 = vmatprep.subr.mxu0 0.0
  %v6455 = vand.u32 %v54, 4294901760
  %v6456 = vsub.f32 %v54, %v6455
  %v6457 = vand.u32 %v6456, 4294901760
  %v6458 = vsub.f32 %v6456, %v6457
  %v6459 = vand.u32 %v6458, 4294901760
  %6460 = vmatpush1.msra.mxu0 %v6459
  %6461 = vmatprep.subr.mxu0 0.0
  %v6462 = vand.u32 %v55, 4294901760
  %v6463 = vsub.f32 %v55, %v6462
  %v6464 = vand.u32 %v6463, 4294901760
  %v6465 = vsub.f32 %v6463, %v6464
  %v6466 = vand.u32 %v6465, 4294901760
  %6467 = vmatpush1.msra.mxu0 %v6466
  %6468 = vmatprep.subr.mxu0 0.0
  %v6469 = vand.u32 %v56, 4294901760
  %v6470 = vsub.f32 %v56, %v6469
  %v6471 = vand.u32 %v6470, 4294901760
  %v6472 = vsub.f32 %v6470, %v6471
  %v6473 = vand.u32 %v6472, 4294901760
  %6474 = vmatpush1.msra.mxu0 %v6473
  %6475 = vmatprep.subr.mxu0 0.0
  %v6476 = vand.u32 %v57, 4294901760
  %v6477 = vsub.f32 %v57, %v6476
  %v6478 = vand.u32 %v6477, 4294901760
  %v6479 = vsub.f32 %v6477, %v6478
  %v6480 = vand.u32 %v6479, 4294901760
  %6481 = vmatpush1.msra.mxu0 %v6480
  %6482 = vmatprep.subr.mxu0 0.0
  %v6483 = vand.u32 %v58, 4294901760
  %v6484 = vsub.f32 %v58, %v6483
  %v6485 = vand.u32 %v6484, 4294901760
  %v6486 = vsub.f32 %v6484, %v6485
  %v6487 = vand.u32 %v6486, 4294901760
  %6488 = vmatpush1.msra.mxu0 %v6487
  %6489 = vmatprep.subr.mxu0 0.0
  %v6490 = vand.u32 %v59, 4294901760
  %v6491 = vsub.f32 %v59, %v6490
  %v6492 = vand.u32 %v6491, 4294901760
  %v6493 = vsub.f32 %v6491, %v6492
  %v6494 = vand.u32 %v6493, 4294901760
  %6495 = vmatpush1.msra.mxu0 %v6494
  %6496 = vmatprep.subr.mxu0 0.0
  %v6497 = vand.u32 %v60, 4294901760
  %v6498 = vsub.f32 %v60, %v6497
  %v6499 = vand.u32 %v6498, 4294901760
  %v6500 = vsub.f32 %v6498, %v6499
  %v6501 = vand.u32 %v6500, 4294901760
  %6502 = vmatpush1.msra.mxu0 %v6501
  %6503 = vmatprep.subr.mxu0 0.0
  %v6504 = vand.u32 %v61, 4294901760
  %v6505 = vsub.f32 %v61, %v6504
  %v6506 = vand.u32 %v6505, 4294901760
  %v6507 = vsub.f32 %v6505, %v6506
  %v6508 = vand.u32 %v6507, 4294901760
  %6509 = vmatpush1.msra.mxu0 %v6508
  %6510 = vmatprep.subr.mxu0 0.0
  %v6511 = vand.u32 %v62, 4294901760
  %v6512 = vsub.f32 %v62, %v6511
  %v6513 = vand.u32 %v6512, 4294901760
  %v6514 = vsub.f32 %v6512, %v6513
  %v6515 = vand.u32 %v6514, 4294901760
  %6516 = vmatpush1.msra.mxu0 %v6515
  %6517 = vmatprep.subr.mxu0 0.0
  %6518 = vmatpush1.msra.mxu0 0.0
  %6519 = vmatprep.subr.mxu0 0.0
  %6520 = vmatpush1.msra.mxu0 0.0
  %6521 = vmatprep.subr.mxu0 0.0
  %6522 = vmatpush1.msra.mxu0 0.0
  %6523 = vmatprep.subr.mxu0 0.0
  %6524 = vmatpush1.msra.mxu0 0.0
  %6525 = vmatprep.subr.mxu0 0.0
  %6526 = vmatpush1.msra.mxu0 0.0
  %6527 = vmatprep.subr.mxu0 0.0
  %6528 = vmatpush1.msra.mxu0 0.0
  %6529 = vmatprep.subr.mxu0 0.0
  %6530 = vmatpush1.msra.mxu0 0.0
  %6531 = vmatprep.subr.mxu0 0.0
  %6532 = vmatpush1.msra.mxu0 0.0
  %6533 = vmatprep.subr.mxu0 0.0
  %6534 = vmatpush1.msra.mxu0 0.0
  %6535 = vmatprep.subr.mxu0 0.0
  %6536 = vmatpush1.msra.mxu0 0.0
  %6537 = vmatprep.subr.mxu0 0.0
  %6538 = vmatpush1.msra.mxu0 0.0
  %6539 = vmatprep.subr.mxu0 0.0
  %6540 = vmatpush1.msra.mxu0 0.0
  %6541 = vmatprep.subr.mxu0 0.0
  %6542 = vmatpush1.msra.mxu0 0.0
  %6543 = vmatprep.subr.mxu0 0.0
  %6544 = vmatpush1.msra.mxu0 0.0
  %6545 = vmatprep.subr.mxu0 0.0
  %6546 = vmatpush1.msra.mxu0 0.0
  %6547 = vmatprep.subr.mxu0 0.0
  %6548 = vmatpush1.msra.mxu0 0.0
  %6549 = vmatprep.mubr.f32.mxu0 0.0
  %v6550 = vand.u32 %v6312, 4294901760
  %6551 = vmatmul.mubr.f32.gmra.mrb[0].mxu0 %v6550
  %v6552 = vpop.f32.mrb[0].mxu0
  %v6553 = vadd.f32 %v6402, %v6552
  %v6554 = vpop.f32.mrb[0].mxu0
  %6555 = vdwg.mxu0
  %6556 = vmatprep.subr.mxu0 0.0
  %v6557 = vand.u32 %v47, 4294901760
  %v6558 = vsub.f32 %v47, %v6557
  %6559 = vmatpush1.msra.mxu0 %v6558
  %6560 = vmatprep.subr.mxu0 0.0
  %v6561 = vand.u32 %v48, 4294901760
  %v6562 = vsub.f32 %v48, %v6561
  %6563 = vmatpush1.msra.mxu0 %v6562
  %6564 = vmatprep.subr.mxu0 0.0
  %v6565 = vand.u32 %v49, 4294901760
  %v6566 = vsub.f32 %v49, %v6565
  %6567 = vmatpush1.msra.mxu0 %v6566
  %6568 = vmatprep.subr.mxu0 0.0
  %v6569 = vand.u32 %v50, 4294901760
  %v6570 = vsub.f32 %v50, %v6569
  %6571 = vmatpush1.msra.mxu0 %v6570
  %6572 = vmatprep.subr.mxu0 0.0
  %v6573 = vand.u32 %v51, 4294901760
  %v6574 = vsub.f32 %v51, %v6573
  %6575 = vmatpush1.msra.mxu0 %v6574
  %6576 = vmatprep.subr.mxu0 0.0
  %v6577 = vand.u32 %v52, 4294901760
  %v6578 = vsub.f32 %v52, %v6577
  %6579 = vmatpush1.msra.mxu0 %v6578
  %6580 = vmatprep.subr.mxu0 0.0
  %v6581 = vand.u32 %v53, 4294901760
  %v6582 = vsub.f32 %v53, %v6581
  %6583 = vmatpush1.msra.mxu0 %v6582
  %6584 = vmatprep.subr.mxu0 0.0
  %v6585 = vand.u32 %v54, 4294901760
  %v6586 = vsub.f32 %v54, %v6585
  %6587 = vmatpush1.msra.mxu0 %v6586
  %6588 = vmatprep.subr.mxu0 0.0
  %v6589 = vand.u32 %v55, 4294901760
  %v6590 = vsub.f32 %v55, %v6589
  %6591 = vmatpush1.msra.mxu0 %v6590
  %6592 = vmatprep.subr.mxu0 0.0
  %v6593 = vand.u32 %v56, 4294901760
  %v6594 = vsub.f32 %v56, %v6593
  %6595 = vmatpush1.msra.mxu0 %v6594
  %6596 = vmatprep.subr.mxu0 0.0
  %v6597 = vand.u32 %v57, 4294901760
  %v6598 = vsub.f32 %v57, %v6597
  %6599 = vmatpush1.msra.mxu0 %v6598
  %6600 = vmatprep.subr.mxu0 0.0
  %v6601 = vand.u32 %v58, 4294901760
  %v6602 = vsub.f32 %v58, %v6601
  %6603 = vmatpush1.msra.mxu0 %v6602
  %6604 = vmatprep.subr.mxu0 0.0
  %v6605 = vand.u32 %v59, 4294901760
  %v6606 = vsub.f32 %v59, %v6605
  %6607 = vmatpush1.msra.mxu0 %v6606
  %6608 = vmatprep.subr.mxu0 0.0
  %v6609 = vand.u32 %v60, 4294901760
  %v6610 = vsub.f32 %v60, %v6609
  %6611 = vmatpush1.msra.mxu0 %v6610
  %6612 = vmatprep.subr.mxu0 0.0
  %v6613 = vand.u32 %v61, 4294901760
  %v6614 = vsub.f32 %v61, %v6613
  %6615 = vmatpush1.msra.mxu0 %v6614
  %6616 = vmatprep.subr.mxu0 0.0
  %v6617 = vand.u32 %v62, 4294901760
  %v6618 = vsub.f32 %v62, %v6617
  %6619 = vmatpush1.msra.mxu0 %v6618
  %6620 = vmatprep.subr.mxu0 0.0
  %6621 = vmatpush1.msra.mxu0 0.0
  %6622 = vmatprep.subr.mxu0 0.0
  %6623 = vmatpush1.msra.mxu0 0.0
  %6624 = vmatprep.subr.mxu0 0.0
  %6625 = vmatpush1.msra.mxu0 0.0
  %6626 = vmatprep.subr.mxu0 0.0
  %6627 = vmatpush1.msra.mxu0 0.0
  %6628 = vmatprep.subr.mxu0 0.0
  %6629 = vmatpush1.msra.mxu0 0.0
  %6630 = vmatprep.subr.mxu0 0.0
  %6631 = vmatpush1.msra.mxu0 0.0
  %6632 = vmatprep.subr.mxu0 0.0
  %6633 = vmatpush1.msra.mxu0 0.0
  %6634 = vmatprep.subr.mxu0 0.0
  %6635 = vmatpush1.msra.mxu0 0.0
  %6636 = vmatprep.subr.mxu0 0.0
  %6637 = vmatpush1.msra.mxu0 0.0
  %6638 = vmatprep.subr.mxu0 0.0
  %6639 = vmatpush1.msra.mxu0 0.0
  %6640 = vmatprep.subr.mxu0 0.0
  %6641 = vmatpush1.msra.mxu0 0.0
  %6642 = vmatprep.subr.mxu0 0.0
  %6643 = vmatpush1.msra.mxu0 0.0
  %6644 = vmatprep.subr.mxu0 0.0
  %6645 = vmatpush1.msra.mxu0 0.0
  %6646 = vmatprep.subr.mxu0 0.0
  %6647 = vmatpush1.msra.mxu0 0.0
  %6648 = vmatprep.subr.mxu0 0.0
  %6649 = vmatpush1.msra.mxu0 0.0
  %6650 = vmatprep.subr.mxu0 0.0
  %6651 = vmatpush1.msra.mxu0 0.0
  %6652 = vmatprep.mubr.f32.mxu0 0.0
  %v6653 = vand.u32 %v6312, 4294901760
  %v6654 = vsub.f32 %v6312, %v6653
  %6655 = vmatmul.mubr.f32.gmra.mrb[0].mxu0 %v6654
  %v6656 = vpop.f32.mrb[0].mxu0
  %v6657 = vadd.f32 %v6553, %v6656
  %v6658 = vpop.f32.mrb[0].mxu0
  %6659 = vdwg.mxu0
  %6660 = vmatprep.subr.mxu0 0.0
  %v6661 = vand.u32 %v47, 4294901760
  %6662 = vmatpush1.msra.mxu0 %v6661
  %6663 = vmatprep.subr.mxu0 0.0
  %v6664 = vand.u32 %v48, 4294901760
  %6665 = vmatpush1.msra.mxu0 %v6664
  %6666 = vmatprep.subr.mxu0 0.0
  %v6667 = vand.u32 %v49, 4294901760
  %6668 = vmatpush1.msra.mxu0 %v6667
  %6669 = vmatprep.subr.mxu0 0.0
  %v6670 = vand.u32 %v50, 4294901760
  %6671 = vmatpush1.msra.mxu0 %v6670
  %6672 = vmatprep.subr.mxu0 0.0
  %v6673 = vand.u32 %v51, 4294901760
  %6674 = vmatpush1.msra.mxu0 %v6673
  %6675 = vmatprep.subr.mxu0 0.0
  %v6676 = vand.u32 %v52, 4294901760
  %6677 = vmatpush1.msra.mxu0 %v6676
  %6678 = vmatprep.subr.mxu0 0.0
  %v6679 = vand.u32 %v53, 4294901760
  %6680 = vmatpush1.msra.mxu0 %v6679
  %6681 = vmatprep.subr.mxu0 0.0
  %v6682 = vand.u32 %v54, 4294901760
  %6683 = vmatpush1.msra.mxu0 %v6682
  %6684 = vmatprep.subr.mxu0 0.0
  %v6685 = vand.u32 %v55, 4294901760
  %6686 = vmatpush1.msra.mxu0 %v6685
  %6687 = vmatprep.subr.mxu0 0.0
  %v6688 = vand.u32 %v56, 4294901760
  %6689 = vmatpush1.msra.mxu0 %v6688
  %6690 = vmatprep.subr.mxu0 0.0
  %v6691 = vand.u32 %v57, 4294901760
  %6692 = vmatpush1.msra.mxu0 %v6691
  %6693 = vmatprep.subr.mxu0 0.0
  %v6694 = vand.u32 %v58, 4294901760
  %6695 = vmatpush1.msra.mxu0 %v6694
  %6696 = vmatprep.subr.mxu0 0.0
  %v6697 = vand.u32 %v59, 4294901760
  %6698 = vmatpush1.msra.mxu0 %v6697
  %6699 = vmatprep.subr.mxu0 0.0
  %v6700 = vand.u32 %v60, 4294901760
  %6701 = vmatpush1.msra.mxu0 %v6700
  %6702 = vmatprep.subr.mxu0 0.0
  %v6703 = vand.u32 %v61, 4294901760
  %6704 = vmatpush1.msra.mxu0 %v6703
  %6705 = vmatprep.subr.mxu0 0.0
  %v6706 = vand.u32 %v62, 4294901760
  %6707 = vmatpush1.msra.mxu0 %v6706
  %6708 = vmatprep.subr.mxu0 0.0
  %6709 = vmatpush1.msra.mxu0 0.0
  %6710 = vmatprep.subr.mxu0 0.0
  %6711 = vmatpush1.msra.mxu0 0.0
  %6712 = vmatprep.subr.mxu0 0.0
  %6713 = vmatpush1.msra.mxu0 0.0
  %6714 = vmatprep.subr.mxu0 0.0
  %6715 = vmatpush1.msra.mxu0 0.0
  %6716 = vmatprep.subr.mxu0 0.0
  %6717 = vmatpush1.msra.mxu0 0.0
  %6718 = vmatprep.subr.mxu0 0.0
  %6719 = vmatpush1.msra.mxu0 0.0
  %6720 = vmatprep.subr.mxu0 0.0
  %6721 = vmatpush1.msra.mxu0 0.0
  %6722 = vmatprep.subr.mxu0 0.0
  %6723 = vmatpush1.msra.mxu0 0.0
  %6724 = vmatprep.subr.mxu0 0.0
  %6725 = vmatpush1.msra.mxu0 0.0
  %6726 = vmatprep.subr.mxu0 0.0
  %6727 = vmatpush1.msra.mxu0 0.0
  %6728 = vmatprep.subr.mxu0 0.0
  %6729 = vmatpush1.msra.mxu0 0.0
  %6730 = vmatprep.subr.mxu0 0.0
  %6731 = vmatpush1.msra.mxu0 0.0
  %6732 = vmatprep.subr.mxu0 0.0
  %6733 = vmatpush1.msra.mxu0 0.0
  %6734 = vmatprep.subr.mxu0 0.0
  %6735 = vmatpush1.msra.mxu0 0.0
  %6736 = vmatprep.subr.mxu0 0.0
  %6737 = vmatpush1.msra.mxu0 0.0
  %6738 = vmatprep.subr.mxu0 0.0
  %6739 = vmatpush1.msra.mxu0 0.0
  %6740 = vmatprep.mubr.f32.mxu0 0.0
  %v6741 = vand.u32 %v6312, 4294901760
  %v6742 = vsub.f32 %v6312, %v6741
  %v6743 = vand.u32 %v6742, 4294901760
  %6744 = vmatmul.mubr.f32.gmra.mrb[0].mxu0 %v6743
  %v6745 = vpop.f32.mrb[0].mxu0
  %v6746 = vadd.f32 %v6657, %v6745
  %v6747 = vpop.f32.mrb[0].mxu0
  %6748 = vdwg.mxu0
  %6749 = vmatprep.subr.mxu0 0.0
  %v6750 = vand.u32 %v47, 4294901760
  %v6751 = vsub.f32 %v47, %v6750
  %v6752 = vand.u32 %v6751, 4294901760
  %6753 = vmatpush1.msra.mxu0 %v6752
  %6754 = vmatprep.subr.mxu0 0.0
  %v6755 = vand.u32 %v48, 4294901760
  %v6756 = vsub.f32 %v48, %v6755
  %v6757 = vand.u32 %v6756, 4294901760
  %6758 = vmatpush1.msra.mxu0 %v6757
  %6759 = vmatprep.subr.mxu0 0.0
  %v6760 = vand.u32 %v49, 4294901760
  %v6761 = vsub.f32 %v49, %v6760
  %v6762 = vand.u32 %v6761, 4294901760
  %6763 = vmatpush1.msra.mxu0 %v6762
  %6764 = vmatprep.subr.mxu0 0.0
  %v6765 = vand.u32 %v50, 4294901760
  %v6766 = vsub.f32 %v50, %v6765
  %v6767 = vand.u32 %v6766, 4294901760
  %6768 = vmatpush1.msra.mxu0 %v6767
  %6769 = vmatprep.subr.mxu0 0.0
  %v6770 = vand.u32 %v51, 4294901760
  %v6771 = vsub.f32 %v51, %v6770
  %v6772 = vand.u32 %v6771, 4294901760
  %6773 = vmatpush1.msra.mxu0 %v6772
  %6774 = vmatprep.subr.mxu0 0.0
  %v6775 = vand.u32 %v52, 4294901760
  %v6776 = vsub.f32 %v52, %v6775
  %v6777 = vand.u32 %v6776, 4294901760
  %6778 = vmatpush1.msra.mxu0 %v6777
  %6779 = vmatprep.subr.mxu0 0.0
  %v6780 = vand.u32 %v53, 4294901760
  %v6781 = vsub.f32 %v53, %v6780
  %v6782 = vand.u32 %v6781, 4294901760
  %6783 = vmatpush1.msra.mxu0 %v6782
  %6784 = vmatprep.subr.mxu0 0.0
  %v6785 = vand.u32 %v54, 4294901760
  %v6786 = vsub.f32 %v54, %v6785
  %v6787 = vand.u32 %v6786, 4294901760
  %6788 = vmatpush1.msra.mxu0 %v6787
  %6789 = vmatprep.subr.mxu0 0.0
  %v6790 = vand.u32 %v55, 4294901760
  %v6791 = vsub.f32 %v55, %v6790
  %v6792 = vand.u32 %v6791, 4294901760
  %6793 = vmatpush1.msra.mxu0 %v6792
  %6794 = vmatprep.subr.mxu0 0.0
  %v6795 = vand.u32 %v56, 4294901760
  %v6796 = vsub.f32 %v56, %v6795
  %v6797 = vand.u32 %v6796, 4294901760
  %6798 = vmatpush1.msra.mxu0 %v6797
  %6799 = vmatprep.subr.mxu0 0.0
  %v6800 = vand.u32 %v57, 4294901760
  %v6801 = vsub.f32 %v57, %v6800
  %v6802 = vand.u32 %v6801, 4294901760
  %6803 = vmatpush1.msra.mxu0 %v6802
  %6804 = vmatprep.subr.mxu0 0.0
  %v6805 = vand.u32 %v58, 4294901760
  %v6806 = vsub.f32 %v58, %v6805
  %v6807 = vand.u32 %v6806, 4294901760
  %6808 = vmatpush1.msra.mxu0 %v6807
  %6809 = vmatprep.subr.mxu0 0.0
  %v6810 = vand.u32 %v59, 4294901760
  %v6811 = vsub.f32 %v59, %v6810
  %v6812 = vand.u32 %v6811, 4294901760
  %6813 = vmatpush1.msra.mxu0 %v6812
  %6814 = vmatprep.subr.mxu0 0.0
  %v6815 = vand.u32 %v60, 4294901760
  %v6816 = vsub.f32 %v60, %v6815
  %v6817 = vand.u32 %v6816, 4294901760
  %6818 = vmatpush1.msra.mxu0 %v6817
  %6819 = vmatprep.subr.mxu0 0.0
  %v6820 = vand.u32 %v61, 4294901760
  %v6821 = vsub.f32 %v61, %v6820
  %v6822 = vand.u32 %v6821, 4294901760
  %6823 = vmatpush1.msra.mxu0 %v6822
  %6824 = vmatprep.subr.mxu0 0.0
  %v6825 = vand.u32 %v62, 4294901760
  %v6826 = vsub.f32 %v62, %v6825
  %v6827 = vand.u32 %v6826, 4294901760
  %6828 = vmatpush1.msra.mxu0 %v6827
  %6829 = vmatprep.subr.mxu0 0.0
  %6830 = vmatpush1.msra.mxu0 0.0
  %6831 = vmatprep.subr.mxu0 0.0
  %6832 = vmatpush1.msra.mxu0 0.0
  %6833 = vmatprep.subr.mxu0 0.0
  %6834 = vmatpush1.msra.mxu0 0.0
  %6835 = vmatprep.subr.mxu0 0.0
  %6836 = vmatpush1.msra.mxu0 0.0
  %6837 = vmatprep.subr.mxu0 0.0
  %6838 = vmatpush1.msra.mxu0 0.0
  %6839 = vmatprep.subr.mxu0 0.0
  %6840 = vmatpush1.msra.mxu0 0.0
  %6841 = vmatprep.subr.mxu0 0.0
  %6842 = vmatpush1.msra.mxu0 0.0
  %6843 = vmatprep.subr.mxu0 0.0
  %6844 = vmatpush1.msra.mxu0 0.0
  %6845 = vmatprep.subr.mxu0 0.0
  %6846 = vmatpush1.msra.mxu0 0.0
  %6847 = vmatprep.subr.mxu0 0.0
  %6848 = vmatpush1.msra.mxu0 0.0
  %6849 = vmatprep.subr.mxu0 0.0
  %6850 = vmatpush1.msra.mxu0 0.0
  %6851 = vmatprep.subr.mxu0 0.0
  %6852 = vmatpush1.msra.mxu0 0.0
  %6853 = vmatprep.subr.mxu0 0.0
  %6854 = vmatpush1.msra.mxu0 0.0
  %6855 = vmatprep.subr.mxu0 0.0
  %6856 = vmatpush1.msra.mxu0 0.0
  %6857 = vmatprep.subr.mxu0 0.0
  %6858 = vmatpush1.msra.mxu0 0.0
  %6859 = vmatprep.subr.mxu0 0.0
  %6860 = vmatpush1.msra.mxu0 0.0
  %6861 = vmatprep.mubr.f32.mxu0 0.0
  %v6862 = vand.u32 %v6312, 4294901760
  %6863 = vmatmul.mubr.f32.gmra.mrb[0].mxu0 %v6862
  %v6864 = vpop.f32.mrb[0].mxu0
  %v6865 = vadd.f32 %v6746, %v6864
  %v6866 = vpop.f32.mrb[0].mxu0
  %6867 = vdwg.mxu0
  %6868 = vmatprep.subr.mxu0 0.0
  %v6869 = vand.u32 %v47, 4294901760
  %6870 = vmatpush1.msra.mxu0 %v6869
  %6871 = vmatprep.subr.mxu0 0.0
  %v6872 = vand.u32 %v48, 4294901760
  %6873 = vmatpush1.msra.mxu0 %v6872
  %6874 = vmatprep.subr.mxu0 0.0
  %v6875 = vand.u32 %v49, 4294901760
  %6876 = vmatpush1.msra.mxu0 %v6875
  %6877 = vmatprep.subr.mxu0 0.0
  %v6878 = vand.u32 %v50, 4294901760
  %6879 = vmatpush1.msra.mxu0 %v6878
  %6880 = vmatprep.subr.mxu0 0.0
  %v6881 = vand.u32 %v51, 4294901760
  %6882 = vmatpush1.msra.mxu0 %v6881
  %6883 = vmatprep.subr.mxu0 0.0
  %v6884 = vand.u32 %v52, 4294901760
  %6885 = vmatpush1.msra.mxu0 %v6884
  %6886 = vmatprep.subr.mxu0 0.0
  %v6887 = vand.u32 %v53, 4294901760
  %6888 = vmatpush1.msra.mxu0 %v6887
  %6889 = vmatprep.subr.mxu0 0.0
  %v6890 = vand.u32 %v54, 4294901760
  %6891 = vmatpush1.msra.mxu0 %v6890
  %6892 = vmatprep.subr.mxu0 0.0
  %v6893 = vand.u32 %v55, 4294901760
  %6894 = vmatpush1.msra.mxu0 %v6893
  %6895 = vmatprep.subr.mxu0 0.0
  %v6896 = vand.u32 %v56, 4294901760
  %6897 = vmatpush1.msra.mxu0 %v6896
  %6898 = vmatprep.subr.mxu0 0.0
  %v6899 = vand.u32 %v57, 4294901760
  %6900 = vmatpush1.msra.mxu0 %v6899
  %6901 = vmatprep.subr.mxu0 0.0
  %v6902 = vand.u32 %v58, 4294901760
  %6903 = vmatpush1.msra.mxu0 %v6902
  %6904 = vmatprep.subr.mxu0 0.0
  %v6905 = vand.u32 %v59, 4294901760
  %6906 = vmatpush1.msra.mxu0 %v6905
  %6907 = vmatprep.subr.mxu0 0.0
  %v6908 = vand.u32 %v60, 4294901760
  %6909 = vmatpush1.msra.mxu0 %v6908
  %6910 = vmatprep.subr.mxu0 0.0
  %v6911 = vand.u32 %v61, 4294901760
  %6912 = vmatpush1.msra.mxu0 %v6911
  %6913 = vmatprep.subr.mxu0 0.0
  %v6914 = vand.u32 %v62, 4294901760
  %6915 = vmatpush1.msra.mxu0 %v6914
  %6916 = vmatprep.subr.mxu0 0.0
  %6917 = vmatpush1.msra.mxu0 0.0
  %6918 = vmatprep.subr.mxu0 0.0
  %6919 = vmatpush1.msra.mxu0 0.0
  %6920 = vmatprep.subr.mxu0 0.0
  %6921 = vmatpush1.msra.mxu0 0.0
  %6922 = vmatprep.subr.mxu0 0.0
  %6923 = vmatpush1.msra.mxu0 0.0
  %6924 = vmatprep.subr.mxu0 0.0
  %6925 = vmatpush1.msra.mxu0 0.0
  %6926 = vmatprep.subr.mxu0 0.0
  %6927 = vmatpush1.msra.mxu0 0.0
  %6928 = vmatprep.subr.mxu0 0.0
  %6929 = vmatpush1.msra.mxu0 0.0
  %6930 = vmatprep.subr.mxu0 0.0
  %6931 = vmatpush1.msra.mxu0 0.0
  %6932 = vmatprep.subr.mxu0 0.0
  %6933 = vmatpush1.msra.mxu0 0.0
  %6934 = vmatprep.subr.mxu0 0.0
  %6935 = vmatpush1.msra.mxu0 0.0
  %6936 = vmatprep.subr.mxu0 0.0
  %6937 = vmatpush1.msra.mxu0 0.0
  %6938 = vmatprep.subr.mxu0 0.0
  %6939 = vmatpush1.msra.mxu0 0.0
  %6940 = vmatprep.subr.mxu0 0.0
  %6941 = vmatpush1.msra.mxu0 0.0
  %6942 = vmatprep.subr.mxu0 0.0
  %6943 = vmatpush1.msra.mxu0 0.0
  %6944 = vmatprep.subr.mxu0 0.0
  %6945 = vmatpush1.msra.mxu0 0.0
  %6946 = vmatprep.subr.mxu0 0.0
  %6947 = vmatpush1.msra.mxu0 0.0
  %6948 = vmatprep.mubr.f32.mxu0 0.0
  %v6949 = vand.u32 %v6312, 4294901760
  %6950 = vmatmul.mubr.f32.gmra.mrb[0].mxu0 %v6949
  %v6951 = vpop.f32.mrb[0].mxu0
  %v6952 = vadd.f32 %v6865, %v6951
  %v6953 = vpop.f32.mrb[0].mxu0
  %6954 = vdwg.mxu0
  %v6955 = vlog2.pop %v6952
  %v6956 = vmul.f32 %v6955, 0.6931472
  %v6957 = vadd.f32 %v6290, %v6956
  %v6958 = vadd.f32 %v6957, %v6110
  %v6959 = vsel %vm6119, 1, 0
  %v6960 = vsel %vm6120, 1, 0
  %v6961 = vsel %vm6121, 1, 0
  %v6962 = vsel %vm6122, 1, 0
  %v6963 = vsel %vm6123, 1, 0
  %v6964 = vsel %vm6124, 1, 0
  %v6965 = vsel %vm6125, 1, 0
  %v6966 = vsel %vm6126, 1, 0
  %6967 = vset.pattern.permute.xlu0 0
  %6968 = vperm.xlu0 %6967, %v6959
  %v6969 = vpop.permute.xlu0 %6968
  %6970 = vset.pattern.permute.xlu0 0
  %6971 = vperm.xlu0 %6970, %v6960
  %v6972 = vpop.permute.xlu0 %6971
  %6973 = vset.pattern.permute.xlu0 0
  %6974 = vperm.xlu0 %6973, %v6961
  %v6975 = vpop.permute.xlu0 %6974
  %6976 = vset.pattern.permute.xlu0 0
  %6977 = vperm.xlu0 %6976, %v6962
  %v6978 = vpop.permute.xlu0 %6977
  %6979 = vset.pattern.permute.xlu0 0
  %6980 = vperm.xlu0 %6979, %v6963
  %v6981 = vpop.permute.xlu0 %6980
  %6982 = vset.pattern.permute.xlu0 0
  %6983 = vperm.xlu0 %6982, %v6964
  %v6984 = vpop.permute.xlu0 %6983
  %6985 = vset.pattern.permute.xlu0 0
  %6986 = vperm.xlu0 %6985, %v6965
  %v6987 = vpop.permute.xlu0 %6986
  %6988 = vset.pattern.permute.xlu0 0
  %6989 = vperm.xlu0 %6988, %v6966
  %v6990 = vpop.permute.xlu0 %6989
  %vm6991 = vcmp.eq.s32.totalorder %v6969, 1
  %vm6992 = vcmp.eq.s32.totalorder %v6972, 1
  %vm6993 = vcmp.eq.s32.totalorder %v6975, 1
  %vm6994 = vcmp.eq.s32.totalorder %v6978, 1
  %vm6995 = vcmp.eq.s32.totalorder %v6981, 1
  %vm6996 = vcmp.eq.s32.totalorder %v6984, 1
  %vm6997 = vcmp.eq.s32.totalorder %v6987, 1
  %vm6998 = vcmp.eq.s32.totalorder %v6990, 1
  %v7000 = vrot.slane %v6958, 1
  %v7001 = vrot.slane %v6958, 2
  %v7002 = vrot.slane %v6958, 3
  %v7003 = vrot.slane %v6958, 4
  %v7004 = vrot.slane %v6958, 5
  %v7005 = vrot.slane %v6958, 6
  %v7006 = vrot.slane %v6958, 7
  %v7015 = vsel %vm6991, %v6958, %v6012
  %v7016 = vsel %vm6992, %v7000, %v6013
  %v7017 = vsel %vm6993, %v7001, %v6014
  %v7018 = vsel %vm6994, %v7002, %v6015
  %v7019 = vsel %vm6995, %v7003, %v6016
  %v7020 = vsel %vm6996, %v7004, %v6017
  %v7021 = vsel %vm6997, %v7005, %v6018
  %v7022 = vsel %vm6998, %v7006, %v6019
  %v7023 = vld [vmem:[%s0 + $0x7] sm:$0x1]
  %v7024 = vld [vmem:[%s0 + $0xf] sm:$0x1]
  %v7025 = vld [vmem:[%s0 + $0x17] sm:$0x1]
  %v7026 = vld [vmem:[%s0 + $0x1f] sm:$0x1]
  %v7027 = vld [vmem:[%s0 + $0x27] sm:$0x1]
  %v7028 = vld [vmem:[%s0 + $0x2f] sm:$0x1]
  %v7029 = vld [vmem:[%s0 + $0x37] sm:$0x1]
  %v7030 = vld [vmem:[%s0 + $0x3f] sm:$0x1]
  %v7031 = vpack.c.bf16 %v7023, %v7023
  %v7032 = vpack.c.bf16 %v7024, %v7024
  %v7033 = vpack.c.bf16 %v7025, %v7025
  %v7034 = vpack.c.bf16 %v7026, %v7026
  %v7035 = vpack.c.bf16 %v7027, %v7027
  %v7036 = vpack.c.bf16 %v7028, %v7028
  %v7037 = vpack.c.bf16 %v7029, %v7029
  %v7038 = vpack.c.bf16 %v7030, %v7030
  %v7047 = vunpack.c.l.b16 %v7031
  %v7048 = vunpack.c.l.b16 %v7032
  %v7049 = vunpack.c.l.b16 %v7033
  %v7050 = vunpack.c.l.b16 %v7034
  %v7051 = vunpack.c.l.b16 %v7035
  %v7052 = vunpack.c.l.b16 %v7036
  %v7053 = vunpack.c.l.b16 %v7037
  %v7054 = vunpack.c.l.b16 %v7038
  %v7055 = vrot.slane %v7048, 7
  %v7056 = vsel %vm108, %v7055, %v7047
  %v7057 = vrot.slane %v7049, 6
  %v7058 = vsel %vm111, %v7057, %v7056
  %v7059 = vrot.slane %v7050, 5
  %v7060 = vsel %vm114, %v7059, %v7058
  %v7061 = vrot.slane %v7051, 4
  %v7062 = vsel %vm117, %v7061, %v7060
  %v7063 = vrot.slane %v7052, 3
  %v7064 = vsel %vm120, %v7063, %v7062
  %v7065 = vrot.slane %v7053, 2
  %v7066 = vsel %vm123, %v7065, %v7064
  %v7067 = vrot.slane %v7054, 1
  %v7068 = vsel %vm126, %v7067, %v7066
  %v7069 = vpack.c.b16 %v7068, %v7068
  %v7071 = vsel %vm141, %v7069, 0
  %7073 = vmatprep.subr.bf16.mxu0 0
  %7074 = vmatpush1.bf16.msra.mxu0 %v137
  %7075 = vmatprep.subr.bf16.mxu0 0
  %7076 = vmatpush1.bf16.msra.mxu0 %v138
  %7077 = vmatprep.subr.bf16.mxu0 0
  %7078 = vmatpush1.bf16.msra.mxu0 0
  %7079 = vmatprep.subr.bf16.mxu0 0
  %7080 = vmatpush1.bf16.msra.mxu0 0
  %7081 = vmatprep.subr.bf16.mxu0 0
  %7082 = vmatpush1.bf16.msra.mxu0 0
  %7083 = vmatprep.subr.bf16.mxu0 0
  %7084 = vmatpush1.bf16.msra.mxu0 0
  %7085 = vmatprep.subr.bf16.mxu0 0
  %7086 = vmatpush1.bf16.msra.mxu0 0
  %7087 = vmatprep.subr.bf16.mxu0 0
  %7088 = vmatpush1.bf16.msra.mxu0 0
  %7089 = vmatprep.subr.bf16.mxu0 0
  %7090 = vmatpush1.bf16.msra.mxu0 0
  %7091 = vmatprep.subr.bf16.mxu0 0
  %7092 = vmatpush1.bf16.msra.mxu0 0
  %7093 = vmatprep.subr.bf16.mxu0 0
  %7094 = vmatpush1.bf16.msra.mxu0 0
  %7095 = vmatprep.subr.bf16.mxu0 0
  %7096 = vmatpush1.bf16.msra.mxu0 0
  %7097 = vmatprep.subr.bf16.mxu0 0
  %7098 = vmatpush1.bf16.msra.mxu0 0
  %7099 = vmatprep.subr.bf16.mxu0 0
  %7100 = vmatpush1.bf16.msra.mxu0 0
  %7101 = vmatprep.subr.bf16.mxu0 0
  %7102 = vmatpush1.bf16.msra.mxu0 0
  %7103 = vmatprep.subr.bf16.mxu0 0
  %7104 = vmatpush1.bf16.msra.mxu0 0
  %7105 = vmatprep.mubr.bf16.mxu0 0
  %7106 = vmatmul.mubr.bf16.gmra.mrb[0].mxu0 %v7071
  %v7107 = vpop.f32.mrb[0].mxu0
  %v7108 = vadd.f32 %v89, %v7107
  %v7109 = vpop.f32.mrb[0].mxu0
  %v7110 = vpop.f32.mrb[0].mxu0
  %v7111 = vpop.f32.mrb[0].mxu0
  %7112 = vdwg.mxu0
  %v7113 = vmax.f32 %v7108, 0.0
  %v7114 = vld [vmem:[%s1 + $0x7] sm:$0x1]
  %v7115 = vld [vmem:[%s1 + $0xf] sm:$0x1]
  %v7116 = vld [vmem:[%s1 + $0x17] sm:$0x1]
  %v7117 = vld [vmem:[%s1 + $0x1f] sm:$0x1]
  %v7118 = vld [vmem:[%s1 + $0x27] sm:$0x1]
  %v7119 = vld [vmem:[%s1 + $0x2f] sm:$0x1]
  %v7120 = vld [vmem:[%s1 + $0x37] sm:$0x1]
  %v7121 = vld [vmem:[%s1 + $0x3f] sm:$0x1]
  %vm7122 = vcmp.gt.f32.partialorder %v7114, 0.0
  %vm7123 = vcmp.gt.f32.partialorder %v7115, 0.0
  %vm7124 = vcmp.gt.f32.partialorder %v7116, 0.0
  %vm7125 = vcmp.gt.f32.partialorder %v7117, 0.0
  %vm7126 = vcmp.gt.f32.partialorder %v7118, 0.0
  %vm7127 = vcmp.gt.f32.partialorder %v7119, 0.0
  %vm7128 = vcmp.gt.f32.partialorder %v7120, 0.0
  %vm7129 = vcmp.gt.f32.partialorder %v7121, 0.0
  %v7130 = vld [vmem:[%s2 + $0x7] sm:$0x1]
  %v7131 = vld [vmem:[%s2 + $0xf] sm:$0x1]
  %v7132 = vld [vmem:[%s2 + $0x17] sm:$0x1]
  %v7133 = vld [vmem:[%s2 + $0x1f] sm:$0x1]
  %v7134 = vld [vmem:[%s2 + $0x27] sm:$0x1]
  %v7135 = vld [vmem:[%s2 + $0x2f] sm:$0x1]
  %v7136 = vld [vmem:[%s2 + $0x37] sm:$0x1]
  %v7137 = vld [vmem:[%s2 + $0x3f] sm:$0x1]
  %7138 = vset.pattern.permute.xlu0 0
  %7139 = vperm.xlu0 %7138, %v7130
  %v7140 = vpop.permute.xlu0 %7139
  %7141 = vset.pattern.permute.xlu0 0
  %7142 = vperm.xlu0 %7141, %v7131
  %v7143 = vpop.permute.xlu0 %7142
  %7144 = vset.pattern.permute.xlu0 0
  %7145 = vperm.xlu0 %7144, %v7132
  %v7146 = vpop.permute.xlu0 %7145
  %7147 = vset.pattern.permute.xlu0 0
  %7148 = vperm.xlu0 %7147, %v7133
  %v7149 = vpop.permute.xlu0 %7148
  %7150 = vset.pattern.permute.xlu0 0
  %7151 = vperm.xlu0 %7150, %v7134
  %v7152 = vpop.permute.xlu0 %7151
  %7153 = vset.pattern.permute.xlu0 0
  %7154 = vperm.xlu0 %7153, %v7135
  %v7155 = vpop.permute.xlu0 %7154
  %7156 = vset.pattern.permute.xlu0 0
  %7157 = vperm.xlu0 %7156, %v7136
  %v7158 = vpop.permute.xlu0 %7157
  %7159 = vset.pattern.permute.xlu0 0
  %7160 = vperm.xlu0 %7159, %v7137
  %v7161 = vpop.permute.xlu0 %7160
  %v7162 = vrot.slane %v7143, 7
  %v7163 = vsel %vm108, %v7162, %v7140
  %v7164 = vrot.slane %v7146, 6
  %v7165 = vsel %vm111, %v7164, %v7163
  %v7166 = vrot.slane %v7149, 5
  %v7167 = vsel %vm114, %v7166, %v7165
  %v7168 = vrot.slane %v7152, 4
  %v7169 = vsel %vm117, %v7168, %v7167
  %v7170 = vrot.slane %v7155, 3
  %v7171 = vsel %vm120, %v7170, %v7169
  %v7172 = vrot.slane %v7158, 2
  %v7173 = vsel %vm123, %v7172, %v7171
  %v7174 = vrot.slane %v7161, 1
  %v7175 = vsel %vm126, %v7174, %v7173
  %vm7176 = vcmp.eq.s32.totalorder %v68, %v7175
  %v7177 = vsel %vm7176, %v7113, 0.0
  %7178 = vadd.xlane.f32.xlu0 %v7177
  %v7179 = vpop.xlane.xlu0 %7178
  %v7181 = vrot.slane %v7179, 1
  %v7182 = vrot.slane %v7179, 2
  %v7183 = vrot.slane %v7179, 3
  %v7184 = vrot.slane %v7179, 4
  %v7185 = vrot.slane %v7179, 5
  %v7186 = vrot.slane %v7179, 6
  %v7187 = vrot.slane %v7179, 7
  %v7196 = vsel %vm7122, %v7179, 0.0
  %v7197 = vsel %vm7123, %v7181, 0.0
  %v7198 = vsel %vm7124, %v7182, 0.0
  %v7199 = vsel %vm7125, %v7183, 0.0
  %v7200 = vsel %vm7126, %v7184, 0.0
  %v7201 = vsel %vm7127, %v7185, 0.0
  %v7202 = vsel %vm7128, %v7186, 0.0
  %v7203 = vsel %vm7129, %v7187, 0.0
  %v7212 = vrot.slane %v7197, 7
  %v7213 = vsel %vm108, %v7212, %v7196
  %v7214 = vrot.slane %v7198, 6
  %v7215 = vsel %vm111, %v7214, %v7213
  %v7216 = vrot.slane %v7199, 5
  %v7217 = vsel %vm114, %v7216, %v7215
  %v7218 = vrot.slane %v7200, 4
  %v7219 = vsel %vm117, %v7218, %v7217
  %v7220 = vrot.slane %v7201, 3
  %v7221 = vsel %vm120, %v7220, %v7219
  %v7222 = vrot.slane %v7202, 2
  %v7223 = vsel %vm123, %v7222, %v7221
  %v7224 = vrot.slane %v7203, 1
  %v7225 = vsel %vm126, %v7224, %v7223
  %v7227 = vadd.f32 %v6224, %v7225
  %v7236 = vrot.slane %v7016, 7
  %v7237 = vsel %vm108, %v7236, %v7015
  %v7238 = vrot.slane %v7017, 6
  %v7239 = vsel %vm111, %v7238, %v7237
  %v7240 = vrot.slane %v7018, 5
  %v7241 = vsel %vm114, %v7240, %v7239
  %v7242 = vrot.slane %v7019, 4
  %v7243 = vsel %vm117, %v7242, %v7241
  %v7244 = vrot.slane %v7020, 3
  %v7245 = vsel %vm120, %v7244, %v7243
  %v7246 = vrot.slane %v7021, 2
  %v7247 = vsel %vm123, %v7246, %v7245
  %v7248 = vrot.slane %v7022, 1
  %v7249 = vsel %vm126, %v7248, %v7247
  %7251 = vmax.xlane.f32.xlu0 %v7249
  %v7252 = vpop.xlane.xlu0 %7251
  %v7254 = vrot.slane %v7252, 1
  %v7255 = vrot.slane %v7252, 2
  %v7256 = vrot.slane %v7252, 3
  %v7257 = vrot.slane %v7252, 4
  %v7258 = vrot.slane %v7252, 5
  %v7259 = vrot.slane %v7252, 6
  %v7260 = vrot.slane %v7252, 7
  %v7269 = vsub.f32 %v7015, %v7252
  %v7270 = vsub.f32 %v7016, %v7254
  %v7271 = vsub.f32 %v7017, %v7255
  %v7272 = vsub.f32 %v7018, %v7256
  %v7273 = vsub.f32 %v7019, %v7257
  %v7274 = vsub.f32 %v7020, %v7258
  %v7275 = vsub.f32 %v7021, %v7259
  %v7276 = vsub.f32 %v7022, %v7260
  %v7277 = vmul.f32 %v7269, 1.442695
  %v7278 = vpow.pop %v7277
  %v7279 = vmul.f32 %v7270, 1.442695
  %v7280 = vpow.pop %v7279
  %v7281 = vmul.f32 %v7271, 1.442695
  %v7282 = vpow.pop %v7281
  %v7283 = vmul.f32 %v7272, 1.442695
  %v7284 = vpow.pop %v7283
  %v7285 = vmul.f32 %v7273, 1.442695
  %v7286 = vpow.pop %v7285
  %v7287 = vmul.f32 %v7274, 1.442695
  %v7288 = vpow.pop %v7287
  %v7289 = vmul.f32 %v7275, 1.442695
  %v7290 = vpow.pop %v7289
  %v7291 = vmul.f32 %v7276, 1.442695
  %v7292 = vpow.pop %v7291
  %v7293 = vadd.f32 %v7252, %v313
  %v7302 = vrot.slane %v7280, 7
  %v7303 = vsel %vm108, %v7302, %v7278
  %v7304 = vrot.slane %v7282, 6
  %v7305 = vsel %vm111, %v7304, %v7303
  %v7306 = vrot.slane %v7284, 5
  %v7307 = vsel %vm114, %v7306, %v7305
  %v7308 = vrot.slane %v7286, 4
  %v7309 = vsel %vm117, %v7308, %v7307
  %v7310 = vrot.slane %v7288, 3
  %v7311 = vsel %vm120, %v7310, %v7309
  %v7312 = vrot.slane %v7290, 2
  %v7313 = vsel %vm123, %v7312, %v7311
  %v7314 = vrot.slane %v7292, 1
  %v7315 = vsel %vm126, %v7314, %v7313
  %7317 = vmatprep.subr.mxu0 0.0
  %v7318 = vand.u32 %v47, 4294901760
  %7319 = vmatpush1.msra.mxu0 %v7318
  %7320 = vmatprep.subr.mxu0 0.0
  %v7321 = vand.u32 %v48, 4294901760
  %7322 = vmatpush1.msra.mxu0 %v7321
  %7323 = vmatprep.subr.mxu0 0.0
  %v7324 = vand.u32 %v49, 4294901760
  %7325 = vmatpush1.msra.mxu0 %v7324
  %7326 = vmatprep.subr.mxu0 0.0
  %v7327 = vand.u32 %v50, 4294901760
  %7328 = vmatpush1.msra.mxu0 %v7327
  %7329 = vmatprep.subr.mxu0 0.0
  %v7330 = vand.u32 %v51, 4294901760
  %7331 = vmatpush1.msra.mxu0 %v7330
  %7332 = vmatprep.subr.mxu0 0.0
  %v7333 = vand.u32 %v52, 4294901760
  %7334 = vmatpush1.msra.mxu0 %v7333
  %7335 = vmatprep.subr.mxu0 0.0
  %v7336 = vand.u32 %v53, 4294901760
  %7337 = vmatpush1.msra.mxu0 %v7336
  %7338 = vmatprep.subr.mxu0 0.0
  %v7339 = vand.u32 %v54, 4294901760
  %7340 = vmatpush1.msra.mxu0 %v7339
  %7341 = vmatprep.subr.mxu0 0.0
  %v7342 = vand.u32 %v55, 4294901760
  %7343 = vmatpush1.msra.mxu0 %v7342
  %7344 = vmatprep.subr.mxu0 0.0
  %v7345 = vand.u32 %v56, 4294901760
  %7346 = vmatpush1.msra.mxu0 %v7345
  %7347 = vmatprep.subr.mxu0 0.0
  %v7348 = vand.u32 %v57, 4294901760
  %7349 = vmatpush1.msra.mxu0 %v7348
  %7350 = vmatprep.subr.mxu0 0.0
  %v7351 = vand.u32 %v58, 4294901760
  %7352 = vmatpush1.msra.mxu0 %v7351
  %7353 = vmatprep.subr.mxu0 0.0
  %v7354 = vand.u32 %v59, 4294901760
  %7355 = vmatpush1.msra.mxu0 %v7354
  %7356 = vmatprep.subr.mxu0 0.0
  %v7357 = vand.u32 %v60, 4294901760
  %7358 = vmatpush1.msra.mxu0 %v7357
  %7359 = vmatprep.subr.mxu0 0.0
  %v7360 = vand.u32 %v61, 4294901760
  %7361 = vmatpush1.msra.mxu0 %v7360
  %7362 = vmatprep.subr.mxu0 0.0
  %v7363 = vand.u32 %v62, 4294901760
  %7364 = vmatpush1.msra.mxu0 %v7363
  %7365 = vmatprep.subr.mxu0 0.0
  %7366 = vmatpush1.msra.mxu0 0.0
  %7367 = vmatprep.subr.mxu0 0.0
  %7368 = vmatpush1.msra.mxu0 0.0
  %7369 = vmatprep.subr.mxu0 0.0
  %7370 = vmatpush1.msra.mxu0 0.0
  %7371 = vmatprep.subr.mxu0 0.0
  %7372 = vmatpush1.msra.mxu0 0.0
  %7373 = vmatprep.subr.mxu0 0.0
  %7374 = vmatpush1.msra.mxu0 0.0
  %7375 = vmatprep.subr.mxu0 0.0
  %7376 = vmatpush1.msra.mxu0 0.0
  %7377 = vmatprep.subr.mxu0 0.0
  %7378 = vmatpush1.msra.mxu0 0.0
  %7379 = vmatprep.subr.mxu0 0.0
  %7380 = vmatpush1.msra.mxu0 0.0
  %7381 = vmatprep.subr.mxu0 0.0
  %7382 = vmatpush1.msra.mxu0 0.0
  %7383 = vmatprep.subr.mxu0 0.0
  %7384 = vmatpush1.msra.mxu0 0.0
  %7385 = vmatprep.subr.mxu0 0.0
  %7386 = vmatpush1.msra.mxu0 0.0
  %7387 = vmatprep.subr.mxu0 0.0
  %7388 = vmatpush1.msra.mxu0 0.0
  %7389 = vmatprep.subr.mxu0 0.0
  %7390 = vmatpush1.msra.mxu0 0.0
  %7391 = vmatprep.subr.mxu0 0.0
  %7392 = vmatpush1.msra.mxu0 0.0
  %7393 = vmatprep.subr.mxu0 0.0
  %7394 = vmatpush1.msra.mxu0 0.0
  %7395 = vmatprep.subr.mxu0 0.0
  %7396 = vmatpush1.msra.mxu0 0.0
  %7397 = vmatprep.mubr.f32.mxu0 0.0
  %v7398 = vand.u32 %v7315, 4294901760
  %v7399 = vsub.f32 %v7315, %v7398
  %v7400 = vand.u32 %v7399, 4294901760
  %v7401 = vsub.f32 %v7399, %v7400
  %v7402 = vand.u32 %v7401, 4294901760
  %7403 = vmatmul.mubr.f32.gmra.mrb[0].mxu0 %v7402
  %v7404 = vpop.f32.mrb[0].mxu0
  %v7405 = vadd.f32 1e-30, %v7404
  %v7406 = vpop.f32.mrb[0].mxu0
  %7407 = vdwg.mxu0
  %7408 = vmatprep.subr.mxu0 0.0
  %v7409 = vand.u32 %v47, 4294901760
  %v7410 = vsub.f32 %v47, %v7409
  %v7411 = vand.u32 %v7410, 4294901760
  %v7412 = vsub.f32 %v7410, %v7411
  %v7413 = vand.u32 %v7412, 4294901760
  %7414 = vmatpush1.msra.mxu0 %v7413
  %7415 = vmatprep.subr.mxu0 0.0
  %v7416 = vand.u32 %v48, 4294901760
  %v7417 = vsub.f32 %v48, %v7416
  %v7418 = vand.u32 %v7417, 4294901760
  %v7419 = vsub.f32 %v7417, %v7418
  %v7420 = vand.u32 %v7419, 4294901760
  %7421 = vmatpush1.msra.mxu0 %v7420
  %7422 = vmatprep.subr.mxu0 0.0
  %v7423 = vand.u32 %v49, 4294901760
  %v7424 = vsub.f32 %v49, %v7423
  %v7425 = vand.u32 %v7424, 4294901760
  %v7426 = vsub.f32 %v7424, %v7425
  %v7427 = vand.u32 %v7426, 4294901760
  %7428 = vmatpush1.msra.mxu0 %v7427
  %7429 = vmatprep.subr.mxu0 0.0
  %v7430 = vand.u32 %v50, 4294901760
  %v7431 = vsub.f32 %v50, %v7430
  %v7432 = vand.u32 %v7431, 4294901760
  %v7433 = vsub.f32 %v7431, %v7432
  %v7434 = vand.u32 %v7433, 4294901760
  %7435 = vmatpush1.msra.mxu0 %v7434
  %7436 = vmatprep.subr.mxu0 0.0
  %v7437 = vand.u32 %v51, 4294901760
  %v7438 = vsub.f32 %v51, %v7437
  %v7439 = vand.u32 %v7438, 4294901760
  %v7440 = vsub.f32 %v7438, %v7439
  %v7441 = vand.u32 %v7440, 4294901760
  %7442 = vmatpush1.msra.mxu0 %v7441
  %7443 = vmatprep.subr.mxu0 0.0
  %v7444 = vand.u32 %v52, 4294901760
  %v7445 = vsub.f32 %v52, %v7444
  %v7446 = vand.u32 %v7445, 4294901760
  %v7447 = vsub.f32 %v7445, %v7446
  %v7448 = vand.u32 %v7447, 4294901760
  %7449 = vmatpush1.msra.mxu0 %v7448
  %7450 = vmatprep.subr.mxu0 0.0
  %v7451 = vand.u32 %v53, 4294901760
  %v7452 = vsub.f32 %v53, %v7451
  %v7453 = vand.u32 %v7452, 4294901760
  %v7454 = vsub.f32 %v7452, %v7453
  %v7455 = vand.u32 %v7454, 4294901760
  %7456 = vmatpush1.msra.mxu0 %v7455
  %7457 = vmatprep.subr.mxu0 0.0
  %v7458 = vand.u32 %v54, 4294901760
  %v7459 = vsub.f32 %v54, %v7458
  %v7460 = vand.u32 %v7459, 4294901760
  %v7461 = vsub.f32 %v7459, %v7460
  %v7462 = vand.u32 %v7461, 4294901760
  %7463 = vmatpush1.msra.mxu0 %v7462
  %7464 = vmatprep.subr.mxu0 0.0
  %v7465 = vand.u32 %v55, 4294901760
  %v7466 = vsub.f32 %v55, %v7465
  %v7467 = vand.u32 %v7466, 4294901760
  %v7468 = vsub.f32 %v7466, %v7467
  %v7469 = vand.u32 %v7468, 4294901760
  %7470 = vmatpush1.msra.mxu0 %v7469
  %7471 = vmatprep.subr.mxu0 0.0
  %v7472 = vand.u32 %v56, 4294901760
  %v7473 = vsub.f32 %v56, %v7472
  %v7474 = vand.u32 %v7473, 4294901760
  %v7475 = vsub.f32 %v7473, %v7474
  %v7476 = vand.u32 %v7475, 4294901760
  %7477 = vmatpush1.msra.mxu0 %v7476
  %7478 = vmatprep.subr.mxu0 0.0
  %v7479 = vand.u32 %v57, 4294901760
  %v7480 = vsub.f32 %v57, %v7479
  %v7481 = vand.u32 %v7480, 4294901760
  %v7482 = vsub.f32 %v7480, %v7481
  %v7483 = vand.u32 %v7482, 4294901760
  %7484 = vmatpush1.msra.mxu0 %v7483
  %7485 = vmatprep.subr.mxu0 0.0
  %v7486 = vand.u32 %v58, 4294901760
  %v7487 = vsub.f32 %v58, %v7486
  %v7488 = vand.u32 %v7487, 4294901760
  %v7489 = vsub.f32 %v7487, %v7488
  %v7490 = vand.u32 %v7489, 4294901760
  %7491 = vmatpush1.msra.mxu0 %v7490
  %7492 = vmatprep.subr.mxu0 0.0
  %v7493 = vand.u32 %v59, 4294901760
  %v7494 = vsub.f32 %v59, %v7493
  %v7495 = vand.u32 %v7494, 4294901760
  %v7496 = vsub.f32 %v7494, %v7495
  %v7497 = vand.u32 %v7496, 4294901760
  %7498 = vmatpush1.msra.mxu0 %v7497
  %7499 = vmatprep.subr.mxu0 0.0
  %v7500 = vand.u32 %v60, 4294901760
  %v7501 = vsub.f32 %v60, %v7500
  %v7502 = vand.u32 %v7501, 4294901760
  %v7503 = vsub.f32 %v7501, %v7502
  %v7504 = vand.u32 %v7503, 4294901760
  %7505 = vmatpush1.msra.mxu0 %v7504
  %7506 = vmatprep.subr.mxu0 0.0
  %v7507 = vand.u32 %v61, 4294901760
  %v7508 = vsub.f32 %v61, %v7507
  %v7509 = vand.u32 %v7508, 4294901760
  %v7510 = vsub.f32 %v7508, %v7509
  %v7511 = vand.u32 %v7510, 4294901760
  %7512 = vmatpush1.msra.mxu0 %v7511
  %7513 = vmatprep.subr.mxu0 0.0
  %v7514 = vand.u32 %v62, 4294901760
  %v7515 = vsub.f32 %v62, %v7514
  %v7516 = vand.u32 %v7515, 4294901760
  %v7517 = vsub.f32 %v7515, %v7516
  %v7518 = vand.u32 %v7517, 4294901760
  %7519 = vmatpush1.msra.mxu0 %v7518
  %7520 = vmatprep.subr.mxu0 0.0
  %7521 = vmatpush1.msra.mxu0 0.0
  %7522 = vmatprep.subr.mxu0 0.0
  %7523 = vmatpush1.msra.mxu0 0.0
  %7524 = vmatprep.subr.mxu0 0.0
  %7525 = vmatpush1.msra.mxu0 0.0
  %7526 = vmatprep.subr.mxu0 0.0
  %7527 = vmatpush1.msra.mxu0 0.0
  %7528 = vmatprep.subr.mxu0 0.0
  %7529 = vmatpush1.msra.mxu0 0.0
  %7530 = vmatprep.subr.mxu0 0.0
  %7531 = vmatpush1.msra.mxu0 0.0
  %7532 = vmatprep.subr.mxu0 0.0
  %7533 = vmatpush1.msra.mxu0 0.0
  %7534 = vmatprep.subr.mxu0 0.0
  %7535 = vmatpush1.msra.mxu0 0.0
  %7536 = vmatprep.subr.mxu0 0.0
  %7537 = vmatpush1.msra.mxu0 0.0
  %7538 = vmatprep.subr.mxu0 0.0
  %7539 = vmatpush1.msra.mxu0 0.0
  %7540 = vmatprep.subr.mxu0 0.0
  %7541 = vmatpush1.msra.mxu0 0.0
  %7542 = vmatprep.subr.mxu0 0.0
  %7543 = vmatpush1.msra.mxu0 0.0
  %7544 = vmatprep.subr.mxu0 0.0
  %7545 = vmatpush1.msra.mxu0 0.0
  %7546 = vmatprep.subr.mxu0 0.0
  %7547 = vmatpush1.msra.mxu0 0.0
  %7548 = vmatprep.subr.mxu0 0.0
  %7549 = vmatpush1.msra.mxu0 0.0
  %7550 = vmatprep.subr.mxu0 0.0
  %7551 = vmatpush1.msra.mxu0 0.0
  %7552 = vmatprep.mubr.f32.mxu0 0.0
  %v7553 = vand.u32 %v7315, 4294901760
  %7554 = vmatmul.mubr.f32.gmra.mrb[0].mxu0 %v7553
  %v7555 = vpop.f32.mrb[0].mxu0
  %v7556 = vadd.f32 %v7405, %v7555
  %v7557 = vpop.f32.mrb[0].mxu0
  %7558 = vdwg.mxu0
  %7559 = vmatprep.subr.mxu0 0.0
  %v7560 = vand.u32 %v47, 4294901760
  %v7561 = vsub.f32 %v47, %v7560
  %7562 = vmatpush1.msra.mxu0 %v7561
  %7563 = vmatprep.subr.mxu0 0.0
  %v7564 = vand.u32 %v48, 4294901760
  %v7565 = vsub.f32 %v48, %v7564
  %7566 = vmatpush1.msra.mxu0 %v7565
  %7567 = vmatprep.subr.mxu0 0.0
  %v7568 = vand.u32 %v49, 4294901760
  %v7569 = vsub.f32 %v49, %v7568
  %7570 = vmatpush1.msra.mxu0 %v7569
  %7571 = vmatprep.subr.mxu0 0.0
  %v7572 = vand.u32 %v50, 4294901760
  %v7573 = vsub.f32 %v50, %v7572
  %7574 = vmatpush1.msra.mxu0 %v7573
  %7575 = vmatprep.subr.mxu0 0.0
  %v7576 = vand.u32 %v51, 4294901760
  %v7577 = vsub.f32 %v51, %v7576
  %7578 = vmatpush1.msra.mxu0 %v7577
  %7579 = vmatprep.subr.mxu0 0.0
  %v7580 = vand.u32 %v52, 4294901760
  %v7581 = vsub.f32 %v52, %v7580
  %7582 = vmatpush1.msra.mxu0 %v7581
  %7583 = vmatprep.subr.mxu0 0.0
  %v7584 = vand.u32 %v53, 4294901760
  %v7585 = vsub.f32 %v53, %v7584
  %7586 = vmatpush1.msra.mxu0 %v7585
  %7587 = vmatprep.subr.mxu0 0.0
  %v7588 = vand.u32 %v54, 4294901760
  %v7589 = vsub.f32 %v54, %v7588
  %7590 = vmatpush1.msra.mxu0 %v7589
  %7591 = vmatprep.subr.mxu0 0.0
  %v7592 = vand.u32 %v55, 4294901760
  %v7593 = vsub.f32 %v55, %v7592
  %7594 = vmatpush1.msra.mxu0 %v7593
  %7595 = vmatprep.subr.mxu0 0.0
  %v7596 = vand.u32 %v56, 4294901760
  %v7597 = vsub.f32 %v56, %v7596
  %7598 = vmatpush1.msra.mxu0 %v7597
  %7599 = vmatprep.subr.mxu0 0.0
  %v7600 = vand.u32 %v57, 4294901760
  %v7601 = vsub.f32 %v57, %v7600
  %7602 = vmatpush1.msra.mxu0 %v7601
  %7603 = vmatprep.subr.mxu0 0.0
  %v7604 = vand.u32 %v58, 4294901760
  %v7605 = vsub.f32 %v58, %v7604
  %7606 = vmatpush1.msra.mxu0 %v7605
  %7607 = vmatprep.subr.mxu0 0.0
  %v7608 = vand.u32 %v59, 4294901760
  %v7609 = vsub.f32 %v59, %v7608
  %7610 = vmatpush1.msra.mxu0 %v7609
  %7611 = vmatprep.subr.mxu0 0.0
  %v7612 = vand.u32 %v60, 4294901760
  %v7613 = vsub.f32 %v60, %v7612
  %7614 = vmatpush1.msra.mxu0 %v7613
  %7615 = vmatprep.subr.mxu0 0.0
  %v7616 = vand.u32 %v61, 4294901760
  %v7617 = vsub.f32 %v61, %v7616
  %7618 = vmatpush1.msra.mxu0 %v7617
  %7619 = vmatprep.subr.mxu0 0.0
  %v7620 = vand.u32 %v62, 4294901760
  %v7621 = vsub.f32 %v62, %v7620
  %7622 = vmatpush1.msra.mxu0 %v7621
  %7623 = vmatprep.subr.mxu0 0.0
  %7624 = vmatpush1.msra.mxu0 0.0
  %7625 = vmatprep.subr.mxu0 0.0
  %7626 = vmatpush1.msra.mxu0 0.0
  %7627 = vmatprep.subr.mxu0 0.0
  %7628 = vmatpush1.msra.mxu0 0.0
  %7629 = vmatprep.subr.mxu0 0.0
  %7630 = vmatpush1.msra.mxu0 0.0
  %7631 = vmatprep.subr.mxu0 0.0
  %7632 = vmatpush1.msra.mxu0 0.0
  %7633 = vmatprep.subr.mxu0 0.0
  %7634 = vmatpush1.msra.mxu0 0.0
  %7635 = vmatprep.subr.mxu0 0.0
  %7636 = vmatpush1.msra.mxu0 0.0
  %7637 = vmatprep.subr.mxu0 0.0
  %7638 = vmatpush1.msra.mxu0 0.0
  %7639 = vmatprep.subr.mxu0 0.0
  %7640 = vmatpush1.msra.mxu0 0.0
  %7641 = vmatprep.subr.mxu0 0.0
  %7642 = vmatpush1.msra.mxu0 0.0
  %7643 = vmatprep.subr.mxu0 0.0
  %7644 = vmatpush1.msra.mxu0 0.0
  %7645 = vmatprep.subr.mxu0 0.0
  %7646 = vmatpush1.msra.mxu0 0.0
  %7647 = vmatprep.subr.mxu0 0.0
  %7648 = vmatpush1.msra.mxu0 0.0
  %7649 = vmatprep.subr.mxu0 0.0
  %7650 = vmatpush1.msra.mxu0 0.0
  %7651 = vmatprep.subr.mxu0 0.0
  %7652 = vmatpush1.msra.mxu0 0.0
  %7653 = vmatprep.subr.mxu0 0.0
  %7654 = vmatpush1.msra.mxu0 0.0
  %7655 = vmatprep.mubr.f32.mxu0 0.0
  %v7656 = vand.u32 %v7315, 4294901760
  %v7657 = vsub.f32 %v7315, %v7656
  %7658 = vmatmul.mubr.f32.gmra.mrb[0].mxu0 %v7657
  %v7659 = vpop.f32.mrb[0].mxu0
  %v7660 = vadd.f32 %v7556, %v7659
  %v7661 = vpop.f32.mrb[0].mxu0
  %7662 = vdwg.mxu0
  %7663 = vmatprep.subr.mxu0 0.0
  %v7664 = vand.u32 %v47, 4294901760
  %7665 = vmatpush1.msra.mxu0 %v7664
  %7666 = vmatprep.subr.mxu0 0.0
  %v7667 = vand.u32 %v48, 4294901760
  %7668 = vmatpush1.msra.mxu0 %v7667
  %7669 = vmatprep.subr.mxu0 0.0
  %v7670 = vand.u32 %v49, 4294901760
  %7671 = vmatpush1.msra.mxu0 %v7670
  %7672 = vmatprep.subr.mxu0 0.0
  %v7673 = vand.u32 %v50, 4294901760
  %7674 = vmatpush1.msra.mxu0 %v7673
  %7675 = vmatprep.subr.mxu0 0.0
  %v7676 = vand.u32 %v51, 4294901760
  %7677 = vmatpush1.msra.mxu0 %v7676
  %7678 = vmatprep.subr.mxu0 0.0
  %v7679 = vand.u32 %v52, 4294901760
  %7680 = vmatpush1.msra.mxu0 %v7679
  %7681 = vmatprep.subr.mxu0 0.0
  %v7682 = vand.u32 %v53, 4294901760
  %7683 = vmatpush1.msra.mxu0 %v7682
  %7684 = vmatprep.subr.mxu0 0.0
  %v7685 = vand.u32 %v54, 4294901760
  %7686 = vmatpush1.msra.mxu0 %v7685
  %7687 = vmatprep.subr.mxu0 0.0
  %v7688 = vand.u32 %v55, 4294901760
  %7689 = vmatpush1.msra.mxu0 %v7688
  %7690 = vmatprep.subr.mxu0 0.0
  %v7691 = vand.u32 %v56, 4294901760
  %7692 = vmatpush1.msra.mxu0 %v7691
  %7693 = vmatprep.subr.mxu0 0.0
  %v7694 = vand.u32 %v57, 4294901760
  %7695 = vmatpush1.msra.mxu0 %v7694
  %7696 = vmatprep.subr.mxu0 0.0
  %v7697 = vand.u32 %v58, 4294901760
  %7698 = vmatpush1.msra.mxu0 %v7697
  %7699 = vmatprep.subr.mxu0 0.0
  %v7700 = vand.u32 %v59, 4294901760
  %7701 = vmatpush1.msra.mxu0 %v7700
  %7702 = vmatprep.subr.mxu0 0.0
  %v7703 = vand.u32 %v60, 4294901760
  %7704 = vmatpush1.msra.mxu0 %v7703
  %7705 = vmatprep.subr.mxu0 0.0
  %v7706 = vand.u32 %v61, 4294901760
  %7707 = vmatpush1.msra.mxu0 %v7706
  %7708 = vmatprep.subr.mxu0 0.0
  %v7709 = vand.u32 %v62, 4294901760
  %7710 = vmatpush1.msra.mxu0 %v7709
  %7711 = vmatprep.subr.mxu0 0.0
  %7712 = vmatpush1.msra.mxu0 0.0
  %7713 = vmatprep.subr.mxu0 0.0
  %7714 = vmatpush1.msra.mxu0 0.0
  %7715 = vmatprep.subr.mxu0 0.0
  %7716 = vmatpush1.msra.mxu0 0.0
  %7717 = vmatprep.subr.mxu0 0.0
  %7718 = vmatpush1.msra.mxu0 0.0
  %7719 = vmatprep.subr.mxu0 0.0
  %7720 = vmatpush1.msra.mxu0 0.0
  %7721 = vmatprep.subr.mxu0 0.0
  %7722 = vmatpush1.msra.mxu0 0.0
  %7723 = vmatprep.subr.mxu0 0.0
  %7724 = vmatpush1.msra.mxu0 0.0
  %7725 = vmatprep.subr.mxu0 0.0
  %7726 = vmatpush1.msra.mxu0 0.0
  %7727 = vmatprep.subr.mxu0 0.0
  %7728 = vmatpush1.msra.mxu0 0.0
  %7729 = vmatprep.subr.mxu0 0.0
  %7730 = vmatpush1.msra.mxu0 0.0
  %7731 = vmatprep.subr.mxu0 0.0
  %7732 = vmatpush1.msra.mxu0 0.0
  %7733 = vmatprep.subr.mxu0 0.0
  %7734 = vmatpush1.msra.mxu0 0.0
  %7735 = vmatprep.subr.mxu0 0.0
  %7736 = vmatpush1.msra.mxu0 0.0
  %7737 = vmatprep.subr.mxu0 0.0
  %7738 = vmatpush1.msra.mxu0 0.0
  %7739 = vmatprep.subr.mxu0 0.0
  %7740 = vmatpush1.msra.mxu0 0.0
  %7741 = vmatprep.subr.mxu0 0.0
  %7742 = vmatpush1.msra.mxu0 0.0
  %7743 = vmatprep.mubr.f32.mxu0 0.0
  %v7744 = vand.u32 %v7315, 4294901760
  %v7745 = vsub.f32 %v7315, %v7744
  %v7746 = vand.u32 %v7745, 4294901760
  %7747 = vmatmul.mubr.f32.gmra.mrb[0].mxu0 %v7746
  %v7748 = vpop.f32.mrb[0].mxu0
  %v7749 = vadd.f32 %v7660, %v7748
  %v7750 = vpop.f32.mrb[0].mxu0
  %7751 = vdwg.mxu0
  %7752 = vmatprep.subr.mxu0 0.0
  %v7753 = vand.u32 %v47, 4294901760
  %v7754 = vsub.f32 %v47, %v7753
  %v7755 = vand.u32 %v7754, 4294901760
  %7756 = vmatpush1.msra.mxu0 %v7755
  %7757 = vmatprep.subr.mxu0 0.0
  %v7758 = vand.u32 %v48, 4294901760
  %v7759 = vsub.f32 %v48, %v7758
  %v7760 = vand.u32 %v7759, 4294901760
  %7761 = vmatpush1.msra.mxu0 %v7760
  %7762 = vmatprep.subr.mxu0 0.0
  %v7763 = vand.u32 %v49, 4294901760
  %v7764 = vsub.f32 %v49, %v7763
  %v7765 = vand.u32 %v7764, 4294901760
  %7766 = vmatpush1.msra.mxu0 %v7765
  %7767 = vmatprep.subr.mxu0 0.0
  %v7768 = vand.u32 %v50, 4294901760
  %v7769 = vsub.f32 %v50, %v7768
  %v7770 = vand.u32 %v7769, 4294901760
  %7771 = vmatpush1.msra.mxu0 %v7770
  %7772 = vmatprep.subr.mxu0 0.0
  %v7773 = vand.u32 %v51, 4294901760
  %v7774 = vsub.f32 %v51, %v7773
  %v7775 = vand.u32 %v7774, 4294901760
  %7776 = vmatpush1.msra.mxu0 %v7775
  %7777 = vmatprep.subr.mxu0 0.0
  %v7778 = vand.u32 %v52, 4294901760
  %v7779 = vsub.f32 %v52, %v7778
  %v7780 = vand.u32 %v7779, 4294901760
  %7781 = vmatpush1.msra.mxu0 %v7780
  %7782 = vmatprep.subr.mxu0 0.0
  %v7783 = vand.u32 %v53, 4294901760
  %v7784 = vsub.f32 %v53, %v7783
  %v7785 = vand.u32 %v7784, 4294901760
  %7786 = vmatpush1.msra.mxu0 %v7785
  %7787 = vmatprep.subr.mxu0 0.0
  %v7788 = vand.u32 %v54, 4294901760
  %v7789 = vsub.f32 %v54, %v7788
  %v7790 = vand.u32 %v7789, 4294901760
  %7791 = vmatpush1.msra.mxu0 %v7790
  %7792 = vmatprep.subr.mxu0 0.0
  %v7793 = vand.u32 %v55, 4294901760
  %v7794 = vsub.f32 %v55, %v7793
  %v7795 = vand.u32 %v7794, 4294901760
  %7796 = vmatpush1.msra.mxu0 %v7795
  %7797 = vmatprep.subr.mxu0 0.0
  %v7798 = vand.u32 %v56, 4294901760
  %v7799 = vsub.f32 %v56, %v7798
  %v7800 = vand.u32 %v7799, 4294901760
  %7801 = vmatpush1.msra.mxu0 %v7800
  %7802 = vmatprep.subr.mxu0 0.0
  %v7803 = vand.u32 %v57, 4294901760
  %v7804 = vsub.f32 %v57, %v7803
  %v7805 = vand.u32 %v7804, 4294901760
  %7806 = vmatpush1.msra.mxu0 %v7805
  %7807 = vmatprep.subr.mxu0 0.0
  %v7808 = vand.u32 %v58, 4294901760
  %v7809 = vsub.f32 %v58, %v7808
  %v7810 = vand.u32 %v7809, 4294901760
  %7811 = vmatpush1.msra.mxu0 %v7810
  %7812 = vmatprep.subr.mxu0 0.0
  %v7813 = vand.u32 %v59, 4294901760
  %v7814 = vsub.f32 %v59, %v7813
  %v7815 = vand.u32 %v7814, 4294901760
  %7816 = vmatpush1.msra.mxu0 %v7815
  %7817 = vmatprep.subr.mxu0 0.0
  %v7818 = vand.u32 %v60, 4294901760
  %v7819 = vsub.f32 %v60, %v7818
  %v7820 = vand.u32 %v7819, 4294901760
  %7821 = vmatpush1.msra.mxu0 %v7820
  %7822 = vmatprep.subr.mxu0 0.0
  %v7823 = vand.u32 %v61, 4294901760
  %v7824 = vsub.f32 %v61, %v7823
  %v7825 = vand.u32 %v7824, 4294901760
  %7826 = vmatpush1.msra.mxu0 %v7825
  %7827 = vmatprep.subr.mxu0 0.0
  %v7828 = vand.u32 %v62, 4294901760
  %v7829 = vsub.f32 %v62, %v7828
  %v7830 = vand.u32 %v7829, 4294901760
  %7831 = vmatpush1.msra.mxu0 %v7830
  %7832 = vmatprep.subr.mxu0 0.0
  %7833 = vmatpush1.msra.mxu0 0.0
  %7834 = vmatprep.subr.mxu0 0.0
  %7835 = vmatpush1.msra.mxu0 0.0
  %7836 = vmatprep.subr.mxu0 0.0
  %7837 = vmatpush1.msra.mxu0 0.0
  %7838 = vmatprep.subr.mxu0 0.0
  %7839 = vmatpush1.msra.mxu0 0.0
  %7840 = vmatprep.subr.mxu0 0.0
  %7841 = vmatpush1.msra.mxu0 0.0
  %7842 = vmatprep.subr.mxu0 0.0
  %7843 = vmatpush1.msra.mxu0 0.0
  %7844 = vmatprep.subr.mxu0 0.0
  %7845 = vmatpush1.msra.mxu0 0.0
  %7846 = vmatprep.subr.mxu0 0.0
  %7847 = vmatpush1.msra.mxu0 0.0
  %7848 = vmatprep.subr.mxu0 0.0
  %7849 = vmatpush1.msra.mxu0 0.0
  %7850 = vmatprep.subr.mxu0 0.0
  %7851 = vmatpush1.msra.mxu0 0.0
  %7852 = vmatprep.subr.mxu0 0.0
  %7853 = vmatpush1.msra.mxu0 0.0
  %7854 = vmatprep.subr.mxu0 0.0
  %7855 = vmatpush1.msra.mxu0 0.0
  %7856 = vmatprep.subr.mxu0 0.0
  %7857 = vmatpush1.msra.mxu0 0.0
  %7858 = vmatprep.subr.mxu0 0.0
  %7859 = vmatpush1.msra.mxu0 0.0
  %7860 = vmatprep.subr.mxu0 0.0
  %7861 = vmatpush1.msra.mxu0 0.0
  %7862 = vmatprep.subr.mxu0 0.0
  %7863 = vmatpush1.msra.mxu0 0.0
  %7864 = vmatprep.mubr.f32.mxu0 0.0
  %v7865 = vand.u32 %v7315, 4294901760
  %7866 = vmatmul.mubr.f32.gmra.mrb[0].mxu0 %v7865
  %v7867 = vpop.f32.mrb[0].mxu0
  %v7868 = vadd.f32 %v7749, %v7867
  %v7869 = vpop.f32.mrb[0].mxu0
  %7870 = vdwg.mxu0
  %7871 = vmatprep.subr.mxu0 0.0
  %v7872 = vand.u32 %v47, 4294901760
  %7873 = vmatpush1.msra.mxu0 %v7872
  %7874 = vmatprep.subr.mxu0 0.0
  %v7875 = vand.u32 %v48, 4294901760
  %7876 = vmatpush1.msra.mxu0 %v7875
  %7877 = vmatprep.subr.mxu0 0.0
  %v7878 = vand.u32 %v49, 4294901760
  %7879 = vmatpush1.msra.mxu0 %v7878
  %7880 = vmatprep.subr.mxu0 0.0
  %v7881 = vand.u32 %v50, 4294901760
  %7882 = vmatpush1.msra.mxu0 %v7881
  %7883 = vmatprep.subr.mxu0 0.0
  %v7884 = vand.u32 %v51, 4294901760
  %7885 = vmatpush1.msra.mxu0 %v7884
  %7886 = vmatprep.subr.mxu0 0.0
  %v7887 = vand.u32 %v52, 4294901760
  %7888 = vmatpush1.msra.mxu0 %v7887
  %7889 = vmatprep.subr.mxu0 0.0
  %v7890 = vand.u32 %v53, 4294901760
  %7891 = vmatpush1.msra.mxu0 %v7890
  %7892 = vmatprep.subr.mxu0 0.0
  %v7893 = vand.u32 %v54, 4294901760
  %7894 = vmatpush1.msra.mxu0 %v7893
  %7895 = vmatprep.subr.mxu0 0.0
  %v7896 = vand.u32 %v55, 4294901760
  %7897 = vmatpush1.msra.mxu0 %v7896
  %7898 = vmatprep.subr.mxu0 0.0
  %v7899 = vand.u32 %v56, 4294901760
  %7900 = vmatpush1.msra.mxu0 %v7899
  %7901 = vmatprep.subr.mxu0 0.0
  %v7902 = vand.u32 %v57, 4294901760
  %7903 = vmatpush1.msra.mxu0 %v7902
  %7904 = vmatprep.subr.mxu0 0.0
  %v7905 = vand.u32 %v58, 4294901760
  %7906 = vmatpush1.msra.mxu0 %v7905
  %7907 = vmatprep.subr.mxu0 0.0
  %v7908 = vand.u32 %v59, 4294901760
  %7909 = vmatpush1.msra.mxu0 %v7908
  %7910 = vmatprep.subr.mxu0 0.0
  %v7911 = vand.u32 %v60, 4294901760
  %7912 = vmatpush1.msra.mxu0 %v7911
  %7913 = vmatprep.subr.mxu0 0.0
  %v7914 = vand.u32 %v61, 4294901760
  %7915 = vmatpush1.msra.mxu0 %v7914
  %7916 = vmatprep.subr.mxu0 0.0
  %v7917 = vand.u32 %v62, 4294901760
  %7918 = vmatpush1.msra.mxu0 %v7917
  %7919 = vmatprep.subr.mxu0 0.0
  %7920 = vmatpush1.msra.mxu0 0.0
  %7921 = vmatprep.subr.mxu0 0.0
  %7922 = vmatpush1.msra.mxu0 0.0
  %7923 = vmatprep.subr.mxu0 0.0
  %7924 = vmatpush1.msra.mxu0 0.0
  %7925 = vmatprep.subr.mxu0 0.0
  %7926 = vmatpush1.msra.mxu0 0.0
  %7927 = vmatprep.subr.mxu0 0.0
  %7928 = vmatpush1.msra.mxu0 0.0
  %7929 = vmatprep.subr.mxu0 0.0
  %7930 = vmatpush1.msra.mxu0 0.0
  %7931 = vmatprep.subr.mxu0 0.0
  %7932 = vmatpush1.msra.mxu0 0.0
  %7933 = vmatprep.subr.mxu0 0.0
  %7934 = vmatpush1.msra.mxu0 0.0
  %7935 = vmatprep.subr.mxu0 0.0
  %7936 = vmatpush1.msra.mxu0 0.0
  %7937 = vmatprep.subr.mxu0 0.0
  %7938 = vmatpush1.msra.mxu0 0.0
  %7939 = vmatprep.subr.mxu0 0.0
  %7940 = vmatpush1.msra.mxu0 0.0
  %7941 = vmatprep.subr.mxu0 0.0
  %7942 = vmatpush1.msra.mxu0 0.0
  %7943 = vmatprep.subr.mxu0 0.0
  %7944 = vmatpush1.msra.mxu0 0.0
  %7945 = vmatprep.subr.mxu0 0.0
  %7946 = vmatpush1.msra.mxu0 0.0
  %7947 = vmatprep.subr.mxu0 0.0
  %7948 = vmatpush1.msra.mxu0 0.0
  %7949 = vmatprep.subr.mxu0 0.0
  %7950 = vmatpush1.msra.mxu0 0.0
  %7951 = vmatprep.mubr.f32.mxu0 0.0
  %v7952 = vand.u32 %v7315, 4294901760
  %7953 = vmatmul.mubr.f32.gmra.mrb[0].mxu0 %v7952
  %v7954 = vpop.f32.mrb[0].mxu0
  %v7955 = vadd.f32 %v7868, %v7954
  %v7956 = vpop.f32.mrb[0].mxu0
  %7957 = vdwg.mxu0
  %v7958 = vlog2.pop %v7955
  %v7959 = vmul.f32 %v7958, 0.6931472
  %v7960 = vadd.f32 %v7293, %v7959
  %v7961 = vadd.f32 %v7960, %v7113
  %v7962 = vsel %vm7122, 1, 0
  %v7963 = vsel %vm7123, 1, 0
  %v7964 = vsel %vm7124, 1, 0
  %v7965 = vsel %vm7125, 1, 0
  %v7966 = vsel %vm7126, 1, 0
  %v7967 = vsel %vm7127, 1, 0
  %v7968 = vsel %vm7128, 1, 0
  %v7969 = vsel %vm7129, 1, 0
  %7970 = vset.pattern.permute.xlu0 0
  %7971 = vperm.xlu0 %7970, %v7962
  %v7972 = vpop.permute.xlu0 %7971
  %7973 = vset.pattern.permute.xlu0 0
  %7974 = vperm.xlu0 %7973, %v7963
  %v7975 = vpop.permute.xlu0 %7974
  %7976 = vset.pattern.permute.xlu0 0
  %7977 = vperm.xlu0 %7976, %v7964
  %v7978 = vpop.permute.xlu0 %7977
  %7979 = vset.pattern.permute.xlu0 0
  %7980 = vperm.xlu0 %7979, %v7965
  %v7981 = vpop.permute.xlu0 %7980
  %7982 = vset.pattern.permute.xlu0 0
  %7983 = vperm.xlu0 %7982, %v7966
  %v7984 = vpop.permute.xlu0 %7983
  %7985 = vset.pattern.permute.xlu0 0
  %7986 = vperm.xlu0 %7985, %v7967
  %v7987 = vpop.permute.xlu0 %7986
  %7988 = vset.pattern.permute.xlu0 0
  %7989 = vperm.xlu0 %7988, %v7968
  %v7990 = vpop.permute.xlu0 %7989
  %7991 = vset.pattern.permute.xlu0 0
  %7992 = vperm.xlu0 %7991, %v7969
  %v7993 = vpop.permute.xlu0 %7992
  %vm7994 = vcmp.eq.s32.totalorder %v7972, 1
  %vm7995 = vcmp.eq.s32.totalorder %v7975, 1
  %vm7996 = vcmp.eq.s32.totalorder %v7978, 1
  %vm7997 = vcmp.eq.s32.totalorder %v7981, 1
  %vm7998 = vcmp.eq.s32.totalorder %v7984, 1
  %vm7999 = vcmp.eq.s32.totalorder %v7987, 1
  %vm8000 = vcmp.eq.s32.totalorder %v7990, 1
  %vm8001 = vcmp.eq.s32.totalorder %v7993, 1
  %v8003 = vrot.slane %v7961, 1
  %v8004 = vrot.slane %v7961, 2
  %v8005 = vrot.slane %v7961, 3
  %v8006 = vrot.slane %v7961, 4
  %v8007 = vrot.slane %v7961, 5
  %v8008 = vrot.slane %v7961, 6
  %v8009 = vrot.slane %v7961, 7
  %v8018 = vsel %vm7994, %v7961, %v7015
  %v8019 = vsel %vm7995, %v8003, %v7016
  %v8020 = vsel %vm7996, %v8004, %v7017
  %v8021 = vsel %vm7997, %v8005, %v7018
  %v8022 = vsel %vm7998, %v8006, %v7019
  %v8023 = vsel %vm7999, %v8007, %v7020
  %v8024 = vsel %vm8000, %v8008, %v7021
  %v8025 = vsel %vm8001, %v8009, %v7022
  %v8034 = vrot.slane %v8019, 7
  %v8035 = vsel %vm108, %v8034, %v8018
  %v8036 = vrot.slane %v8020, 6
  %v8037 = vsel %vm111, %v8036, %v8035
  %v8038 = vrot.slane %v8021, 5
  %v8039 = vsel %vm114, %v8038, %v8037
  %v8040 = vrot.slane %v8022, 4
  %v8041 = vsel %vm117, %v8040, %v8039
  %v8042 = vrot.slane %v8023, 3
  %v8043 = vsel %vm120, %v8042, %v8041
  %v8044 = vrot.slane %v8024, 2
  %v8045 = vsel %vm123, %v8044, %v8043
  %v8046 = vrot.slane %v8025, 1
  %v8047 = vsel %vm126, %v8046, %v8045
  %8049 = vst [vmem:[#allocation2] sm:$0xff] %v8047
  %vm8050 = vcmask 7168
  %8051 = vst.msk [vmem:[#allocation3] sm:$0xff] %vm8050, %v7227
  // Predicated region
  $region42: #{ner_head_forward.1} parent=0 // pred_check
    %p8052 = pneg %p35
  $region43: #{ner_head_forward.1} parent=0 // pred_check_branch
    %8054 = sbr.rel (%p8052) target = $region45
  $region44: #{ner_head_forward.1} parent=0 // pred_region
    %v8055 = vld [vmem:[%s8] sm:$0x1]
    %v8057 = vlaneseq
    %v8058 = vshrl.u32 %v8057, 7
    %v8059 = vsub.s32 0, %v8058
    %v8060 = vrot.slane %v8055, %v8059
    %v8062 = vadd.f32 %v8018, %v8060
    %v8063 = vadd.f32 %v8019, %v8060
    %v8064 = vadd.f32 %v8020, %v8060
    %v8065 = vadd.f32 %v8021, %v8060
    %v8066 = vadd.f32 %v8022, %v8060
    %v8067 = vadd.f32 %v8023, %v8060
    %v8068 = vadd.f32 %v8024, %v8060
    %v8069 = vadd.f32 %v8025, %v8060
    %v8078 = vrot.slane %v8063, 7
    %v8079 = vsel %vm108, %v8078, %v8062
    %v8080 = vrot.slane %v8064, 6
    %v8081 = vsel %vm111, %v8080, %v8079
    %v8082 = vrot.slane %v8065, 5
    %v8083 = vsel %vm114, %v8082, %v8081
    %v8084 = vrot.slane %v8066, 4
    %v8085 = vsel %vm117, %v8084, %v8083
    %v8086 = vrot.slane %v8067, 3
    %v8087 = vsel %vm120, %v8086, %v8085
    %v8088 = vrot.slane %v8068, 2
    %v8089 = vsel %vm123, %v8088, %v8087
    %v8090 = vrot.slane %v8069, 1
    %v8091 = vsel %vm126, %v8090, %v8089
    %8093 = vmax.xlane.f32.xlu0 %v8091
    %v8094 = vpop.xlane.xlu0 %8093
    %v8096 = vrot.slane %v8094, 1
    %v8097 = vrot.slane %v8094, 2
    %v8098 = vrot.slane %v8094, 3
    %v8099 = vrot.slane %v8094, 4
    %v8100 = vrot.slane %v8094, 5
    %v8101 = vrot.slane %v8094, 6
    %v8102 = vrot.slane %v8094, 7
    %v8111 = vsub.f32 %v8062, %v8094
    %v8112 = vsub.f32 %v8063, %v8096
    %v8113 = vsub.f32 %v8064, %v8097
    %v8114 = vsub.f32 %v8065, %v8098
    %v8115 = vsub.f32 %v8066, %v8099
    %v8116 = vsub.f32 %v8067, %v8100
    %v8117 = vsub.f32 %v8068, %v8101
    %v8118 = vsub.f32 %v8069, %v8102
    %v8119 = vmul.f32 %v8111, 1.442695
    %v8120 = vpow.pop %v8119
    %v8121 = vmul.f32 %v8112, 1.442695
    %v8122 = vpow.pop %v8121
    %v8123 = vmul.f32 %v8113, 1.442695
    %v8124 = vpow.pop %v8123
    %v8125 = vmul.f32 %v8114, 1.442695
    %v8126 = vpow.pop %v8125
    %v8127 = vmul.f32 %v8115, 1.442695
    %v8128 = vpow.pop %v8127
    %v8129 = vmul.f32 %v8116, 1.442695
    %v8130 = vpow.pop %v8129
    %v8131 = vmul.f32 %v8117, 1.442695
    %v8132 = vpow.pop %v8131
    %v8133 = vmul.f32 %v8118, 1.442695
    %v8134 = vpow.pop %v8133
    %v8143 = vrot.slane %v8122, 7
    %v8144 = vsel %vm108, %v8143, %v8120
    %v8145 = vrot.slane %v8124, 6
    %v8146 = vsel %vm111, %v8145, %v8144
    %v8147 = vrot.slane %v8126, 5
    %v8148 = vsel %vm114, %v8147, %v8146
    %v8149 = vrot.slane %v8128, 4
    %v8150 = vsel %vm117, %v8149, %v8148
    %v8151 = vrot.slane %v8130, 3
    %v8152 = vsel %vm120, %v8151, %v8150
    %v8153 = vrot.slane %v8132, 2
    %v8154 = vsel %vm123, %v8153, %v8152
    %v8155 = vrot.slane %v8134, 1
    %v8156 = vsel %vm126, %v8155, %v8154
    %8158 = vadd.xlane.f32.xlu0 %v8156
    %v8159 = vpop.xlane.xlu0 %8158
    %v8160 = vlog2.pop %v8159
    %v8161 = vmul.f32 %v8160, 0.6931472
    %v8162 = vadd.f32 %v8094, %v8161
    %8163 = vst.msk [vmem:[%s9] sm:$0xff] %vm8050, %v8162
    %8164 = vst.msk [vmem:[%s10] sm:$0xff] %vm8050, %v7227
  $region45: #{ner_head_forward.1} parent=0 // pred_fallthru
    _
  // Predicated region
  $region46: #{ner_head_forward.1} parent=0 // pred_check
    _
  $region47: #{ner_head_forward.1} parent=0 // pred_check_branch
    %8166 = sbr.rel (0) target = $region49
  $region48: #{ner_head_forward.1} parent=0 // pred_region
    _
  $region49: #{ner_head_forward.1} parent=0 // pred_fallthru
    _
  // Predicated region
  $region50: #{ner_head_forward.1} parent=0 // pred_check
    _
  $region51: #{ner_head_forward.1} parent=0 // pred_check_branch
    %8168 = sbr.rel (0) target = $region53
  $region52: #{ner_head_forward.1} parent=0 // pred_region
    _
  $region53: #{ner_head_forward.1} parent=0 // pred_fallthru
    _
  // Predicated region
  $region54: #{ner_head_forward.1} parent=0 // pred_check
    _
  $region55: #{ner_head_forward.1} parent=0 // pred_check_branch
    %8170 = sbr.rel (0) target = $region57
  $region56: #{ner_head_forward.1} parent=0 // pred_region
    _
  $region57: #{ner_head_forward.1} parent=0 // pred_fallthru
    _
  // Predicated region
  $region58: #{ner_head_forward.1} parent=0 // pred_check
    _
  $region59: #{ner_head_forward.1} parent=0 // pred_check_branch
    %8172 = sbr.rel (0) target = $region61
  $region60: #{ner_head_forward.1} parent=0 // pred_region
    _
  $region61: #{ner_head_forward.1} parent=0 // pred_fallthru
    _

</llo_original>
